<compile_context>
chip_gen: v5e
topology: v5e:2x2
jax: 0.10.0
libtpu: 0.0.40
codegen_flags: <defaults>
</compile_context>

<pallas_src>
import jax
import jax.numpy as jnp
from jax.experimental import pallas as pl
from jax.experimental.pallas import tpu as pltpu

LATENT_DIM = 40   # logical latent size (matches the PyTorch module)
PAD = 128         # lane-dense padded width for latent / 64-wide hiddens


def _relu(v):
    return jnp.maximum(v, 0.0)


def _dot(a, b):
    # bf16 x bf16 matmul with f32 accumulation (full-rate MXU path).
    return jnp.dot(a.astype(jnp.bfloat16), b, preferred_element_type=jnp.float32)


def _reparam_decode_store(mu, logvar, eps_ref,
                          w_d1, b_d1, w_d2, b_d2, w_d3, b_d3,
                          xpred_ref, packed_ref):
    """Shared tail: reparameterize, decode, numerically-stable sigmoid, stores."""
    eps = eps_ref[...].astype(jnp.float32)                  # (TB, 128), cols >=40 are 0
    z = mu + eps * jnp.exp(0.5 * logvar)                    # padded cols stay 0

    d = _relu(_dot(z, w_d1[...]) + b_d1[...])               # (TB, 128)
    d = _relu(_dot(d, w_d2[...]) + b_d2[...])               # (TB, 256)
    logits = _dot(d, w_d3[...]) + b_d3[...]                 # (TB, 784)
    # sigmoid(x) = 0.5*(1 + tanh(x/2)): stable (no inf intermediate), runs on the EUP.
    x_pred = 0.5 * (jnp.tanh(0.5 * logits) + 1.0)

    xpred_ref[...] = x_pred.astype(xpred_ref.dtype)         # bf16 store (largest stream)
    # one lane-dense packed f32 output; three aligned unmasked 128-wide stores
    packed_ref[:, 0:PAD] = z.astype(packed_ref.dtype)
    packed_ref[:, PAD:2 * PAD] = mu.astype(packed_ref.dtype)
    packed_ref[:, 2 * PAD:3 * PAD] = logvar.astype(packed_ref.dtype)


def vae_kernel_fused(x_ref, eps_ref,
                     w_enc1, b_enc1, w_h2, b_h2, w_h3, b_h3,
                     w_d1, b_d1, w_d2, b_d2, w_d3, b_d3,
                     xpred_ref, packed_ref):
    """Encoder with block-diag fused hidden layers (N=256 fills the 256-wide MXU on v6e/v7x)."""
    x = x_ref[...]                                          # (TB, 784) bf16 (or f32)
    cat = _relu(_dot(x, w_enc1[...]) + b_enc1[...])         # (TB, 512) = [h | g]
    h2g2 = _relu(_dot(cat, w_h2[...]) + b_h2[...])          # (TB, 256) = [h2_pad | g2_pad]
    out3 = _dot(h2g2, w_h3[...]) + b_h3[...]                # (TB, 256) = [mu_pad | logvar_pad]
    mu = out3[:, :PAD]
    logvar = out3[:, PAD:]
    _reparam_decode_store(mu, logvar, eps_ref,
                          w_d1, b_d1, w_d2, b_d2, w_d3, b_d3, xpred_ref, packed_ref)


def vae_kernel_split(x_ref, eps_ref,
                     w_enc1, b_enc1,
                     w_mu2, b_mu2, w_lv2, b_lv2,
                     w_mu3, b_mu3, w_lv3, b_lv3,
                     w_d1, b_d1, w_d2, b_d2, w_d3, b_d3,
                     xpred_ref, packed_ref):
    """Encoder with separate mu/logvar hidden layers (N=128 already fills v2-v5 128-wide MXUs)."""
    x = x_ref[...]                                          # (TB, 784)
    cat = _relu(_dot(x, w_enc1[...]) + b_enc1[...])         # (TB, 512)
    h = cat[:, :256]                                        # mu branch
    g = cat[:, 256:]                                        # logvar branch
    h2 = _relu(_dot(h, w_mu2[...]) + b_mu2[...])            # (TB, 128)
    g2 = _relu(_dot(g, w_lv2[...]) + b_lv2[...])            # (TB, 128)
    mu = _dot(h2, w_mu3[...]) + b_mu3[...]                  # (TB, 128), cols >=40 are 0
    logvar = _dot(g2, w_lv3[...]) + b_lv3[...]              # (TB, 128), cols >=40 are 0
    _reparam_decode_store(mu, logvar, eps_ref,
                          w_d1, b_d1, w_d2, b_d2, w_d3, b_d3, xpred_ref, packed_ref)


def init_params(key):
    """Logical params matching the PyTorch Linear shapes (W stored as (in, out), b as (1, out))."""
    dims = {
        "mu1": (784, 256), "mu2": (256, 64), "mu3": (64, LATENT_DIM),
        "lv1": (784, 256), "lv2": (256, 64), "lv3": (64, LATENT_DIM),
        "d1": (LATENT_DIM, 64), "d2": (64, 256), "d3": (256, 784),
    }
    params = {}
    for name, (fan_in, fan_out) in dims.items():
        key, kw, kb = jax.random.split(key, 3)
        bound = 1.0 / jnp.sqrt(jnp.float32(fan_in))
        params["w_" + name] = jax.random.uniform(
            kw, (fan_in, fan_out), jnp.float32, -bound, bound)
        params["b_" + name] = jax.random.uniform(
            kb, (1, fan_out), jnp.float32, -bound, bound)
    return params


def _default_fuse_hidden():
    """Block-diag fusion only pays off on 256-wide MXUs (v6e/v7x); it doubles real MXU work on v2-v5."""
    try:
        kind = jax.devices()[0].device_kind.lower()
    except Exception:
        return True
    return not any(tag in kind for tag in ("v2", "v3", "v4", "v5"))


def prepare_kernel_params(p, *, fuse_hidden=None):
    """One-time weight prep: fuse mu1/lv1, zero-pad 40/64-wide dims to 128, cast weights to bf16.

    All padding is zero-fill of both weights and biases, which guarantees the padded
    latent/hidden columns are exactly zero throughout the kernel (load-bearing invariant).
    Biases stay f32 (they are added in the f32 epilogue and are tiny).
    """
    if fuse_hidden is None:
        fuse_hidden = _default_fuse_hidden()
    wdt = jnp.bfloat16

    def padw(w, rows, cols):
        return jnp.zeros((rows, cols), jnp.float32).at[:w.shape[0], :w.shape[1]].set(w)

    def padb(b, cols):
        return jnp.zeros((1, cols), jnp.float32).at[:, :b.shape[1]].set(b)

    kp = {}
    # encoder layer 1: mu/logvar branches share x -> one 784x512 matmul
    kp["w_enc1"] = jnp.concatenate([p["w_mu1"], p["w_lv1"]], axis=1).astype(wdt)   # (784, 512)
    kp["b_enc1"] = jnp.concatenate([p["b_mu1"], p["b_lv1"]], axis=1)               # (1, 512) f32

    if fuse_hidden:
        # block-diagonal fusion: layer 2 is (512,256), layer 3 is (256,256); each half is 128-padded
        w_h2 = (jnp.zeros((512, 2 * PAD), jnp.float32)
                .at[0:256, 0:64].set(p["w_mu2"])
                .at[256:512, PAD:PAD + 64].set(p["w_lv2"]))
        b_h2 = (jnp.zeros((1, 2 * PAD), jnp.float32)
                .at[:, 0:64].set(p["b_mu2"])
                .at[:, PAD:PAD + 64].set(p["b_lv2"]))
        w_h3 = (jnp.zeros((2 * PAD, 2 * PAD), jnp.float32)
                .at[0:64, 0:LATENT_DIM].set(p["w_mu3"])
                .at[PAD:PAD + 64, PAD:PAD + LATENT_DIM].set(p["w_lv3"]))
        b_h3 = (jnp.zeros((1, 2 * PAD), jnp.float32)
                .at[:, 0:LATENT_DIM].set(p["b_mu3"])
                .at[:, PAD:PAD + LATENT_DIM].set(p["b_lv3"]))
        kp["w_h2"] = w_h2.astype(wdt); kp["b_h2"] = b_h2
        kp["w_h3"] = w_h3.astype(wdt); kp["b_h3"] = b_h3
    else:
        kp["w_mu2"] = padw(p["w_mu2"], 256, PAD).astype(wdt); kp["b_mu2"] = padb(p["b_mu2"], PAD)
        kp["w_lv2"] = padw(p["w_lv2"], 256, PAD).astype(wdt); kp["b_lv2"] = padb(p["b_lv2"], PAD)
        kp["w_mu3"] = padw(p["w_mu3"], PAD, PAD).astype(wdt); kp["b_mu3"] = padb(p["b_mu3"], PAD)
        kp["w_lv3"] = padw(p["w_lv3"], PAD, PAD).astype(wdt); kp["b_lv3"] = padb(p["b_lv3"], PAD)

    kp["w_d1"] = padw(p["w_d1"], PAD, PAD).astype(wdt);  kp["b_d1"] = padb(p["b_d1"], PAD)
    kp["w_d2"] = padw(p["w_d2"], PAD, 256).astype(wdt);  kp["b_d2"] = p["b_d2"]
    kp["w_d3"] = p["w_d3"].astype(wdt);                  kp["b_d3"] = p["b_d3"]
    return kp


def _choose_tile_b(B):
    """Prefer the largest tile in {512..8} that still leaves >= 8 grid steps (>= 4 per v7x TC);
    for small batches just take the largest divisor <= 512."""
    best = None
    for tb in (512, 256, 128, 64, 32, 16, 8):
        if B % tb == 0:
            if best is None:
                best = tb
            if B // tb >= 8:
                return tb
    return best if best is not None else B


def vae_forward(x, eps, kparams, *, tile_b=None):
    """x: (B, 784) bf16/f32, eps: (B, LATENT_DIM) bf16/f32, kparams: prepare_kernel_params(...).

    Returns (x_pred[bf16], z[f32], mu[f32], logvar[f32])."""
    B = x.shape[0]
    if tile_b is None:
        tile_b = _choose_tile_b(B)
    tile_b = min(tile_b, B)
    assert B % tile_b == 0, "batch must be a multiple of the batch tile"

    fuse = "w_h2" in kparams
    kernel = vae_kernel_fused if fuse else vae_kernel_split
    names = (("enc1", "h2", "h3", "d1", "d2", "d3") if fuse else
             ("enc1", "mu2", "lv2", "mu3", "lv3", "d1", "d2", "d3"))

    # zero-pad the reparameterization noise to the lane-dense latent width (kept in eps.dtype;
    # bf16 eps halves its HBM stream vs the old padded-f32 slab).
    eps_pad = jnp.zeros((B, PAD), eps.dtype).at[:, :eps.shape[1]].set(eps)

    args = [x, eps_pad]
    in_specs = [
        pl.BlockSpec((tile_b, x.shape[1]), lambda i: (i, 0)),   # streamed, double-buffered
        pl.BlockSpec((tile_b, PAD), lambda i: (i, 0)),
    ]
    # weights/biases: constant block index -> DMA'd once, resident across the grid.
    # (pl.Buffered(1) would halve their VMEM footprint, but bf16 weights are only ~1.7 MiB
    #  so the default double-buffer already leaves ample headroom on every generation.)
    for name in names:
        w = kparams["w_" + name]
        b = kparams["b_" + name]
        args += [w, b]
        in_specs += [
            pl.BlockSpec(w.shape, lambda i: (0, 0)),
            pl.BlockSpec(b.shape, lambda i: (0, 0)),
        ]

    out_shapes = (
        jax.ShapeDtypeStruct((B, 784), jnp.bfloat16),       # x_pred (largest stream) in bf16
        jax.ShapeDtypeStruct((B, 3 * PAD), jnp.float32),    # packed [z | mu | logvar] kept f32
    )
    out_specs = (
        pl.BlockSpec((tile_b, 784), lambda i: (i, 0)),
        pl.BlockSpec((tile_b, 3 * PAD), lambda i: (i, 0)),
    )

    x_pred, packed = pl.pallas_call(
        kernel,
        grid=(B // tile_b,),
        out_shape=out_shapes,
        in_specs=in_specs,
        out_specs=out_specs,
        compiler_params=pltpu.CompilerParams(
            dimension_semantics=("parallel",),   # shards batch tiles across TCs on v7x
        ),
    )(*args)

    z = packed[:, :LATENT_DIM]
    mu = packed[:, PAD:PAD + LATENT_DIM]
    logvar = packed[:, 2 * PAD:2 * PAD + LATENT_DIM]
    return x_pred, z, mu, logvar


def reference_forward(x, eps, params):
    """Pure-JAX reference mirroring the kernel arithmetic: bf16 matmul operands, f32 accumulation
    and f32 elementwise epilogue (so it tracks the bf16 kernel tightly)."""
    bf = jnp.bfloat16

    def lin(a, name):
        return jnp.dot(a.astype(bf), params["w_" + name].astype(bf),
                       preferred_element_type=jnp.float32) + params["b_" + name]

    xf = x.astype(jnp.float32)
    mu = lin(_relu(lin(_relu(lin(xf, "mu1")), "mu2")), "mu3")
    lv = lin(_relu(lin(_relu(lin(xf, "lv1")), "lv2")), "lv3")
    z = mu + eps.astype(jnp.float32) * jnp.exp(0.5 * lv)
    d = _relu(lin(z, "d1"))
    d = _relu(lin(d, "d2"))
    x_pred = jax.nn.sigmoid(lin(d, "d3"))
    return x_pred, z, mu, lv


if __name__ == "__main__":
    key = jax.random.PRNGKey(0)
    key, kx, keps, kp = jax.random.split(key, 4)

    B = 256          # two batch tiles of 128 -> exercises the batch grid / pipelining
    TILE_B = 128     # demo tile; pass tile_b=None for the production heuristic (256-512 row tiles)

    # flattened 28x28 images; shipped to the kernel as bf16 (half the x HBM stream)
    x_f32 = jax.random.uniform(kx, (B, 784), jnp.float32)
    x = x_f32.astype(jnp.bfloat16)
    # reparameterize noise, external like the PyTorch np.random.randn, shipped as bf16
    eps_f32 = jax.random.normal(keps, (B, LATENT_DIM), jnp.float32)
    eps = eps_f32.astype(jnp.bfloat16)

    params = init_params(kp)
    kparams = prepare_kernel_params(params)   # auto-selects block-diag fusion for >=v6 chips

    x_pred, z, mu, logvar = vae_forward(x, eps, kparams, tile_b=TILE_B)
    jax.block_until_ready((x_pred, z, mu, logvar))

    # sanity check vs pure-JAX bf16-matmul reference (unfused, unpadded weights)
    rx, rz, rmu, rlv = reference_forward(x, eps, params)
    assert jnp.allclose(x_pred.astype(jnp.float32), rx, atol=2e-2), "x_pred mismatch"
    assert jnp.allclose(z, rz, atol=5e-3), "z mismatch"
    assert jnp.allclose(mu, rmu, atol=5e-3), "mu mismatch"
    assert jnp.allclose(logvar, rlv, atol=5e-3), "logvar mismatch"

    print("KERNEL_OK")
</pallas_src>

<mosaic_0001>
module attributes {stable_mosaic.version = 11 : i64} {
  func.func @vae_kernel_fused(%arg0: i32, %arg1: memref<128x784xbf16, #tpu.memory_space<vmem>>, %arg2: memref<128x128xbf16, #tpu.memory_space<vmem>>, %arg3: memref<784x512xbf16, #tpu.memory_space<vmem>>, %arg4: memref<1x512xf32, #tpu.memory_space<vmem>>, %arg5: memref<512x256xbf16, #tpu.memory_space<vmem>>, %arg6: memref<1x256xf32, #tpu.memory_space<vmem>>, %arg7: memref<256x256xbf16, #tpu.memory_space<vmem>>, %arg8: memref<1x256xf32, #tpu.memory_space<vmem>>, %arg9: memref<128x128xbf16, #tpu.memory_space<vmem>>, %arg10: memref<1x128xf32, #tpu.memory_space<vmem>>, %arg11: memref<128x256xbf16, #tpu.memory_space<vmem>>, %arg12: memref<1x256xf32, #tpu.memory_space<vmem>>, %arg13: memref<256x784xbf16, #tpu.memory_space<vmem>>, %arg14: memref<1x784xf32, #tpu.memory_space<vmem>>, %arg15: memref<128x784xbf16, #tpu.memory_space<vmem>>, %arg16: memref<128x384xf32, #tpu.memory_space<vmem>>) attributes {dimension_semantics = [#tpu.dimension_semantics<parallel>], iteration_bounds = array<i64: 2>, scalar_prefetch = 0 : i64, scratch_operands = 0 : i64, tpu.core_type = #tpu.core_type<tc>, window_params = [{transform_indices = @transform_0, window_bounds = array<i64: 128, 784>}, {transform_indices = @transform_1, window_bounds = array<i64: 128, 128>}, {pipeline_mode = #tpu.pipeline_mode<synchronous>, transform_indices = @transform_2, window_bounds = array<i64: 784, 512>}, {pipeline_mode = #tpu.pipeline_mode<synchronous>, transform_indices = @transform_3, window_bounds = array<i64: 1, 512>}, {pipeline_mode = #tpu.pipeline_mode<synchronous>, transform_indices = @transform_4, window_bounds = array<i64: 512, 256>}, {pipeline_mode = #tpu.pipeline_mode<synchronous>, transform_indices = @transform_5, window_bounds = array<i64: 1, 256>}, {pipeline_mode = #tpu.pipeline_mode<synchronous>, transform_indices = @transform_6, window_bounds = array<i64: 256, 256>}, {pipeline_mode = #tpu.pipeline_mode<synchronous>, transform_indices = @transform_7, window_bounds = array<i64: 1, 256>}, {pipeline_mode = #tpu.pipeline_mode<synchronous>, transform_indices = @transform_8, window_bounds = array<i64: 128, 128>}, {pipeline_mode = #tpu.pipeline_mode<synchronous>, transform_indices = @transform_9, window_bounds = array<i64: 1, 128>}, {pipeline_mode = #tpu.pipeline_mode<synchronous>, transform_indices = @transform_10, window_bounds = array<i64: 128, 256>}, {pipeline_mode = #tpu.pipeline_mode<synchronous>, transform_indices = @transform_11, window_bounds = array<i64: 1, 256>}, {pipeline_mode = #tpu.pipeline_mode<synchronous>, transform_indices = @transform_12, window_bounds = array<i64: 256, 784>}, {pipeline_mode = #tpu.pipeline_mode<synchronous>, transform_indices = @transform_13, window_bounds = array<i64: 1, 784>}, {transform_indices = @transform_14, window_bounds = array<i64: 128, 784>}, {transform_indices = @transform_15, window_bounds = array<i64: 128, 384>}]} {
    %c0 = arith.constant 0 : index
    %c0_0 = arith.constant 0 : index
    %0 = vector.load %arg1[%c0, %c0_0] : memref<128x784xbf16, #tpu.memory_space<vmem>>, vector<128x784xbf16>
    %c0_1 = arith.constant 0 : index
    %c0_2 = arith.constant 0 : index
    %1 = vector.load %arg3[%c0_1, %c0_2] : memref<784x512xbf16, #tpu.memory_space<vmem>>, vector<784x512xbf16>
    %cst = arith.constant dense<0.000000e+00> : vector<128x512xf32>
    %2 = tpu.matmul %0, %1, %cst {dimension_numbers = #tpu.dot_dimension_numbers<[1], [0], [0], [1], [0, 0, 1, 1], [], []>} : vector<128x784xbf16>, vector<784x512xbf16>, vector<128x512xf32> -> vector<128x512xf32>
    %c0_3 = arith.constant 0 : index
    %c0_4 = arith.constant 0 : index
    %3 = vector.load %arg4[%c0_3, %c0_4] : memref<1x512xf32, #tpu.memory_space<vmem>>, vector<1x512xf32>
    %4 = vector.broadcast %3 : vector<1x512xf32> to vector<128x512xf32>
    %5 = arith.addf %2, %4 : vector<128x512xf32>
    %cst_5 = arith.constant 0.000000e+00 : f32
    %6 = vector.broadcast %cst_5 : f32 to vector<128x512xf32>
    %7 = arith.maximumf %5, %6 : vector<128x512xf32>
    %c0_6 = arith.constant 0 : index
    %c0_7 = arith.constant 0 : index
    %8 = vector.load %arg5[%c0_6, %c0_7] : memref<512x256xbf16, #tpu.memory_space<vmem>>, vector<512x256xbf16>
    %9 = arith.truncf %7 : vector<128x512xf32> to vector<128x512xbf16>
    %cst_8 = arith.constant dense<0.000000e+00> : vector<128x256xf32>
    %10 = tpu.matmul %9, %8, %cst_8 {dimension_numbers = #tpu.dot_dimension_numbers<[1], [0], [0], [1], [0, 0, 1, 1], [], []>} : vector<128x512xbf16>, vector<512x256xbf16>, vector<128x256xf32> -> vector<128x256xf32>
    %c0_9 = arith.constant 0 : index
    %c0_10 = arith.constant 0 : index
    %11 = vector.load %arg6[%c0_9, %c0_10] : memref<1x256xf32, #tpu.memory_space<vmem>>, vector<1x256xf32>
    %12 = vector.broadcast %11 : vector<1x256xf32> to vector<128x256xf32>
    %13 = arith.addf %10, %12 : vector<128x256xf32>
    %cst_11 = arith.constant 0.000000e+00 : f32
    %14 = vector.broadcast %cst_11 : f32 to vector<128x256xf32>
    %15 = arith.maximumf %13, %14 : vector<128x256xf32>
    %c0_12 = arith.constant 0 : index
    %c0_13 = arith.constant 0 : index
    %16 = vector.load %arg7[%c0_12, %c0_13] : memref<256x256xbf16, #tpu.memory_space<vmem>>, vector<256x256xbf16>
    %17 = arith.truncf %15 : vector<128x256xf32> to vector<128x256xbf16>
    %cst_14 = arith.constant dense<0.000000e+00> : vector<128x256xf32>
    %18 = tpu.matmul %17, %16, %cst_14 {dimension_numbers = #tpu.dot_dimension_numbers<[1], [0], [0], [1], [0, 0, 1, 1], [], []>} : vector<128x256xbf16>, vector<256x256xbf16>, vector<128x256xf32> -> vector<128x256xf32>
    %c0_15 = arith.constant 0 : index
    %c0_16 = arith.constant 0 : index
    %19 = vector.load %arg8[%c0_15, %c0_16] : memref<1x256xf32, #tpu.memory_space<vmem>>, vector<1x256xf32>
    %20 = vector.broadcast %19 : vector<1x256xf32> to vector<128x256xf32>
    %21 = arith.addf %18, %20 : vector<128x256xf32>
    %22 = vector.extract_strided_slice %21 {offsets = [0, 0], sizes = [128, 128], strides = [1, 1]} : vector<128x256xf32> to vector<128x128xf32>
    %23 = vector.extract_strided_slice %21 {offsets = [0, 128], sizes = [128, 128], strides = [1, 1]} : vector<128x256xf32> to vector<128x128xf32>
    %c0_17 = arith.constant 0 : index
    %c0_18 = arith.constant 0 : index
    %24 = vector.load %arg2[%c0_17, %c0_18] : memref<128x128xbf16, #tpu.memory_space<vmem>>, vector<128x128xbf16>
    %25 = arith.extf %24 : vector<128x128xbf16> to vector<128x128xf32>
    %cst_19 = arith.constant 5.000000e-01 : f32
    %26 = vector.broadcast %cst_19 : f32 to vector<128x128xf32>
    %27 = arith.mulf %26, %23 : vector<128x128xf32>
    %28 = math.exp %27 : vector<128x128xf32>
    %29 = arith.mulf %25, %28 : vector<128x128xf32>
    %30 = arith.addf %22, %29 : vector<128x128xf32>
    %c0_20 = arith.constant 0 : index
    %c0_21 = arith.constant 0 : index
    %31 = vector.load %arg9[%c0_20, %c0_21] : memref<128x128xbf16, #tpu.memory_space<vmem>>, vector<128x128xbf16>
    %32 = arith.truncf %30 : vector<128x128xf32> to vector<128x128xbf16>
    %cst_22 = arith.constant dense<0.000000e+00> : vector<128x128xf32>
    %33 = tpu.matmul %32, %31, %cst_22 {dimension_numbers = #tpu.dot_dimension_numbers<[1], [0], [0], [1], [0, 0, 1, 1], [], []>} : vector<128x128xbf16>, vector<128x128xbf16>, vector<128x128xf32> -> vector<128x128xf32>
    %c0_23 = arith.constant 0 : index
    %c0_24 = arith.constant 0 : index
    %34 = vector.load %arg10[%c0_23, %c0_24] : memref<1x128xf32, #tpu.memory_space<vmem>>, vector<1x128xf32>
    %35 = vector.broadcast %34 : vector<1x128xf32> to vector<128x128xf32>
    %36 = arith.addf %33, %35 : vector<128x128xf32>
    %cst_25 = arith.constant 0.000000e+00 : f32
    %37 = vector.broadcast %cst_25 : f32 to vector<128x128xf32>
    %38 = arith.maximumf %36, %37 : vector<128x128xf32>
    %c0_26 = arith.constant 0 : index
    %c0_27 = arith.constant 0 : index
    %39 = vector.load %arg11[%c0_26, %c0_27] : memref<128x256xbf16, #tpu.memory_space<vmem>>, vector<128x256xbf16>
    %40 = arith.truncf %38 : vector<128x128xf32> to vector<128x128xbf16>
    %cst_28 = arith.constant dense<0.000000e+00> : vector<128x256xf32>
    %41 = tpu.matmul %40, %39, %cst_28 {dimension_numbers = #tpu.dot_dimension_numbers<[1], [0], [0], [1], [0, 0, 1, 1], [], []>} : vector<128x128xbf16>, vector<128x256xbf16>, vector<128x256xf32> -> vector<128x256xf32>
    %c0_29 = arith.constant 0 : index
    %c0_30 = arith.constant 0 : index
    %42 = vector.load %arg12[%c0_29, %c0_30] : memref<1x256xf32, #tpu.memory_space<vmem>>, vector<1x256xf32>
    %43 = vector.broadcast %42 : vector<1x256xf32> to vector<128x256xf32>
    %44 = arith.addf %41, %43 : vector<128x256xf32>
    %cst_31 = arith.constant 0.000000e+00 : f32
    %45 = vector.broadcast %cst_31 : f32 to vector<128x256xf32>
    %46 = arith.maximumf %44, %45 : vector<128x256xf32>
    %c0_32 = arith.constant 0 : index
    %c0_33 = arith.constant 0 : index
    %47 = vector.load %arg13[%c0_32, %c0_33] : memref<256x784xbf16, #tpu.memory_space<vmem>>, vector<256x784xbf16>
    %48 = arith.truncf %46 : vector<128x256xf32> to vector<128x256xbf16>
    %cst_34 = arith.constant dense<0.000000e+00> : vector<128x784xf32>
    %49 = tpu.matmul %48, %47, %cst_34 {dimension_numbers = #tpu.dot_dimension_numbers<[1], [0], [0], [1], [0, 0, 1, 1], [], []>} : vector<128x256xbf16>, vector<256x784xbf16>, vector<128x784xf32> -> vector<128x784xf32>
    %c0_35 = arith.constant 0 : index
    %c0_36 = arith.constant 0 : index
    %50 = vector.load %arg14[%c0_35, %c0_36] : memref<1x784xf32, #tpu.memory_space<vmem>>, vector<1x784xf32>
    %51 = vector.broadcast %50 : vector<1x784xf32> to vector<128x784xf32>
    %52 = arith.addf %49, %51 : vector<128x784xf32>
    %cst_37 = arith.constant 5.000000e-01 : f32
    %53 = vector.broadcast %cst_37 : f32 to vector<128x784xf32>
    %54 = arith.mulf %53, %52 : vector<128x784xf32>
    %55 = math.tanh %54 : vector<128x784xf32>
    %cst_38 = arith.constant 1.000000e+00 : f32
    %56 = vector.broadcast %cst_38 : f32 to vector<128x784xf32>
    %57 = arith.addf %55, %56 : vector<128x784xf32>
    %cst_39 = arith.constant 5.000000e-01 : f32
    %58 = vector.broadcast %cst_39 : f32 to vector<128x784xf32>
    %59 = arith.mulf %58, %57 : vector<128x784xf32>
    %60 = arith.truncf %59 : vector<128x784xf32> to vector<128x784xbf16>
    %c0_40 = arith.constant 0 : index
    %c0_41 = arith.constant 0 : index
    %61 = vector.load %arg15[%c0_40, %c0_41] : memref<128x784xbf16, #tpu.memory_space<vmem>>, vector<128x784xbf16>
    tpu.vector_store %arg15[%c0_40, %c0_41], %60 {strides = array<i32>} : memref<128x784xbf16, #tpu.memory_space<vmem>>, vector<128x784xbf16>,
    %c0_42 = arith.constant 0 : index
    %c0_43 = arith.constant 0 : index
    %62 = vector.load %arg16[%c0_42, %c0_43] : memref<128x384xf32, #tpu.memory_space<vmem>>, vector<128x128xf32>
    tpu.vector_store %arg16[%c0_42, %c0_43], %30 {strides = array<i32>} : memref<128x384xf32, #tpu.memory_space<vmem>>, vector<128x128xf32>,
    %c0_44 = arith.constant 0 : index
    %c128 = arith.constant 128 : index
    %63 = vector.load %arg16[%c0_44, %c128] : memref<128x384xf32, #tpu.memory_space<vmem>>, vector<128x128xf32>
    tpu.vector_store %arg16[%c0_44, %c128], %22 {strides = array<i32>} : memref<128x384xf32, #tpu.memory_space<vmem>>, vector<128x128xf32>,
    %c0_45 = arith.constant 0 : index
    %c256 = arith.constant 256 : index
    %64 = vector.load %arg16[%c0_45, %c256] : memref<128x384xf32, #tpu.memory_space<vmem>>, vector<128x128xf32>
    tpu.vector_store %arg16[%c0_45, %c256], %23 {strides = array<i32>} : memref<128x384xf32, #tpu.memory_space<vmem>>, vector<128x128xf32>,
    return
  }
  func.func @transform_0(%arg0: i32) -> (i32, i32) {
    %c0_i32 = arith.constant 0 : i32
    %c0_i32_0 = arith.constant 0 : i32
    return %arg0, %c0_i32 : i32, i32
  }
  func.func @transform_1(%arg0: i32) -> (i32, i32) {
    %c0_i32 = arith.constant 0 : i32
    %c0_i32_0 = arith.constant 0 : i32
    return %arg0, %c0_i32 : i32, i32
  }
  func.func @transform_2(%arg0: i32) -> (i32, i32) {
    %c0_i32 = arith.constant 0 : i32
    %c0_i32_0 = arith.constant 0 : i32
    %c0_i32_1 = arith.constant 0 : i32
    return %c0_i32, %c0_i32_0 : i32, i32
  }
  func.func @transform_3(%arg0: i32) -> (i32, i32) {
    %c0_i32 = arith.constant 0 : i32
    %c0_i32_0 = arith.constant 0 : i32
    %c0_i32_1 = arith.constant 0 : i32
    return %c0_i32, %c0_i32_0 : i32, i32
  }
  func.func @transform_4(%arg0: i32) -> (i32, i32) {
    %c0_i32 = arith.constant 0 : i32
    %c0_i32_0 = arith.constant 0 : i32
    %c0_i32_1 = arith.constant 0 : i32
    return %c0_i32, %c0_i32_0 : i32, i32
  }
  func.func @transform_5(%arg0: i32) -> (i32, i32) {
    %c0_i32 = arith.constant 0 : i32
    %c0_i32_0 = arith.constant 0 : i32
    %c0_i32_1 = arith.constant 0 : i32
    return %c0_i32, %c0_i32_0 : i32, i32
  }
  func.func @transform_6(%arg0: i32) -> (i32, i32) {
    %c0_i32 = arith.constant 0 : i32
    %c0_i32_0 = arith.constant 0 : i32
    %c0_i32_1 = arith.constant 0 : i32
    return %c0_i32, %c0_i32_0 : i32, i32
  }
  func.func @transform_7(%arg0: i32) -> (i32, i32) {
    %c0_i32 = arith.constant 0 : i32
    %c0_i32_0 = arith.constant 0 : i32
    %c0_i32_1 = arith.constant 0 : i32
    return %c0_i32, %c0_i32_0 : i32, i32
  }
  func.func @transform_8(%arg0: i32) -> (i32, i32) {
    %c0_i32 = arith.constant 0 : i32
    %c0_i32_0 = arith.constant 0 : i32
    %c0_i32_1 = arith.constant 0 : i32
    return %c0_i32, %c0_i32_0 : i32, i32
  }
  func.func @transform_9(%arg0: i32) -> (i32, i32) {
    %c0_i32 = arith.constant 0 : i32
    %c0_i32_0 = arith.constant 0 : i32
    %c0_i32_1 = arith.constant 0 : i32
    return %c0_i32, %c0_i32_0 : i32, i32
  }
  func.func @transform_10(%arg0: i32) -> (i32, i32) {
    %c0_i32 = arith.constant 0 : i32
    %c0_i32_0 = arith.constant 0 : i32
    %c0_i32_1 = arith.constant 0 : i32
    return %c0_i32, %c0_i32_0 : i32, i32
  }
  func.func @transform_11(%arg0: i32) -> (i32, i32) {
    %c0_i32 = arith.constant 0 : i32
    %c0_i32_0 = arith.constant 0 : i32
    %c0_i32_1 = arith.constant 0 : i32
    return %c0_i32, %c0_i32_0 : i32, i32
  }
  func.func @transform_12(%arg0: i32) -> (i32, i32) {
    %c0_i32 = arith.constant 0 : i32
    %c0_i32_0 = arith.constant 0 : i32
    %c0_i32_1 = arith.constant 0 : i32
    return %c0_i32, %c0_i32_0 : i32, i32
  }
  func.func @transform_13(%arg0: i32) -> (i32, i32) {
    %c0_i32 = arith.constant 0 : i32
    %c0_i32_0 = arith.constant 0 : i32
    %c0_i32_1 = arith.constant 0 : i32
    return %c0_i32, %c0_i32_0 : i32, i32
  }
  func.func @transform_14(%arg0: i32) -> (i32, i32) {
    %c0_i32 = arith.constant 0 : i32
    %c0_i32_0 = arith.constant 0 : i32
    return %arg0, %c0_i32 : i32, i32
  }
  func.func @transform_15(%arg0: i32) -> (i32, i32) {
    %c0_i32 = arith.constant 0 : i32
    %c0_i32_0 = arith.constant 0 : i32
    return %arg0, %c0_i32 : i32, i32
  }
}

</mosaic_0001>

<llo_original>
// kernel: tpu_custom_call.1
$region0: #{tpu_custom_call.1}
  #allocation0 [shape = 'u32[]', space=smem, size = 0x4, offset = 0x4, fixed_abs, tag = 'smem constant byte address 0x4 - core index']
  #allocation1 [shape = 'u32[72,128]{1,0:T(1,128)}', space=vmem, size = 0x9000, scoped, tag = 'internal scratch']
  %s0 = inlined_call_operand.vmem [shape: bf16[256,784], index: 0, kind: input, shape index: {}]
  %s1 = inlined_call_operand.vmem [shape: bf16[256,128], index: 1, kind: input, shape index: {}]
  %s2 = inlined_call_operand.vmem [shape: bf16[784,512], index: 2, kind: input, shape index: {}]
  %s3 = inlined_call_operand.vmem [shape: f32[1,512], index: 3, kind: input, shape index: {}]
  %s4 = inlined_call_operand.vmem [shape: bf16[512,256], index: 4, kind: input, shape index: {}]
  %s5 = inlined_call_operand.vmem [shape: f32[1,256], index: 5, kind: input, shape index: {}]
  %s6 = inlined_call_operand.vmem [shape: bf16[256,256], index: 6, kind: input, shape index: {}]
  %s7 = inlined_call_operand.vmem [shape: f32[1,256], index: 7, kind: input, shape index: {}]
  %s8 = inlined_call_operand.vmem [shape: bf16[128,128], index: 8, kind: input, shape index: {}]
  %s9 = inlined_call_operand.vmem [shape: f32[1,128], index: 9, kind: input, shape index: {}]
  %s10 = inlined_call_operand.hbm [shape: bf16[128,256], index: 10, kind: input, shape index: {}]
  %s11 = inlined_call_operand.vmem [shape: f32[1,256], index: 11, kind: input, shape index: {}]
  %s12 = inlined_call_operand.vmem [shape: bf16[256,784], index: 12, kind: input, shape index: {}]
  %s13 = inlined_call_operand.vmem [shape: f32[1,784], index: 13, kind: input, shape index: {}]
  %s14 = inlined_call_operand.vmem [shape: bf16[256,784], index: 14, kind: output, shape index: {0}]
  %s15 = inlined_call_operand.hbm [shape: f32[256,384], index: 15, kind: output, shape index: {1}]
  %16 = xla_tuple %s14, %s15
  %s17 = sld [smem:[#allocation0]]
  $region101: #{tpu_custom_call.1} parent=0
    _
  %s19 = ssub.s32 1, %s17
  %s20 = scalar_select 0, %s19, %s17
  $region1: #{tpu_custom_call.1} parent=0
    #allocation2 [shape = 'u8[65536]{0}', space=vmem, size = 0x10000, scoped, tag = 'input window, operand 10, single buffered']
    #allocation3 [shape = 's32[2]{0}', space=sflag, size = 0x8, scoped, tag = 'scoped memory for tpu_custom_call.1']
    #allocation4 [shape = 's32[2]{0}', space=sflag, size = 0x8, scoped, tag = 'scoped memory for tpu_custom_call.1']
    #allocation5 [shape = 'u8[393216]{0}', space=vmem, size = 0x60000, scoped, tag = 'output window, operand 1']
    %21 = vsyncpa [#allocation3], 0
    %22 = vsyncpa [#allocation4], 0
    %s23 = scalar_lea.sflag [#allocation4], 1
    %24 = vsyncpa %s23, 0
    loop: start=0, step=1, limit=4
    $region2: #{tpu_custom_call.1} parent=1 // loop_pre_header
      _
    $region3: #{tpu_custom_call.1} parent=1 // loop_header
      %s26 = sphi 0, %s30
      %p27 = scmp.ge.s32.totalorder %s26, 4
      %s36 = sphi 0, %s38
      %s39 = sphi 0, %s36
      %s40 = sphi 0, %s39
      %s56 = sphi 0, %s40
      %s62 = sphi 0, %s64
      %s65 = sphi 0, %s62
      %s66 = sphi 0, %s65
      %s82 = sphi 0, %s66
      %s86 = sphi 0, %s86
      %s88 = sphi 0, %s86
      %s89 = sphi 0, %s88
      %s103 = sphi 0, %s89
      %s107 = sphi 0, %s107
      %s109 = sphi 0, %s107
      %s110 = sphi 0, %s109
      %s124 = sphi 0, %s110
      %s128 = sphi 0, %s128
      %s130 = sphi 0, %s128
      %s131 = sphi 0, %s130
      %s145 = sphi 0, %s131
      %s149 = sphi 0, %s149
      %s151 = sphi 0, %s149
      %s152 = sphi 0, %s151
      %s166 = sphi 0, %s152
      %s170 = sphi 0, %s170
      %s172 = sphi 0, %s170
      %s173 = sphi 0, %s172
      %s187 = sphi 0, %s173
      %s191 = sphi 0, %s191
      %s193 = sphi 0, %s191
      %s194 = sphi 0, %s193
      %s208 = sphi 0, %s194
      %s212 = sphi 0, %s212
      %s214 = sphi 0, %s212
      %s215 = sphi 0, %s214
      %s229 = sphi 0, %s215
      %s233 = sphi 0, %s233
      %s235 = sphi 0, %s233
      %s236 = sphi 0, %s235
      %s250 = sphi 0, %s236
      %s254 = sphi 0, %s254
      %s256 = sphi 0, %s254
      %s257 = sphi 0, %s256
      %s271 = sphi 0, %s257
      %s275 = sphi 0, %s275
      %s277 = sphi 0, %s275
      %s278 = sphi 0, %s277
      %s292 = sphi 0, %s278
      %s296 = sphi 0, %s296
      %s298 = sphi 0, %s296
      %s299 = sphi 0, %s298
      %s313 = sphi 0, %s299
      %s317 = sphi 0, %s317
      %s319 = sphi 0, %s317
      %s320 = sphi 0, %s319
      %s334 = sphi 0, %s320
      %s340 = sphi 0, %s342
      %s343 = sphi 0, %s340
      %s344 = sphi 0, %s343
      %s360 = sphi 0, %s344
      %s366 = sphi 0, %s368
      %s369 = sphi 0, %s366
      %s370 = sphi 0, %s369
      %s386 = sphi 0, %s370
    $region4: #{tpu_custom_call.1} parent=1 // loop_header_branch
      %29 = sbr.rel (%p27) target = $region8
    $region5: #{tpu_custom_call.1} parent=1 // loop_body
      %s31 = ssub.s32 %s26, 1
      %s32 = ssub.s32 %s26, 2
      %s33 = sadd.s32 %s26, 1
      %s34 = ssub.s32 %s26, %s33
      %p35 = scmp.eq.s32.totalorder %s34, 0
      %s37 = sadd.s32 %s36, 1
      %s38 = scalar_select %p35, %s36, %s37
      %p41 = pneg %p35
      %p42 = scmp.eq.s32.totalorder %s26, 1
      %p43 = por %p41, %p42
      %p44 = scmp.ne.s32.totalorder %s36, %s39
      %p45 = scmp.eq.s32.totalorder %s26, 0
      %p46 = por %p44, %p45
      %p47 = scmp.ne.s32.totalorder %s36, %s39
      %p48 = scmp.eq.s32.totalorder %s31, 1
      %p49 = por %p47, %p48
      %p50 = scmp.ne.s32.totalorder %s39, %s40
      %p51 = scmp.eq.s32.totalorder %s31, 0
      %p52 = por %p50, %p51
      %p53 = scmp.ne.s32.totalorder %s39, %s40
      %p54 = scmp.eq.s32.totalorder %s32, 1
      %p55 = por %p53, %p54
      %p57 = scmp.ne.s32.totalorder %s40, %s56
      %p58 = scmp.eq.s32.totalorder %s32, 0
      %p59 = por %p57, %p58
      %s60 = ssub.s32 %s26, %s33
      %p61 = scmp.eq.s32.totalorder %s60, 0
      %s63 = sadd.s32 %s62, 1
      %s64 = scalar_select %p61, %s62, %s63
      %p67 = pneg %p61
      %p68 = scmp.eq.s32.totalorder %s26, 1
      %p69 = por %p67, %p68
      %p70 = scmp.ne.s32.totalorder %s62, %s65
      %p71 = scmp.eq.s32.totalorder %s26, 0
      %p72 = por %p70, %p71
      %p73 = scmp.ne.s32.totalorder %s62, %s65
      %p74 = scmp.eq.s32.totalorder %s31, 1
      %p75 = por %p73, %p74
      %p76 = scmp.ne.s32.totalorder %s65, %s66
      %p77 = scmp.eq.s32.totalorder %s31, 0
      %p78 = por %p76, %p77
      %p79 = scmp.ne.s32.totalorder %s65, %s66
      %p80 = scmp.eq.s32.totalorder %s32, 1
      %p81 = por %p79, %p80
      %p83 = scmp.ne.s32.totalorder %s66, %s82
      %p84 = scmp.eq.s32.totalorder %s32, 0
      %p85 = por %p83, %p84
      %s87 = sadd.s32 %s86, 1
      %p90 = scmp.eq.s32.totalorder %s26, 1
      %p91 = scmp.ne.s32.totalorder %s86, %s88
      %p92 = scmp.eq.s32.totalorder %s26, 0
      %p93 = por %p91, %p92
      %p94 = scmp.ne.s32.totalorder %s86, %s88
      %p95 = scmp.eq.s32.totalorder %s31, 1
      %p96 = por %p94, %p95
      %p97 = scmp.ne.s32.totalorder %s88, %s89
      %p98 = scmp.eq.s32.totalorder %s31, 0
      %p99 = por %p97, %p98
      %p100 = scmp.ne.s32.totalorder %s88, %s89
      %p101 = scmp.eq.s32.totalorder %s32, 1
      %p102 = por %p100, %p101
      %p104 = scmp.ne.s32.totalorder %s89, %s103
      %p105 = scmp.eq.s32.totalorder %s32, 0
      %p106 = por %p104, %p105
      %s108 = sadd.s32 %s107, 1
      %p111 = scmp.eq.s32.totalorder %s26, 1
      %p112 = scmp.ne.s32.totalorder %s107, %s109
      %p113 = scmp.eq.s32.totalorder %s26, 0
      %p114 = por %p112, %p113
      %p115 = scmp.ne.s32.totalorder %s107, %s109
      %p116 = scmp.eq.s32.totalorder %s31, 1
      %p117 = por %p115, %p116
      %p118 = scmp.ne.s32.totalorder %s109, %s110
      %p119 = scmp.eq.s32.totalorder %s31, 0
      %p120 = por %p118, %p119
      %p121 = scmp.ne.s32.totalorder %s109, %s110
      %p122 = scmp.eq.s32.totalorder %s32, 1
      %p123 = por %p121, %p122
      %p125 = scmp.ne.s32.totalorder %s110, %s124
      %p126 = scmp.eq.s32.totalorder %s32, 0
      %p127 = por %p125, %p126
      %s129 = sadd.s32 %s128, 1
      %p132 = scmp.eq.s32.totalorder %s26, 1
      %p133 = scmp.ne.s32.totalorder %s128, %s130
      %p134 = scmp.eq.s32.totalorder %s26, 0
      %p135 = por %p133, %p134
      %p136 = scmp.ne.s32.totalorder %s128, %s130
      %p137 = scmp.eq.s32.totalorder %s31, 1
      %p138 = por %p136, %p137
      %p139 = scmp.ne.s32.totalorder %s130, %s131
      %p140 = scmp.eq.s32.totalorder %s31, 0
      %p141 = por %p139, %p140
      %p142 = scmp.ne.s32.totalorder %s130, %s131
      %p143 = scmp.eq.s32.totalorder %s32, 1
      %p144 = por %p142, %p143
      %p146 = scmp.ne.s32.totalorder %s131, %s145
      %p147 = scmp.eq.s32.totalorder %s32, 0
      %p148 = por %p146, %p147
      %s150 = sadd.s32 %s149, 1
      %p153 = scmp.eq.s32.totalorder %s26, 1
      %p154 = scmp.ne.s32.totalorder %s149, %s151
      %p155 = scmp.eq.s32.totalorder %s26, 0
      %p156 = por %p154, %p155
      %p157 = scmp.ne.s32.totalorder %s149, %s151
      %p158 = scmp.eq.s32.totalorder %s31, 1
      %p159 = por %p157, %p158
      %p160 = scmp.ne.s32.totalorder %s151, %s152
      %p161 = scmp.eq.s32.totalorder %s31, 0
      %p162 = por %p160, %p161
      %p163 = scmp.ne.s32.totalorder %s151, %s152
      %p164 = scmp.eq.s32.totalorder %s32, 1
      %p165 = por %p163, %p164
      %p167 = scmp.ne.s32.totalorder %s152, %s166
      %p168 = scmp.eq.s32.totalorder %s32, 0
      %p169 = por %p167, %p168
      %s171 = sadd.s32 %s170, 1
      %p174 = scmp.eq.s32.totalorder %s26, 1
      %p175 = scmp.ne.s32.totalorder %s170, %s172
      %p176 = scmp.eq.s32.totalorder %s26, 0
      %p177 = por %p175, %p176
      %p178 = scmp.ne.s32.totalorder %s170, %s172
      %p179 = scmp.eq.s32.totalorder %s31, 1
      %p180 = por %p178, %p179
      %p181 = scmp.ne.s32.totalorder %s172, %s173
      %p182 = scmp.eq.s32.totalorder %s31, 0
      %p183 = por %p181, %p182
      %p184 = scmp.ne.s32.totalorder %s172, %s173
      %p185 = scmp.eq.s32.totalorder %s32, 1
      %p186 = por %p184, %p185
      %p188 = scmp.ne.s32.totalorder %s173, %s187
      %p189 = scmp.eq.s32.totalorder %s32, 0
      %p190 = por %p188, %p189
      %s192 = sadd.s32 %s191, 1
      %p195 = scmp.eq.s32.totalorder %s26, 1
      %p196 = scmp.ne.s32.totalorder %s191, %s193
      %p197 = scmp.eq.s32.totalorder %s26, 0
      %p198 = por %p196, %p197
      %p199 = scmp.ne.s32.totalorder %s191, %s193
      %p200 = scmp.eq.s32.totalorder %s31, 1
      %p201 = por %p199, %p200
      %p202 = scmp.ne.s32.totalorder %s193, %s194
      %p203 = scmp.eq.s32.totalorder %s31, 0
      %p204 = por %p202, %p203
      %p205 = scmp.ne.s32.totalorder %s193, %s194
      %p206 = scmp.eq.s32.totalorder %s32, 1
      %p207 = por %p205, %p206
      %p209 = scmp.ne.s32.totalorder %s194, %s208
      %p210 = scmp.eq.s32.totalorder %s32, 0
      %p211 = por %p209, %p210
      %s213 = sadd.s32 %s212, 1
      %p216 = scmp.eq.s32.totalorder %s26, 1
      %p217 = scmp.ne.s32.totalorder %s212, %s214
      %p218 = scmp.eq.s32.totalorder %s26, 0
      %p219 = por %p217, %p218
      %p220 = scmp.ne.s32.totalorder %s212, %s214
      %p221 = scmp.eq.s32.totalorder %s31, 1
      %p222 = por %p220, %p221
      %p223 = scmp.ne.s32.totalorder %s214, %s215
      %p224 = scmp.eq.s32.totalorder %s31, 0
      %p225 = por %p223, %p224
      %p226 = scmp.ne.s32.totalorder %s214, %s215
      %p227 = scmp.eq.s32.totalorder %s32, 1
      %p228 = por %p226, %p227
      %p230 = scmp.ne.s32.totalorder %s215, %s229
      %p231 = scmp.eq.s32.totalorder %s32, 0
      %p232 = por %p230, %p231
      %s234 = sadd.s32 %s233, 1
      %p237 = scmp.eq.s32.totalorder %s26, 1
      %p238 = scmp.ne.s32.totalorder %s233, %s235
      %p239 = scmp.eq.s32.totalorder %s26, 0
      %p240 = por %p238, %p239
      %p241 = scmp.ne.s32.totalorder %s233, %s235
      %p242 = scmp.eq.s32.totalorder %s31, 1
      %p243 = por %p241, %p242
      %p244 = scmp.ne.s32.totalorder %s235, %s236
      %p245 = scmp.eq.s32.totalorder %s31, 0
      %p246 = por %p244, %p245
      %p247 = scmp.ne.s32.totalorder %s235, %s236
      %p248 = scmp.eq.s32.totalorder %s32, 1
      %p249 = por %p247, %p248
      %p251 = scmp.ne.s32.totalorder %s236, %s250
      %p252 = scmp.eq.s32.totalorder %s32, 0
      %p253 = por %p251, %p252
      %s255 = sadd.s32 %s254, 1
      %p258 = scmp.eq.s32.totalorder %s26, 1
      %p259 = scmp.ne.s32.totalorder %s254, %s256
      %p260 = scmp.eq.s32.totalorder %s26, 0
      %p261 = por %p259, %p260
      %p262 = scmp.ne.s32.totalorder %s254, %s256
      %p263 = scmp.eq.s32.totalorder %s31, 1
      %p264 = por %p262, %p263
      %p265 = scmp.ne.s32.totalorder %s256, %s257
      %p266 = scmp.eq.s32.totalorder %s31, 0
      %p267 = por %p265, %p266
      %p268 = scmp.ne.s32.totalorder %s256, %s257
      %p269 = scmp.eq.s32.totalorder %s32, 1
      %p270 = por %p268, %p269
      %p272 = scmp.ne.s32.totalorder %s257, %s271
      %p273 = scmp.eq.s32.totalorder %s32, 0
      %p274 = por %p272, %p273
      %s276 = sadd.s32 %s275, 1
      %p279 = scmp.eq.s32.totalorder %s26, 1
      %p280 = scmp.ne.s32.totalorder %s275, %s277
      %p281 = scmp.eq.s32.totalorder %s26, 0
      %p282 = por %p280, %p281
      %p283 = scmp.ne.s32.totalorder %s275, %s277
      %p284 = scmp.eq.s32.totalorder %s31, 1
      %p285 = por %p283, %p284
      %p286 = scmp.ne.s32.totalorder %s277, %s278
      %p287 = scmp.eq.s32.totalorder %s31, 0
      %p288 = por %p286, %p287
      %p289 = scmp.ne.s32.totalorder %s277, %s278
      %p290 = scmp.eq.s32.totalorder %s32, 1
      %p291 = por %p289, %p290
      %p293 = scmp.ne.s32.totalorder %s278, %s292
      %p294 = scmp.eq.s32.totalorder %s32, 0
      %p295 = por %p293, %p294
      %s297 = sadd.s32 %s296, 1
      %p300 = scmp.eq.s32.totalorder %s26, 1
      %p301 = scmp.ne.s32.totalorder %s296, %s298
      %p302 = scmp.eq.s32.totalorder %s26, 0
      %p303 = por %p301, %p302
      %p304 = scmp.ne.s32.totalorder %s296, %s298
      %p305 = scmp.eq.s32.totalorder %s31, 1
      %p306 = por %p304, %p305
      %p307 = scmp.ne.s32.totalorder %s298, %s299
      %p308 = scmp.eq.s32.totalorder %s31, 0
      %p309 = por %p307, %p308
      %p310 = scmp.ne.s32.totalorder %s298, %s299
      %p311 = scmp.eq.s32.totalorder %s32, 1
      %p312 = por %p310, %p311
      %p314 = scmp.ne.s32.totalorder %s299, %s313
      %p315 = scmp.eq.s32.totalorder %s32, 0
      %p316 = por %p314, %p315
      %s318 = sadd.s32 %s317, 1
      %p321 = scmp.eq.s32.totalorder %s26, 1
      %p322 = scmp.ne.s32.totalorder %s317, %s319
      %p323 = scmp.eq.s32.totalorder %s26, 0
      %p324 = por %p322, %p323
      %p325 = scmp.ne.s32.totalorder %s317, %s319
      %p326 = scmp.eq.s32.totalorder %s31, 1
      %p327 = por %p325, %p326
      %p328 = scmp.ne.s32.totalorder %s319, %s320
      %p329 = scmp.eq.s32.totalorder %s31, 0
      %p330 = por %p328, %p329
      %p331 = scmp.ne.s32.totalorder %s319, %s320
      %p332 = scmp.eq.s32.totalorder %s32, 1
      %p333 = por %p331, %p332
      %p335 = scmp.ne.s32.totalorder %s320, %s334
      %p336 = scmp.eq.s32.totalorder %s32, 0
      %p337 = por %p335, %p336
      %s338 = ssub.s32 %s26, %s33
      %p339 = scmp.eq.s32.totalorder %s338, 0
      %s341 = sadd.s32 %s340, 1
      %s342 = scalar_select %p339, %s340, %s341
      %p345 = pneg %p339
      %p346 = scmp.eq.s32.totalorder %s26, 1
      %p347 = por %p345, %p346
      %p348 = scmp.ne.s32.totalorder %s340, %s343
      %p349 = scmp.eq.s32.totalorder %s26, 0
      %p350 = por %p348, %p349
      %p351 = scmp.ne.s32.totalorder %s340, %s343
      %p352 = scmp.eq.s32.totalorder %s31, 1
      %p353 = por %p351, %p352
      %p354 = scmp.ne.s32.totalorder %s343, %s344
      %p355 = scmp.eq.s32.totalorder %s31, 0
      %p356 = por %p354, %p355
      %p357 = scmp.ne.s32.totalorder %s343, %s344
      %p358 = scmp.eq.s32.totalorder %s32, 1
      %p359 = por %p357, %p358
      %p361 = scmp.ne.s32.totalorder %s344, %s360
      %p362 = scmp.eq.s32.totalorder %s32, 0
      %p363 = por %p361, %p362
      %s364 = ssub.s32 %s26, %s33
      %p365 = scmp.eq.s32.totalorder %s364, 0
      %s367 = sadd.s32 %s366, 1
      %s368 = scalar_select %p365, %s366, %s367
      %p371 = pneg %p365
      %p372 = scmp.eq.s32.totalorder %s26, 1
      %p373 = por %p371, %p372
      %p374 = scmp.ne.s32.totalorder %s366, %s369
      %p375 = scmp.eq.s32.totalorder %s26, 0
      %p376 = por %p374, %p375
      %p377 = scmp.ne.s32.totalorder %s366, %s369
      %p378 = scmp.eq.s32.totalorder %s31, 1
      %p379 = por %p377, %p378
      %p380 = scmp.ne.s32.totalorder %s369, %s370
      %p381 = scmp.eq.s32.totalorder %s31, 0
      %p382 = por %p380, %p381
      %p383 = scmp.ne.s32.totalorder %s369, %s370
      %p384 = scmp.eq.s32.totalorder %s32, 1
      %p385 = por %p383, %p384
      %p387 = scmp.ne.s32.totalorder %s370, %s386
      %p388 = scmp.eq.s32.totalorder %s32, 0
      %p389 = por %p387, %p388
      %p390 = scmp.le.s32.totalorder 1, %s26
      %p391 = scmp.lt.s32.totalorder %s26, 3
      %p392 = pnand %p390, %p391
      %p393 = pneg %p392
      // Predicated region
      $region9: #{tpu_custom_call.1} parent=5 // pred_check
        _
      $region10: #{tpu_custom_call.1} parent=5 // pred_check_branch
        %395 = sbr.rel (%p392) target = $region12
      $region11: #{tpu_custom_call.1} parent=5 // pred_region
        %s396 = ssub.s32 %s26, 1
        // Predicated region
        $region13: #{tpu_custom_call.1} parent=11 // pred_check
          %p397 = pneg %p99
        $region14: #{tpu_custom_call.1} parent=11 // pred_check_branch
          %399 = sbr.rel (%p397) target = $region16
        $region15: #{tpu_custom_call.1} parent=11 // pred_region
          _
        $region16: #{tpu_custom_call.1} parent=11 // pred_fallthru
          _
        // Predicated region
        $region17: #{tpu_custom_call.1} parent=11 // pred_check
          %p400 = pneg %p120
        $region18: #{tpu_custom_call.1} parent=11 // pred_check_branch
          %402 = sbr.rel (%p400) target = $region20
        $region19: #{tpu_custom_call.1} parent=11 // pred_region
          _
        $region20: #{tpu_custom_call.1} parent=11 // pred_fallthru
          _
        // Predicated region
        $region21: #{tpu_custom_call.1} parent=11 // pred_check
          %p403 = pneg %p141
        $region22: #{tpu_custom_call.1} parent=11 // pred_check_branch
          %405 = sbr.rel (%p403) target = $region24
        $region23: #{tpu_custom_call.1} parent=11 // pred_region
          _
        $region24: #{tpu_custom_call.1} parent=11 // pred_fallthru
          _
        // Predicated region
        $region25: #{tpu_custom_call.1} parent=11 // pred_check
          %p406 = pneg %p162
        $region26: #{tpu_custom_call.1} parent=11 // pred_check_branch
          %408 = sbr.rel (%p406) target = $region28
        $region27: #{tpu_custom_call.1} parent=11 // pred_region
          _
        $region28: #{tpu_custom_call.1} parent=11 // pred_fallthru
          _
        // Predicated region
        $region29: #{tpu_custom_call.1} parent=11 // pred_check
          %p409 = pneg %p183
        $region30: #{tpu_custom_call.1} parent=11 // pred_check_branch
          %411 = sbr.rel (%p409) target = $region32
        $region31: #{tpu_custom_call.1} parent=11 // pred_region
          _
        $region32: #{tpu_custom_call.1} parent=11 // pred_fallthru
          _
        // Predicated region
        $region33: #{tpu_custom_call.1} parent=11 // pred_check
          %p412 = pneg %p204
        $region34: #{tpu_custom_call.1} parent=11 // pred_check_branch
          %414 = sbr.rel (%p412) target = $region36
        $region35: #{tpu_custom_call.1} parent=11 // pred_region
          _
        $region36: #{tpu_custom_call.1} parent=11 // pred_fallthru
          _
        // Predicated region
        $region37: #{tpu_custom_call.1} parent=11 // pred_check
          %p415 = pneg %p225
        $region38: #{tpu_custom_call.1} parent=11 // pred_check_branch
          %417 = sbr.rel (%p415) target = $region40
        $region39: #{tpu_custom_call.1} parent=11 // pred_region
          _
        $region40: #{tpu_custom_call.1} parent=11 // pred_fallthru
          _
        // Predicated region
        $region41: #{tpu_custom_call.1} parent=11 // pred_check
          %p418 = pneg %p246
        $region42: #{tpu_custom_call.1} parent=11 // pred_check_branch
          %420 = sbr.rel (%p418) target = $region44
        $region43: #{tpu_custom_call.1} parent=11 // pred_region
          _
        $region44: #{tpu_custom_call.1} parent=11 // pred_fallthru
          _
        // Predicated region
        $region45: #{tpu_custom_call.1} parent=11 // pred_check
          %p421 = pneg %p267
        $region46: #{tpu_custom_call.1} parent=11 // pred_check_branch
          %423 = sbr.rel (%p421) target = $region48
        $region47: #{tpu_custom_call.1} parent=11 // pred_region
          %425 = vsyncadd [#allocation3], 0
          %s426 = sshll.u32 %s10, 4
          %s427 = int_to_ptr.hbm [resolvable:$true] %s426
          %s428 = sshll.u32 [#allocation2], 4
          %s429 = int_to_ptr.vmem [resolvable:$true] %s428
          %434 = dma.hbm_to_vmem [thread:$0]  %s427, 2048, %s429, [#allocation3], 128, 128, 8
        $region48: #{tpu_custom_call.1} parent=11 // pred_fallthru
          _
        // Predicated region
        $region49: #{tpu_custom_call.1} parent=11 // pred_check
          %p435 = pneg %p288
        $region50: #{tpu_custom_call.1} parent=11 // pred_check_branch
          %437 = sbr.rel (%p435) target = $region52
        $region51: #{tpu_custom_call.1} parent=11 // pred_region
          _
        $region52: #{tpu_custom_call.1} parent=11 // pred_fallthru
          _
        // Predicated region
        $region53: #{tpu_custom_call.1} parent=11 // pred_check
          %p438 = pneg %p309
        $region54: #{tpu_custom_call.1} parent=11 // pred_check_branch
          %440 = sbr.rel (%p438) target = $region56
        $region55: #{tpu_custom_call.1} parent=11 // pred_region
          _
        $region56: #{tpu_custom_call.1} parent=11 // pred_fallthru
          _
        // Predicated region
        $region57: #{tpu_custom_call.1} parent=11 // pred_check
          %p441 = pneg %p330
        $region58: #{tpu_custom_call.1} parent=11 // pred_check_branch
          %443 = sbr.rel (%p441) target = $region60
        $region59: #{tpu_custom_call.1} parent=11 // pred_region
          _
        $region60: #{tpu_custom_call.1} parent=11 // pred_fallthru
          _
      $region12: #{tpu_custom_call.1} parent=5 // pred_fallthru
        _
      %p444 = scmp.lt.s32.totalorder %s26, 2
      // Predicated region
      $region61: #{tpu_custom_call.1} parent=5 // pred_check
        %p445 = pneg %p444
      $region62: #{tpu_custom_call.1} parent=5 // pred_check_branch
        %447 = sbr.rel (%p445) target = $region64
      $region63: #{tpu_custom_call.1} parent=5 // pred_region
        // Predicated region
        $region65: #{tpu_custom_call.1} parent=63 // pred_check
          %p448 = pneg %p46
        $region66: #{tpu_custom_call.1} parent=63 // pred_check_branch
          %450 = sbr.rel (%p448) target = $region68
        $region67: #{tpu_custom_call.1} parent=63 // pred_region
          %s451 = smul.u32 16, %s26
          %p452 = scmp.lt.s32.totalorder %s451, 31
          %s453 = scalar_select %p452, %s451, 31
          %s454 = smul.addr %s453, 7
          %s455 = smul.addr %s454, 4
          %s456 = scalar_lea.vmem %s0, %s455
          %s457 = smul.u32 16, %s26
        $region68: #{tpu_custom_call.1} parent=63 // pred_fallthru
          _
        // Predicated region
        $region69: #{tpu_custom_call.1} parent=63 // pred_check
          %p458 = pneg %p72
        $region70: #{tpu_custom_call.1} parent=63 // pred_check_branch
          %460 = sbr.rel (%p458) target = $region72
        $region71: #{tpu_custom_call.1} parent=63 // pred_region
          %s461 = smul.u32 16, %s26
          %p462 = scmp.lt.s32.totalorder %s461, 31
          %s463 = scalar_select %p462, %s461, 31
          %s464 = smul.addr %s463, 4
          %s465 = scalar_lea.vmem %s1, %s464
          %s466 = smul.u32 16, %s26
        $region72: #{tpu_custom_call.1} parent=63 // pred_fallthru
          _
      $region64: #{tpu_custom_call.1} parent=5 // pred_fallthru
        _
      %p467 = scmp.le.s32.totalorder 1, %s26
      %p468 = scmp.lt.s32.totalorder %s26, 3
      %p469 = pnand %p467, %p468
      %p470 = pneg %p469
      // Predicated region
      $region73: #{tpu_custom_call.1} parent=5 // pred_check
        _
      $region74: #{tpu_custom_call.1} parent=5 // pred_check_branch
        %472 = sbr.rel (%p469) target = $region76
      $region75: #{tpu_custom_call.1} parent=5 // pred_region
        %s473 = ssub.s32 %s26, 1
        // Predicated region
        $region77: #{tpu_custom_call.1} parent=75 // pred_check
          %p474 = pneg %p267
        $region78: #{tpu_custom_call.1} parent=75 // pred_check_branch
          %476 = sbr.rel (%p474) target = $region80
        $region79: #{tpu_custom_call.1} parent=75 // pred_region
          %478 = dma.done [#allocation3], 2048
        $region80: #{tpu_custom_call.1} parent=75 // pred_fallthru
          _
        %s479 = smul.u32 16, %s31
        %p480 = scmp.lt.s32.totalorder %s479, 31
        %s481 = scalar_select %p480, %s479, 31
        %s482 = smul.addr %s481, 7
        %s483 = smul.addr %s482, 4
        %s484 = scalar_lea.vmem %s0, %s483
        %p485 = pneg %p52
        %p486 = pneg %p49
        %s487 = smul.u32 16, %s31
        %p488 = scmp.lt.s32.totalorder %s487, 31
        %s489 = scalar_select %p488, %s487, 31
        %s490 = smul.addr %s489, 4
        %s491 = scalar_lea.vmem %s1, %s490
        %p492 = pneg %p78
        %p493 = pneg %p75
        %p494 = pneg %p99
        %p495 = pneg %p96
        %p496 = pneg %p120
        %p497 = pneg %p117
        %p498 = pneg %p141
        %p499 = pneg %p138
        %p500 = pneg %p162
        %p501 = pneg %p159
        %p502 = pneg %p183
        %p503 = pneg %p180
        %p504 = pneg %p204
        %p505 = pneg %p201
        %p506 = pneg %p225
        %p507 = pneg %p222
        %p508 = pneg %p246
        %p509 = pneg %p243
        %p510 = pneg %p267
        %p511 = pneg %p264
        %p512 = pneg %p288
        %p513 = pneg %p285
        %p514 = pneg %p309
        %p515 = pneg %p306
        %p516 = pneg %p330
        %p517 = pneg %p327
        %p518 = pneg %p356
        %p519 = pneg %p353
        %s520 = smul.u32 16, %s31
        %p521 = scmp.lt.s32.totalorder %s520, 31
        %s522 = scalar_select %p521, %s520, 31
        %s523 = smul.addr %s522, 7
        %s524 = smul.addr %s523, 4
        %s525 = scalar_lea.vmem %s14, %s524
        %p526 = pneg %p382
        %p527 = pneg %p379
        %s528 = sand.u32 %s369, 1
        %s529 = scalar_lea.sflag [#allocation4], %s528
        %s530 = sand.u32 %s369, 1
        %s531 = smul.addr %s530, 384
        %s532 = scalar_lea.vmem [#allocation5], %s531
        %s533 = smul.u32 16, %s31
        %p534 = scmp.lt.s32.totalorder %s533, 31
        %s535 = scalar_select %p534, %s533, 31
        %s536 = smul.addr %s535, 7
        %s537 = smul.addr %s536, 4
        %s538 = scalar_lea.vmem %s0, %s537
        %s539 = smul.u32 16, %s31
        %s540 = smul.u32 16, %s31
        %p541 = scmp.lt.s32.totalorder %s540, 31
        %s542 = scalar_select %p541, %s540, 31
        %s543 = smul.addr %s542, 4
        %s544 = scalar_lea.vmem %s1, %s543
        %s545 = smul.u32 16, %s31
        %s546 = smul.u32 16, %s31
        %p547 = scmp.lt.s32.totalorder %s546, 31
        %s548 = scalar_select %p547, %s546, 31
        %s549 = smul.addr %s548, 7
        %s550 = smul.addr %s549, 4
        %s551 = scalar_lea.vmem %s14, %s550
        %s552 = smul.u32 16, %s31
        %s553 = smul.u32 16, %s31
        %v555 = vld [vmem:[%s538] sm:$0xff]
        %v556 = vld [vmem:[%s538 + $0x8] sm:$0xff]
        %v557 = vld [vmem:[%s538 + $0x10] sm:$0xff]
        %v558 = vld [vmem:[%s538 + $0x18] sm:$0xf]
        %v559 = vld [vmem:[%s538 + $0x1c] sm:$0xff]
        %v560 = vld [vmem:[%s538 + $0x24] sm:$0xff]
        %v561 = vld [vmem:[%s538 + $0x2c] sm:$0xff]
        %v562 = vld [vmem:[%s538 + $0x34] sm:$0xf]
        %v563 = vld [vmem:[%s538 + $0x38] sm:$0xff]
        %v564 = vld [vmem:[%s538 + $0x40] sm:$0xff]
        %v565 = vld [vmem:[%s538 + $0x48] sm:$0xff]
        %v566 = vld [vmem:[%s538 + $0x50] sm:$0xf]
        %v567 = vld [vmem:[%s538 + $0x54] sm:$0xff]
        %v568 = vld [vmem:[%s538 + $0x5c] sm:$0xff]
        %v569 = vld [vmem:[%s538 + $0x64] sm:$0xff]
        %v570 = vld [vmem:[%s538 + $0x6c] sm:$0xf]
        %v571 = vld [vmem:[%s538 + $0x70] sm:$0xff]
        %v572 = vld [vmem:[%s538 + $0x78] sm:$0xff]
        %v573 = vld [vmem:[%s538 + $0x80] sm:$0xff]
        %v574 = vld [vmem:[%s538 + $0x88] sm:$0xf]
        %v575 = vld [vmem:[%s538 + $0x8c] sm:$0xff]
        %v576 = vld [vmem:[%s538 + $0x94] sm:$0xff]
        %v577 = vld [vmem:[%s538 + $0x9c] sm:$0xff]
        %v578 = vld [vmem:[%s538 + $0xa4] sm:$0xf]
        %v579 = vld [vmem:[%s538 + $0xa8] sm:$0xff]
        %v580 = vld [vmem:[%s538 + $0xb0] sm:$0xff]
        %v581 = vld [vmem:[%s538 + $0xb8] sm:$0xff]
        %v582 = vld [vmem:[%s538 + $0xc0] sm:$0xf]
        %v583 = vld [vmem:[%s538 + $0xc4] sm:$0xff]
        %v584 = vld [vmem:[%s538 + $0xcc] sm:$0xff]
        %v585 = vld [vmem:[%s538 + $0xd4] sm:$0xff]
        %v586 = vld [vmem:[%s538 + $0xdc] sm:$0xf]
        %v587 = vld [vmem:[%s538 + $0xe0] sm:$0xff]
        %v588 = vld [vmem:[%s538 + $0xe8] sm:$0xff]
        %v589 = vld [vmem:[%s538 + $0xf0] sm:$0xff]
        %v590 = vld [vmem:[%s538 + $0xf8] sm:$0xf]
        %v591 = vld [vmem:[%s538 + $0xfc] sm:$0xff]
        %v592 = vld [vmem:[%s538 + $0x104] sm:$0xff]
        %v593 = vld [vmem:[%s538 + $0x10c] sm:$0xff]
        %v594 = vld [vmem:[%s538 + $0x114] sm:$0xf]
        %v595 = vld [vmem:[%s538 + $0x118] sm:$0xff]
        %v596 = vld [vmem:[%s538 + $0x120] sm:$0xff]
        %v597 = vld [vmem:[%s538 + $0x128] sm:$0xff]
        %v598 = vld [vmem:[%s538 + $0x130] sm:$0xf]
        %v599 = vld [vmem:[%s538 + $0x134] sm:$0xff]
        %v600 = vld [vmem:[%s538 + $0x13c] sm:$0xff]
        %v601 = vld [vmem:[%s538 + $0x144] sm:$0xff]
        %v602 = vld [vmem:[%s538 + $0x14c] sm:$0xf]
        %v603 = vld [vmem:[%s538 + $0x150] sm:$0xff]
        %v604 = vld [vmem:[%s538 + $0x158] sm:$0xff]
        %v605 = vld [vmem:[%s538 + $0x160] sm:$0xff]
        %v606 = vld [vmem:[%s538 + $0x168] sm:$0xf]
        %v607 = vld [vmem:[%s538 + $0x16c] sm:$0xff]
        %v608 = vld [vmem:[%s538 + $0x174] sm:$0xff]
        %v609 = vld [vmem:[%s538 + $0x17c] sm:$0xff]
        %v610 = vld [vmem:[%s538 + $0x184] sm:$0xf]
        %v611 = vld [vmem:[%s538 + $0x188] sm:$0xff]
        %v612 = vld [vmem:[%s538 + $0x190] sm:$0xff]
        %v613 = vld [vmem:[%s538 + $0x198] sm:$0xff]
        %v614 = vld [vmem:[%s538 + $0x1a0] sm:$0xf]
        %v615 = vld [vmem:[%s538 + $0x1a4] sm:$0xff]
        %v616 = vld [vmem:[%s538 + $0x1ac] sm:$0xff]
        %v617 = vld [vmem:[%s538 + $0x1b4] sm:$0xff]
        %v618 = vld [vmem:[%s538 + $0x1bc] sm:$0xf]
        %v619 = vld [vmem:[%s2] sm:$0xff]
        %v620 = vld [vmem:[%s2 + $0x8] sm:$0xff]
        %v621 = vld [vmem:[%s2 + $0x10] sm:$0xff]
        %v622 = vld [vmem:[%s2 + $0x18] sm:$0xff]
        %v623 = vld [vmem:[%s2 + $0x20] sm:$0xff]
        %v624 = vld [vmem:[%s2 + $0x28] sm:$0xff]
        %v625 = vld [vmem:[%s2 + $0x30] sm:$0xff]
        %v626 = vld [vmem:[%s2 + $0x38] sm:$0xff]
        %v627 = vld [vmem:[%s2 + $0x40] sm:$0xff]
        %v628 = vld [vmem:[%s2 + $0x48] sm:$0xff]
        %v629 = vld [vmem:[%s2 + $0x50] sm:$0xff]
        %v630 = vld [vmem:[%s2 + $0x58] sm:$0xff]
        %v631 = vld [vmem:[%s2 + $0x60] sm:$0xff]
        %v632 = vld [vmem:[%s2 + $0x68] sm:$0xff]
        %v633 = vld [vmem:[%s2 + $0x70] sm:$0xff]
        %v634 = vld [vmem:[%s2 + $0x78] sm:$0xff]
        %v635 = vld [vmem:[%s2 + $0x80] sm:$0xff]
        %v636 = vld [vmem:[%s2 + $0x88] sm:$0xff]
        %v637 = vld [vmem:[%s2 + $0x90] sm:$0xff]
        %v638 = vld [vmem:[%s2 + $0x98] sm:$0xff]
        %v639 = vld [vmem:[%s2 + $0xa0] sm:$0xff]
        %v640 = vld [vmem:[%s2 + $0xa8] sm:$0xff]
        %v641 = vld [vmem:[%s2 + $0xb0] sm:$0xff]
        %v642 = vld [vmem:[%s2 + $0xb8] sm:$0xff]
        %v643 = vld [vmem:[%s2 + $0xc0] sm:$0xff]
        %v644 = vld [vmem:[%s2 + $0xc8] sm:$0xff]
        %v645 = vld [vmem:[%s2 + $0xd0] sm:$0xff]
        %v646 = vld [vmem:[%s2 + $0xd8] sm:$0xff]
        %v647 = vld [vmem:[%s2 + $0xe0] sm:$0xff]
        %v648 = vld [vmem:[%s2 + $0xe8] sm:$0xff]
        %v649 = vld [vmem:[%s2 + $0xf0] sm:$0xff]
        %v650 = vld [vmem:[%s2 + $0xf8] sm:$0xff]
        %v651 = vld [vmem:[%s2 + $0x100] sm:$0xff]
        %v652 = vld [vmem:[%s2 + $0x108] sm:$0xff]
        %v653 = vld [vmem:[%s2 + $0x110] sm:$0xff]
        %v654 = vld [vmem:[%s2 + $0x118] sm:$0xff]
        %v655 = vld [vmem:[%s2 + $0x120] sm:$0xff]
        %v656 = vld [vmem:[%s2 + $0x128] sm:$0xff]
        %v657 = vld [vmem:[%s2 + $0x130] sm:$0xff]
        %v658 = vld [vmem:[%s2 + $0x138] sm:$0xff]
        %v659 = vld [vmem:[%s2 + $0x140] sm:$0xff]
        %v660 = vld [vmem:[%s2 + $0x148] sm:$0xff]
        %v661 = vld [vmem:[%s2 + $0x150] sm:$0xff]
        %v662 = vld [vmem:[%s2 + $0x158] sm:$0xff]
        %v663 = vld [vmem:[%s2 + $0x160] sm:$0xff]
        %v664 = vld [vmem:[%s2 + $0x168] sm:$0xff]
        %v665 = vld [vmem:[%s2 + $0x170] sm:$0xff]
        %v666 = vld [vmem:[%s2 + $0x178] sm:$0xff]
        %v667 = vld [vmem:[%s2 + $0x180] sm:$0xff]
        %v668 = vld [vmem:[%s2 + $0x188] sm:$0xff]
        %v669 = vld [vmem:[%s2 + $0x190] sm:$0xff]
        %v670 = vld [vmem:[%s2 + $0x198] sm:$0xff]
        %v671 = vld [vmem:[%s2 + $0x1a0] sm:$0xff]
        %v672 = vld [vmem:[%s2 + $0x1a8] sm:$0xff]
        %v673 = vld [vmem:[%s2 + $0x1b0] sm:$0xff]
        %v674 = vld [vmem:[%s2 + $0x1b8] sm:$0xff]
        %v675 = vld [vmem:[%s2 + $0x1c0] sm:$0xff]
        %v676 = vld [vmem:[%s2 + $0x1c8] sm:$0xff]
        %v677 = vld [vmem:[%s2 + $0x1d0] sm:$0xff]
        %v678 = vld [vmem:[%s2 + $0x1d8] sm:$0xff]
        %v679 = vld [vmem:[%s2 + $0x1e0] sm:$0xff]
        %v680 = vld [vmem:[%s2 + $0x1e8] sm:$0xff]
        %v681 = vld [vmem:[%s2 + $0x1f0] sm:$0xff]
        %v682 = vld [vmem:[%s2 + $0x1f8] sm:$0xff]
        %v683 = vld [vmem:[%s2 + $0x200] sm:$0xff]
        %v684 = vld [vmem:[%s2 + $0x208] sm:$0xff]
        %v685 = vld [vmem:[%s2 + $0x210] sm:$0xff]
        %v686 = vld [vmem:[%s2 + $0x218] sm:$0xff]
        %v687 = vld [vmem:[%s2 + $0x220] sm:$0xff]
        %v688 = vld [vmem:[%s2 + $0x228] sm:$0xff]
        %v689 = vld [vmem:[%s2 + $0x230] sm:$0xff]
        %v690 = vld [vmem:[%s2 + $0x238] sm:$0xff]
        %v691 = vld [vmem:[%s2 + $0x240] sm:$0xff]
        %v692 = vld [vmem:[%s2 + $0x248] sm:$0xff]
        %v693 = vld [vmem:[%s2 + $0x250] sm:$0xff]
        %v694 = vld [vmem:[%s2 + $0x258] sm:$0xff]
        %v695 = vld [vmem:[%s2 + $0x260] sm:$0xff]
        %v696 = vld [vmem:[%s2 + $0x268] sm:$0xff]
        %v697 = vld [vmem:[%s2 + $0x270] sm:$0xff]
        %v698 = vld [vmem:[%s2 + $0x278] sm:$0xff]
        %v699 = vld [vmem:[%s2 + $0x280] sm:$0xff]
        %v700 = vld [vmem:[%s2 + $0x288] sm:$0xff]
        %v701 = vld [vmem:[%s2 + $0x290] sm:$0xff]
        %v702 = vld [vmem:[%s2 + $0x298] sm:$0xff]
        %v703 = vld [vmem:[%s2 + $0x2a0] sm:$0xff]
        %v704 = vld [vmem:[%s2 + $0x2a8] sm:$0xff]
        %v705 = vld [vmem:[%s2 + $0x2b0] sm:$0xff]
        %v706 = vld [vmem:[%s2 + $0x2b8] sm:$0xff]
        %v707 = vld [vmem:[%s2 + $0x2c0] sm:$0xff]
        %v708 = vld [vmem:[%s2 + $0x2c8] sm:$0xff]
        %v709 = vld [vmem:[%s2 + $0x2d0] sm:$0xff]
        %v710 = vld [vmem:[%s2 + $0x2d8] sm:$0xff]
        %v711 = vld [vmem:[%s2 + $0x2e0] sm:$0xff]
        %v712 = vld [vmem:[%s2 + $0x2e8] sm:$0xff]
        %v713 = vld [vmem:[%s2 + $0x2f0] sm:$0xff]
        %v714 = vld [vmem:[%s2 + $0x2f8] sm:$0xff]
        %v715 = vld [vmem:[%s2 + $0x300] sm:$0xff]
        %v716 = vld [vmem:[%s2 + $0x308] sm:$0xff]
        %v717 = vld [vmem:[%s2 + $0x310] sm:$0xff]
        %v718 = vld [vmem:[%s2 + $0x318] sm:$0xff]
        %v719 = vld [vmem:[%s2 + $0x320] sm:$0xff]
        %v720 = vld [vmem:[%s2 + $0x328] sm:$0xff]
        %v721 = vld [vmem:[%s2 + $0x330] sm:$0xff]
        %v722 = vld [vmem:[%s2 + $0x338] sm:$0xff]
        %v723 = vld [vmem:[%s2 + $0x340] sm:$0xff]
        %v724 = vld [vmem:[%s2 + $0x348] sm:$0xff]
        %v725 = vld [vmem:[%s2 + $0x350] sm:$0xff]
        %v726 = vld [vmem:[%s2 + $0x358] sm:$0xff]
        %v727 = vld [vmem:[%s2 + $0x360] sm:$0xff]
        %v728 = vld [vmem:[%s2 + $0x368] sm:$0xff]
        %v729 = vld [vmem:[%s2 + $0x370] sm:$0xff]
        %v730 = vld [vmem:[%s2 + $0x378] sm:$0xff]
        %v731 = vld [vmem:[%s2 + $0x380] sm:$0xff]
        %v732 = vld [vmem:[%s2 + $0x388] sm:$0xff]
        %v733 = vld [vmem:[%s2 + $0x390] sm:$0xff]
        %v734 = vld [vmem:[%s2 + $0x398] sm:$0xff]
        %v735 = vld [vmem:[%s2 + $0x3a0] sm:$0xff]
        %v736 = vld [vmem:[%s2 + $0x3a8] sm:$0xff]
        %v737 = vld [vmem:[%s2 + $0x3b0] sm:$0xff]
        %v738 = vld [vmem:[%s2 + $0x3b8] sm:$0xff]
        %v739 = vld [vmem:[%s2 + $0x3c0] sm:$0xff]
        %v740 = vld [vmem:[%s2 + $0x3c8] sm:$0xff]
        %v741 = vld [vmem:[%s2 + $0x3d0] sm:$0xff]
        %v742 = vld [vmem:[%s2 + $0x3d8] sm:$0xff]
        %v743 = vld [vmem:[%s2 + $0x3e0] sm:$0xff]
        %v744 = vld [vmem:[%s2 + $0x3e8] sm:$0xff]
        %v745 = vld [vmem:[%s2 + $0x3f0] sm:$0xff]
        %v746 = vld [vmem:[%s2 + $0x3f8] sm:$0xff]
        %v747 = vld [vmem:[%s2 + $0x400] sm:$0xff]
        %v748 = vld [vmem:[%s2 + $0x408] sm:$0xff]
        %v749 = vld [vmem:[%s2 + $0x410] sm:$0xff]
        %v750 = vld [vmem:[%s2 + $0x418] sm:$0xff]
        %v751 = vld [vmem:[%s2 + $0x420] sm:$0xff]
        %v752 = vld [vmem:[%s2 + $0x428] sm:$0xff]
        %v753 = vld [vmem:[%s2 + $0x430] sm:$0xff]
        %v754 = vld [vmem:[%s2 + $0x438] sm:$0xff]
        %v755 = vld [vmem:[%s2 + $0x440] sm:$0xff]
        %v756 = vld [vmem:[%s2 + $0x448] sm:$0xff]
        %v757 = vld [vmem:[%s2 + $0x450] sm:$0xff]
        %v758 = vld [vmem:[%s2 + $0x458] sm:$0xff]
        %v759 = vld [vmem:[%s2 + $0x460] sm:$0xff]
        %v760 = vld [vmem:[%s2 + $0x468] sm:$0xff]
        %v761 = vld [vmem:[%s2 + $0x470] sm:$0xff]
        %v762 = vld [vmem:[%s2 + $0x478] sm:$0xff]
        %v763 = vld [vmem:[%s2 + $0x480] sm:$0xff]
        %v764 = vld [vmem:[%s2 + $0x488] sm:$0xff]
        %v765 = vld [vmem:[%s2 + $0x490] sm:$0xff]
        %v766 = vld [vmem:[%s2 + $0x498] sm:$0xff]
        %v767 = vld [vmem:[%s2 + $0x4a0] sm:$0xff]
        %v768 = vld [vmem:[%s2 + $0x4a8] sm:$0xff]
        %v769 = vld [vmem:[%s2 + $0x4b0] sm:$0xff]
        %v770 = vld [vmem:[%s2 + $0x4b8] sm:$0xff]
        %v771 = vld [vmem:[%s2 + $0x4c0] sm:$0xff]
        %v772 = vld [vmem:[%s2 + $0x4c8] sm:$0xff]
        %v773 = vld [vmem:[%s2 + $0x4d0] sm:$0xff]
        %v774 = vld [vmem:[%s2 + $0x4d8] sm:$0xff]
        %v775 = vld [vmem:[%s2 + $0x4e0] sm:$0xff]
        %v776 = vld [vmem:[%s2 + $0x4e8] sm:$0xff]
        %v777 = vld [vmem:[%s2 + $0x4f0] sm:$0xff]
        %v778 = vld [vmem:[%s2 + $0x4f8] sm:$0xff]
        %v779 = vld [vmem:[%s2 + $0x500] sm:$0xff]
        %v780 = vld [vmem:[%s2 + $0x508] sm:$0xff]
        %v781 = vld [vmem:[%s2 + $0x510] sm:$0xff]
        %v782 = vld [vmem:[%s2 + $0x518] sm:$0xff]
        %v783 = vld [vmem:[%s2 + $0x520] sm:$0xff]
        %v784 = vld [vmem:[%s2 + $0x528] sm:$0xff]
        %v785 = vld [vmem:[%s2 + $0x530] sm:$0xff]
        %v786 = vld [vmem:[%s2 + $0x538] sm:$0xff]
        %v787 = vld [vmem:[%s2 + $0x540] sm:$0xff]
        %v788 = vld [vmem:[%s2 + $0x548] sm:$0xff]
        %v789 = vld [vmem:[%s2 + $0x550] sm:$0xff]
        %v790 = vld [vmem:[%s2 + $0x558] sm:$0xff]
        %v791 = vld [vmem:[%s2 + $0x560] sm:$0xff]
        %v792 = vld [vmem:[%s2 + $0x568] sm:$0xff]
        %v793 = vld [vmem:[%s2 + $0x570] sm:$0xff]
        %v794 = vld [vmem:[%s2 + $0x578] sm:$0xff]
        %v795 = vld [vmem:[%s2 + $0x580] sm:$0xff]
        %v796 = vld [vmem:[%s2 + $0x588] sm:$0xff]
        %v797 = vld [vmem:[%s2 + $0x590] sm:$0xff]
        %v798 = vld [vmem:[%s2 + $0x598] sm:$0xff]
        %v799 = vld [vmem:[%s2 + $0x5a0] sm:$0xff]
        %v800 = vld [vmem:[%s2 + $0x5a8] sm:$0xff]
        %v801 = vld [vmem:[%s2 + $0x5b0] sm:$0xff]
        %v802 = vld [vmem:[%s2 + $0x5b8] sm:$0xff]
        %v803 = vld [vmem:[%s2 + $0x5c0] sm:$0xff]
        %v804 = vld [vmem:[%s2 + $0x5c8] sm:$0xff]
        %v805 = vld [vmem:[%s2 + $0x5d0] sm:$0xff]
        %v806 = vld [vmem:[%s2 + $0x5d8] sm:$0xff]
        %v807 = vld [vmem:[%s2 + $0x5e0] sm:$0xff]
        %v808 = vld [vmem:[%s2 + $0x5e8] sm:$0xff]
        %v809 = vld [vmem:[%s2 + $0x5f0] sm:$0xff]
        %v810 = vld [vmem:[%s2 + $0x5f8] sm:$0xff]
        %v811 = vld [vmem:[%s2 + $0x600] sm:$0xff]
        %v812 = vld [vmem:[%s2 + $0x608] sm:$0xff]
        %v813 = vld [vmem:[%s2 + $0x610] sm:$0xff]
        %v814 = vld [vmem:[%s2 + $0x618] sm:$0xff]
        %v815 = vld [vmem:[%s3] sm:$0xf]
        %v817 = vperm.slane %v815, 0
        %v818 = vperm.slane %v815, 1
        %v819 = vperm.slane %v815, 2
        %v820 = vperm.slane %v815, 3
        %v889 = vunpack.c.l.b16 %v555
        %v890 = vunpack.c.h.b16 %v555
        %v891 = vunpack.c.l.b16 %v556
        %v892 = vunpack.c.h.b16 %v556
        %v893 = vunpack.c.l.b16 %v557
        %v894 = vunpack.c.h.b16 %v557
        %v895 = vunpack.c.l.b16 %v558
        %v896 = vunpack.c.l.b16 %v559
        %v897 = vunpack.c.h.b16 %v559
        %v898 = vunpack.c.l.b16 %v560
        %v899 = vunpack.c.h.b16 %v560
        %v900 = vunpack.c.l.b16 %v561
        %v901 = vunpack.c.h.b16 %v561
        %v902 = vunpack.c.l.b16 %v562
        %v903 = vunpack.c.l.b16 %v563
        %v904 = vunpack.c.h.b16 %v563
        %v905 = vunpack.c.l.b16 %v564
        %v906 = vunpack.c.h.b16 %v564
        %v907 = vunpack.c.l.b16 %v565
        %v908 = vunpack.c.h.b16 %v565
        %v909 = vunpack.c.l.b16 %v566
        %v910 = vunpack.c.l.b16 %v567
        %v911 = vunpack.c.h.b16 %v567
        %v912 = vunpack.c.l.b16 %v568
        %v913 = vunpack.c.h.b16 %v568
        %v914 = vunpack.c.l.b16 %v569
        %v915 = vunpack.c.h.b16 %v569
        %v916 = vunpack.c.l.b16 %v570
        %v917 = vunpack.c.l.b16 %v571
        %v918 = vunpack.c.h.b16 %v571
        %v919 = vunpack.c.l.b16 %v572
        %v920 = vunpack.c.h.b16 %v572
        %v921 = vunpack.c.l.b16 %v573
        %v922 = vunpack.c.h.b16 %v573
        %v923 = vunpack.c.l.b16 %v574
        %v924 = vunpack.c.l.b16 %v575
        %v925 = vunpack.c.h.b16 %v575
        %v926 = vunpack.c.l.b16 %v576
        %v927 = vunpack.c.h.b16 %v576
        %v928 = vunpack.c.l.b16 %v577
        %v929 = vunpack.c.h.b16 %v577
        %v930 = vunpack.c.l.b16 %v578
        %v931 = vunpack.c.l.b16 %v579
        %v932 = vunpack.c.h.b16 %v579
        %v933 = vunpack.c.l.b16 %v580
        %v934 = vunpack.c.h.b16 %v580
        %v935 = vunpack.c.l.b16 %v581
        %v936 = vunpack.c.h.b16 %v581
        %v937 = vunpack.c.l.b16 %v582
        %v938 = vunpack.c.l.b16 %v583
        %v939 = vunpack.c.h.b16 %v583
        %v940 = vunpack.c.l.b16 %v584
        %v941 = vunpack.c.h.b16 %v584
        %v942 = vunpack.c.l.b16 %v585
        %v943 = vunpack.c.h.b16 %v585
        %v944 = vunpack.c.l.b16 %v586
        %v945 = vunpack.c.l.b16 %v587
        %v946 = vunpack.c.h.b16 %v587
        %v947 = vunpack.c.l.b16 %v588
        %v948 = vunpack.c.h.b16 %v588
        %v949 = vunpack.c.l.b16 %v589
        %v950 = vunpack.c.h.b16 %v589
        %v951 = vunpack.c.l.b16 %v590
        %v952 = vunpack.c.l.b16 %v591
        %v953 = vunpack.c.h.b16 %v591
        %v954 = vunpack.c.l.b16 %v592
        %v955 = vunpack.c.h.b16 %v592
        %v956 = vunpack.c.l.b16 %v593
        %v957 = vunpack.c.h.b16 %v593
        %v958 = vunpack.c.l.b16 %v594
        %v959 = vunpack.c.l.b16 %v595
        %v960 = vunpack.c.h.b16 %v595
        %v961 = vunpack.c.l.b16 %v596
        %v962 = vunpack.c.h.b16 %v596
        %v963 = vunpack.c.l.b16 %v597
        %v964 = vunpack.c.h.b16 %v597
        %v965 = vunpack.c.l.b16 %v598
        %v966 = vunpack.c.l.b16 %v599
        %v967 = vunpack.c.h.b16 %v599
        %v968 = vunpack.c.l.b16 %v600
        %v969 = vunpack.c.h.b16 %v600
        %v970 = vunpack.c.l.b16 %v601
        %v971 = vunpack.c.h.b16 %v601
        %v972 = vunpack.c.l.b16 %v602
        %v973 = vunpack.c.l.b16 %v603
        %v974 = vunpack.c.h.b16 %v603
        %v975 = vunpack.c.l.b16 %v604
        %v976 = vunpack.c.h.b16 %v604
        %v977 = vunpack.c.l.b16 %v605
        %v978 = vunpack.c.h.b16 %v605
        %v979 = vunpack.c.l.b16 %v606
        %v980 = vunpack.c.l.b16 %v607
        %v981 = vunpack.c.h.b16 %v607
        %v982 = vunpack.c.l.b16 %v608
        %v983 = vunpack.c.h.b16 %v608
        %v984 = vunpack.c.l.b16 %v609
        %v985 = vunpack.c.h.b16 %v609
        %v986 = vunpack.c.l.b16 %v610
        %v987 = vunpack.c.l.b16 %v611
        %v988 = vunpack.c.h.b16 %v611
        %v989 = vunpack.c.l.b16 %v612
        %v990 = vunpack.c.h.b16 %v612
        %v991 = vunpack.c.l.b16 %v613
        %v992 = vunpack.c.h.b16 %v613
        %v993 = vunpack.c.l.b16 %v614
        %v994 = vunpack.c.l.b16 %v615
        %v995 = vunpack.c.h.b16 %v615
        %v996 = vunpack.c.l.b16 %v616
        %v997 = vunpack.c.h.b16 %v616
        %v998 = vunpack.c.l.b16 %v617
        %v999 = vunpack.c.h.b16 %v617
        %v1000 = vunpack.c.l.b16 %v618
        %v1001 = vpack.c.b16 %v896, %v889
        %v1002 = vpack.c.b16 %v897, %v890
        %v1003 = vpack.c.b16 %v898, %v891
        %v1004 = vpack.c.b16 %v899, %v892
        %v1005 = vpack.c.b16 %v900, %v893
        %v1006 = vpack.c.b16 %v901, %v894
        %v1007 = vpack.c.b16 %v902, %v895
        %v1008 = vpack.c.b16 %v910, %v903
        %v1009 = vpack.c.b16 %v911, %v904
        %v1010 = vpack.c.b16 %v912, %v905
        %v1011 = vpack.c.b16 %v913, %v906
        %v1012 = vpack.c.b16 %v914, %v907
        %v1013 = vpack.c.b16 %v915, %v908
        %v1014 = vpack.c.b16 %v916, %v909
        %v1015 = vpack.c.b16 %v924, %v917
        %v1016 = vpack.c.b16 %v925, %v918
        %v1017 = vpack.c.b16 %v926, %v919
        %v1018 = vpack.c.b16 %v927, %v920
        %v1019 = vpack.c.b16 %v928, %v921
        %v1020 = vpack.c.b16 %v929, %v922
        %v1021 = vpack.c.b16 %v930, %v923
        %v1022 = vpack.c.b16 %v938, %v931
        %v1023 = vpack.c.b16 %v939, %v932
        %v1024 = vpack.c.b16 %v940, %v933
        %v1025 = vpack.c.b16 %v941, %v934
        %v1026 = vpack.c.b16 %v942, %v935
        %v1027 = vpack.c.b16 %v943, %v936
        %v1028 = vpack.c.b16 %v944, %v937
        %v1029 = vpack.c.b16 %v952, %v945
        %v1030 = vpack.c.b16 %v953, %v946
        %v1031 = vpack.c.b16 %v954, %v947
        %v1032 = vpack.c.b16 %v955, %v948
        %v1033 = vpack.c.b16 %v956, %v949
        %v1034 = vpack.c.b16 %v957, %v950
        %v1035 = vpack.c.b16 %v958, %v951
        %v1036 = vpack.c.b16 %v966, %v959
        %v1037 = vpack.c.b16 %v967, %v960
        %v1038 = vpack.c.b16 %v968, %v961
        %v1039 = vpack.c.b16 %v969, %v962
        %v1040 = vpack.c.b16 %v970, %v963
        %v1041 = vpack.c.b16 %v971, %v964
        %v1042 = vpack.c.b16 %v972, %v965
        %v1043 = vpack.c.b16 %v980, %v973
        %v1044 = vpack.c.b16 %v981, %v974
        %v1045 = vpack.c.b16 %v982, %v975
        %v1046 = vpack.c.b16 %v983, %v976
        %v1047 = vpack.c.b16 %v984, %v977
        %v1048 = vpack.c.b16 %v985, %v978
        %v1049 = vpack.c.b16 %v986, %v979
        %v1050 = vpack.c.b16 %v994, %v987
        %v1051 = vpack.c.b16 %v995, %v988
        %v1052 = vpack.c.b16 %v996, %v989
        %v1053 = vpack.c.b16 %v997, %v990
        %v1054 = vpack.c.b16 %v998, %v991
        %v1055 = vpack.c.b16 %v999, %v992
        %v1056 = vpack.c.b16 %v1000, %v993
        %v1301 = vunpack.c.l.b16 %v619
        %v1302 = vunpack.c.h.b16 %v619
        %v1303 = vunpack.c.l.b16 %v620
        %v1304 = vunpack.c.h.b16 %v620
        %v1305 = vunpack.c.l.b16 %v621
        %v1306 = vunpack.c.h.b16 %v621
        %v1307 = vunpack.c.l.b16 %v622
        %v1308 = vunpack.c.h.b16 %v622
        %v1309 = vunpack.c.l.b16 %v623
        %v1310 = vunpack.c.h.b16 %v623
        %v1311 = vunpack.c.l.b16 %v624
        %v1312 = vunpack.c.h.b16 %v624
        %v1313 = vunpack.c.l.b16 %v625
        %v1314 = vunpack.c.h.b16 %v625
        %v1315 = vunpack.c.l.b16 %v626
        %v1316 = vunpack.c.h.b16 %v626
        %v1317 = vunpack.c.l.b16 %v627
        %v1318 = vunpack.c.h.b16 %v627
        %v1319 = vunpack.c.l.b16 %v628
        %v1320 = vunpack.c.h.b16 %v628
        %v1321 = vunpack.c.l.b16 %v629
        %v1322 = vunpack.c.h.b16 %v629
        %v1323 = vunpack.c.l.b16 %v630
        %v1324 = vunpack.c.h.b16 %v630
        %v1325 = vunpack.c.l.b16 %v631
        %v1326 = vunpack.c.h.b16 %v631
        %v1327 = vunpack.c.l.b16 %v632
        %v1328 = vunpack.c.h.b16 %v632
        %v1329 = vunpack.c.l.b16 %v633
        %v1330 = vunpack.c.h.b16 %v633
        %v1331 = vunpack.c.l.b16 %v634
        %v1332 = vunpack.c.h.b16 %v634
        %v1333 = vunpack.c.l.b16 %v635
        %v1334 = vunpack.c.h.b16 %v635
        %v1335 = vunpack.c.l.b16 %v636
        %v1336 = vunpack.c.h.b16 %v636
        %v1337 = vunpack.c.l.b16 %v637
        %v1338 = vunpack.c.h.b16 %v637
        %v1339 = vunpack.c.l.b16 %v638
        %v1340 = vunpack.c.h.b16 %v638
        %v1341 = vunpack.c.l.b16 %v639
        %v1342 = vunpack.c.h.b16 %v639
        %v1343 = vunpack.c.l.b16 %v640
        %v1344 = vunpack.c.h.b16 %v640
        %v1345 = vunpack.c.l.b16 %v641
        %v1346 = vunpack.c.h.b16 %v641
        %v1347 = vunpack.c.l.b16 %v642
        %v1348 = vunpack.c.h.b16 %v642
        %v1349 = vunpack.c.l.b16 %v643
        %v1350 = vunpack.c.h.b16 %v643
        %v1351 = vunpack.c.l.b16 %v644
        %v1352 = vunpack.c.h.b16 %v644
        %v1353 = vunpack.c.l.b16 %v645
        %v1354 = vunpack.c.h.b16 %v645
        %v1355 = vunpack.c.l.b16 %v646
        %v1356 = vunpack.c.h.b16 %v646
        %v1357 = vunpack.c.l.b16 %v647
        %v1358 = vunpack.c.h.b16 %v647
        %v1359 = vunpack.c.l.b16 %v648
        %v1360 = vunpack.c.h.b16 %v648
        %v1361 = vunpack.c.l.b16 %v649
        %v1362 = vunpack.c.h.b16 %v649
        %v1363 = vunpack.c.l.b16 %v650
        %v1364 = vunpack.c.h.b16 %v650
        %v1365 = vunpack.c.l.b16 %v651
        %v1366 = vunpack.c.h.b16 %v651
        %v1367 = vunpack.c.l.b16 %v652
        %v1368 = vunpack.c.h.b16 %v652
        %v1369 = vunpack.c.l.b16 %v653
        %v1370 = vunpack.c.h.b16 %v653
        %v1371 = vunpack.c.l.b16 %v654
        %v1372 = vunpack.c.h.b16 %v654
        %v1373 = vunpack.c.l.b16 %v655
        %v1374 = vunpack.c.h.b16 %v655
        %v1375 = vunpack.c.l.b16 %v656
        %v1376 = vunpack.c.h.b16 %v656
        %v1377 = vunpack.c.l.b16 %v657
        %v1378 = vunpack.c.h.b16 %v657
        %v1379 = vunpack.c.l.b16 %v658
        %v1380 = vunpack.c.h.b16 %v658
        %v1381 = vunpack.c.l.b16 %v659
        %v1382 = vunpack.c.h.b16 %v659
        %v1383 = vunpack.c.l.b16 %v660
        %v1384 = vunpack.c.h.b16 %v660
        %v1385 = vunpack.c.l.b16 %v661
        %v1386 = vunpack.c.h.b16 %v661
        %v1387 = vunpack.c.l.b16 %v662
        %v1388 = vunpack.c.h.b16 %v662
        %v1389 = vunpack.c.l.b16 %v663
        %v1390 = vunpack.c.h.b16 %v663
        %v1391 = vunpack.c.l.b16 %v664
        %v1392 = vunpack.c.h.b16 %v664
        %v1393 = vunpack.c.l.b16 %v665
        %v1394 = vunpack.c.h.b16 %v665
        %v1395 = vunpack.c.l.b16 %v666
        %v1396 = vunpack.c.h.b16 %v666
        %v1397 = vunpack.c.l.b16 %v667
        %v1398 = vunpack.c.h.b16 %v667
        %v1399 = vunpack.c.l.b16 %v668
        %v1400 = vunpack.c.h.b16 %v668
        %v1401 = vunpack.c.l.b16 %v669
        %v1402 = vunpack.c.h.b16 %v669
        %v1403 = vunpack.c.l.b16 %v670
        %v1404 = vunpack.c.h.b16 %v670
        %v1405 = vunpack.c.l.b16 %v671
        %v1406 = vunpack.c.h.b16 %v671
        %v1407 = vunpack.c.l.b16 %v672
        %v1408 = vunpack.c.h.b16 %v672
        %v1409 = vunpack.c.l.b16 %v673
        %v1410 = vunpack.c.h.b16 %v673
        %v1411 = vunpack.c.l.b16 %v674
        %v1412 = vunpack.c.h.b16 %v674
        %v1413 = vunpack.c.l.b16 %v675
        %v1414 = vunpack.c.h.b16 %v675
        %v1415 = vunpack.c.l.b16 %v676
        %v1416 = vunpack.c.h.b16 %v676
        %v1417 = vunpack.c.l.b16 %v677
        %v1418 = vunpack.c.h.b16 %v677
        %v1419 = vunpack.c.l.b16 %v678
        %v1420 = vunpack.c.h.b16 %v678
        %v1421 = vunpack.c.l.b16 %v679
        %v1422 = vunpack.c.h.b16 %v679
        %v1423 = vunpack.c.l.b16 %v680
        %v1424 = vunpack.c.h.b16 %v680
        %v1425 = vunpack.c.l.b16 %v681
        %v1426 = vunpack.c.h.b16 %v681
        %v1427 = vunpack.c.l.b16 %v682
        %v1428 = vunpack.c.h.b16 %v682
        %v1429 = vunpack.c.l.b16 %v683
        %v1430 = vunpack.c.h.b16 %v683
        %v1431 = vunpack.c.l.b16 %v684
        %v1432 = vunpack.c.h.b16 %v684
        %v1433 = vunpack.c.l.b16 %v685
        %v1434 = vunpack.c.h.b16 %v685
        %v1435 = vunpack.c.l.b16 %v686
        %v1436 = vunpack.c.h.b16 %v686
        %v1437 = vunpack.c.l.b16 %v687
        %v1438 = vunpack.c.h.b16 %v687
        %v1439 = vunpack.c.l.b16 %v688
        %v1440 = vunpack.c.h.b16 %v688
        %v1441 = vunpack.c.l.b16 %v689
        %v1442 = vunpack.c.h.b16 %v689
        %v1443 = vunpack.c.l.b16 %v690
        %v1444 = vunpack.c.h.b16 %v690
        %v1445 = vunpack.c.l.b16 %v691
        %v1446 = vunpack.c.h.b16 %v691
        %v1447 = vunpack.c.l.b16 %v692
        %v1448 = vunpack.c.h.b16 %v692
        %v1449 = vunpack.c.l.b16 %v693
        %v1450 = vunpack.c.h.b16 %v693
        %v1451 = vunpack.c.l.b16 %v694
        %v1452 = vunpack.c.h.b16 %v694
        %v1453 = vunpack.c.l.b16 %v695
        %v1454 = vunpack.c.h.b16 %v695
        %v1455 = vunpack.c.l.b16 %v696
        %v1456 = vunpack.c.h.b16 %v696
        %v1457 = vunpack.c.l.b16 %v697
        %v1458 = vunpack.c.h.b16 %v697
        %v1459 = vunpack.c.l.b16 %v698
        %v1460 = vunpack.c.h.b16 %v698
        %v1461 = vunpack.c.l.b16 %v699
        %v1462 = vunpack.c.h.b16 %v699
        %v1463 = vunpack.c.l.b16 %v700
        %v1464 = vunpack.c.h.b16 %v700
        %v1465 = vunpack.c.l.b16 %v701
        %v1466 = vunpack.c.h.b16 %v701
        %v1467 = vunpack.c.l.b16 %v702
        %v1468 = vunpack.c.h.b16 %v702
        %v1469 = vunpack.c.l.b16 %v703
        %v1470 = vunpack.c.h.b16 %v703
        %v1471 = vunpack.c.l.b16 %v704
        %v1472 = vunpack.c.h.b16 %v704
        %v1473 = vunpack.c.l.b16 %v705
        %v1474 = vunpack.c.h.b16 %v705
        %v1475 = vunpack.c.l.b16 %v706
        %v1476 = vunpack.c.h.b16 %v706
        %v1477 = vunpack.c.l.b16 %v707
        %v1478 = vunpack.c.h.b16 %v707
        %v1479 = vunpack.c.l.b16 %v708
        %v1480 = vunpack.c.h.b16 %v708
        %v1481 = vunpack.c.l.b16 %v709
        %v1482 = vunpack.c.h.b16 %v709
        %v1483 = vunpack.c.l.b16 %v710
        %v1484 = vunpack.c.h.b16 %v710
        %v1485 = vunpack.c.l.b16 %v711
        %v1486 = vunpack.c.h.b16 %v711
        %v1487 = vunpack.c.l.b16 %v712
        %v1488 = vunpack.c.h.b16 %v712
        %v1489 = vunpack.c.l.b16 %v713
        %v1490 = vunpack.c.h.b16 %v713
        %v1491 = vunpack.c.l.b16 %v714
        %v1492 = vunpack.c.h.b16 %v714
        %v1493 = vunpack.c.l.b16 %v715
        %v1494 = vunpack.c.h.b16 %v715
        %v1495 = vunpack.c.l.b16 %v716
        %v1496 = vunpack.c.h.b16 %v716
        %v1497 = vunpack.c.l.b16 %v717
        %v1498 = vunpack.c.h.b16 %v717
        %v1499 = vunpack.c.l.b16 %v718
        %v1500 = vunpack.c.h.b16 %v718
        %v1501 = vunpack.c.l.b16 %v719
        %v1502 = vunpack.c.h.b16 %v719
        %v1503 = vunpack.c.l.b16 %v720
        %v1504 = vunpack.c.h.b16 %v720
        %v1505 = vunpack.c.l.b16 %v721
        %v1506 = vunpack.c.h.b16 %v721
        %v1507 = vunpack.c.l.b16 %v722
        %v1508 = vunpack.c.h.b16 %v722
        %v1509 = vunpack.c.l.b16 %v723
        %v1510 = vunpack.c.h.b16 %v723
        %v1511 = vunpack.c.l.b16 %v724
        %v1512 = vunpack.c.h.b16 %v724
        %v1513 = vunpack.c.l.b16 %v725
        %v1514 = vunpack.c.h.b16 %v725
        %v1515 = vunpack.c.l.b16 %v726
        %v1516 = vunpack.c.h.b16 %v726
        %v1517 = vunpack.c.l.b16 %v727
        %v1518 = vunpack.c.h.b16 %v727
        %v1519 = vunpack.c.l.b16 %v728
        %v1520 = vunpack.c.h.b16 %v728
        %v1521 = vunpack.c.l.b16 %v729
        %v1522 = vunpack.c.h.b16 %v729
        %v1523 = vunpack.c.l.b16 %v730
        %v1524 = vunpack.c.h.b16 %v730
        %v1525 = vunpack.c.l.b16 %v731
        %v1526 = vunpack.c.h.b16 %v731
        %v1527 = vunpack.c.l.b16 %v732
        %v1528 = vunpack.c.h.b16 %v732
        %v1529 = vunpack.c.l.b16 %v733
        %v1530 = vunpack.c.h.b16 %v733
        %v1531 = vunpack.c.l.b16 %v734
        %v1532 = vunpack.c.h.b16 %v734
        %v1533 = vunpack.c.l.b16 %v735
        %v1534 = vunpack.c.h.b16 %v735
        %v1535 = vunpack.c.l.b16 %v736
        %v1536 = vunpack.c.h.b16 %v736
        %v1537 = vunpack.c.l.b16 %v737
        %v1538 = vunpack.c.h.b16 %v737
        %v1539 = vunpack.c.l.b16 %v738
        %v1540 = vunpack.c.h.b16 %v738
        %v1541 = vunpack.c.l.b16 %v739
        %v1542 = vunpack.c.h.b16 %v739
        %v1543 = vunpack.c.l.b16 %v740
        %v1544 = vunpack.c.h.b16 %v740
        %v1545 = vunpack.c.l.b16 %v741
        %v1546 = vunpack.c.h.b16 %v741
        %v1547 = vunpack.c.l.b16 %v742
        %v1548 = vunpack.c.h.b16 %v742
        %v1549 = vunpack.c.l.b16 %v743
        %v1550 = vunpack.c.h.b16 %v743
        %v1551 = vunpack.c.l.b16 %v744
        %v1552 = vunpack.c.h.b16 %v744
        %v1553 = vunpack.c.l.b16 %v745
        %v1554 = vunpack.c.h.b16 %v745
        %v1555 = vunpack.c.l.b16 %v746
        %v1556 = vunpack.c.h.b16 %v746
        %v1557 = vunpack.c.l.b16 %v747
        %v1558 = vunpack.c.h.b16 %v747
        %v1559 = vunpack.c.l.b16 %v748
        %v1560 = vunpack.c.h.b16 %v748
        %v1561 = vunpack.c.l.b16 %v749
        %v1562 = vunpack.c.h.b16 %v749
        %v1563 = vunpack.c.l.b16 %v750
        %v1564 = vunpack.c.h.b16 %v750
        %v1565 = vunpack.c.l.b16 %v751
        %v1566 = vunpack.c.h.b16 %v751
        %v1567 = vunpack.c.l.b16 %v752
        %v1568 = vunpack.c.h.b16 %v752
        %v1569 = vunpack.c.l.b16 %v753
        %v1570 = vunpack.c.h.b16 %v753
        %v1571 = vunpack.c.l.b16 %v754
        %v1572 = vunpack.c.h.b16 %v754
        %v1573 = vunpack.c.l.b16 %v755
        %v1574 = vunpack.c.h.b16 %v755
        %v1575 = vunpack.c.l.b16 %v756
        %v1576 = vunpack.c.h.b16 %v756
        %v1577 = vunpack.c.l.b16 %v757
        %v1578 = vunpack.c.h.b16 %v757
        %v1579 = vunpack.c.l.b16 %v758
        %v1580 = vunpack.c.h.b16 %v758
        %v1581 = vunpack.c.l.b16 %v759
        %v1582 = vunpack.c.h.b16 %v759
        %v1583 = vunpack.c.l.b16 %v760
        %v1584 = vunpack.c.h.b16 %v760
        %v1585 = vunpack.c.l.b16 %v761
        %v1586 = vunpack.c.h.b16 %v761
        %v1587 = vunpack.c.l.b16 %v762
        %v1588 = vunpack.c.h.b16 %v762
        %v1589 = vunpack.c.l.b16 %v763
        %v1590 = vunpack.c.h.b16 %v763
        %v1591 = vunpack.c.l.b16 %v764
        %v1592 = vunpack.c.h.b16 %v764
        %v1593 = vunpack.c.l.b16 %v765
        %v1594 = vunpack.c.h.b16 %v765
        %v1595 = vunpack.c.l.b16 %v766
        %v1596 = vunpack.c.h.b16 %v766
        %v1597 = vunpack.c.l.b16 %v767
        %v1598 = vunpack.c.h.b16 %v767
        %v1599 = vunpack.c.l.b16 %v768
        %v1600 = vunpack.c.h.b16 %v768
        %v1601 = vunpack.c.l.b16 %v769
        %v1602 = vunpack.c.h.b16 %v769
        %v1603 = vunpack.c.l.b16 %v770
        %v1604 = vunpack.c.h.b16 %v770
        %v1605 = vunpack.c.l.b16 %v771
        %v1606 = vunpack.c.h.b16 %v771
        %v1607 = vunpack.c.l.b16 %v772
        %v1608 = vunpack.c.h.b16 %v772
        %v1609 = vunpack.c.l.b16 %v773
        %v1610 = vunpack.c.h.b16 %v773
        %v1611 = vunpack.c.l.b16 %v774
        %v1612 = vunpack.c.h.b16 %v774
        %v1613 = vunpack.c.l.b16 %v775
        %v1614 = vunpack.c.h.b16 %v775
        %v1615 = vunpack.c.l.b16 %v776
        %v1616 = vunpack.c.h.b16 %v776
        %v1617 = vunpack.c.l.b16 %v777
        %v1618 = vunpack.c.h.b16 %v777
        %v1619 = vunpack.c.l.b16 %v778
        %v1620 = vunpack.c.h.b16 %v778
        %v1621 = vunpack.c.l.b16 %v779
        %v1622 = vunpack.c.h.b16 %v779
        %v1623 = vunpack.c.l.b16 %v780
        %v1624 = vunpack.c.h.b16 %v780
        %v1625 = vunpack.c.l.b16 %v781
        %v1626 = vunpack.c.h.b16 %v781
        %v1627 = vunpack.c.l.b16 %v782
        %v1628 = vunpack.c.h.b16 %v782
        %v1629 = vunpack.c.l.b16 %v783
        %v1630 = vunpack.c.h.b16 %v783
        %v1631 = vunpack.c.l.b16 %v784
        %v1632 = vunpack.c.h.b16 %v784
        %v1633 = vunpack.c.l.b16 %v785
        %v1634 = vunpack.c.h.b16 %v785
        %v1635 = vunpack.c.l.b16 %v786
        %v1636 = vunpack.c.h.b16 %v786
        %v1637 = vunpack.c.l.b16 %v787
        %v1638 = vunpack.c.h.b16 %v787
        %v1639 = vunpack.c.l.b16 %v788
        %v1640 = vunpack.c.h.b16 %v788
        %v1641 = vunpack.c.l.b16 %v789
        %v1642 = vunpack.c.h.b16 %v789
        %v1643 = vunpack.c.l.b16 %v790
        %v1644 = vunpack.c.h.b16 %v790
        %v1645 = vunpack.c.l.b16 %v791
        %v1646 = vunpack.c.h.b16 %v791
        %v1647 = vunpack.c.l.b16 %v792
        %v1648 = vunpack.c.h.b16 %v792
        %v1649 = vunpack.c.l.b16 %v793
        %v1650 = vunpack.c.h.b16 %v793
        %v1651 = vunpack.c.l.b16 %v794
        %v1652 = vunpack.c.h.b16 %v794
        %v1653 = vunpack.c.l.b16 %v795
        %v1654 = vunpack.c.h.b16 %v795
        %v1655 = vunpack.c.l.b16 %v796
        %v1656 = vunpack.c.h.b16 %v796
        %v1657 = vunpack.c.l.b16 %v797
        %v1658 = vunpack.c.h.b16 %v797
        %v1659 = vunpack.c.l.b16 %v798
        %v1660 = vunpack.c.h.b16 %v798
        %v1661 = vunpack.c.l.b16 %v799
        %v1662 = vunpack.c.h.b16 %v799
        %v1663 = vunpack.c.l.b16 %v800
        %v1664 = vunpack.c.h.b16 %v800
        %v1665 = vunpack.c.l.b16 %v801
        %v1666 = vunpack.c.h.b16 %v801
        %v1667 = vunpack.c.l.b16 %v802
        %v1668 = vunpack.c.h.b16 %v802
        %v1669 = vunpack.c.l.b16 %v803
        %v1670 = vunpack.c.h.b16 %v803
        %v1671 = vunpack.c.l.b16 %v804
        %v1672 = vunpack.c.h.b16 %v804
        %v1673 = vunpack.c.l.b16 %v805
        %v1674 = vunpack.c.h.b16 %v805
        %v1675 = vunpack.c.l.b16 %v806
        %v1676 = vunpack.c.h.b16 %v806
        %v1677 = vunpack.c.l.b16 %v807
        %v1678 = vunpack.c.h.b16 %v807
        %v1679 = vunpack.c.l.b16 %v808
        %v1680 = vunpack.c.h.b16 %v808
        %v1681 = vunpack.c.l.b16 %v809
        %v1682 = vunpack.c.h.b16 %v809
        %v1683 = vunpack.c.l.b16 %v810
        %v1684 = vunpack.c.h.b16 %v810
        %v1685 = vunpack.c.l.b16 %v811
        %v1686 = vunpack.c.h.b16 %v811
        %v1687 = vunpack.c.l.b16 %v812
        %v1688 = vunpack.c.h.b16 %v812
        %v1689 = vunpack.c.l.b16 %v813
        %v1690 = vunpack.c.h.b16 %v813
        %v1691 = vunpack.c.l.b16 %v814
        %v1692 = vunpack.c.h.b16 %v814
        %v1693 = vpack.c.b16 %v1305, %v1301
        %v1694 = vpack.c.b16 %v1306, %v1302
        %v1695 = vpack.c.b16 %v1307, %v1303
        %v1696 = vpack.c.b16 %v1308, %v1304
        %v1697 = vpack.c.b16 %v1313, %v1309
        %v1698 = vpack.c.b16 %v1314, %v1310
        %v1699 = vpack.c.b16 %v1315, %v1311
        %v1700 = vpack.c.b16 %v1316, %v1312
        %v1701 = vpack.c.b16 %v1321, %v1317
        %v1702 = vpack.c.b16 %v1322, %v1318
        %v1703 = vpack.c.b16 %v1323, %v1319
        %v1704 = vpack.c.b16 %v1324, %v1320
        %v1705 = vpack.c.b16 %v1329, %v1325
        %v1706 = vpack.c.b16 %v1330, %v1326
        %v1707 = vpack.c.b16 %v1331, %v1327
        %v1708 = vpack.c.b16 %v1332, %v1328
        %v1709 = vpack.c.b16 %v1337, %v1333
        %v1710 = vpack.c.b16 %v1338, %v1334
        %v1711 = vpack.c.b16 %v1339, %v1335
        %v1712 = vpack.c.b16 %v1340, %v1336
        %v1713 = vpack.c.b16 %v1345, %v1341
        %v1714 = vpack.c.b16 %v1346, %v1342
        %v1715 = vpack.c.b16 %v1347, %v1343
        %v1716 = vpack.c.b16 %v1348, %v1344
        %v1717 = vpack.c.b16 %v1353, %v1349
        %v1718 = vpack.c.b16 %v1354, %v1350
        %v1719 = vpack.c.b16 %v1355, %v1351
        %v1720 = vpack.c.b16 %v1356, %v1352
        %v1721 = vpack.c.b16 %v1361, %v1357
        %v1722 = vpack.c.b16 %v1362, %v1358
        %v1723 = vpack.c.b16 %v1363, %v1359
        %v1724 = vpack.c.b16 %v1364, %v1360
        %v1725 = vpack.c.b16 %v1369, %v1365
        %v1726 = vpack.c.b16 %v1370, %v1366
        %v1727 = vpack.c.b16 %v1371, %v1367
        %v1728 = vpack.c.b16 %v1372, %v1368
        %v1729 = vpack.c.b16 %v1377, %v1373
        %v1730 = vpack.c.b16 %v1378, %v1374
        %v1731 = vpack.c.b16 %v1379, %v1375
        %v1732 = vpack.c.b16 %v1380, %v1376
        %v1733 = vpack.c.b16 %v1385, %v1381
        %v1734 = vpack.c.b16 %v1386, %v1382
        %v1735 = vpack.c.b16 %v1387, %v1383
        %v1736 = vpack.c.b16 %v1388, %v1384
        %v1737 = vpack.c.b16 %v1393, %v1389
        %v1738 = vpack.c.b16 %v1394, %v1390
        %v1739 = vpack.c.b16 %v1395, %v1391
        %v1740 = vpack.c.b16 %v1396, %v1392
        %v1741 = vpack.c.b16 %v1401, %v1397
        %v1742 = vpack.c.b16 %v1402, %v1398
        %v1743 = vpack.c.b16 %v1403, %v1399
        %v1744 = vpack.c.b16 %v1404, %v1400
        %v1745 = vpack.c.b16 %v1409, %v1405
        %v1746 = vpack.c.b16 %v1410, %v1406
        %v1747 = vpack.c.b16 %v1411, %v1407
        %v1748 = vpack.c.b16 %v1412, %v1408
        %v1749 = vpack.c.b16 %v1417, %v1413
        %v1750 = vpack.c.b16 %v1418, %v1414
        %v1751 = vpack.c.b16 %v1419, %v1415
        %v1752 = vpack.c.b16 %v1420, %v1416
        %v1753 = vpack.c.b16 %v1425, %v1421
        %v1754 = vpack.c.b16 %v1426, %v1422
        %v1755 = vpack.c.b16 %v1427, %v1423
        %v1756 = vpack.c.b16 %v1428, %v1424
        %v1757 = vpack.c.b16 %v1433, %v1429
        %v1758 = vpack.c.b16 %v1434, %v1430
        %v1759 = vpack.c.b16 %v1435, %v1431
        %v1760 = vpack.c.b16 %v1436, %v1432
        %v1761 = vpack.c.b16 %v1441, %v1437
        %v1762 = vpack.c.b16 %v1442, %v1438
        %v1763 = vpack.c.b16 %v1443, %v1439
        %v1764 = vpack.c.b16 %v1444, %v1440
        %v1765 = vpack.c.b16 %v1449, %v1445
        %v1766 = vpack.c.b16 %v1450, %v1446
        %v1767 = vpack.c.b16 %v1451, %v1447
        %v1768 = vpack.c.b16 %v1452, %v1448
        %v1769 = vpack.c.b16 %v1457, %v1453
        %v1770 = vpack.c.b16 %v1458, %v1454
        %v1771 = vpack.c.b16 %v1459, %v1455
        %v1772 = vpack.c.b16 %v1460, %v1456
        %v1773 = vpack.c.b16 %v1465, %v1461
        %v1774 = vpack.c.b16 %v1466, %v1462
        %v1775 = vpack.c.b16 %v1467, %v1463
        %v1776 = vpack.c.b16 %v1468, %v1464
        %v1777 = vpack.c.b16 %v1473, %v1469
        %v1778 = vpack.c.b16 %v1474, %v1470
        %v1779 = vpack.c.b16 %v1475, %v1471
        %v1780 = vpack.c.b16 %v1476, %v1472
        %v1781 = vpack.c.b16 %v1481, %v1477
        %v1782 = vpack.c.b16 %v1482, %v1478
        %v1783 = vpack.c.b16 %v1483, %v1479
        %v1784 = vpack.c.b16 %v1484, %v1480
        %v1785 = vpack.c.b16 %v1489, %v1485
        %v1786 = vpack.c.b16 %v1490, %v1486
        %v1787 = vpack.c.b16 %v1491, %v1487
        %v1788 = vpack.c.b16 %v1492, %v1488
        %v1789 = vpack.c.b16 %v1497, %v1493
        %v1790 = vpack.c.b16 %v1498, %v1494
        %v1791 = vpack.c.b16 %v1499, %v1495
        %v1792 = vpack.c.b16 %v1500, %v1496
        %v1793 = vpack.c.b16 %v1505, %v1501
        %v1794 = vpack.c.b16 %v1506, %v1502
        %v1795 = vpack.c.b16 %v1507, %v1503
        %v1796 = vpack.c.b16 %v1508, %v1504
        %v1797 = vpack.c.b16 %v1513, %v1509
        %v1798 = vpack.c.b16 %v1514, %v1510
        %v1799 = vpack.c.b16 %v1515, %v1511
        %v1800 = vpack.c.b16 %v1516, %v1512
        %v1801 = vpack.c.b16 %v1521, %v1517
        %v1802 = vpack.c.b16 %v1522, %v1518
        %v1803 = vpack.c.b16 %v1523, %v1519
        %v1804 = vpack.c.b16 %v1524, %v1520
        %v1805 = vpack.c.b16 %v1529, %v1525
        %v1806 = vpack.c.b16 %v1530, %v1526
        %v1807 = vpack.c.b16 %v1531, %v1527
        %v1808 = vpack.c.b16 %v1532, %v1528
        %v1809 = vpack.c.b16 %v1537, %v1533
        %v1810 = vpack.c.b16 %v1538, %v1534
        %v1811 = vpack.c.b16 %v1539, %v1535
        %v1812 = vpack.c.b16 %v1540, %v1536
        %v1813 = vpack.c.b16 %v1545, %v1541
        %v1814 = vpack.c.b16 %v1546, %v1542
        %v1815 = vpack.c.b16 %v1547, %v1543
        %v1816 = vpack.c.b16 %v1548, %v1544
        %v1817 = vpack.c.b16 %v1553, %v1549
        %v1818 = vpack.c.b16 %v1554, %v1550
        %v1819 = vpack.c.b16 %v1555, %v1551
        %v1820 = vpack.c.b16 %v1556, %v1552
        %v1821 = vpack.c.b16 %v1561, %v1557
        %v1822 = vpack.c.b16 %v1562, %v1558
        %v1823 = vpack.c.b16 %v1563, %v1559
        %v1824 = vpack.c.b16 %v1564, %v1560
        %v1825 = vpack.c.b16 %v1569, %v1565
        %v1826 = vpack.c.b16 %v1570, %v1566
        %v1827 = vpack.c.b16 %v1571, %v1567
        %v1828 = vpack.c.b16 %v1572, %v1568
        %v1829 = vpack.c.b16 %v1577, %v1573
        %v1830 = vpack.c.b16 %v1578, %v1574
        %v1831 = vpack.c.b16 %v1579, %v1575
        %v1832 = vpack.c.b16 %v1580, %v1576
        %v1833 = vpack.c.b16 %v1585, %v1581
        %v1834 = vpack.c.b16 %v1586, %v1582
        %v1835 = vpack.c.b16 %v1587, %v1583
        %v1836 = vpack.c.b16 %v1588, %v1584
        %v1837 = vpack.c.b16 %v1593, %v1589
        %v1838 = vpack.c.b16 %v1594, %v1590
        %v1839 = vpack.c.b16 %v1595, %v1591
        %v1840 = vpack.c.b16 %v1596, %v1592
        %v1841 = vpack.c.b16 %v1601, %v1597
        %v1842 = vpack.c.b16 %v1602, %v1598
        %v1843 = vpack.c.b16 %v1603, %v1599
        %v1844 = vpack.c.b16 %v1604, %v1600
        %v1845 = vpack.c.b16 %v1609, %v1605
        %v1846 = vpack.c.b16 %v1610, %v1606
        %v1847 = vpack.c.b16 %v1611, %v1607
        %v1848 = vpack.c.b16 %v1612, %v1608
        %v1849 = vpack.c.b16 %v1617, %v1613
        %v1850 = vpack.c.b16 %v1618, %v1614
        %v1851 = vpack.c.b16 %v1619, %v1615
        %v1852 = vpack.c.b16 %v1620, %v1616
        %v1853 = vpack.c.b16 %v1625, %v1621
        %v1854 = vpack.c.b16 %v1626, %v1622
        %v1855 = vpack.c.b16 %v1627, %v1623
        %v1856 = vpack.c.b16 %v1628, %v1624
        %v1857 = vpack.c.b16 %v1633, %v1629
        %v1858 = vpack.c.b16 %v1634, %v1630
        %v1859 = vpack.c.b16 %v1635, %v1631
        %v1860 = vpack.c.b16 %v1636, %v1632
        %v1861 = vpack.c.b16 %v1641, %v1637
        %v1862 = vpack.c.b16 %v1642, %v1638
        %v1863 = vpack.c.b16 %v1643, %v1639
        %v1864 = vpack.c.b16 %v1644, %v1640
        %v1865 = vpack.c.b16 %v1649, %v1645
        %v1866 = vpack.c.b16 %v1650, %v1646
        %v1867 = vpack.c.b16 %v1651, %v1647
        %v1868 = vpack.c.b16 %v1652, %v1648
        %v1869 = vpack.c.b16 %v1657, %v1653
        %v1870 = vpack.c.b16 %v1658, %v1654
        %v1871 = vpack.c.b16 %v1659, %v1655
        %v1872 = vpack.c.b16 %v1660, %v1656
        %v1873 = vpack.c.b16 %v1665, %v1661
        %v1874 = vpack.c.b16 %v1666, %v1662
        %v1875 = vpack.c.b16 %v1667, %v1663
        %v1876 = vpack.c.b16 %v1668, %v1664
        %v1877 = vpack.c.b16 %v1673, %v1669
        %v1878 = vpack.c.b16 %v1674, %v1670
        %v1879 = vpack.c.b16 %v1675, %v1671
        %v1880 = vpack.c.b16 %v1676, %v1672
        %v1881 = vpack.c.b16 %v1681, %v1677
        %v1882 = vpack.c.b16 %v1682, %v1678
        %v1883 = vpack.c.b16 %v1683, %v1679
        %v1884 = vpack.c.b16 %v1684, %v1680
        %v1885 = vpack.c.b16 %v1689, %v1685
        %v1886 = vpack.c.b16 %v1690, %v1686
        %v1887 = vpack.c.b16 %v1691, %v1687
        %v1888 = vpack.c.b16 %v1692, %v1688
        %vm2085 = vcmask 130048
        %v2087 = vsel %vm2085, %v1007, 0
        %v2090 = vsel %vm2085, %v1014, 0
        %v2093 = vsel %vm2085, %v1021, 0
        %v2096 = vsel %vm2085, %v1028, 0
        %v2099 = vsel %vm2085, %v1035, 0
        %v2102 = vsel %vm2085, %v1042, 0
        %v2105 = vsel %vm2085, %v1049, 0
        %v2108 = vsel %vm2085, %v1056, 0
        %2110 = vmatpush.bf16.msra.mxu0 %v1721
        %2111 = vmatpush.bf16.msra.mxu0 %v1717
        %2112 = vmatpush.bf16.msra.mxu0 %v1713
        %2113 = vmatpush.bf16.msra.mxu0 %v1709
        %2114 = vmatpush.bf16.msra.mxu0 %v1705
        %2115 = vmatpush.bf16.msra.mxu0 %v1701
        %2116 = vmatpush.bf16.msra.mxu0 %v1697
        %2117 = vmatpush.bf16.msra.mxu0 %v1693
        %2118 = vmatmul.bf16.gmra.mxu0 %v1001
        %v2119 = vpop.f32.mrf.mxu0
        %v2120 = vadd.f32 %v817, %v2119
        %v2121 = vpop.f32.mrf.mxu0
        %v2122 = vadd.f32 %v817, %v2121
        %2123 = vmatmul.bf16.gmra.mxu0 %v1008
        %v2124 = vpop.f32.mrf.mxu0
        %v2125 = vadd.f32 %v817, %v2124
        %v2126 = vpop.f32.mrf.mxu0
        %v2127 = vadd.f32 %v817, %v2126
        %2128 = vmatmul.bf16.gmra.mxu0 %v1015
        %v2129 = vpop.f32.mrf.mxu0
        %v2130 = vadd.f32 %v817, %v2129
        %v2131 = vpop.f32.mrf.mxu0
        %v2132 = vadd.f32 %v817, %v2131
        %2133 = vmatmul.bf16.gmra.mxu0 %v1022
        %v2134 = vpop.f32.mrf.mxu0
        %v2135 = vadd.f32 %v817, %v2134
        %v2136 = vpop.f32.mrf.mxu0
        %v2137 = vadd.f32 %v817, %v2136
        %2138 = vmatmul.bf16.gmra.mxu0 %v1029
        %v2139 = vpop.f32.mrf.mxu0
        %v2140 = vadd.f32 %v817, %v2139
        %v2141 = vpop.f32.mrf.mxu0
        %v2142 = vadd.f32 %v817, %v2141
        %2143 = vmatmul.bf16.gmra.mxu0 %v1036
        %v2144 = vpop.f32.mrf.mxu0
        %v2145 = vadd.f32 %v817, %v2144
        %v2146 = vpop.f32.mrf.mxu0
        %v2147 = vadd.f32 %v817, %v2146
        %2148 = vmatmul.bf16.gmra.mxu0 %v1043
        %v2149 = vpop.f32.mrf.mxu0
        %v2150 = vadd.f32 %v817, %v2149
        %v2151 = vpop.f32.mrf.mxu0
        %v2152 = vadd.f32 %v817, %v2151
        %2153 = vmatmul.bf16.gmra.mxu0 %v1050
        %v2154 = vpop.f32.mrf.mxu0
        %v2155 = vadd.f32 %v817, %v2154
        %v2156 = vpop.f32.mrf.mxu0
        %v2157 = vadd.f32 %v817, %v2156
        %2158 = vdwg.mxu0
        %2159 = vmatpush.bf16.msra.mxu0 %v1753
        %2160 = vmatpush.bf16.msra.mxu0 %v1749
        %2161 = vmatpush.bf16.msra.mxu0 %v1745
        %2162 = vmatpush.bf16.msra.mxu0 %v1741
        %2163 = vmatpush.bf16.msra.mxu0 %v1737
        %2164 = vmatpush.bf16.msra.mxu0 %v1733
        %2165 = vmatpush.bf16.msra.mxu0 %v1729
        %2166 = vmatpush.bf16.msra.mxu0 %v1725
        %2167 = vmatmul.bf16.gmra.mxu0 %v1002
        %v2168 = vpop.f32.mrf.mxu0
        %v2169 = vadd.f32 %v2120, %v2168
        %v2170 = vpop.f32.mrf.mxu0
        %v2171 = vadd.f32 %v2122, %v2170
        %2172 = vmatmul.bf16.gmra.mxu0 %v1009
        %v2173 = vpop.f32.mrf.mxu0
        %v2174 = vadd.f32 %v2125, %v2173
        %v2175 = vpop.f32.mrf.mxu0
        %v2176 = vadd.f32 %v2127, %v2175
        %2177 = vmatmul.bf16.gmra.mxu0 %v1016
        %v2178 = vpop.f32.mrf.mxu0
        %v2179 = vadd.f32 %v2130, %v2178
        %v2180 = vpop.f32.mrf.mxu0
        %v2181 = vadd.f32 %v2132, %v2180
        %2182 = vmatmul.bf16.gmra.mxu0 %v1023
        %v2183 = vpop.f32.mrf.mxu0
        %v2184 = vadd.f32 %v2135, %v2183
        %v2185 = vpop.f32.mrf.mxu0
        %v2186 = vadd.f32 %v2137, %v2185
        %2187 = vmatmul.bf16.gmra.mxu0 %v1030
        %v2188 = vpop.f32.mrf.mxu0
        %v2189 = vadd.f32 %v2140, %v2188
        %v2190 = vpop.f32.mrf.mxu0
        %v2191 = vadd.f32 %v2142, %v2190
        %2192 = vmatmul.bf16.gmra.mxu0 %v1037
        %v2193 = vpop.f32.mrf.mxu0
        %v2194 = vadd.f32 %v2145, %v2193
        %v2195 = vpop.f32.mrf.mxu0
        %v2196 = vadd.f32 %v2147, %v2195
        %2197 = vmatmul.bf16.gmra.mxu0 %v1044
        %v2198 = vpop.f32.mrf.mxu0
        %v2199 = vadd.f32 %v2150, %v2198
        %v2200 = vpop.f32.mrf.mxu0
        %v2201 = vadd.f32 %v2152, %v2200
        %2202 = vmatmul.bf16.gmra.mxu0 %v1051
        %v2203 = vpop.f32.mrf.mxu0
        %v2204 = vadd.f32 %v2155, %v2203
        %v2205 = vpop.f32.mrf.mxu0
        %v2206 = vadd.f32 %v2157, %v2205
        %2207 = vdwg.mxu0
        %2208 = vmatpush.bf16.msra.mxu0 %v1785
        %2209 = vmatpush.bf16.msra.mxu0 %v1781
        %2210 = vmatpush.bf16.msra.mxu0 %v1777
        %2211 = vmatpush.bf16.msra.mxu0 %v1773
        %2212 = vmatpush.bf16.msra.mxu0 %v1769
        %2213 = vmatpush.bf16.msra.mxu0 %v1765
        %2214 = vmatpush.bf16.msra.mxu0 %v1761
        %2215 = vmatpush.bf16.msra.mxu0 %v1757
        %2216 = vmatmul.bf16.gmra.mxu0 %v1003
        %v2217 = vpop.f32.mrf.mxu0
        %v2218 = vadd.f32 %v2169, %v2217
        %v2219 = vpop.f32.mrf.mxu0
        %v2220 = vadd.f32 %v2171, %v2219
        %2221 = vmatmul.bf16.gmra.mxu0 %v1010
        %v2222 = vpop.f32.mrf.mxu0
        %v2223 = vadd.f32 %v2174, %v2222
        %v2224 = vpop.f32.mrf.mxu0
        %v2225 = vadd.f32 %v2176, %v2224
        %2226 = vmatmul.bf16.gmra.mxu0 %v1017
        %v2227 = vpop.f32.mrf.mxu0
        %v2228 = vadd.f32 %v2179, %v2227
        %v2229 = vpop.f32.mrf.mxu0
        %v2230 = vadd.f32 %v2181, %v2229
        %2231 = vmatmul.bf16.gmra.mxu0 %v1024
        %v2232 = vpop.f32.mrf.mxu0
        %v2233 = vadd.f32 %v2184, %v2232
        %v2234 = vpop.f32.mrf.mxu0
        %v2235 = vadd.f32 %v2186, %v2234
        %2236 = vmatmul.bf16.gmra.mxu0 %v1031
        %v2237 = vpop.f32.mrf.mxu0
        %v2238 = vadd.f32 %v2189, %v2237
        %v2239 = vpop.f32.mrf.mxu0
        %v2240 = vadd.f32 %v2191, %v2239
        %2241 = vmatmul.bf16.gmra.mxu0 %v1038
        %v2242 = vpop.f32.mrf.mxu0
        %v2243 = vadd.f32 %v2194, %v2242
        %v2244 = vpop.f32.mrf.mxu0
        %v2245 = vadd.f32 %v2196, %v2244
        %2246 = vmatmul.bf16.gmra.mxu0 %v1045
        %v2247 = vpop.f32.mrf.mxu0
        %v2248 = vadd.f32 %v2199, %v2247
        %v2249 = vpop.f32.mrf.mxu0
        %v2250 = vadd.f32 %v2201, %v2249
        %2251 = vmatmul.bf16.gmra.mxu0 %v1052
        %v2252 = vpop.f32.mrf.mxu0
        %v2253 = vadd.f32 %v2204, %v2252
        %v2254 = vpop.f32.mrf.mxu0
        %v2255 = vadd.f32 %v2206, %v2254
        %2256 = vdwg.mxu0
        %2257 = vmatpush.bf16.msra.mxu0 %v1817
        %2258 = vmatpush.bf16.msra.mxu0 %v1813
        %2259 = vmatpush.bf16.msra.mxu0 %v1809
        %2260 = vmatpush.bf16.msra.mxu0 %v1805
        %2261 = vmatpush.bf16.msra.mxu0 %v1801
        %2262 = vmatpush.bf16.msra.mxu0 %v1797
        %2263 = vmatpush.bf16.msra.mxu0 %v1793
        %2264 = vmatpush.bf16.msra.mxu0 %v1789
        %2265 = vmatmul.bf16.gmra.mxu0 %v1004
        %v2266 = vpop.f32.mrf.mxu0
        %v2267 = vadd.f32 %v2218, %v2266
        %v2268 = vpop.f32.mrf.mxu0
        %v2269 = vadd.f32 %v2220, %v2268
        %2270 = vmatmul.bf16.gmra.mxu0 %v1011
        %v2271 = vpop.f32.mrf.mxu0
        %v2272 = vadd.f32 %v2223, %v2271
        %v2273 = vpop.f32.mrf.mxu0
        %v2274 = vadd.f32 %v2225, %v2273
        %2275 = vmatmul.bf16.gmra.mxu0 %v1018
        %v2276 = vpop.f32.mrf.mxu0
        %v2277 = vadd.f32 %v2228, %v2276
        %v2278 = vpop.f32.mrf.mxu0
        %v2279 = vadd.f32 %v2230, %v2278
        %2280 = vmatmul.bf16.gmra.mxu0 %v1025
        %v2281 = vpop.f32.mrf.mxu0
        %v2282 = vadd.f32 %v2233, %v2281
        %v2283 = vpop.f32.mrf.mxu0
        %v2284 = vadd.f32 %v2235, %v2283
        %2285 = vmatmul.bf16.gmra.mxu0 %v1032
        %v2286 = vpop.f32.mrf.mxu0
        %v2287 = vadd.f32 %v2238, %v2286
        %v2288 = vpop.f32.mrf.mxu0
        %v2289 = vadd.f32 %v2240, %v2288
        %2290 = vmatmul.bf16.gmra.mxu0 %v1039
        %v2291 = vpop.f32.mrf.mxu0
        %v2292 = vadd.f32 %v2243, %v2291
        %v2293 = vpop.f32.mrf.mxu0
        %v2294 = vadd.f32 %v2245, %v2293
        %2295 = vmatmul.bf16.gmra.mxu0 %v1046
        %v2296 = vpop.f32.mrf.mxu0
        %v2297 = vadd.f32 %v2248, %v2296
        %v2298 = vpop.f32.mrf.mxu0
        %v2299 = vadd.f32 %v2250, %v2298
        %2300 = vmatmul.bf16.gmra.mxu0 %v1053
        %v2301 = vpop.f32.mrf.mxu0
        %v2302 = vadd.f32 %v2253, %v2301
        %v2303 = vpop.f32.mrf.mxu0
        %v2304 = vadd.f32 %v2255, %v2303
        %2305 = vdwg.mxu0
        %2306 = vmatpush.bf16.msra.mxu0 %v1849
        %2307 = vmatpush.bf16.msra.mxu0 %v1845
        %2308 = vmatpush.bf16.msra.mxu0 %v1841
        %2309 = vmatpush.bf16.msra.mxu0 %v1837
        %2310 = vmatpush.bf16.msra.mxu0 %v1833
        %2311 = vmatpush.bf16.msra.mxu0 %v1829
        %2312 = vmatpush.bf16.msra.mxu0 %v1825
        %2313 = vmatpush.bf16.msra.mxu0 %v1821
        %2314 = vmatmul.bf16.gmra.mxu0 %v1005
        %v2315 = vpop.f32.mrf.mxu0
        %v2316 = vadd.f32 %v2267, %v2315
        %v2317 = vpop.f32.mrf.mxu0
        %v2318 = vadd.f32 %v2269, %v2317
        %2319 = vmatmul.bf16.gmra.mxu0 %v1012
        %v2320 = vpop.f32.mrf.mxu0
        %v2321 = vadd.f32 %v2272, %v2320
        %v2322 = vpop.f32.mrf.mxu0
        %v2323 = vadd.f32 %v2274, %v2322
        %2324 = vmatmul.bf16.gmra.mxu0 %v1019
        %v2325 = vpop.f32.mrf.mxu0
        %v2326 = vadd.f32 %v2277, %v2325
        %v2327 = vpop.f32.mrf.mxu0
        %v2328 = vadd.f32 %v2279, %v2327
        %2329 = vmatmul.bf16.gmra.mxu0 %v1026
        %v2330 = vpop.f32.mrf.mxu0
        %v2331 = vadd.f32 %v2282, %v2330
        %v2332 = vpop.f32.mrf.mxu0
        %v2333 = vadd.f32 %v2284, %v2332
        %2334 = vmatmul.bf16.gmra.mxu0 %v1033
        %v2335 = vpop.f32.mrf.mxu0
        %v2336 = vadd.f32 %v2287, %v2335
        %v2337 = vpop.f32.mrf.mxu0
        %v2338 = vadd.f32 %v2289, %v2337
        %2339 = vmatmul.bf16.gmra.mxu0 %v1040
        %v2340 = vpop.f32.mrf.mxu0
        %v2341 = vadd.f32 %v2292, %v2340
        %v2342 = vpop.f32.mrf.mxu0
        %v2343 = vadd.f32 %v2294, %v2342
        %2344 = vmatmul.bf16.gmra.mxu0 %v1047
        %v2345 = vpop.f32.mrf.mxu0
        %v2346 = vadd.f32 %v2297, %v2345
        %v2347 = vpop.f32.mrf.mxu0
        %v2348 = vadd.f32 %v2299, %v2347
        %2349 = vmatmul.bf16.gmra.mxu0 %v1054
        %v2350 = vpop.f32.mrf.mxu0
        %v2351 = vadd.f32 %v2302, %v2350
        %v2352 = vpop.f32.mrf.mxu0
        %v2353 = vadd.f32 %v2304, %v2352
        %2354 = vdwg.mxu0
        %2355 = vmatpush.bf16.msra.mxu0 %v1881
        %2356 = vmatpush.bf16.msra.mxu0 %v1877
        %2357 = vmatpush.bf16.msra.mxu0 %v1873
        %2358 = vmatpush.bf16.msra.mxu0 %v1869
        %2359 = vmatpush.bf16.msra.mxu0 %v1865
        %2360 = vmatpush.bf16.msra.mxu0 %v1861
        %2361 = vmatpush.bf16.msra.mxu0 %v1857
        %2362 = vmatpush.bf16.msra.mxu0 %v1853
        %2363 = vmatmul.bf16.gmra.mxu0 %v1006
        %v2364 = vpop.f32.mrf.mxu0
        %v2365 = vadd.f32 %v2316, %v2364
        %v2366 = vpop.f32.mrf.mxu0
        %v2367 = vadd.f32 %v2318, %v2366
        %2368 = vmatmul.bf16.gmra.mxu0 %v1013
        %v2369 = vpop.f32.mrf.mxu0
        %v2370 = vadd.f32 %v2321, %v2369
        %v2371 = vpop.f32.mrf.mxu0
        %v2372 = vadd.f32 %v2323, %v2371
        %2373 = vmatmul.bf16.gmra.mxu0 %v1020
        %v2374 = vpop.f32.mrf.mxu0
        %v2375 = vadd.f32 %v2326, %v2374
        %v2376 = vpop.f32.mrf.mxu0
        %v2377 = vadd.f32 %v2328, %v2376
        %2378 = vmatmul.bf16.gmra.mxu0 %v1027
        %v2379 = vpop.f32.mrf.mxu0
        %v2380 = vadd.f32 %v2331, %v2379
        %v2381 = vpop.f32.mrf.mxu0
        %v2382 = vadd.f32 %v2333, %v2381
        %2383 = vmatmul.bf16.gmra.mxu0 %v1034
        %v2384 = vpop.f32.mrf.mxu0
        %v2385 = vadd.f32 %v2336, %v2384
        %v2386 = vpop.f32.mrf.mxu0
        %v2387 = vadd.f32 %v2338, %v2386
        %2388 = vmatmul.bf16.gmra.mxu0 %v1041
        %v2389 = vpop.f32.mrf.mxu0
        %v2390 = vadd.f32 %v2341, %v2389
        %v2391 = vpop.f32.mrf.mxu0
        %v2392 = vadd.f32 %v2343, %v2391
        %2393 = vmatmul.bf16.gmra.mxu0 %v1048
        %v2394 = vpop.f32.mrf.mxu0
        %v2395 = vadd.f32 %v2346, %v2394
        %v2396 = vpop.f32.mrf.mxu0
        %v2397 = vadd.f32 %v2348, %v2396
        %2398 = vmatmul.bf16.gmra.mxu0 %v1055
        %v2399 = vpop.f32.mrf.mxu0
        %v2400 = vadd.f32 %v2351, %v2399
        %v2401 = vpop.f32.mrf.mxu0
        %v2402 = vadd.f32 %v2353, %v2401
        %2403 = vdwg.mxu0
        %2404 = vmatpush.bf16.msra.mxu0 0
        %2405 = vmatpush.bf16.msra.mxu0 0
        %2406 = vmatpush.bf16.msra.mxu0 0
        %2407 = vmatpush.bf16.msra.mxu0 0
        %2408 = vmatpush.bf16.msra.mxu0 0
        %2409 = vmatpush.bf16.msra.mxu0 0
        %2410 = vmatpush.bf16.msra.mxu0 0
        %2411 = vmatpush.bf16.msra.mxu0 %v1885
        %2412 = vmatmul.bf16.gmra.mxu0 %v2087
        %v2413 = vpop.f32.mrf.mxu0
        %v2414 = vadd.f32 %v2365, %v2413
        %v2415 = vpop.f32.mrf.mxu0
        %v2416 = vadd.f32 %v2367, %v2415
        %2417 = vmatmul.bf16.gmra.mxu0 %v2090
        %v2418 = vpop.f32.mrf.mxu0
        %v2419 = vadd.f32 %v2370, %v2418
        %v2420 = vpop.f32.mrf.mxu0
        %v2421 = vadd.f32 %v2372, %v2420
        %2422 = vmatmul.bf16.gmra.mxu0 %v2093
        %v2423 = vpop.f32.mrf.mxu0
        %v2424 = vadd.f32 %v2375, %v2423
        %v2425 = vpop.f32.mrf.mxu0
        %v2426 = vadd.f32 %v2377, %v2425
        %2427 = vmatmul.bf16.gmra.mxu0 %v2096
        %v2428 = vpop.f32.mrf.mxu0
        %v2429 = vadd.f32 %v2380, %v2428
        %v2430 = vpop.f32.mrf.mxu0
        %v2431 = vadd.f32 %v2382, %v2430
        %2432 = vmatmul.bf16.gmra.mxu0 %v2099
        %v2433 = vpop.f32.mrf.mxu0
        %v2434 = vadd.f32 %v2385, %v2433
        %v2435 = vpop.f32.mrf.mxu0
        %v2436 = vadd.f32 %v2387, %v2435
        %2437 = vmatmul.bf16.gmra.mxu0 %v2102
        %v2438 = vpop.f32.mrf.mxu0
        %v2439 = vadd.f32 %v2390, %v2438
        %v2440 = vpop.f32.mrf.mxu0
        %v2441 = vadd.f32 %v2392, %v2440
        %2442 = vmatmul.bf16.gmra.mxu0 %v2105
        %v2443 = vpop.f32.mrf.mxu0
        %v2444 = vadd.f32 %v2395, %v2443
        %v2445 = vpop.f32.mrf.mxu0
        %v2446 = vadd.f32 %v2397, %v2445
        %2447 = vmatmul.bf16.gmra.mxu0 %v2108
        %v2448 = vpop.f32.mrf.mxu0
        %v2449 = vadd.f32 %v2400, %v2448
        %v2450 = vpop.f32.mrf.mxu0
        %v2451 = vadd.f32 %v2402, %v2450
        %2452 = vdwg.mxu0
        %2453 = vmatpush.bf16.msra.mxu0 %v1722
        %2454 = vmatpush.bf16.msra.mxu0 %v1718
        %2455 = vmatpush.bf16.msra.mxu0 %v1714
        %2456 = vmatpush.bf16.msra.mxu0 %v1710
        %2457 = vmatpush.bf16.msra.mxu0 %v1706
        %2458 = vmatpush.bf16.msra.mxu0 %v1702
        %2459 = vmatpush.bf16.msra.mxu0 %v1698
        %2460 = vmatpush.bf16.msra.mxu0 %v1694
        %2461 = vmatmul.bf16.gmra.mxu0 %v1001
        %v2462 = vpop.f32.mrf.mxu0
        %v2463 = vadd.f32 %v818, %v2462
        %v2464 = vpop.f32.mrf.mxu0
        %v2465 = vadd.f32 %v818, %v2464
        %2466 = vmatmul.bf16.gmra.mxu0 %v1008
        %v2467 = vpop.f32.mrf.mxu0
        %v2468 = vadd.f32 %v818, %v2467
        %v2469 = vpop.f32.mrf.mxu0
        %v2470 = vadd.f32 %v818, %v2469
        %2471 = vmatmul.bf16.gmra.mxu0 %v1015
        %v2472 = vpop.f32.mrf.mxu0
        %v2473 = vadd.f32 %v818, %v2472
        %v2474 = vpop.f32.mrf.mxu0
        %v2475 = vadd.f32 %v818, %v2474
        %2476 = vmatmul.bf16.gmra.mxu0 %v1022
        %v2477 = vpop.f32.mrf.mxu0
        %v2478 = vadd.f32 %v818, %v2477
        %v2479 = vpop.f32.mrf.mxu0
        %v2480 = vadd.f32 %v818, %v2479
        %2481 = vmatmul.bf16.gmra.mxu0 %v1029
        %v2482 = vpop.f32.mrf.mxu0
        %v2483 = vadd.f32 %v818, %v2482
        %v2484 = vpop.f32.mrf.mxu0
        %v2485 = vadd.f32 %v818, %v2484
        %2486 = vmatmul.bf16.gmra.mxu0 %v1036
        %v2487 = vpop.f32.mrf.mxu0
        %v2488 = vadd.f32 %v818, %v2487
        %v2489 = vpop.f32.mrf.mxu0
        %v2490 = vadd.f32 %v818, %v2489
        %2491 = vmatmul.bf16.gmra.mxu0 %v1043
        %v2492 = vpop.f32.mrf.mxu0
        %v2493 = vadd.f32 %v818, %v2492
        %v2494 = vpop.f32.mrf.mxu0
        %v2495 = vadd.f32 %v818, %v2494
        %2496 = vmatmul.bf16.gmra.mxu0 %v1050
        %v2497 = vpop.f32.mrf.mxu0
        %v2498 = vadd.f32 %v818, %v2497
        %v2499 = vpop.f32.mrf.mxu0
        %v2500 = vadd.f32 %v818, %v2499
        %2501 = vdwg.mxu0
        %2502 = vmatpush.bf16.msra.mxu0 %v1754
        %2503 = vmatpush.bf16.msra.mxu0 %v1750
        %2504 = vmatpush.bf16.msra.mxu0 %v1746
        %2505 = vmatpush.bf16.msra.mxu0 %v1742
        %2506 = vmatpush.bf16.msra.mxu0 %v1738
        %2507 = vmatpush.bf16.msra.mxu0 %v1734
        %2508 = vmatpush.bf16.msra.mxu0 %v1730
        %2509 = vmatpush.bf16.msra.mxu0 %v1726
        %2510 = vmatmul.bf16.gmra.mxu0 %v1002
        %v2511 = vpop.f32.mrf.mxu0
        %v2512 = vadd.f32 %v2463, %v2511
        %v2513 = vpop.f32.mrf.mxu0
        %v2514 = vadd.f32 %v2465, %v2513
        %2515 = vmatmul.bf16.gmra.mxu0 %v1009
        %v2516 = vpop.f32.mrf.mxu0
        %v2517 = vadd.f32 %v2468, %v2516
        %v2518 = vpop.f32.mrf.mxu0
        %v2519 = vadd.f32 %v2470, %v2518
        %2520 = vmatmul.bf16.gmra.mxu0 %v1016
        %v2521 = vpop.f32.mrf.mxu0
        %v2522 = vadd.f32 %v2473, %v2521
        %v2523 = vpop.f32.mrf.mxu0
        %v2524 = vadd.f32 %v2475, %v2523
        %2525 = vmatmul.bf16.gmra.mxu0 %v1023
        %v2526 = vpop.f32.mrf.mxu0
        %v2527 = vadd.f32 %v2478, %v2526
        %v2528 = vpop.f32.mrf.mxu0
        %v2529 = vadd.f32 %v2480, %v2528
        %2530 = vmatmul.bf16.gmra.mxu0 %v1030
        %v2531 = vpop.f32.mrf.mxu0
        %v2532 = vadd.f32 %v2483, %v2531
        %v2533 = vpop.f32.mrf.mxu0
        %v2534 = vadd.f32 %v2485, %v2533
        %2535 = vmatmul.bf16.gmra.mxu0 %v1037
        %v2536 = vpop.f32.mrf.mxu0
        %v2537 = vadd.f32 %v2488, %v2536
        %v2538 = vpop.f32.mrf.mxu0
        %v2539 = vadd.f32 %v2490, %v2538
        %2540 = vmatmul.bf16.gmra.mxu0 %v1044
        %v2541 = vpop.f32.mrf.mxu0
        %v2542 = vadd.f32 %v2493, %v2541
        %v2543 = vpop.f32.mrf.mxu0
        %v2544 = vadd.f32 %v2495, %v2543
        %2545 = vmatmul.bf16.gmra.mxu0 %v1051
        %v2546 = vpop.f32.mrf.mxu0
        %v2547 = vadd.f32 %v2498, %v2546
        %v2548 = vpop.f32.mrf.mxu0
        %v2549 = vadd.f32 %v2500, %v2548
        %2550 = vdwg.mxu0
        %2551 = vmatpush.bf16.msra.mxu0 %v1786
        %2552 = vmatpush.bf16.msra.mxu0 %v1782
        %2553 = vmatpush.bf16.msra.mxu0 %v1778
        %2554 = vmatpush.bf16.msra.mxu0 %v1774
        %2555 = vmatpush.bf16.msra.mxu0 %v1770
        %2556 = vmatpush.bf16.msra.mxu0 %v1766
        %2557 = vmatpush.bf16.msra.mxu0 %v1762
        %2558 = vmatpush.bf16.msra.mxu0 %v1758
        %2559 = vmatmul.bf16.gmra.mxu0 %v1003
        %v2560 = vpop.f32.mrf.mxu0
        %v2561 = vadd.f32 %v2512, %v2560
        %v2562 = vpop.f32.mrf.mxu0
        %v2563 = vadd.f32 %v2514, %v2562
        %2564 = vmatmul.bf16.gmra.mxu0 %v1010
        %v2565 = vpop.f32.mrf.mxu0
        %v2566 = vadd.f32 %v2517, %v2565
        %v2567 = vpop.f32.mrf.mxu0
        %v2568 = vadd.f32 %v2519, %v2567
        %2569 = vmatmul.bf16.gmra.mxu0 %v1017
        %v2570 = vpop.f32.mrf.mxu0
        %v2571 = vadd.f32 %v2522, %v2570
        %v2572 = vpop.f32.mrf.mxu0
        %v2573 = vadd.f32 %v2524, %v2572
        %2574 = vmatmul.bf16.gmra.mxu0 %v1024
        %v2575 = vpop.f32.mrf.mxu0
        %v2576 = vadd.f32 %v2527, %v2575
        %v2577 = vpop.f32.mrf.mxu0
        %v2578 = vadd.f32 %v2529, %v2577
        %2579 = vmatmul.bf16.gmra.mxu0 %v1031
        %v2580 = vpop.f32.mrf.mxu0
        %v2581 = vadd.f32 %v2532, %v2580
        %v2582 = vpop.f32.mrf.mxu0
        %v2583 = vadd.f32 %v2534, %v2582
        %2584 = vmatmul.bf16.gmra.mxu0 %v1038
        %v2585 = vpop.f32.mrf.mxu0
        %v2586 = vadd.f32 %v2537, %v2585
        %v2587 = vpop.f32.mrf.mxu0
        %v2588 = vadd.f32 %v2539, %v2587
        %2589 = vmatmul.bf16.gmra.mxu0 %v1045
        %v2590 = vpop.f32.mrf.mxu0
        %v2591 = vadd.f32 %v2542, %v2590
        %v2592 = vpop.f32.mrf.mxu0
        %v2593 = vadd.f32 %v2544, %v2592
        %2594 = vmatmul.bf16.gmra.mxu0 %v1052
        %v2595 = vpop.f32.mrf.mxu0
        %v2596 = vadd.f32 %v2547, %v2595
        %v2597 = vpop.f32.mrf.mxu0
        %v2598 = vadd.f32 %v2549, %v2597
        %2599 = vdwg.mxu0
        %2600 = vmatpush.bf16.msra.mxu0 %v1818
        %2601 = vmatpush.bf16.msra.mxu0 %v1814
        %2602 = vmatpush.bf16.msra.mxu0 %v1810
        %2603 = vmatpush.bf16.msra.mxu0 %v1806
        %2604 = vmatpush.bf16.msra.mxu0 %v1802
        %2605 = vmatpush.bf16.msra.mxu0 %v1798
        %2606 = vmatpush.bf16.msra.mxu0 %v1794
        %2607 = vmatpush.bf16.msra.mxu0 %v1790
        %2608 = vmatmul.bf16.gmra.mxu0 %v1004
        %v2609 = vpop.f32.mrf.mxu0
        %v2610 = vadd.f32 %v2561, %v2609
        %v2611 = vpop.f32.mrf.mxu0
        %v2612 = vadd.f32 %v2563, %v2611
        %2613 = vmatmul.bf16.gmra.mxu0 %v1011
        %v2614 = vpop.f32.mrf.mxu0
        %v2615 = vadd.f32 %v2566, %v2614
        %v2616 = vpop.f32.mrf.mxu0
        %v2617 = vadd.f32 %v2568, %v2616
        %2618 = vmatmul.bf16.gmra.mxu0 %v1018
        %v2619 = vpop.f32.mrf.mxu0
        %v2620 = vadd.f32 %v2571, %v2619
        %v2621 = vpop.f32.mrf.mxu0
        %v2622 = vadd.f32 %v2573, %v2621
        %2623 = vmatmul.bf16.gmra.mxu0 %v1025
        %v2624 = vpop.f32.mrf.mxu0
        %v2625 = vadd.f32 %v2576, %v2624
        %v2626 = vpop.f32.mrf.mxu0
        %v2627 = vadd.f32 %v2578, %v2626
        %2628 = vmatmul.bf16.gmra.mxu0 %v1032
        %v2629 = vpop.f32.mrf.mxu0
        %v2630 = vadd.f32 %v2581, %v2629
        %v2631 = vpop.f32.mrf.mxu0
        %v2632 = vadd.f32 %v2583, %v2631
        %2633 = vmatmul.bf16.gmra.mxu0 %v1039
        %v2634 = vpop.f32.mrf.mxu0
        %v2635 = vadd.f32 %v2586, %v2634
        %v2636 = vpop.f32.mrf.mxu0
        %v2637 = vadd.f32 %v2588, %v2636
        %2638 = vmatmul.bf16.gmra.mxu0 %v1046
        %v2639 = vpop.f32.mrf.mxu0
        %v2640 = vadd.f32 %v2591, %v2639
        %v2641 = vpop.f32.mrf.mxu0
        %v2642 = vadd.f32 %v2593, %v2641
        %2643 = vmatmul.bf16.gmra.mxu0 %v1053
        %v2644 = vpop.f32.mrf.mxu0
        %v2645 = vadd.f32 %v2596, %v2644
        %v2646 = vpop.f32.mrf.mxu0
        %v2647 = vadd.f32 %v2598, %v2646
        %2648 = vdwg.mxu0
        %2649 = vmatpush.bf16.msra.mxu0 %v1850
        %2650 = vmatpush.bf16.msra.mxu0 %v1846
        %2651 = vmatpush.bf16.msra.mxu0 %v1842
        %2652 = vmatpush.bf16.msra.mxu0 %v1838
        %2653 = vmatpush.bf16.msra.mxu0 %v1834
        %2654 = vmatpush.bf16.msra.mxu0 %v1830
        %2655 = vmatpush.bf16.msra.mxu0 %v1826
        %2656 = vmatpush.bf16.msra.mxu0 %v1822
        %2657 = vmatmul.bf16.gmra.mxu0 %v1005
        %v2658 = vpop.f32.mrf.mxu0
        %v2659 = vadd.f32 %v2610, %v2658
        %v2660 = vpop.f32.mrf.mxu0
        %v2661 = vadd.f32 %v2612, %v2660
        %2662 = vmatmul.bf16.gmra.mxu0 %v1012
        %v2663 = vpop.f32.mrf.mxu0
        %v2664 = vadd.f32 %v2615, %v2663
        %v2665 = vpop.f32.mrf.mxu0
        %v2666 = vadd.f32 %v2617, %v2665
        %2667 = vmatmul.bf16.gmra.mxu0 %v1019
        %v2668 = vpop.f32.mrf.mxu0
        %v2669 = vadd.f32 %v2620, %v2668
        %v2670 = vpop.f32.mrf.mxu0
        %v2671 = vadd.f32 %v2622, %v2670
        %2672 = vmatmul.bf16.gmra.mxu0 %v1026
        %v2673 = vpop.f32.mrf.mxu0
        %v2674 = vadd.f32 %v2625, %v2673
        %v2675 = vpop.f32.mrf.mxu0
        %v2676 = vadd.f32 %v2627, %v2675
        %2677 = vmatmul.bf16.gmra.mxu0 %v1033
        %v2678 = vpop.f32.mrf.mxu0
        %v2679 = vadd.f32 %v2630, %v2678
        %v2680 = vpop.f32.mrf.mxu0
        %v2681 = vadd.f32 %v2632, %v2680
        %2682 = vmatmul.bf16.gmra.mxu0 %v1040
        %v2683 = vpop.f32.mrf.mxu0
        %v2684 = vadd.f32 %v2635, %v2683
        %v2685 = vpop.f32.mrf.mxu0
        %v2686 = vadd.f32 %v2637, %v2685
        %2687 = vmatmul.bf16.gmra.mxu0 %v1047
        %v2688 = vpop.f32.mrf.mxu0
        %v2689 = vadd.f32 %v2640, %v2688
        %v2690 = vpop.f32.mrf.mxu0
        %v2691 = vadd.f32 %v2642, %v2690
        %2692 = vmatmul.bf16.gmra.mxu0 %v1054
        %v2693 = vpop.f32.mrf.mxu0
        %v2694 = vadd.f32 %v2645, %v2693
        %v2695 = vpop.f32.mrf.mxu0
        %v2696 = vadd.f32 %v2647, %v2695
        %2697 = vdwg.mxu0
        %2698 = vmatpush.bf16.msra.mxu0 %v1882
        %2699 = vmatpush.bf16.msra.mxu0 %v1878
        %2700 = vmatpush.bf16.msra.mxu0 %v1874
        %2701 = vmatpush.bf16.msra.mxu0 %v1870
        %2702 = vmatpush.bf16.msra.mxu0 %v1866
        %2703 = vmatpush.bf16.msra.mxu0 %v1862
        %2704 = vmatpush.bf16.msra.mxu0 %v1858
        %2705 = vmatpush.bf16.msra.mxu0 %v1854
        %2706 = vmatmul.bf16.gmra.mxu0 %v1006
        %v2707 = vpop.f32.mrf.mxu0
        %v2708 = vadd.f32 %v2659, %v2707
        %v2709 = vpop.f32.mrf.mxu0
        %v2710 = vadd.f32 %v2661, %v2709
        %2711 = vmatmul.bf16.gmra.mxu0 %v1013
        %v2712 = vpop.f32.mrf.mxu0
        %v2713 = vadd.f32 %v2664, %v2712
        %v2714 = vpop.f32.mrf.mxu0
        %v2715 = vadd.f32 %v2666, %v2714
        %2716 = vmatmul.bf16.gmra.mxu0 %v1020
        %v2717 = vpop.f32.mrf.mxu0
        %v2718 = vadd.f32 %v2669, %v2717
        %v2719 = vpop.f32.mrf.mxu0
        %v2720 = vadd.f32 %v2671, %v2719
        %2721 = vmatmul.bf16.gmra.mxu0 %v1027
        %v2722 = vpop.f32.mrf.mxu0
        %v2723 = vadd.f32 %v2674, %v2722
        %v2724 = vpop.f32.mrf.mxu0
        %v2725 = vadd.f32 %v2676, %v2724
        %2726 = vmatmul.bf16.gmra.mxu0 %v1034
        %v2727 = vpop.f32.mrf.mxu0
        %v2728 = vadd.f32 %v2679, %v2727
        %v2729 = vpop.f32.mrf.mxu0
        %v2730 = vadd.f32 %v2681, %v2729
        %2731 = vmatmul.bf16.gmra.mxu0 %v1041
        %v2732 = vpop.f32.mrf.mxu0
        %v2733 = vadd.f32 %v2684, %v2732
        %v2734 = vpop.f32.mrf.mxu0
        %v2735 = vadd.f32 %v2686, %v2734
        %2736 = vmatmul.bf16.gmra.mxu0 %v1048
        %v2737 = vpop.f32.mrf.mxu0
        %v2738 = vadd.f32 %v2689, %v2737
        %v2739 = vpop.f32.mrf.mxu0
        %v2740 = vadd.f32 %v2691, %v2739
        %2741 = vmatmul.bf16.gmra.mxu0 %v1055
        %v2742 = vpop.f32.mrf.mxu0
        %v2743 = vadd.f32 %v2694, %v2742
        %v2744 = vpop.f32.mrf.mxu0
        %v2745 = vadd.f32 %v2696, %v2744
        %2746 = vdwg.mxu0
        %2747 = vmatpush.bf16.msra.mxu0 0
        %2748 = vmatpush.bf16.msra.mxu0 0
        %2749 = vmatpush.bf16.msra.mxu0 0
        %2750 = vmatpush.bf16.msra.mxu0 0
        %2751 = vmatpush.bf16.msra.mxu0 0
        %2752 = vmatpush.bf16.msra.mxu0 0
        %2753 = vmatpush.bf16.msra.mxu0 0
        %2754 = vmatpush.bf16.msra.mxu0 %v1886
        %2755 = vmatmul.bf16.gmra.mxu0 %v2087
        %v2756 = vpop.f32.mrf.mxu0
        %v2757 = vadd.f32 %v2708, %v2756
        %v2758 = vpop.f32.mrf.mxu0
        %v2759 = vadd.f32 %v2710, %v2758
        %2760 = vmatmul.bf16.gmra.mxu0 %v2090
        %v2761 = vpop.f32.mrf.mxu0
        %v2762 = vadd.f32 %v2713, %v2761
        %v2763 = vpop.f32.mrf.mxu0
        %v2764 = vadd.f32 %v2715, %v2763
        %2765 = vmatmul.bf16.gmra.mxu0 %v2093
        %v2766 = vpop.f32.mrf.mxu0
        %v2767 = vadd.f32 %v2718, %v2766
        %v2768 = vpop.f32.mrf.mxu0
        %v2769 = vadd.f32 %v2720, %v2768
        %2770 = vmatmul.bf16.gmra.mxu0 %v2096
        %v2771 = vpop.f32.mrf.mxu0
        %v2772 = vadd.f32 %v2723, %v2771
        %v2773 = vpop.f32.mrf.mxu0
        %v2774 = vadd.f32 %v2725, %v2773
        %2775 = vmatmul.bf16.gmra.mxu0 %v2099
        %v2776 = vpop.f32.mrf.mxu0
        %v2777 = vadd.f32 %v2728, %v2776
        %v2778 = vpop.f32.mrf.mxu0
        %v2779 = vadd.f32 %v2730, %v2778
        %2780 = vmatmul.bf16.gmra.mxu0 %v2102
        %v2781 = vpop.f32.mrf.mxu0
        %v2782 = vadd.f32 %v2733, %v2781
        %v2783 = vpop.f32.mrf.mxu0
        %v2784 = vadd.f32 %v2735, %v2783
        %2785 = vmatmul.bf16.gmra.mxu0 %v2105
        %v2786 = vpop.f32.mrf.mxu0
        %v2787 = vadd.f32 %v2738, %v2786
        %v2788 = vpop.f32.mrf.mxu0
        %v2789 = vadd.f32 %v2740, %v2788
        %2790 = vmatmul.bf16.gmra.mxu0 %v2108
        %v2791 = vpop.f32.mrf.mxu0
        %v2792 = vadd.f32 %v2743, %v2791
        %v2793 = vpop.f32.mrf.mxu0
        %v2794 = vadd.f32 %v2745, %v2793
        %2795 = vdwg.mxu0
        %2796 = vmatpush.bf16.msra.mxu0 %v1723
        %2797 = vmatpush.bf16.msra.mxu0 %v1719
        %2798 = vmatpush.bf16.msra.mxu0 %v1715
        %2799 = vmatpush.bf16.msra.mxu0 %v1711
        %2800 = vmatpush.bf16.msra.mxu0 %v1707
        %2801 = vmatpush.bf16.msra.mxu0 %v1703
        %2802 = vmatpush.bf16.msra.mxu0 %v1699
        %2803 = vmatpush.bf16.msra.mxu0 %v1695
        %2804 = vmatmul.bf16.gmra.mxu0 %v1001
        %v2805 = vpop.f32.mrf.mxu0
        %v2806 = vadd.f32 %v819, %v2805
        %v2807 = vpop.f32.mrf.mxu0
        %v2808 = vadd.f32 %v819, %v2807
        %2809 = vmatmul.bf16.gmra.mxu0 %v1008
        %v2810 = vpop.f32.mrf.mxu0
        %v2811 = vadd.f32 %v819, %v2810
        %v2812 = vpop.f32.mrf.mxu0
        %v2813 = vadd.f32 %v819, %v2812
        %2814 = vmatmul.bf16.gmra.mxu0 %v1015
        %v2815 = vpop.f32.mrf.mxu0
        %v2816 = vadd.f32 %v819, %v2815
        %v2817 = vpop.f32.mrf.mxu0
        %v2818 = vadd.f32 %v819, %v2817
        %2819 = vmatmul.bf16.gmra.mxu0 %v1022
        %v2820 = vpop.f32.mrf.mxu0
        %v2821 = vadd.f32 %v819, %v2820
        %v2822 = vpop.f32.mrf.mxu0
        %v2823 = vadd.f32 %v819, %v2822
        %2824 = vmatmul.bf16.gmra.mxu0 %v1029
        %v2825 = vpop.f32.mrf.mxu0
        %v2826 = vadd.f32 %v819, %v2825
        %v2827 = vpop.f32.mrf.mxu0
        %v2828 = vadd.f32 %v819, %v2827
        %2829 = vmatmul.bf16.gmra.mxu0 %v1036
        %v2830 = vpop.f32.mrf.mxu0
        %v2831 = vadd.f32 %v819, %v2830
        %v2832 = vpop.f32.mrf.mxu0
        %v2833 = vadd.f32 %v819, %v2832
        %2834 = vmatmul.bf16.gmra.mxu0 %v1043
        %v2835 = vpop.f32.mrf.mxu0
        %v2836 = vadd.f32 %v819, %v2835
        %v2837 = vpop.f32.mrf.mxu0
        %v2838 = vadd.f32 %v819, %v2837
        %2839 = vmatmul.bf16.gmra.mxu0 %v1050
        %v2840 = vpop.f32.mrf.mxu0
        %v2841 = vadd.f32 %v819, %v2840
        %v2842 = vpop.f32.mrf.mxu0
        %v2843 = vadd.f32 %v819, %v2842
        %2844 = vdwg.mxu0
        %2845 = vmatpush.bf16.msra.mxu0 %v1755
        %2846 = vmatpush.bf16.msra.mxu0 %v1751
        %2847 = vmatpush.bf16.msra.mxu0 %v1747
        %2848 = vmatpush.bf16.msra.mxu0 %v1743
        %2849 = vmatpush.bf16.msra.mxu0 %v1739
        %2850 = vmatpush.bf16.msra.mxu0 %v1735
        %2851 = vmatpush.bf16.msra.mxu0 %v1731
        %2852 = vmatpush.bf16.msra.mxu0 %v1727
        %2853 = vmatmul.bf16.gmra.mxu0 %v1002
        %v2854 = vpop.f32.mrf.mxu0
        %v2855 = vadd.f32 %v2806, %v2854
        %v2856 = vpop.f32.mrf.mxu0
        %v2857 = vadd.f32 %v2808, %v2856
        %2858 = vmatmul.bf16.gmra.mxu0 %v1009
        %v2859 = vpop.f32.mrf.mxu0
        %v2860 = vadd.f32 %v2811, %v2859
        %v2861 = vpop.f32.mrf.mxu0
        %v2862 = vadd.f32 %v2813, %v2861
        %2863 = vmatmul.bf16.gmra.mxu0 %v1016
        %v2864 = vpop.f32.mrf.mxu0
        %v2865 = vadd.f32 %v2816, %v2864
        %v2866 = vpop.f32.mrf.mxu0
        %v2867 = vadd.f32 %v2818, %v2866
        %2868 = vmatmul.bf16.gmra.mxu0 %v1023
        %v2869 = vpop.f32.mrf.mxu0
        %v2870 = vadd.f32 %v2821, %v2869
        %v2871 = vpop.f32.mrf.mxu0
        %v2872 = vadd.f32 %v2823, %v2871
        %2873 = vmatmul.bf16.gmra.mxu0 %v1030
        %v2874 = vpop.f32.mrf.mxu0
        %v2875 = vadd.f32 %v2826, %v2874
        %v2876 = vpop.f32.mrf.mxu0
        %v2877 = vadd.f32 %v2828, %v2876
        %2878 = vmatmul.bf16.gmra.mxu0 %v1037
        %v2879 = vpop.f32.mrf.mxu0
        %v2880 = vadd.f32 %v2831, %v2879
        %v2881 = vpop.f32.mrf.mxu0
        %v2882 = vadd.f32 %v2833, %v2881
        %2883 = vmatmul.bf16.gmra.mxu0 %v1044
        %v2884 = vpop.f32.mrf.mxu0
        %v2885 = vadd.f32 %v2836, %v2884
        %v2886 = vpop.f32.mrf.mxu0
        %v2887 = vadd.f32 %v2838, %v2886
        %2888 = vmatmul.bf16.gmra.mxu0 %v1051
        %v2889 = vpop.f32.mrf.mxu0
        %v2890 = vadd.f32 %v2841, %v2889
        %v2891 = vpop.f32.mrf.mxu0
        %v2892 = vadd.f32 %v2843, %v2891
        %2893 = vdwg.mxu0
        %2894 = vmatpush.bf16.msra.mxu0 %v1787
        %2895 = vmatpush.bf16.msra.mxu0 %v1783
        %2896 = vmatpush.bf16.msra.mxu0 %v1779
        %2897 = vmatpush.bf16.msra.mxu0 %v1775
        %2898 = vmatpush.bf16.msra.mxu0 %v1771
        %2899 = vmatpush.bf16.msra.mxu0 %v1767
        %2900 = vmatpush.bf16.msra.mxu0 %v1763
        %2901 = vmatpush.bf16.msra.mxu0 %v1759
        %2902 = vmatmul.bf16.gmra.mxu0 %v1003
        %v2903 = vpop.f32.mrf.mxu0
        %v2904 = vadd.f32 %v2855, %v2903
        %v2905 = vpop.f32.mrf.mxu0
        %v2906 = vadd.f32 %v2857, %v2905
        %2907 = vmatmul.bf16.gmra.mxu0 %v1010
        %v2908 = vpop.f32.mrf.mxu0
        %v2909 = vadd.f32 %v2860, %v2908
        %v2910 = vpop.f32.mrf.mxu0
        %v2911 = vadd.f32 %v2862, %v2910
        %2912 = vmatmul.bf16.gmra.mxu0 %v1017
        %v2913 = vpop.f32.mrf.mxu0
        %v2914 = vadd.f32 %v2865, %v2913
        %v2915 = vpop.f32.mrf.mxu0
        %v2916 = vadd.f32 %v2867, %v2915
        %2917 = vmatmul.bf16.gmra.mxu0 %v1024
        %v2918 = vpop.f32.mrf.mxu0
        %v2919 = vadd.f32 %v2870, %v2918
        %v2920 = vpop.f32.mrf.mxu0
        %v2921 = vadd.f32 %v2872, %v2920
        %2922 = vmatmul.bf16.gmra.mxu0 %v1031
        %v2923 = vpop.f32.mrf.mxu0
        %v2924 = vadd.f32 %v2875, %v2923
        %v2925 = vpop.f32.mrf.mxu0
        %v2926 = vadd.f32 %v2877, %v2925
        %2927 = vmatmul.bf16.gmra.mxu0 %v1038
        %v2928 = vpop.f32.mrf.mxu0
        %v2929 = vadd.f32 %v2880, %v2928
        %v2930 = vpop.f32.mrf.mxu0
        %v2931 = vadd.f32 %v2882, %v2930
        %2932 = vmatmul.bf16.gmra.mxu0 %v1045
        %v2933 = vpop.f32.mrf.mxu0
        %v2934 = vadd.f32 %v2885, %v2933
        %v2935 = vpop.f32.mrf.mxu0
        %v2936 = vadd.f32 %v2887, %v2935
        %2937 = vmatmul.bf16.gmra.mxu0 %v1052
        %v2938 = vpop.f32.mrf.mxu0
        %v2939 = vadd.f32 %v2890, %v2938
        %v2940 = vpop.f32.mrf.mxu0
        %v2941 = vadd.f32 %v2892, %v2940
        %2942 = vdwg.mxu0
        %2943 = vmatpush.bf16.msra.mxu0 %v1819
        %2944 = vmatpush.bf16.msra.mxu0 %v1815
        %2945 = vmatpush.bf16.msra.mxu0 %v1811
        %2946 = vmatpush.bf16.msra.mxu0 %v1807
        %2947 = vmatpush.bf16.msra.mxu0 %v1803
        %2948 = vmatpush.bf16.msra.mxu0 %v1799
        %2949 = vmatpush.bf16.msra.mxu0 %v1795
        %2950 = vmatpush.bf16.msra.mxu0 %v1791
        %2951 = vmatmul.bf16.gmra.mxu0 %v1004
        %v2952 = vpop.f32.mrf.mxu0
        %v2953 = vadd.f32 %v2904, %v2952
        %v2954 = vpop.f32.mrf.mxu0
        %v2955 = vadd.f32 %v2906, %v2954
        %2956 = vmatmul.bf16.gmra.mxu0 %v1011
        %v2957 = vpop.f32.mrf.mxu0
        %v2958 = vadd.f32 %v2909, %v2957
        %v2959 = vpop.f32.mrf.mxu0
        %v2960 = vadd.f32 %v2911, %v2959
        %2961 = vmatmul.bf16.gmra.mxu0 %v1018
        %v2962 = vpop.f32.mrf.mxu0
        %v2963 = vadd.f32 %v2914, %v2962
        %v2964 = vpop.f32.mrf.mxu0
        %v2965 = vadd.f32 %v2916, %v2964
        %2966 = vmatmul.bf16.gmra.mxu0 %v1025
        %v2967 = vpop.f32.mrf.mxu0
        %v2968 = vadd.f32 %v2919, %v2967
        %v2969 = vpop.f32.mrf.mxu0
        %v2970 = vadd.f32 %v2921, %v2969
        %2971 = vmatmul.bf16.gmra.mxu0 %v1032
        %v2972 = vpop.f32.mrf.mxu0
        %v2973 = vadd.f32 %v2924, %v2972
        %v2974 = vpop.f32.mrf.mxu0
        %v2975 = vadd.f32 %v2926, %v2974
        %2976 = vmatmul.bf16.gmra.mxu0 %v1039
        %v2977 = vpop.f32.mrf.mxu0
        %v2978 = vadd.f32 %v2929, %v2977
        %v2979 = vpop.f32.mrf.mxu0
        %v2980 = vadd.f32 %v2931, %v2979
        %2981 = vmatmul.bf16.gmra.mxu0 %v1046
        %v2982 = vpop.f32.mrf.mxu0
        %v2983 = vadd.f32 %v2934, %v2982
        %v2984 = vpop.f32.mrf.mxu0
        %v2985 = vadd.f32 %v2936, %v2984
        %2986 = vmatmul.bf16.gmra.mxu0 %v1053
        %v2987 = vpop.f32.mrf.mxu0
        %v2988 = vadd.f32 %v2939, %v2987
        %v2989 = vpop.f32.mrf.mxu0
        %v2990 = vadd.f32 %v2941, %v2989
        %2991 = vdwg.mxu0
        %2992 = vmatpush.bf16.msra.mxu0 %v1851
        %2993 = vmatpush.bf16.msra.mxu0 %v1847
        %2994 = vmatpush.bf16.msra.mxu0 %v1843
        %2995 = vmatpush.bf16.msra.mxu0 %v1839
        %2996 = vmatpush.bf16.msra.mxu0 %v1835
        %2997 = vmatpush.bf16.msra.mxu0 %v1831
        %2998 = vmatpush.bf16.msra.mxu0 %v1827
        %2999 = vmatpush.bf16.msra.mxu0 %v1823
        %3000 = vmatmul.bf16.gmra.mxu0 %v1005
        %v3001 = vpop.f32.mrf.mxu0
        %v3002 = vadd.f32 %v2953, %v3001
        %v3003 = vpop.f32.mrf.mxu0
        %v3004 = vadd.f32 %v2955, %v3003
        %3005 = vmatmul.bf16.gmra.mxu0 %v1012
        %v3006 = vpop.f32.mrf.mxu0
        %v3007 = vadd.f32 %v2958, %v3006
        %v3008 = vpop.f32.mrf.mxu0
        %v3009 = vadd.f32 %v2960, %v3008
        %3010 = vmatmul.bf16.gmra.mxu0 %v1019
        %v3011 = vpop.f32.mrf.mxu0
        %v3012 = vadd.f32 %v2963, %v3011
        %v3013 = vpop.f32.mrf.mxu0
        %v3014 = vadd.f32 %v2965, %v3013
        %3015 = vmatmul.bf16.gmra.mxu0 %v1026
        %v3016 = vpop.f32.mrf.mxu0
        %v3017 = vadd.f32 %v2968, %v3016
        %v3018 = vpop.f32.mrf.mxu0
        %v3019 = vadd.f32 %v2970, %v3018
        %3020 = vmatmul.bf16.gmra.mxu0 %v1033
        %v3021 = vpop.f32.mrf.mxu0
        %v3022 = vadd.f32 %v2973, %v3021
        %v3023 = vpop.f32.mrf.mxu0
        %v3024 = vadd.f32 %v2975, %v3023
        %3025 = vmatmul.bf16.gmra.mxu0 %v1040
        %v3026 = vpop.f32.mrf.mxu0
        %v3027 = vadd.f32 %v2978, %v3026
        %v3028 = vpop.f32.mrf.mxu0
        %v3029 = vadd.f32 %v2980, %v3028
        %3030 = vmatmul.bf16.gmra.mxu0 %v1047
        %v3031 = vpop.f32.mrf.mxu0
        %v3032 = vadd.f32 %v2983, %v3031
        %v3033 = vpop.f32.mrf.mxu0
        %v3034 = vadd.f32 %v2985, %v3033
        %3035 = vmatmul.bf16.gmra.mxu0 %v1054
        %v3036 = vpop.f32.mrf.mxu0
        %v3037 = vadd.f32 %v2988, %v3036
        %v3038 = vpop.f32.mrf.mxu0
        %v3039 = vadd.f32 %v2990, %v3038
        %3040 = vdwg.mxu0
        %3041 = vmatpush.bf16.msra.mxu0 %v1883
        %3042 = vmatpush.bf16.msra.mxu0 %v1879
        %3043 = vmatpush.bf16.msra.mxu0 %v1875
        %3044 = vmatpush.bf16.msra.mxu0 %v1871
        %3045 = vmatpush.bf16.msra.mxu0 %v1867
        %3046 = vmatpush.bf16.msra.mxu0 %v1863
        %3047 = vmatpush.bf16.msra.mxu0 %v1859
        %3048 = vmatpush.bf16.msra.mxu0 %v1855
        %3049 = vmatmul.bf16.gmra.mxu0 %v1006
        %v3050 = vpop.f32.mrf.mxu0
        %v3051 = vadd.f32 %v3002, %v3050
        %v3052 = vpop.f32.mrf.mxu0
        %v3053 = vadd.f32 %v3004, %v3052
        %3054 = vmatmul.bf16.gmra.mxu0 %v1013
        %v3055 = vpop.f32.mrf.mxu0
        %v3056 = vadd.f32 %v3007, %v3055
        %v3057 = vpop.f32.mrf.mxu0
        %v3058 = vadd.f32 %v3009, %v3057
        %3059 = vmatmul.bf16.gmra.mxu0 %v1020
        %v3060 = vpop.f32.mrf.mxu0
        %v3061 = vadd.f32 %v3012, %v3060
        %v3062 = vpop.f32.mrf.mxu0
        %v3063 = vadd.f32 %v3014, %v3062
        %3064 = vmatmul.bf16.gmra.mxu0 %v1027
        %v3065 = vpop.f32.mrf.mxu0
        %v3066 = vadd.f32 %v3017, %v3065
        %v3067 = vpop.f32.mrf.mxu0
        %v3068 = vadd.f32 %v3019, %v3067
        %3069 = vmatmul.bf16.gmra.mxu0 %v1034
        %v3070 = vpop.f32.mrf.mxu0
        %v3071 = vadd.f32 %v3022, %v3070
        %v3072 = vpop.f32.mrf.mxu0
        %v3073 = vadd.f32 %v3024, %v3072
        %3074 = vmatmul.bf16.gmra.mxu0 %v1041
        %v3075 = vpop.f32.mrf.mxu0
        %v3076 = vadd.f32 %v3027, %v3075
        %v3077 = vpop.f32.mrf.mxu0
        %v3078 = vadd.f32 %v3029, %v3077
        %3079 = vmatmul.bf16.gmra.mxu0 %v1048
        %v3080 = vpop.f32.mrf.mxu0
        %v3081 = vadd.f32 %v3032, %v3080
        %v3082 = vpop.f32.mrf.mxu0
        %v3083 = vadd.f32 %v3034, %v3082
        %3084 = vmatmul.bf16.gmra.mxu0 %v1055
        %v3085 = vpop.f32.mrf.mxu0
        %v3086 = vadd.f32 %v3037, %v3085
        %v3087 = vpop.f32.mrf.mxu0
        %v3088 = vadd.f32 %v3039, %v3087
        %3089 = vdwg.mxu0
        %3090 = vmatpush.bf16.msra.mxu0 0
        %3091 = vmatpush.bf16.msra.mxu0 0
        %3092 = vmatpush.bf16.msra.mxu0 0
        %3093 = vmatpush.bf16.msra.mxu0 0
        %3094 = vmatpush.bf16.msra.mxu0 0
        %3095 = vmatpush.bf16.msra.mxu0 0
        %3096 = vmatpush.bf16.msra.mxu0 0
        %3097 = vmatpush.bf16.msra.mxu0 %v1887
        %3098 = vmatmul.bf16.gmra.mxu0 %v2087
        %v3099 = vpop.f32.mrf.mxu0
        %v3100 = vadd.f32 %v3051, %v3099
        %v3101 = vpop.f32.mrf.mxu0
        %v3102 = vadd.f32 %v3053, %v3101
        %3103 = vmatmul.bf16.gmra.mxu0 %v2090
        %v3104 = vpop.f32.mrf.mxu0
        %v3105 = vadd.f32 %v3056, %v3104
        %v3106 = vpop.f32.mrf.mxu0
        %v3107 = vadd.f32 %v3058, %v3106
        %3108 = vmatmul.bf16.gmra.mxu0 %v2093
        %v3109 = vpop.f32.mrf.mxu0
        %v3110 = vadd.f32 %v3061, %v3109
        %v3111 = vpop.f32.mrf.mxu0
        %v3112 = vadd.f32 %v3063, %v3111
        %3113 = vmatmul.bf16.gmra.mxu0 %v2096
        %v3114 = vpop.f32.mrf.mxu0
        %v3115 = vadd.f32 %v3066, %v3114
        %v3116 = vpop.f32.mrf.mxu0
        %v3117 = vadd.f32 %v3068, %v3116
        %3118 = vmatmul.bf16.gmra.mxu0 %v2099
        %v3119 = vpop.f32.mrf.mxu0
        %v3120 = vadd.f32 %v3071, %v3119
        %v3121 = vpop.f32.mrf.mxu0
        %v3122 = vadd.f32 %v3073, %v3121
        %3123 = vmatmul.bf16.gmra.mxu0 %v2102
        %v3124 = vpop.f32.mrf.mxu0
        %v3125 = vadd.f32 %v3076, %v3124
        %v3126 = vpop.f32.mrf.mxu0
        %v3127 = vadd.f32 %v3078, %v3126
        %3128 = vmatmul.bf16.gmra.mxu0 %v2105
        %v3129 = vpop.f32.mrf.mxu0
        %v3130 = vadd.f32 %v3081, %v3129
        %v3131 = vpop.f32.mrf.mxu0
        %v3132 = vadd.f32 %v3083, %v3131
        %3133 = vmatmul.bf16.gmra.mxu0 %v2108
        %v3134 = vpop.f32.mrf.mxu0
        %v3135 = vadd.f32 %v3086, %v3134
        %v3136 = vpop.f32.mrf.mxu0
        %v3137 = vadd.f32 %v3088, %v3136
        %3138 = vdwg.mxu0
        %3139 = vmatpush.bf16.msra.mxu0 %v1724
        %3140 = vmatpush.bf16.msra.mxu0 %v1720
        %3141 = vmatpush.bf16.msra.mxu0 %v1716
        %3142 = vmatpush.bf16.msra.mxu0 %v1712
        %3143 = vmatpush.bf16.msra.mxu0 %v1708
        %3144 = vmatpush.bf16.msra.mxu0 %v1704
        %3145 = vmatpush.bf16.msra.mxu0 %v1700
        %3146 = vmatpush.bf16.msra.mxu0 %v1696
        %3147 = vmatmul.bf16.gmra.mxu0 %v1001
        %v3148 = vpop.f32.mrf.mxu0
        %v3149 = vadd.f32 %v820, %v3148
        %v3150 = vpop.f32.mrf.mxu0
        %v3151 = vadd.f32 %v820, %v3150
        %3152 = vmatmul.bf16.gmra.mxu0 %v1008
        %v3153 = vpop.f32.mrf.mxu0
        %v3154 = vadd.f32 %v820, %v3153
        %v3155 = vpop.f32.mrf.mxu0
        %v3156 = vadd.f32 %v820, %v3155
        %3157 = vmatmul.bf16.gmra.mxu0 %v1015
        %v3158 = vpop.f32.mrf.mxu0
        %v3159 = vadd.f32 %v820, %v3158
        %v3160 = vpop.f32.mrf.mxu0
        %v3161 = vadd.f32 %v820, %v3160
        %3162 = vmatmul.bf16.gmra.mxu0 %v1022
        %v3163 = vpop.f32.mrf.mxu0
        %v3164 = vadd.f32 %v820, %v3163
        %v3165 = vpop.f32.mrf.mxu0
        %v3166 = vadd.f32 %v820, %v3165
        %3167 = vmatmul.bf16.gmra.mxu0 %v1029
        %v3168 = vpop.f32.mrf.mxu0
        %v3169 = vadd.f32 %v820, %v3168
        %v3170 = vpop.f32.mrf.mxu0
        %v3171 = vadd.f32 %v820, %v3170
        %3172 = vmatmul.bf16.gmra.mxu0 %v1036
        %v3173 = vpop.f32.mrf.mxu0
        %v3174 = vadd.f32 %v820, %v3173
        %v3175 = vpop.f32.mrf.mxu0
        %v3176 = vadd.f32 %v820, %v3175
        %3177 = vmatmul.bf16.gmra.mxu0 %v1043
        %v3178 = vpop.f32.mrf.mxu0
        %v3179 = vadd.f32 %v820, %v3178
        %v3180 = vpop.f32.mrf.mxu0
        %v3181 = vadd.f32 %v820, %v3180
        %3182 = vmatmul.bf16.gmra.mxu0 %v1050
        %v3183 = vpop.f32.mrf.mxu0
        %v3184 = vadd.f32 %v820, %v3183
        %v3185 = vpop.f32.mrf.mxu0
        %v3186 = vadd.f32 %v820, %v3185
        %3187 = vdwg.mxu0
        %3188 = vmatpush.bf16.msra.mxu0 %v1756
        %3189 = vmatpush.bf16.msra.mxu0 %v1752
        %3190 = vmatpush.bf16.msra.mxu0 %v1748
        %3191 = vmatpush.bf16.msra.mxu0 %v1744
        %3192 = vmatpush.bf16.msra.mxu0 %v1740
        %3193 = vmatpush.bf16.msra.mxu0 %v1736
        %3194 = vmatpush.bf16.msra.mxu0 %v1732
        %3195 = vmatpush.bf16.msra.mxu0 %v1728
        %3196 = vmatmul.bf16.gmra.mxu0 %v1002
        %v3197 = vpop.f32.mrf.mxu0
        %v3198 = vadd.f32 %v3149, %v3197
        %v3199 = vpop.f32.mrf.mxu0
        %v3200 = vadd.f32 %v3151, %v3199
        %3201 = vmatmul.bf16.gmra.mxu0 %v1009
        %v3202 = vpop.f32.mrf.mxu0
        %v3203 = vadd.f32 %v3154, %v3202
        %v3204 = vpop.f32.mrf.mxu0
        %v3205 = vadd.f32 %v3156, %v3204
        %3206 = vmatmul.bf16.gmra.mxu0 %v1016
        %v3207 = vpop.f32.mrf.mxu0
        %v3208 = vadd.f32 %v3159, %v3207
        %v3209 = vpop.f32.mrf.mxu0
        %v3210 = vadd.f32 %v3161, %v3209
        %3211 = vmatmul.bf16.gmra.mxu0 %v1023
        %v3212 = vpop.f32.mrf.mxu0
        %v3213 = vadd.f32 %v3164, %v3212
        %v3214 = vpop.f32.mrf.mxu0
        %v3215 = vadd.f32 %v3166, %v3214
        %3216 = vmatmul.bf16.gmra.mxu0 %v1030
        %v3217 = vpop.f32.mrf.mxu0
        %v3218 = vadd.f32 %v3169, %v3217
        %v3219 = vpop.f32.mrf.mxu0
        %v3220 = vadd.f32 %v3171, %v3219
        %3221 = vmatmul.bf16.gmra.mxu0 %v1037
        %v3222 = vpop.f32.mrf.mxu0
        %v3223 = vadd.f32 %v3174, %v3222
        %v3224 = vpop.f32.mrf.mxu0
        %v3225 = vadd.f32 %v3176, %v3224
        %3226 = vmatmul.bf16.gmra.mxu0 %v1044
        %v3227 = vpop.f32.mrf.mxu0
        %v3228 = vadd.f32 %v3179, %v3227
        %v3229 = vpop.f32.mrf.mxu0
        %v3230 = vadd.f32 %v3181, %v3229
        %3231 = vmatmul.bf16.gmra.mxu0 %v1051
        %v3232 = vpop.f32.mrf.mxu0
        %v3233 = vadd.f32 %v3184, %v3232
        %v3234 = vpop.f32.mrf.mxu0
        %v3235 = vadd.f32 %v3186, %v3234
        %3236 = vdwg.mxu0
        %3237 = vmatpush.bf16.msra.mxu0 %v1788
        %3238 = vmatpush.bf16.msra.mxu0 %v1784
        %3239 = vmatpush.bf16.msra.mxu0 %v1780
        %3240 = vmatpush.bf16.msra.mxu0 %v1776
        %3241 = vmatpush.bf16.msra.mxu0 %v1772
        %3242 = vmatpush.bf16.msra.mxu0 %v1768
        %3243 = vmatpush.bf16.msra.mxu0 %v1764
        %3244 = vmatpush.bf16.msra.mxu0 %v1760
        %3245 = vmatmul.bf16.gmra.mxu0 %v1003
        %v3246 = vpop.f32.mrf.mxu0
        %v3247 = vadd.f32 %v3198, %v3246
        %v3248 = vpop.f32.mrf.mxu0
        %v3249 = vadd.f32 %v3200, %v3248
        %3250 = vmatmul.bf16.gmra.mxu0 %v1010
        %v3251 = vpop.f32.mrf.mxu0
        %v3252 = vadd.f32 %v3203, %v3251
        %v3253 = vpop.f32.mrf.mxu0
        %v3254 = vadd.f32 %v3205, %v3253
        %3255 = vmatmul.bf16.gmra.mxu0 %v1017
        %v3256 = vpop.f32.mrf.mxu0
        %v3257 = vadd.f32 %v3208, %v3256
        %v3258 = vpop.f32.mrf.mxu0
        %v3259 = vadd.f32 %v3210, %v3258
        %3260 = vmatmul.bf16.gmra.mxu0 %v1024
        %v3261 = vpop.f32.mrf.mxu0
        %v3262 = vadd.f32 %v3213, %v3261
        %v3263 = vpop.f32.mrf.mxu0
        %v3264 = vadd.f32 %v3215, %v3263
        %3265 = vmatmul.bf16.gmra.mxu0 %v1031
        %v3266 = vpop.f32.mrf.mxu0
        %v3267 = vadd.f32 %v3218, %v3266
        %v3268 = vpop.f32.mrf.mxu0
        %v3269 = vadd.f32 %v3220, %v3268
        %3270 = vmatmul.bf16.gmra.mxu0 %v1038
        %v3271 = vpop.f32.mrf.mxu0
        %v3272 = vadd.f32 %v3223, %v3271
        %v3273 = vpop.f32.mrf.mxu0
        %v3274 = vadd.f32 %v3225, %v3273
        %3275 = vmatmul.bf16.gmra.mxu0 %v1045
        %v3276 = vpop.f32.mrf.mxu0
        %v3277 = vadd.f32 %v3228, %v3276
        %v3278 = vpop.f32.mrf.mxu0
        %v3279 = vadd.f32 %v3230, %v3278
        %3280 = vmatmul.bf16.gmra.mxu0 %v1052
        %v3281 = vpop.f32.mrf.mxu0
        %v3282 = vadd.f32 %v3233, %v3281
        %v3283 = vpop.f32.mrf.mxu0
        %v3284 = vadd.f32 %v3235, %v3283
        %3285 = vdwg.mxu0
        %3286 = vmatpush.bf16.msra.mxu0 %v1820
        %3287 = vmatpush.bf16.msra.mxu0 %v1816
        %3288 = vmatpush.bf16.msra.mxu0 %v1812
        %3289 = vmatpush.bf16.msra.mxu0 %v1808
        %3290 = vmatpush.bf16.msra.mxu0 %v1804
        %3291 = vmatpush.bf16.msra.mxu0 %v1800
        %3292 = vmatpush.bf16.msra.mxu0 %v1796
        %3293 = vmatpush.bf16.msra.mxu0 %v1792
        %3294 = vmatmul.bf16.gmra.mxu0 %v1004
        %v3295 = vpop.f32.mrf.mxu0
        %v3296 = vadd.f32 %v3247, %v3295
        %v3297 = vpop.f32.mrf.mxu0
        %v3298 = vadd.f32 %v3249, %v3297
        %3299 = vmatmul.bf16.gmra.mxu0 %v1011
        %v3300 = vpop.f32.mrf.mxu0
        %v3301 = vadd.f32 %v3252, %v3300
        %v3302 = vpop.f32.mrf.mxu0
        %v3303 = vadd.f32 %v3254, %v3302
        %3304 = vmatmul.bf16.gmra.mxu0 %v1018
        %v3305 = vpop.f32.mrf.mxu0
        %v3306 = vadd.f32 %v3257, %v3305
        %v3307 = vpop.f32.mrf.mxu0
        %v3308 = vadd.f32 %v3259, %v3307
        %3309 = vmatmul.bf16.gmra.mxu0 %v1025
        %v3310 = vpop.f32.mrf.mxu0
        %v3311 = vadd.f32 %v3262, %v3310
        %v3312 = vpop.f32.mrf.mxu0
        %v3313 = vadd.f32 %v3264, %v3312
        %3314 = vmatmul.bf16.gmra.mxu0 %v1032
        %v3315 = vpop.f32.mrf.mxu0
        %v3316 = vadd.f32 %v3267, %v3315
        %v3317 = vpop.f32.mrf.mxu0
        %v3318 = vadd.f32 %v3269, %v3317
        %3319 = vmatmul.bf16.gmra.mxu0 %v1039
        %v3320 = vpop.f32.mrf.mxu0
        %v3321 = vadd.f32 %v3272, %v3320
        %v3322 = vpop.f32.mrf.mxu0
        %v3323 = vadd.f32 %v3274, %v3322
        %3324 = vmatmul.bf16.gmra.mxu0 %v1046
        %v3325 = vpop.f32.mrf.mxu0
        %v3326 = vadd.f32 %v3277, %v3325
        %v3327 = vpop.f32.mrf.mxu0
        %v3328 = vadd.f32 %v3279, %v3327
        %3329 = vmatmul.bf16.gmra.mxu0 %v1053
        %v3330 = vpop.f32.mrf.mxu0
        %v3331 = vadd.f32 %v3282, %v3330
        %v3332 = vpop.f32.mrf.mxu0
        %v3333 = vadd.f32 %v3284, %v3332
        %3334 = vdwg.mxu0
        %3335 = vmatpush.bf16.msra.mxu0 %v1852
        %3336 = vmatpush.bf16.msra.mxu0 %v1848
        %3337 = vmatpush.bf16.msra.mxu0 %v1844
        %3338 = vmatpush.bf16.msra.mxu0 %v1840
        %3339 = vmatpush.bf16.msra.mxu0 %v1836
        %3340 = vmatpush.bf16.msra.mxu0 %v1832
        %3341 = vmatpush.bf16.msra.mxu0 %v1828
        %3342 = vmatpush.bf16.msra.mxu0 %v1824
        %3343 = vmatmul.bf16.gmra.mxu0 %v1005
        %v3344 = vpop.f32.mrf.mxu0
        %v3345 = vadd.f32 %v3296, %v3344
        %v3346 = vpop.f32.mrf.mxu0
        %v3347 = vadd.f32 %v3298, %v3346
        %3348 = vmatmul.bf16.gmra.mxu0 %v1012
        %v3349 = vpop.f32.mrf.mxu0
        %v3350 = vadd.f32 %v3301, %v3349
        %v3351 = vpop.f32.mrf.mxu0
        %v3352 = vadd.f32 %v3303, %v3351
        %3353 = vmatmul.bf16.gmra.mxu0 %v1019
        %v3354 = vpop.f32.mrf.mxu0
        %v3355 = vadd.f32 %v3306, %v3354
        %v3356 = vpop.f32.mrf.mxu0
        %v3357 = vadd.f32 %v3308, %v3356
        %3358 = vmatmul.bf16.gmra.mxu0 %v1026
        %v3359 = vpop.f32.mrf.mxu0
        %v3360 = vadd.f32 %v3311, %v3359
        %v3361 = vpop.f32.mrf.mxu0
        %v3362 = vadd.f32 %v3313, %v3361
        %3363 = vmatmul.bf16.gmra.mxu0 %v1033
        %v3364 = vpop.f32.mrf.mxu0
        %v3365 = vadd.f32 %v3316, %v3364
        %v3366 = vpop.f32.mrf.mxu0
        %v3367 = vadd.f32 %v3318, %v3366
        %3368 = vmatmul.bf16.gmra.mxu0 %v1040
        %v3369 = vpop.f32.mrf.mxu0
        %v3370 = vadd.f32 %v3321, %v3369
        %v3371 = vpop.f32.mrf.mxu0
        %v3372 = vadd.f32 %v3323, %v3371
        %3373 = vmatmul.bf16.gmra.mxu0 %v1047
        %v3374 = vpop.f32.mrf.mxu0
        %v3375 = vadd.f32 %v3326, %v3374
        %v3376 = vpop.f32.mrf.mxu0
        %v3377 = vadd.f32 %v3328, %v3376
        %3378 = vmatmul.bf16.gmra.mxu0 %v1054
        %v3379 = vpop.f32.mrf.mxu0
        %v3380 = vadd.f32 %v3331, %v3379
        %v3381 = vpop.f32.mrf.mxu0
        %v3382 = vadd.f32 %v3333, %v3381
        %3383 = vdwg.mxu0
        %3384 = vmatpush.bf16.msra.mxu0 %v1884
        %3385 = vmatpush.bf16.msra.mxu0 %v1880
        %3386 = vmatpush.bf16.msra.mxu0 %v1876
        %3387 = vmatpush.bf16.msra.mxu0 %v1872
        %3388 = vmatpush.bf16.msra.mxu0 %v1868
        %3389 = vmatpush.bf16.msra.mxu0 %v1864
        %3390 = vmatpush.bf16.msra.mxu0 %v1860
        %3391 = vmatpush.bf16.msra.mxu0 %v1856
        %3392 = vmatmul.bf16.gmra.mxu0 %v1006
        %v3393 = vpop.f32.mrf.mxu0
        %v3394 = vadd.f32 %v3345, %v3393
        %v3395 = vpop.f32.mrf.mxu0
        %v3396 = vadd.f32 %v3347, %v3395
        %3397 = vmatmul.bf16.gmra.mxu0 %v1013
        %v3398 = vpop.f32.mrf.mxu0
        %v3399 = vadd.f32 %v3350, %v3398
        %v3400 = vpop.f32.mrf.mxu0
        %v3401 = vadd.f32 %v3352, %v3400
        %3402 = vmatmul.bf16.gmra.mxu0 %v1020
        %v3403 = vpop.f32.mrf.mxu0
        %v3404 = vadd.f32 %v3355, %v3403
        %v3405 = vpop.f32.mrf.mxu0
        %v3406 = vadd.f32 %v3357, %v3405
        %3407 = vmatmul.bf16.gmra.mxu0 %v1027
        %v3408 = vpop.f32.mrf.mxu0
        %v3409 = vadd.f32 %v3360, %v3408
        %v3410 = vpop.f32.mrf.mxu0
        %v3411 = vadd.f32 %v3362, %v3410
        %3412 = vmatmul.bf16.gmra.mxu0 %v1034
        %v3413 = vpop.f32.mrf.mxu0
        %v3414 = vadd.f32 %v3365, %v3413
        %v3415 = vpop.f32.mrf.mxu0
        %v3416 = vadd.f32 %v3367, %v3415
        %3417 = vmatmul.bf16.gmra.mxu0 %v1041
        %v3418 = vpop.f32.mrf.mxu0
        %v3419 = vadd.f32 %v3370, %v3418
        %v3420 = vpop.f32.mrf.mxu0
        %v3421 = vadd.f32 %v3372, %v3420
        %3422 = vmatmul.bf16.gmra.mxu0 %v1048
        %v3423 = vpop.f32.mrf.mxu0
        %v3424 = vadd.f32 %v3375, %v3423
        %v3425 = vpop.f32.mrf.mxu0
        %v3426 = vadd.f32 %v3377, %v3425
        %3427 = vmatmul.bf16.gmra.mxu0 %v1055
        %v3428 = vpop.f32.mrf.mxu0
        %v3429 = vadd.f32 %v3380, %v3428
        %v3430 = vpop.f32.mrf.mxu0
        %v3431 = vadd.f32 %v3382, %v3430
        %3432 = vdwg.mxu0
        %3433 = vmatpush.bf16.msra.mxu0 0
        %3434 = vmatpush.bf16.msra.mxu0 0
        %3435 = vmatpush.bf16.msra.mxu0 0
        %3436 = vmatpush.bf16.msra.mxu0 0
        %3437 = vmatpush.bf16.msra.mxu0 0
        %3438 = vmatpush.bf16.msra.mxu0 0
        %3439 = vmatpush.bf16.msra.mxu0 0
        %3440 = vmatpush.bf16.msra.mxu0 %v1888
        %3441 = vmatmul.bf16.gmra.mxu0 %v2087
        %v3442 = vpop.f32.mrf.mxu0
        %v3443 = vadd.f32 %v3394, %v3442
        %v3444 = vpop.f32.mrf.mxu0
        %v3445 = vadd.f32 %v3396, %v3444
        %3446 = vmatmul.bf16.gmra.mxu0 %v2090
        %v3447 = vpop.f32.mrf.mxu0
        %v3448 = vadd.f32 %v3399, %v3447
        %v3449 = vpop.f32.mrf.mxu0
        %v3450 = vadd.f32 %v3401, %v3449
        %3451 = vmatmul.bf16.gmra.mxu0 %v2093
        %v3452 = vpop.f32.mrf.mxu0
        %v3453 = vadd.f32 %v3404, %v3452
        %v3454 = vpop.f32.mrf.mxu0
        %v3455 = vadd.f32 %v3406, %v3454
        %3456 = vmatmul.bf16.gmra.mxu0 %v2096
        %v3457 = vpop.f32.mrf.mxu0
        %v3458 = vadd.f32 %v3409, %v3457
        %v3459 = vpop.f32.mrf.mxu0
        %v3460 = vadd.f32 %v3411, %v3459
        %3461 = vmatmul.bf16.gmra.mxu0 %v2099
        %v3462 = vpop.f32.mrf.mxu0
        %v3463 = vadd.f32 %v3414, %v3462
        %v3464 = vpop.f32.mrf.mxu0
        %v3465 = vadd.f32 %v3416, %v3464
        %3466 = vmatmul.bf16.gmra.mxu0 %v2102
        %v3467 = vpop.f32.mrf.mxu0
        %v3468 = vadd.f32 %v3419, %v3467
        %v3469 = vpop.f32.mrf.mxu0
        %v3470 = vadd.f32 %v3421, %v3469
        %3471 = vmatmul.bf16.gmra.mxu0 %v2105
        %v3472 = vpop.f32.mrf.mxu0
        %v3473 = vadd.f32 %v3424, %v3472
        %v3474 = vpop.f32.mrf.mxu0
        %v3475 = vadd.f32 %v3426, %v3474
        %3476 = vmatmul.bf16.gmra.mxu0 %v2108
        %v3477 = vpop.f32.mrf.mxu0
        %v3478 = vadd.f32 %v3429, %v3477
        %v3479 = vpop.f32.mrf.mxu0
        %v3480 = vadd.f32 %v3431, %v3479
        %3481 = vdwg.mxu0
        %v3482 = vmax.f32 %v2414, 0.0
        %v3483 = vmax.f32 %v2757, 0.0
        %v3484 = vmax.f32 %v3100, 0.0
        %v3485 = vmax.f32 %v3443, 0.0
        %v3486 = vmax.f32 %v2416, 0.0
        %v3487 = vmax.f32 %v2759, 0.0
        %v3488 = vmax.f32 %v3102, 0.0
        %v3489 = vmax.f32 %v3445, 0.0
        %v3490 = vmax.f32 %v2419, 0.0
        %v3491 = vmax.f32 %v2762, 0.0
        %v3492 = vmax.f32 %v3105, 0.0
        %v3493 = vmax.f32 %v3448, 0.0
        %v3494 = vmax.f32 %v2421, 0.0
        %v3495 = vmax.f32 %v2764, 0.0
        %v3496 = vmax.f32 %v3107, 0.0
        %v3497 = vmax.f32 %v3450, 0.0
        %v3498 = vmax.f32 %v2424, 0.0
        %v3499 = vmax.f32 %v2767, 0.0
        %v3500 = vmax.f32 %v3110, 0.0
        %v3501 = vmax.f32 %v3453, 0.0
        %v3502 = vmax.f32 %v2426, 0.0
        %v3503 = vmax.f32 %v2769, 0.0
        %v3504 = vmax.f32 %v3112, 0.0
        %v3505 = vmax.f32 %v3455, 0.0
        %v3506 = vmax.f32 %v2429, 0.0
        %v3507 = vmax.f32 %v2772, 0.0
        %v3508 = vmax.f32 %v3115, 0.0
        %v3509 = vmax.f32 %v3458, 0.0
        %v3510 = vmax.f32 %v2431, 0.0
        %v3511 = vmax.f32 %v2774, 0.0
        %v3512 = vmax.f32 %v3117, 0.0
        %v3513 = vmax.f32 %v3460, 0.0
        %v3514 = vmax.f32 %v2434, 0.0
        %v3515 = vmax.f32 %v2777, 0.0
        %v3516 = vmax.f32 %v3120, 0.0
        %v3517 = vmax.f32 %v3463, 0.0
        %v3518 = vmax.f32 %v2436, 0.0
        %v3519 = vmax.f32 %v2779, 0.0
        %v3520 = vmax.f32 %v3122, 0.0
        %v3521 = vmax.f32 %v3465, 0.0
        %v3522 = vmax.f32 %v2439, 0.0
        %v3523 = vmax.f32 %v2782, 0.0
        %v3524 = vmax.f32 %v3125, 0.0
        %v3525 = vmax.f32 %v3468, 0.0
        %v3526 = vmax.f32 %v2441, 0.0
        %v3527 = vmax.f32 %v2784, 0.0
        %v3528 = vmax.f32 %v3127, 0.0
        %v3529 = vmax.f32 %v3470, 0.0
        %v3530 = vmax.f32 %v2444, 0.0
        %v3531 = vmax.f32 %v2787, 0.0
        %v3532 = vmax.f32 %v3130, 0.0
        %v3533 = vmax.f32 %v3473, 0.0
        %v3534 = vmax.f32 %v2446, 0.0
        %v3535 = vmax.f32 %v2789, 0.0
        %v3536 = vmax.f32 %v3132, 0.0
        %v3537 = vmax.f32 %v3475, 0.0
        %v3538 = vmax.f32 %v2449, 0.0
        %v3539 = vmax.f32 %v2792, 0.0
        %v3540 = vmax.f32 %v3135, 0.0
        %v3541 = vmax.f32 %v3478, 0.0
        %v3542 = vmax.f32 %v2451, 0.0
        %v3543 = vmax.f32 %v2794, 0.0
        %v3544 = vmax.f32 %v3137, 0.0
        %v3545 = vmax.f32 %v3480, 0.0
        %v3546 = vld [vmem:[%s4] sm:$0xff]
        %v3547 = vld [vmem:[%s4 + $0x8] sm:$0xff]
        %v3548 = vld [vmem:[%s4 + $0x10] sm:$0xff]
        %v3549 = vld [vmem:[%s4 + $0x18] sm:$0xff]
        %v3550 = vld [vmem:[%s4 + $0x20] sm:$0xff]
        %v3551 = vld [vmem:[%s4 + $0x28] sm:$0xff]
        %v3552 = vld [vmem:[%s4 + $0x30] sm:$0xff]
        %v3553 = vld [vmem:[%s4 + $0x38] sm:$0xff]
        %v3554 = vld [vmem:[%s4 + $0x40] sm:$0xff]
        %v3555 = vld [vmem:[%s4 + $0x48] sm:$0xff]
        %v3556 = vld [vmem:[%s4 + $0x50] sm:$0xff]
        %v3557 = vld [vmem:[%s4 + $0x58] sm:$0xff]
        %v3558 = vld [vmem:[%s4 + $0x60] sm:$0xff]
        %v3559 = vld [vmem:[%s4 + $0x68] sm:$0xff]
        %v3560 = vld [vmem:[%s4 + $0x70] sm:$0xff]
        %v3561 = vld [vmem:[%s4 + $0x78] sm:$0xff]
        %v3562 = vld [vmem:[%s4 + $0x80] sm:$0xff]
        %v3563 = vld [vmem:[%s4 + $0x88] sm:$0xff]
        %v3564 = vld [vmem:[%s4 + $0x90] sm:$0xff]
        %v3565 = vld [vmem:[%s4 + $0x98] sm:$0xff]
        %v3566 = vld [vmem:[%s4 + $0xa0] sm:$0xff]
        %v3567 = vld [vmem:[%s4 + $0xa8] sm:$0xff]
        %v3568 = vld [vmem:[%s4 + $0xb0] sm:$0xff]
        %v3569 = vld [vmem:[%s4 + $0xb8] sm:$0xff]
        %v3570 = vld [vmem:[%s4 + $0xc0] sm:$0xff]
        %v3571 = vld [vmem:[%s4 + $0xc8] sm:$0xff]
        %v3572 = vld [vmem:[%s4 + $0xd0] sm:$0xff]
        %v3573 = vld [vmem:[%s4 + $0xd8] sm:$0xff]
        %v3574 = vld [vmem:[%s4 + $0xe0] sm:$0xff]
        %v3575 = vld [vmem:[%s4 + $0xe8] sm:$0xff]
        %v3576 = vld [vmem:[%s4 + $0xf0] sm:$0xff]
        %v3577 = vld [vmem:[%s4 + $0xf8] sm:$0xff]
        %v3578 = vld [vmem:[%s4 + $0x100] sm:$0xff]
        %v3579 = vld [vmem:[%s4 + $0x108] sm:$0xff]
        %v3580 = vld [vmem:[%s4 + $0x110] sm:$0xff]
        %v3581 = vld [vmem:[%s4 + $0x118] sm:$0xff]
        %v3582 = vld [vmem:[%s4 + $0x120] sm:$0xff]
        %v3583 = vld [vmem:[%s4 + $0x128] sm:$0xff]
        %v3584 = vld [vmem:[%s4 + $0x130] sm:$0xff]
        %v3585 = vld [vmem:[%s4 + $0x138] sm:$0xff]
        %v3586 = vld [vmem:[%s4 + $0x140] sm:$0xff]
        %v3587 = vld [vmem:[%s4 + $0x148] sm:$0xff]
        %v3588 = vld [vmem:[%s4 + $0x150] sm:$0xff]
        %v3589 = vld [vmem:[%s4 + $0x158] sm:$0xff]
        %v3590 = vld [vmem:[%s4 + $0x160] sm:$0xff]
        %v3591 = vld [vmem:[%s4 + $0x168] sm:$0xff]
        %v3592 = vld [vmem:[%s4 + $0x170] sm:$0xff]
        %v3593 = vld [vmem:[%s4 + $0x178] sm:$0xff]
        %v3594 = vld [vmem:[%s4 + $0x180] sm:$0xff]
        %v3595 = vld [vmem:[%s4 + $0x188] sm:$0xff]
        %v3596 = vld [vmem:[%s4 + $0x190] sm:$0xff]
        %v3597 = vld [vmem:[%s4 + $0x198] sm:$0xff]
        %v3598 = vld [vmem:[%s4 + $0x1a0] sm:$0xff]
        %v3599 = vld [vmem:[%s4 + $0x1a8] sm:$0xff]
        %v3600 = vld [vmem:[%s4 + $0x1b0] sm:$0xff]
        %v3601 = vld [vmem:[%s4 + $0x1b8] sm:$0xff]
        %v3602 = vld [vmem:[%s4 + $0x1c0] sm:$0xff]
        %v3603 = vld [vmem:[%s4 + $0x1c8] sm:$0xff]
        %v3604 = vld [vmem:[%s4 + $0x1d0] sm:$0xff]
        %v3605 = vld [vmem:[%s4 + $0x1d8] sm:$0xff]
        %v3606 = vld [vmem:[%s4 + $0x1e0] sm:$0xff]
        %v3607 = vld [vmem:[%s4 + $0x1e8] sm:$0xff]
        %v3608 = vld [vmem:[%s4 + $0x1f0] sm:$0xff]
        %v3609 = vld [vmem:[%s4 + $0x1f8] sm:$0xff]
        %v3610 = vpack.c.bf16 %v3486, %v3482
        %v3611 = vpack.c.bf16 %v3487, %v3483
        %v3612 = vpack.c.bf16 %v3488, %v3484
        %v3613 = vpack.c.bf16 %v3489, %v3485
        %v3614 = vpack.c.bf16 %v3494, %v3490
        %v3615 = vpack.c.bf16 %v3495, %v3491
        %v3616 = vpack.c.bf16 %v3496, %v3492
        %v3617 = vpack.c.bf16 %v3497, %v3493
        %v3618 = vpack.c.bf16 %v3502, %v3498
        %v3619 = vpack.c.bf16 %v3503, %v3499
        %v3620 = vpack.c.bf16 %v3504, %v3500
        %v3621 = vpack.c.bf16 %v3505, %v3501
        %v3622 = vpack.c.bf16 %v3510, %v3506
        %v3623 = vpack.c.bf16 %v3511, %v3507
        %v3624 = vpack.c.bf16 %v3512, %v3508
        %v3625 = vpack.c.bf16 %v3513, %v3509
        %v3626 = vpack.c.bf16 %v3518, %v3514
        %v3627 = vpack.c.bf16 %v3519, %v3515
        %v3628 = vpack.c.bf16 %v3520, %v3516
        %v3629 = vpack.c.bf16 %v3521, %v3517
        %v3630 = vpack.c.bf16 %v3526, %v3522
        %v3631 = vpack.c.bf16 %v3527, %v3523
        %v3632 = vpack.c.bf16 %v3528, %v3524
        %v3633 = vpack.c.bf16 %v3529, %v3525
        %v3634 = vpack.c.bf16 %v3534, %v3530
        %v3635 = vpack.c.bf16 %v3535, %v3531
        %v3636 = vpack.c.bf16 %v3536, %v3532
        %v3637 = vpack.c.bf16 %v3537, %v3533
        %v3638 = vpack.c.bf16 %v3542, %v3538
        %v3639 = vpack.c.bf16 %v3543, %v3539
        %v3640 = vpack.c.bf16 %v3544, %v3540
        %v3641 = vpack.c.bf16 %v3545, %v3541
        %v3642 = vld [vmem:[%s5] sm:$0x3]
        %v3644 = vperm.slane %v3642, 0
        %v3645 = vperm.slane %v3642, 1
        %v3712 = vunpack.c.l.b16 %v3546
        %v3713 = vunpack.c.h.b16 %v3546
        %v3714 = vunpack.c.l.b16 %v3547
        %v3715 = vunpack.c.h.b16 %v3547
        %v3716 = vunpack.c.l.b16 %v3548
        %v3717 = vunpack.c.h.b16 %v3548
        %v3718 = vunpack.c.l.b16 %v3549
        %v3719 = vunpack.c.h.b16 %v3549
        %v3720 = vunpack.c.l.b16 %v3550
        %v3721 = vunpack.c.h.b16 %v3550
        %v3722 = vunpack.c.l.b16 %v3551
        %v3723 = vunpack.c.h.b16 %v3551
        %v3724 = vunpack.c.l.b16 %v3552
        %v3725 = vunpack.c.h.b16 %v3552
        %v3726 = vunpack.c.l.b16 %v3553
        %v3727 = vunpack.c.h.b16 %v3553
        %v3728 = vunpack.c.l.b16 %v3554
        %v3729 = vunpack.c.h.b16 %v3554
        %v3730 = vunpack.c.l.b16 %v3555
        %v3731 = vunpack.c.h.b16 %v3555
        %v3732 = vunpack.c.l.b16 %v3556
        %v3733 = vunpack.c.h.b16 %v3556
        %v3734 = vunpack.c.l.b16 %v3557
        %v3735 = vunpack.c.h.b16 %v3557
        %v3736 = vunpack.c.l.b16 %v3558
        %v3737 = vunpack.c.h.b16 %v3558
        %v3738 = vunpack.c.l.b16 %v3559
        %v3739 = vunpack.c.h.b16 %v3559
        %v3740 = vunpack.c.l.b16 %v3560
        %v3741 = vunpack.c.h.b16 %v3560
        %v3742 = vunpack.c.l.b16 %v3561
        %v3743 = vunpack.c.h.b16 %v3561
        %v3744 = vunpack.c.l.b16 %v3562
        %v3745 = vunpack.c.h.b16 %v3562
        %v3746 = vunpack.c.l.b16 %v3563
        %v3747 = vunpack.c.h.b16 %v3563
        %v3748 = vunpack.c.l.b16 %v3564
        %v3749 = vunpack.c.h.b16 %v3564
        %v3750 = vunpack.c.l.b16 %v3565
        %v3751 = vunpack.c.h.b16 %v3565
        %v3752 = vunpack.c.l.b16 %v3566
        %v3753 = vunpack.c.h.b16 %v3566
        %v3754 = vunpack.c.l.b16 %v3567
        %v3755 = vunpack.c.h.b16 %v3567
        %v3756 = vunpack.c.l.b16 %v3568
        %v3757 = vunpack.c.h.b16 %v3568
        %v3758 = vunpack.c.l.b16 %v3569
        %v3759 = vunpack.c.h.b16 %v3569
        %v3760 = vunpack.c.l.b16 %v3570
        %v3761 = vunpack.c.h.b16 %v3570
        %v3762 = vunpack.c.l.b16 %v3571
        %v3763 = vunpack.c.h.b16 %v3571
        %v3764 = vunpack.c.l.b16 %v3572
        %v3765 = vunpack.c.h.b16 %v3572
        %v3766 = vunpack.c.l.b16 %v3573
        %v3767 = vunpack.c.h.b16 %v3573
        %v3768 = vunpack.c.l.b16 %v3574
        %v3769 = vunpack.c.h.b16 %v3574
        %v3770 = vunpack.c.l.b16 %v3575
        %v3771 = vunpack.c.h.b16 %v3575
        %v3772 = vunpack.c.l.b16 %v3576
        %v3773 = vunpack.c.h.b16 %v3576
        %v3774 = vunpack.c.l.b16 %v3577
        %v3775 = vunpack.c.h.b16 %v3577
        %v3776 = vunpack.c.l.b16 %v3578
        %v3777 = vunpack.c.h.b16 %v3578
        %v3778 = vunpack.c.l.b16 %v3579
        %v3779 = vunpack.c.h.b16 %v3579
        %v3780 = vunpack.c.l.b16 %v3580
        %v3781 = vunpack.c.h.b16 %v3580
        %v3782 = vunpack.c.l.b16 %v3581
        %v3783 = vunpack.c.h.b16 %v3581
        %v3784 = vunpack.c.l.b16 %v3582
        %v3785 = vunpack.c.h.b16 %v3582
        %v3786 = vunpack.c.l.b16 %v3583
        %v3787 = vunpack.c.h.b16 %v3583
        %v3788 = vunpack.c.l.b16 %v3584
        %v3789 = vunpack.c.h.b16 %v3584
        %v3790 = vunpack.c.l.b16 %v3585
        %v3791 = vunpack.c.h.b16 %v3585
        %v3792 = vunpack.c.l.b16 %v3586
        %v3793 = vunpack.c.h.b16 %v3586
        %v3794 = vunpack.c.l.b16 %v3587
        %v3795 = vunpack.c.h.b16 %v3587
        %v3796 = vunpack.c.l.b16 %v3588
        %v3797 = vunpack.c.h.b16 %v3588
        %v3798 = vunpack.c.l.b16 %v3589
        %v3799 = vunpack.c.h.b16 %v3589
        %v3800 = vunpack.c.l.b16 %v3590
        %v3801 = vunpack.c.h.b16 %v3590
        %v3802 = vunpack.c.l.b16 %v3591
        %v3803 = vunpack.c.h.b16 %v3591
        %v3804 = vunpack.c.l.b16 %v3592
        %v3805 = vunpack.c.h.b16 %v3592
        %v3806 = vunpack.c.l.b16 %v3593
        %v3807 = vunpack.c.h.b16 %v3593
        %v3808 = vunpack.c.l.b16 %v3594
        %v3809 = vunpack.c.h.b16 %v3594
        %v3810 = vunpack.c.l.b16 %v3595
        %v3811 = vunpack.c.h.b16 %v3595
        %v3812 = vunpack.c.l.b16 %v3596
        %v3813 = vunpack.c.h.b16 %v3596
        %v3814 = vunpack.c.l.b16 %v3597
        %v3815 = vunpack.c.h.b16 %v3597
        %v3816 = vunpack.c.l.b16 %v3598
        %v3817 = vunpack.c.h.b16 %v3598
        %v3818 = vunpack.c.l.b16 %v3599
        %v3819 = vunpack.c.h.b16 %v3599
        %v3820 = vunpack.c.l.b16 %v3600
        %v3821 = vunpack.c.h.b16 %v3600
        %v3822 = vunpack.c.l.b16 %v3601
        %v3823 = vunpack.c.h.b16 %v3601
        %v3824 = vunpack.c.l.b16 %v3602
        %v3825 = vunpack.c.h.b16 %v3602
        %v3826 = vunpack.c.l.b16 %v3603
        %v3827 = vunpack.c.h.b16 %v3603
        %v3828 = vunpack.c.l.b16 %v3604
        %v3829 = vunpack.c.h.b16 %v3604
        %v3830 = vunpack.c.l.b16 %v3605
        %v3831 = vunpack.c.h.b16 %v3605
        %v3832 = vunpack.c.l.b16 %v3606
        %v3833 = vunpack.c.h.b16 %v3606
        %v3834 = vunpack.c.l.b16 %v3607
        %v3835 = vunpack.c.h.b16 %v3607
        %v3836 = vunpack.c.l.b16 %v3608
        %v3837 = vunpack.c.h.b16 %v3608
        %v3838 = vunpack.c.l.b16 %v3609
        %v3839 = vunpack.c.h.b16 %v3609
        %v3840 = vpack.c.b16 %v3714, %v3712
        %v3841 = vpack.c.b16 %v3715, %v3713
        %v3842 = vpack.c.b16 %v3718, %v3716
        %v3843 = vpack.c.b16 %v3719, %v3717
        %v3844 = vpack.c.b16 %v3722, %v3720
        %v3845 = vpack.c.b16 %v3723, %v3721
        %v3846 = vpack.c.b16 %v3726, %v3724
        %v3847 = vpack.c.b16 %v3727, %v3725
        %v3848 = vpack.c.b16 %v3730, %v3728
        %v3849 = vpack.c.b16 %v3731, %v3729
        %v3850 = vpack.c.b16 %v3734, %v3732
        %v3851 = vpack.c.b16 %v3735, %v3733
        %v3852 = vpack.c.b16 %v3738, %v3736
        %v3853 = vpack.c.b16 %v3739, %v3737
        %v3854 = vpack.c.b16 %v3742, %v3740
        %v3855 = vpack.c.b16 %v3743, %v3741
        %v3856 = vpack.c.b16 %v3746, %v3744
        %v3857 = vpack.c.b16 %v3747, %v3745
        %v3858 = vpack.c.b16 %v3750, %v3748
        %v3859 = vpack.c.b16 %v3751, %v3749
        %v3860 = vpack.c.b16 %v3754, %v3752
        %v3861 = vpack.c.b16 %v3755, %v3753
        %v3862 = vpack.c.b16 %v3758, %v3756
        %v3863 = vpack.c.b16 %v3759, %v3757
        %v3864 = vpack.c.b16 %v3762, %v3760
        %v3865 = vpack.c.b16 %v3763, %v3761
        %v3866 = vpack.c.b16 %v3766, %v3764
        %v3867 = vpack.c.b16 %v3767, %v3765
        %v3868 = vpack.c.b16 %v3770, %v3768
        %v3869 = vpack.c.b16 %v3771, %v3769
        %v3870 = vpack.c.b16 %v3774, %v3772
        %v3871 = vpack.c.b16 %v3775, %v3773
        %v3872 = vpack.c.b16 %v3778, %v3776
        %v3873 = vpack.c.b16 %v3779, %v3777
        %v3874 = vpack.c.b16 %v3782, %v3780
        %v3875 = vpack.c.b16 %v3783, %v3781
        %v3876 = vpack.c.b16 %v3786, %v3784
        %v3877 = vpack.c.b16 %v3787, %v3785
        %v3878 = vpack.c.b16 %v3790, %v3788
        %v3879 = vpack.c.b16 %v3791, %v3789
        %v3880 = vpack.c.b16 %v3794, %v3792
        %v3881 = vpack.c.b16 %v3795, %v3793
        %v3882 = vpack.c.b16 %v3798, %v3796
        %v3883 = vpack.c.b16 %v3799, %v3797
        %v3884 = vpack.c.b16 %v3802, %v3800
        %v3885 = vpack.c.b16 %v3803, %v3801
        %v3886 = vpack.c.b16 %v3806, %v3804
        %v3887 = vpack.c.b16 %v3807, %v3805
        %v3888 = vpack.c.b16 %v3810, %v3808
        %v3889 = vpack.c.b16 %v3811, %v3809
        %v3890 = vpack.c.b16 %v3814, %v3812
        %v3891 = vpack.c.b16 %v3815, %v3813
        %v3892 = vpack.c.b16 %v3818, %v3816
        %v3893 = vpack.c.b16 %v3819, %v3817
        %v3894 = vpack.c.b16 %v3822, %v3820
        %v3895 = vpack.c.b16 %v3823, %v3821
        %v3896 = vpack.c.b16 %v3826, %v3824
        %v3897 = vpack.c.b16 %v3827, %v3825
        %v3898 = vpack.c.b16 %v3830, %v3828
        %v3899 = vpack.c.b16 %v3831, %v3829
        %v3900 = vpack.c.b16 %v3834, %v3832
        %v3901 = vpack.c.b16 %v3835, %v3833
        %v3902 = vpack.c.b16 %v3838, %v3836
        %v3903 = vpack.c.b16 %v3839, %v3837
        %3968 = vmatpush.bf16.msra.mxu0 %v3854
        %3969 = vmatpush.bf16.msra.mxu0 %v3852
        %3970 = vmatpush.bf16.msra.mxu0 %v3850
        %3971 = vmatpush.bf16.msra.mxu0 %v3848
        %3972 = vmatpush.bf16.msra.mxu0 %v3846
        %3973 = vmatpush.bf16.msra.mxu0 %v3844
        %3974 = vmatpush.bf16.msra.mxu0 %v3842
        %3975 = vmatpush.bf16.msra.mxu0 %v3840
        %3976 = vmatmul.bf16.gmra.mxu0 %v3610
        %v3977 = vpop.f32.mrf.mxu0
        %v3978 = vadd.f32 %v3644, %v3977
        %v3979 = vpop.f32.mrf.mxu0
        %v3980 = vadd.f32 %v3644, %v3979
        %3981 = vmatmul.bf16.gmra.mxu0 %v3614
        %v3982 = vpop.f32.mrf.mxu0
        %v3983 = vadd.f32 %v3644, %v3982
        %v3984 = vpop.f32.mrf.mxu0
        %v3985 = vadd.f32 %v3644, %v3984
        %3986 = vmatmul.bf16.gmra.mxu0 %v3618
        %v3987 = vpop.f32.mrf.mxu0
        %v3988 = vadd.f32 %v3644, %v3987
        %v3989 = vpop.f32.mrf.mxu0
        %v3990 = vadd.f32 %v3644, %v3989
        %3991 = vmatmul.bf16.gmra.mxu0 %v3622
        %v3992 = vpop.f32.mrf.mxu0
        %v3993 = vadd.f32 %v3644, %v3992
        %v3994 = vpop.f32.mrf.mxu0
        %v3995 = vadd.f32 %v3644, %v3994
        %3996 = vmatmul.bf16.gmra.mxu0 %v3626
        %v3997 = vpop.f32.mrf.mxu0
        %v3998 = vadd.f32 %v3644, %v3997
        %v3999 = vpop.f32.mrf.mxu0
        %v4000 = vadd.f32 %v3644, %v3999
        %4001 = vmatmul.bf16.gmra.mxu0 %v3630
        %v4002 = vpop.f32.mrf.mxu0
        %v4003 = vadd.f32 %v3644, %v4002
        %v4004 = vpop.f32.mrf.mxu0
        %v4005 = vadd.f32 %v3644, %v4004
        %4006 = vmatmul.bf16.gmra.mxu0 %v3634
        %v4007 = vpop.f32.mrf.mxu0
        %v4008 = vadd.f32 %v3644, %v4007
        %v4009 = vpop.f32.mrf.mxu0
        %v4010 = vadd.f32 %v3644, %v4009
        %4011 = vmatmul.bf16.gmra.mxu0 %v3638
        %v4012 = vpop.f32.mrf.mxu0
        %v4013 = vadd.f32 %v3644, %v4012
        %v4014 = vpop.f32.mrf.mxu0
        %v4015 = vadd.f32 %v3644, %v4014
        %4016 = vdwg.mxu0
        %4017 = vmatpush.bf16.msra.mxu0 %v3870
        %4018 = vmatpush.bf16.msra.mxu0 %v3868
        %4019 = vmatpush.bf16.msra.mxu0 %v3866
        %4020 = vmatpush.bf16.msra.mxu0 %v3864
        %4021 = vmatpush.bf16.msra.mxu0 %v3862
        %4022 = vmatpush.bf16.msra.mxu0 %v3860
        %4023 = vmatpush.bf16.msra.mxu0 %v3858
        %4024 = vmatpush.bf16.msra.mxu0 %v3856
        %4025 = vmatmul.bf16.gmra.mxu0 %v3611
        %v4026 = vpop.f32.mrf.mxu0
        %v4027 = vadd.f32 %v3978, %v4026
        %v4028 = vpop.f32.mrf.mxu0
        %v4029 = vadd.f32 %v3980, %v4028
        %4030 = vmatmul.bf16.gmra.mxu0 %v3615
        %v4031 = vpop.f32.mrf.mxu0
        %v4032 = vadd.f32 %v3983, %v4031
        %v4033 = vpop.f32.mrf.mxu0
        %v4034 = vadd.f32 %v3985, %v4033
        %4035 = vmatmul.bf16.gmra.mxu0 %v3619
        %v4036 = vpop.f32.mrf.mxu0
        %v4037 = vadd.f32 %v3988, %v4036
        %v4038 = vpop.f32.mrf.mxu0
        %v4039 = vadd.f32 %v3990, %v4038
        %4040 = vmatmul.bf16.gmra.mxu0 %v3623
        %v4041 = vpop.f32.mrf.mxu0
        %v4042 = vadd.f32 %v3993, %v4041
        %v4043 = vpop.f32.mrf.mxu0
        %v4044 = vadd.f32 %v3995, %v4043
        %4045 = vmatmul.bf16.gmra.mxu0 %v3627
        %v4046 = vpop.f32.mrf.mxu0
        %v4047 = vadd.f32 %v3998, %v4046
        %v4048 = vpop.f32.mrf.mxu0
        %v4049 = vadd.f32 %v4000, %v4048
        %4050 = vmatmul.bf16.gmra.mxu0 %v3631
        %v4051 = vpop.f32.mrf.mxu0
        %v4052 = vadd.f32 %v4003, %v4051
        %v4053 = vpop.f32.mrf.mxu0
        %v4054 = vadd.f32 %v4005, %v4053
        %4055 = vmatmul.bf16.gmra.mxu0 %v3635
        %v4056 = vpop.f32.mrf.mxu0
        %v4057 = vadd.f32 %v4008, %v4056
        %v4058 = vpop.f32.mrf.mxu0
        %v4059 = vadd.f32 %v4010, %v4058
        %4060 = vmatmul.bf16.gmra.mxu0 %v3639
        %v4061 = vpop.f32.mrf.mxu0
        %v4062 = vadd.f32 %v4013, %v4061
        %v4063 = vpop.f32.mrf.mxu0
        %v4064 = vadd.f32 %v4015, %v4063
        %4065 = vdwg.mxu0
        %4066 = vmatpush.bf16.msra.mxu0 %v3886
        %4067 = vmatpush.bf16.msra.mxu0 %v3884
        %4068 = vmatpush.bf16.msra.mxu0 %v3882
        %4069 = vmatpush.bf16.msra.mxu0 %v3880
        %4070 = vmatpush.bf16.msra.mxu0 %v3878
        %4071 = vmatpush.bf16.msra.mxu0 %v3876
        %4072 = vmatpush.bf16.msra.mxu0 %v3874
        %4073 = vmatpush.bf16.msra.mxu0 %v3872
        %4074 = vmatmul.bf16.gmra.mxu0 %v3612
        %v4075 = vpop.f32.mrf.mxu0
        %v4076 = vadd.f32 %v4027, %v4075
        %v4077 = vpop.f32.mrf.mxu0
        %v4078 = vadd.f32 %v4029, %v4077
        %4079 = vmatmul.bf16.gmra.mxu0 %v3616
        %v4080 = vpop.f32.mrf.mxu0
        %v4081 = vadd.f32 %v4032, %v4080
        %v4082 = vpop.f32.mrf.mxu0
        %v4083 = vadd.f32 %v4034, %v4082
        %4084 = vmatmul.bf16.gmra.mxu0 %v3620
        %v4085 = vpop.f32.mrf.mxu0
        %v4086 = vadd.f32 %v4037, %v4085
        %v4087 = vpop.f32.mrf.mxu0
        %v4088 = vadd.f32 %v4039, %v4087
        %4089 = vmatmul.bf16.gmra.mxu0 %v3624
        %v4090 = vpop.f32.mrf.mxu0
        %v4091 = vadd.f32 %v4042, %v4090
        %v4092 = vpop.f32.mrf.mxu0
        %v4093 = vadd.f32 %v4044, %v4092
        %4094 = vmatmul.bf16.gmra.mxu0 %v3628
        %v4095 = vpop.f32.mrf.mxu0
        %v4096 = vadd.f32 %v4047, %v4095
        %v4097 = vpop.f32.mrf.mxu0
        %v4098 = vadd.f32 %v4049, %v4097
        %4099 = vmatmul.bf16.gmra.mxu0 %v3632
        %v4100 = vpop.f32.mrf.mxu0
        %v4101 = vadd.f32 %v4052, %v4100
        %v4102 = vpop.f32.mrf.mxu0
        %v4103 = vadd.f32 %v4054, %v4102
        %4104 = vmatmul.bf16.gmra.mxu0 %v3636
        %v4105 = vpop.f32.mrf.mxu0
        %v4106 = vadd.f32 %v4057, %v4105
        %v4107 = vpop.f32.mrf.mxu0
        %v4108 = vadd.f32 %v4059, %v4107
        %4109 = vmatmul.bf16.gmra.mxu0 %v3640
        %v4110 = vpop.f32.mrf.mxu0
        %v4111 = vadd.f32 %v4062, %v4110
        %v4112 = vpop.f32.mrf.mxu0
        %v4113 = vadd.f32 %v4064, %v4112
        %4114 = vdwg.mxu0
        %4115 = vmatpush.bf16.msra.mxu0 %v3902
        %4116 = vmatpush.bf16.msra.mxu0 %v3900
        %4117 = vmatpush.bf16.msra.mxu0 %v3898
        %4118 = vmatpush.bf16.msra.mxu0 %v3896
        %4119 = vmatpush.bf16.msra.mxu0 %v3894
        %4120 = vmatpush.bf16.msra.mxu0 %v3892
        %4121 = vmatpush.bf16.msra.mxu0 %v3890
        %4122 = vmatpush.bf16.msra.mxu0 %v3888
        %4123 = vmatmul.bf16.gmra.mxu0 %v3613
        %v4124 = vpop.f32.mrf.mxu0
        %v4125 = vadd.f32 %v4076, %v4124
        %v4126 = vpop.f32.mrf.mxu0
        %v4127 = vadd.f32 %v4078, %v4126
        %4128 = vmatmul.bf16.gmra.mxu0 %v3617
        %v4129 = vpop.f32.mrf.mxu0
        %v4130 = vadd.f32 %v4081, %v4129
        %v4131 = vpop.f32.mrf.mxu0
        %v4132 = vadd.f32 %v4083, %v4131
        %4133 = vmatmul.bf16.gmra.mxu0 %v3621
        %v4134 = vpop.f32.mrf.mxu0
        %v4135 = vadd.f32 %v4086, %v4134
        %v4136 = vpop.f32.mrf.mxu0
        %v4137 = vadd.f32 %v4088, %v4136
        %4138 = vmatmul.bf16.gmra.mxu0 %v3625
        %v4139 = vpop.f32.mrf.mxu0
        %v4140 = vadd.f32 %v4091, %v4139
        %v4141 = vpop.f32.mrf.mxu0
        %v4142 = vadd.f32 %v4093, %v4141
        %4143 = vmatmul.bf16.gmra.mxu0 %v3629
        %v4144 = vpop.f32.mrf.mxu0
        %v4145 = vadd.f32 %v4096, %v4144
        %v4146 = vpop.f32.mrf.mxu0
        %v4147 = vadd.f32 %v4098, %v4146
        %4148 = vmatmul.bf16.gmra.mxu0 %v3633
        %v4149 = vpop.f32.mrf.mxu0
        %v4150 = vadd.f32 %v4101, %v4149
        %v4151 = vpop.f32.mrf.mxu0
        %v4152 = vadd.f32 %v4103, %v4151
        %4153 = vmatmul.bf16.gmra.mxu0 %v3637
        %v4154 = vpop.f32.mrf.mxu0
        %v4155 = vadd.f32 %v4106, %v4154
        %v4156 = vpop.f32.mrf.mxu0
        %v4157 = vadd.f32 %v4108, %v4156
        %4158 = vmatmul.bf16.gmra.mxu0 %v3641
        %v4159 = vpop.f32.mrf.mxu0
        %v4160 = vadd.f32 %v4111, %v4159
        %v4161 = vpop.f32.mrf.mxu0
        %v4162 = vadd.f32 %v4113, %v4161
        %4163 = vdwg.mxu0
        %4164 = vmatpush.bf16.msra.mxu0 %v3855
        %4165 = vmatpush.bf16.msra.mxu0 %v3853
        %4166 = vmatpush.bf16.msra.mxu0 %v3851
        %4167 = vmatpush.bf16.msra.mxu0 %v3849
        %4168 = vmatpush.bf16.msra.mxu0 %v3847
        %4169 = vmatpush.bf16.msra.mxu0 %v3845
        %4170 = vmatpush.bf16.msra.mxu0 %v3843
        %4171 = vmatpush.bf16.msra.mxu0 %v3841
        %4172 = vmatmul.bf16.gmra.mxu0 %v3610
        %v4173 = vpop.f32.mrf.mxu0
        %v4174 = vadd.f32 %v3645, %v4173
        %v4175 = vpop.f32.mrf.mxu0
        %v4176 = vadd.f32 %v3645, %v4175
        %4177 = vmatmul.bf16.gmra.mxu0 %v3614
        %v4178 = vpop.f32.mrf.mxu0
        %v4179 = vadd.f32 %v3645, %v4178
        %v4180 = vpop.f32.mrf.mxu0
        %v4181 = vadd.f32 %v3645, %v4180
        %4182 = vmatmul.bf16.gmra.mxu0 %v3618
        %v4183 = vpop.f32.mrf.mxu0
        %v4184 = vadd.f32 %v3645, %v4183
        %v4185 = vpop.f32.mrf.mxu0
        %v4186 = vadd.f32 %v3645, %v4185
        %4187 = vmatmul.bf16.gmra.mxu0 %v3622
        %v4188 = vpop.f32.mrf.mxu0
        %v4189 = vadd.f32 %v3645, %v4188
        %v4190 = vpop.f32.mrf.mxu0
        %v4191 = vadd.f32 %v3645, %v4190
        %4192 = vmatmul.bf16.gmra.mxu0 %v3626
        %v4193 = vpop.f32.mrf.mxu0
        %v4194 = vadd.f32 %v3645, %v4193
        %v4195 = vpop.f32.mrf.mxu0
        %v4196 = vadd.f32 %v3645, %v4195
        %4197 = vmatmul.bf16.gmra.mxu0 %v3630
        %v4198 = vpop.f32.mrf.mxu0
        %v4199 = vadd.f32 %v3645, %v4198
        %v4200 = vpop.f32.mrf.mxu0
        %v4201 = vadd.f32 %v3645, %v4200
        %4202 = vmatmul.bf16.gmra.mxu0 %v3634
        %v4203 = vpop.f32.mrf.mxu0
        %v4204 = vadd.f32 %v3645, %v4203
        %v4205 = vpop.f32.mrf.mxu0
        %v4206 = vadd.f32 %v3645, %v4205
        %4207 = vmatmul.bf16.gmra.mxu0 %v3638
        %v4208 = vpop.f32.mrf.mxu0
        %v4209 = vadd.f32 %v3645, %v4208
        %v4210 = vpop.f32.mrf.mxu0
        %v4211 = vadd.f32 %v3645, %v4210
        %4212 = vdwg.mxu0
        %4213 = vmatpush.bf16.msra.mxu0 %v3871
        %4214 = vmatpush.bf16.msra.mxu0 %v3869
        %4215 = vmatpush.bf16.msra.mxu0 %v3867
        %4216 = vmatpush.bf16.msra.mxu0 %v3865
        %4217 = vmatpush.bf16.msra.mxu0 %v3863
        %4218 = vmatpush.bf16.msra.mxu0 %v3861
        %4219 = vmatpush.bf16.msra.mxu0 %v3859
        %4220 = vmatpush.bf16.msra.mxu0 %v3857
        %4221 = vmatmul.bf16.gmra.mxu0 %v3611
        %v4222 = vpop.f32.mrf.mxu0
        %v4223 = vadd.f32 %v4174, %v4222
        %v4224 = vpop.f32.mrf.mxu0
        %v4225 = vadd.f32 %v4176, %v4224
        %4226 = vmatmul.bf16.gmra.mxu0 %v3615
        %v4227 = vpop.f32.mrf.mxu0
        %v4228 = vadd.f32 %v4179, %v4227
        %v4229 = vpop.f32.mrf.mxu0
        %v4230 = vadd.f32 %v4181, %v4229
        %4231 = vmatmul.bf16.gmra.mxu0 %v3619
        %v4232 = vpop.f32.mrf.mxu0
        %v4233 = vadd.f32 %v4184, %v4232
        %v4234 = vpop.f32.mrf.mxu0
        %v4235 = vadd.f32 %v4186, %v4234
        %4236 = vmatmul.bf16.gmra.mxu0 %v3623
        %v4237 = vpop.f32.mrf.mxu0
        %v4238 = vadd.f32 %v4189, %v4237
        %v4239 = vpop.f32.mrf.mxu0
        %v4240 = vadd.f32 %v4191, %v4239
        %4241 = vmatmul.bf16.gmra.mxu0 %v3627
        %v4242 = vpop.f32.mrf.mxu0
        %v4243 = vadd.f32 %v4194, %v4242
        %v4244 = vpop.f32.mrf.mxu0
        %v4245 = vadd.f32 %v4196, %v4244
        %4246 = vmatmul.bf16.gmra.mxu0 %v3631
        %v4247 = vpop.f32.mrf.mxu0
        %v4248 = vadd.f32 %v4199, %v4247
        %v4249 = vpop.f32.mrf.mxu0
        %v4250 = vadd.f32 %v4201, %v4249
        %4251 = vmatmul.bf16.gmra.mxu0 %v3635
        %v4252 = vpop.f32.mrf.mxu0
        %v4253 = vadd.f32 %v4204, %v4252
        %v4254 = vpop.f32.mrf.mxu0
        %v4255 = vadd.f32 %v4206, %v4254
        %4256 = vmatmul.bf16.gmra.mxu0 %v3639
        %v4257 = vpop.f32.mrf.mxu0
        %v4258 = vadd.f32 %v4209, %v4257
        %v4259 = vpop.f32.mrf.mxu0
        %v4260 = vadd.f32 %v4211, %v4259
        %4261 = vdwg.mxu0
        %4262 = vmatpush.bf16.msra.mxu0 %v3887
        %4263 = vmatpush.bf16.msra.mxu0 %v3885
        %4264 = vmatpush.bf16.msra.mxu0 %v3883
        %4265 = vmatpush.bf16.msra.mxu0 %v3881
        %4266 = vmatpush.bf16.msra.mxu0 %v3879
        %4267 = vmatpush.bf16.msra.mxu0 %v3877
        %4268 = vmatpush.bf16.msra.mxu0 %v3875
        %4269 = vmatpush.bf16.msra.mxu0 %v3873
        %4270 = vmatmul.bf16.gmra.mxu0 %v3612
        %v4271 = vpop.f32.mrf.mxu0
        %v4272 = vadd.f32 %v4223, %v4271
        %v4273 = vpop.f32.mrf.mxu0
        %v4274 = vadd.f32 %v4225, %v4273
        %4275 = vmatmul.bf16.gmra.mxu0 %v3616
        %v4276 = vpop.f32.mrf.mxu0
        %v4277 = vadd.f32 %v4228, %v4276
        %v4278 = vpop.f32.mrf.mxu0
        %v4279 = vadd.f32 %v4230, %v4278
        %4280 = vmatmul.bf16.gmra.mxu0 %v3620
        %v4281 = vpop.f32.mrf.mxu0
        %v4282 = vadd.f32 %v4233, %v4281
        %v4283 = vpop.f32.mrf.mxu0
        %v4284 = vadd.f32 %v4235, %v4283
        %4285 = vmatmul.bf16.gmra.mxu0 %v3624
        %v4286 = vpop.f32.mrf.mxu0
        %v4287 = vadd.f32 %v4238, %v4286
        %v4288 = vpop.f32.mrf.mxu0
        %v4289 = vadd.f32 %v4240, %v4288
        %4290 = vmatmul.bf16.gmra.mxu0 %v3628
        %v4291 = vpop.f32.mrf.mxu0
        %v4292 = vadd.f32 %v4243, %v4291
        %v4293 = vpop.f32.mrf.mxu0
        %v4294 = vadd.f32 %v4245, %v4293
        %4295 = vmatmul.bf16.gmra.mxu0 %v3632
        %v4296 = vpop.f32.mrf.mxu0
        %v4297 = vadd.f32 %v4248, %v4296
        %v4298 = vpop.f32.mrf.mxu0
        %v4299 = vadd.f32 %v4250, %v4298
        %4300 = vmatmul.bf16.gmra.mxu0 %v3636
        %v4301 = vpop.f32.mrf.mxu0
        %v4302 = vadd.f32 %v4253, %v4301
        %v4303 = vpop.f32.mrf.mxu0
        %v4304 = vadd.f32 %v4255, %v4303
        %4305 = vmatmul.bf16.gmra.mxu0 %v3640
        %v4306 = vpop.f32.mrf.mxu0
        %v4307 = vadd.f32 %v4258, %v4306
        %v4308 = vpop.f32.mrf.mxu0
        %v4309 = vadd.f32 %v4260, %v4308
        %4310 = vdwg.mxu0
        %4311 = vmatpush.bf16.msra.mxu0 %v3903
        %4312 = vmatpush.bf16.msra.mxu0 %v3901
        %4313 = vmatpush.bf16.msra.mxu0 %v3899
        %4314 = vmatpush.bf16.msra.mxu0 %v3897
        %4315 = vmatpush.bf16.msra.mxu0 %v3895
        %4316 = vmatpush.bf16.msra.mxu0 %v3893
        %4317 = vmatpush.bf16.msra.mxu0 %v3891
        %4318 = vmatpush.bf16.msra.mxu0 %v3889
        %4319 = vmatmul.bf16.gmra.mxu0 %v3613
        %v4320 = vpop.f32.mrf.mxu0
        %v4321 = vadd.f32 %v4272, %v4320
        %v4322 = vpop.f32.mrf.mxu0
        %v4323 = vadd.f32 %v4274, %v4322
        %4324 = vmatmul.bf16.gmra.mxu0 %v3617
        %v4325 = vpop.f32.mrf.mxu0
        %v4326 = vadd.f32 %v4277, %v4325
        %v4327 = vpop.f32.mrf.mxu0
        %v4328 = vadd.f32 %v4279, %v4327
        %4329 = vmatmul.bf16.gmra.mxu0 %v3621
        %v4330 = vpop.f32.mrf.mxu0
        %v4331 = vadd.f32 %v4282, %v4330
        %v4332 = vpop.f32.mrf.mxu0
        %v4333 = vadd.f32 %v4284, %v4332
        %4334 = vmatmul.bf16.gmra.mxu0 %v3625
        %v4335 = vpop.f32.mrf.mxu0
        %v4336 = vadd.f32 %v4287, %v4335
        %v4337 = vpop.f32.mrf.mxu0
        %v4338 = vadd.f32 %v4289, %v4337
        %4339 = vmatmul.bf16.gmra.mxu0 %v3629
        %v4340 = vpop.f32.mrf.mxu0
        %v4341 = vadd.f32 %v4292, %v4340
        %v4342 = vpop.f32.mrf.mxu0
        %v4343 = vadd.f32 %v4294, %v4342
        %4344 = vmatmul.bf16.gmra.mxu0 %v3633
        %v4345 = vpop.f32.mrf.mxu0
        %v4346 = vadd.f32 %v4297, %v4345
        %v4347 = vpop.f32.mrf.mxu0
        %v4348 = vadd.f32 %v4299, %v4347
        %4349 = vmatmul.bf16.gmra.mxu0 %v3637
        %v4350 = vpop.f32.mrf.mxu0
        %v4351 = vadd.f32 %v4302, %v4350
        %v4352 = vpop.f32.mrf.mxu0
        %v4353 = vadd.f32 %v4304, %v4352
        %4354 = vmatmul.bf16.gmra.mxu0 %v3641
        %v4355 = vpop.f32.mrf.mxu0
        %v4356 = vadd.f32 %v4307, %v4355
        %v4357 = vpop.f32.mrf.mxu0
        %v4358 = vadd.f32 %v4309, %v4357
        %4359 = vdwg.mxu0
        %v4360 = vmax.f32 %v4125, 0.0
        %v4361 = vmax.f32 %v4321, 0.0
        %v4362 = vmax.f32 %v4127, 0.0
        %v4363 = vmax.f32 %v4323, 0.0
        %v4364 = vmax.f32 %v4130, 0.0
        %v4365 = vmax.f32 %v4326, 0.0
        %v4366 = vmax.f32 %v4132, 0.0
        %v4367 = vmax.f32 %v4328, 0.0
        %v4368 = vmax.f32 %v4135, 0.0
        %v4369 = vmax.f32 %v4331, 0.0
        %v4370 = vmax.f32 %v4137, 0.0
        %v4371 = vmax.f32 %v4333, 0.0
        %v4372 = vmax.f32 %v4140, 0.0
        %v4373 = vmax.f32 %v4336, 0.0
        %v4374 = vmax.f32 %v4142, 0.0
        %v4375 = vmax.f32 %v4338, 0.0
        %v4376 = vmax.f32 %v4145, 0.0
        %v4377 = vmax.f32 %v4341, 0.0
        %v4378 = vmax.f32 %v4147, 0.0
        %v4379 = vmax.f32 %v4343, 0.0
        %v4380 = vmax.f32 %v4150, 0.0
        %v4381 = vmax.f32 %v4346, 0.0
        %v4382 = vmax.f32 %v4152, 0.0
        %v4383 = vmax.f32 %v4348, 0.0
        %v4384 = vmax.f32 %v4155, 0.0
        %v4385 = vmax.f32 %v4351, 0.0
        %v4386 = vmax.f32 %v4157, 0.0
        %v4387 = vmax.f32 %v4353, 0.0
        %v4388 = vmax.f32 %v4160, 0.0
        %v4389 = vmax.f32 %v4356, 0.0
        %v4390 = vmax.f32 %v4162, 0.0
        %v4391 = vmax.f32 %v4358, 0.0
        %v4392 = vld [vmem:[%s6] sm:$0xff]
        %v4393 = vld [vmem:[%s6 + $0x8] sm:$0xff]
        %v4394 = vld [vmem:[%s6 + $0x10] sm:$0xff]
        %v4395 = vld [vmem:[%s6 + $0x18] sm:$0xff]
        %v4396 = vld [vmem:[%s6 + $0x20] sm:$0xff]
        %v4397 = vld [vmem:[%s6 + $0x28] sm:$0xff]
        %v4398 = vld [vmem:[%s6 + $0x30] sm:$0xff]
        %v4399 = vld [vmem:[%s6 + $0x38] sm:$0xff]
        %v4400 = vld [vmem:[%s6 + $0x40] sm:$0xff]
        %v4401 = vld [vmem:[%s6 + $0x48] sm:$0xff]
        %v4402 = vld [vmem:[%s6 + $0x50] sm:$0xff]
        %v4403 = vld [vmem:[%s6 + $0x58] sm:$0xff]
        %v4404 = vld [vmem:[%s6 + $0x60] sm:$0xff]
        %v4405 = vld [vmem:[%s6 + $0x68] sm:$0xff]
        %v4406 = vld [vmem:[%s6 + $0x70] sm:$0xff]
        %v4407 = vld [vmem:[%s6 + $0x78] sm:$0xff]
        %v4408 = vld [vmem:[%s6 + $0x80] sm:$0xff]
        %v4409 = vld [vmem:[%s6 + $0x88] sm:$0xff]
        %v4410 = vld [vmem:[%s6 + $0x90] sm:$0xff]
        %v4411 = vld [vmem:[%s6 + $0x98] sm:$0xff]
        %v4412 = vld [vmem:[%s6 + $0xa0] sm:$0xff]
        %v4413 = vld [vmem:[%s6 + $0xa8] sm:$0xff]
        %v4414 = vld [vmem:[%s6 + $0xb0] sm:$0xff]
        %v4415 = vld [vmem:[%s6 + $0xb8] sm:$0xff]
        %v4416 = vld [vmem:[%s6 + $0xc0] sm:$0xff]
        %v4417 = vld [vmem:[%s6 + $0xc8] sm:$0xff]
        %v4418 = vld [vmem:[%s6 + $0xd0] sm:$0xff]
        %v4419 = vld [vmem:[%s6 + $0xd8] sm:$0xff]
        %v4420 = vld [vmem:[%s6 + $0xe0] sm:$0xff]
        %v4421 = vld [vmem:[%s6 + $0xe8] sm:$0xff]
        %v4422 = vld [vmem:[%s6 + $0xf0] sm:$0xff]
        %v4423 = vld [vmem:[%s6 + $0xf8] sm:$0xff]
        %v4424 = vpack.c.bf16 %v4362, %v4360
        %v4425 = vpack.c.bf16 %v4363, %v4361
        %v4426 = vpack.c.bf16 %v4366, %v4364
        %v4427 = vpack.c.bf16 %v4367, %v4365
        %v4428 = vpack.c.bf16 %v4370, %v4368
        %v4429 = vpack.c.bf16 %v4371, %v4369
        %v4430 = vpack.c.bf16 %v4374, %v4372
        %v4431 = vpack.c.bf16 %v4375, %v4373
        %v4432 = vpack.c.bf16 %v4378, %v4376
        %v4433 = vpack.c.bf16 %v4379, %v4377
        %v4434 = vpack.c.bf16 %v4382, %v4380
        %v4435 = vpack.c.bf16 %v4383, %v4381
        %v4436 = vpack.c.bf16 %v4386, %v4384
        %v4437 = vpack.c.bf16 %v4387, %v4385
        %v4438 = vpack.c.bf16 %v4390, %v4388
        %v4439 = vpack.c.bf16 %v4391, %v4389
        %v4440 = vld [vmem:[%s7] sm:$0x3]
        %v4442 = vperm.slane %v4440, 0
        %v4443 = vperm.slane %v4440, 1
        %v4478 = vunpack.c.l.b16 %v4392
        %v4479 = vunpack.c.h.b16 %v4392
        %v4480 = vunpack.c.l.b16 %v4393
        %v4481 = vunpack.c.h.b16 %v4393
        %v4482 = vunpack.c.l.b16 %v4394
        %v4483 = vunpack.c.h.b16 %v4394
        %v4484 = vunpack.c.l.b16 %v4395
        %v4485 = vunpack.c.h.b16 %v4395
        %v4486 = vunpack.c.l.b16 %v4396
        %v4487 = vunpack.c.h.b16 %v4396
        %v4488 = vunpack.c.l.b16 %v4397
        %v4489 = vunpack.c.h.b16 %v4397
        %v4490 = vunpack.c.l.b16 %v4398
        %v4491 = vunpack.c.h.b16 %v4398
        %v4492 = vunpack.c.l.b16 %v4399
        %v4493 = vunpack.c.h.b16 %v4399
        %v4494 = vunpack.c.l.b16 %v4400
        %v4495 = vunpack.c.h.b16 %v4400
        %v4496 = vunpack.c.l.b16 %v4401
        %v4497 = vunpack.c.h.b16 %v4401
        %v4498 = vunpack.c.l.b16 %v4402
        %v4499 = vunpack.c.h.b16 %v4402
        %v4500 = vunpack.c.l.b16 %v4403
        %v4501 = vunpack.c.h.b16 %v4403
        %v4502 = vunpack.c.l.b16 %v4404
        %v4503 = vunpack.c.h.b16 %v4404
        %v4504 = vunpack.c.l.b16 %v4405
        %v4505 = vunpack.c.h.b16 %v4405
        %v4506 = vunpack.c.l.b16 %v4406
        %v4507 = vunpack.c.h.b16 %v4406
        %v4508 = vunpack.c.l.b16 %v4407
        %v4509 = vunpack.c.h.b16 %v4407
        %v4510 = vunpack.c.l.b16 %v4408
        %v4511 = vunpack.c.h.b16 %v4408
        %v4512 = vunpack.c.l.b16 %v4409
        %v4513 = vunpack.c.h.b16 %v4409
        %v4514 = vunpack.c.l.b16 %v4410
        %v4515 = vunpack.c.h.b16 %v4410
        %v4516 = vunpack.c.l.b16 %v4411
        %v4517 = vunpack.c.h.b16 %v4411
        %v4518 = vunpack.c.l.b16 %v4412
        %v4519 = vunpack.c.h.b16 %v4412
        %v4520 = vunpack.c.l.b16 %v4413
        %v4521 = vunpack.c.h.b16 %v4413
        %v4522 = vunpack.c.l.b16 %v4414
        %v4523 = vunpack.c.h.b16 %v4414
        %v4524 = vunpack.c.l.b16 %v4415
        %v4525 = vunpack.c.h.b16 %v4415
        %v4526 = vunpack.c.l.b16 %v4416
        %v4527 = vunpack.c.h.b16 %v4416
        %v4528 = vunpack.c.l.b16 %v4417
        %v4529 = vunpack.c.h.b16 %v4417
        %v4530 = vunpack.c.l.b16 %v4418
        %v4531 = vunpack.c.h.b16 %v4418
        %v4532 = vunpack.c.l.b16 %v4419
        %v4533 = vunpack.c.h.b16 %v4419
        %v4534 = vunpack.c.l.b16 %v4420
        %v4535 = vunpack.c.h.b16 %v4420
        %v4536 = vunpack.c.l.b16 %v4421
        %v4537 = vunpack.c.h.b16 %v4421
        %v4538 = vunpack.c.l.b16 %v4422
        %v4539 = vunpack.c.h.b16 %v4422
        %v4540 = vunpack.c.l.b16 %v4423
        %v4541 = vunpack.c.h.b16 %v4423
        %v4542 = vpack.c.b16 %v4480, %v4478
        %v4543 = vpack.c.b16 %v4481, %v4479
        %v4544 = vpack.c.b16 %v4484, %v4482
        %v4545 = vpack.c.b16 %v4485, %v4483
        %v4546 = vpack.c.b16 %v4488, %v4486
        %v4547 = vpack.c.b16 %v4489, %v4487
        %v4548 = vpack.c.b16 %v4492, %v4490
        %v4549 = vpack.c.b16 %v4493, %v4491
        %v4550 = vpack.c.b16 %v4496, %v4494
        %v4551 = vpack.c.b16 %v4497, %v4495
        %v4552 = vpack.c.b16 %v4500, %v4498
        %v4553 = vpack.c.b16 %v4501, %v4499
        %v4554 = vpack.c.b16 %v4504, %v4502
        %v4555 = vpack.c.b16 %v4505, %v4503
        %v4556 = vpack.c.b16 %v4508, %v4506
        %v4557 = vpack.c.b16 %v4509, %v4507
        %v4558 = vpack.c.b16 %v4512, %v4510
        %v4559 = vpack.c.b16 %v4513, %v4511
        %v4560 = vpack.c.b16 %v4516, %v4514
        %v4561 = vpack.c.b16 %v4517, %v4515
        %v4562 = vpack.c.b16 %v4520, %v4518
        %v4563 = vpack.c.b16 %v4521, %v4519
        %v4564 = vpack.c.b16 %v4524, %v4522
        %v4565 = vpack.c.b16 %v4525, %v4523
        %v4566 = vpack.c.b16 %v4528, %v4526
        %v4567 = vpack.c.b16 %v4529, %v4527
        %v4568 = vpack.c.b16 %v4532, %v4530
        %v4569 = vpack.c.b16 %v4533, %v4531
        %v4570 = vpack.c.b16 %v4536, %v4534
        %v4571 = vpack.c.b16 %v4537, %v4535
        %v4572 = vpack.c.b16 %v4540, %v4538
        %v4573 = vpack.c.b16 %v4541, %v4539
        %4606 = vmatpush.bf16.msra.mxu0 %v4556
        %4607 = vmatpush.bf16.msra.mxu0 %v4554
        %4608 = vmatpush.bf16.msra.mxu0 %v4552
        %4609 = vmatpush.bf16.msra.mxu0 %v4550
        %4610 = vmatpush.bf16.msra.mxu0 %v4548
        %4611 = vmatpush.bf16.msra.mxu0 %v4546
        %4612 = vmatpush.bf16.msra.mxu0 %v4544
        %4613 = vmatpush.bf16.msra.mxu0 %v4542
        %4614 = vmatmul.bf16.gmra.mxu0 %v4424
        %v4615 = vpop.f32.mrf.mxu0
        %v4616 = vadd.f32 %v4442, %v4615
        %v4617 = vpop.f32.mrf.mxu0
        %v4618 = vadd.f32 %v4442, %v4617
        %4619 = vmatmul.bf16.gmra.mxu0 %v4426
        %v4620 = vpop.f32.mrf.mxu0
        %v4621 = vadd.f32 %v4442, %v4620
        %v4622 = vpop.f32.mrf.mxu0
        %v4623 = vadd.f32 %v4442, %v4622
        %4624 = vmatmul.bf16.gmra.mxu0 %v4428
        %v4625 = vpop.f32.mrf.mxu0
        %v4626 = vadd.f32 %v4442, %v4625
        %v4627 = vpop.f32.mrf.mxu0
        %v4628 = vadd.f32 %v4442, %v4627
        %4629 = vmatmul.bf16.gmra.mxu0 %v4430
        %v4630 = vpop.f32.mrf.mxu0
        %v4631 = vadd.f32 %v4442, %v4630
        %v4632 = vpop.f32.mrf.mxu0
        %v4633 = vadd.f32 %v4442, %v4632
        %4634 = vmatmul.bf16.gmra.mxu0 %v4432
        %v4635 = vpop.f32.mrf.mxu0
        %v4636 = vadd.f32 %v4442, %v4635
        %v4637 = vpop.f32.mrf.mxu0
        %v4638 = vadd.f32 %v4442, %v4637
        %4639 = vmatmul.bf16.gmra.mxu0 %v4434
        %v4640 = vpop.f32.mrf.mxu0
        %v4641 = vadd.f32 %v4442, %v4640
        %v4642 = vpop.f32.mrf.mxu0
        %v4643 = vadd.f32 %v4442, %v4642
        %4644 = vmatmul.bf16.gmra.mxu0 %v4436
        %v4645 = vpop.f32.mrf.mxu0
        %v4646 = vadd.f32 %v4442, %v4645
        %v4647 = vpop.f32.mrf.mxu0
        %v4648 = vadd.f32 %v4442, %v4647
        %4649 = vmatmul.bf16.gmra.mxu0 %v4438
        %v4650 = vpop.f32.mrf.mxu0
        %v4651 = vadd.f32 %v4442, %v4650
        %v4652 = vpop.f32.mrf.mxu0
        %v4653 = vadd.f32 %v4442, %v4652
        %4654 = vdwg.mxu0
        %4655 = vmatpush.bf16.msra.mxu0 %v4572
        %4656 = vmatpush.bf16.msra.mxu0 %v4570
        %4657 = vmatpush.bf16.msra.mxu0 %v4568
        %4658 = vmatpush.bf16.msra.mxu0 %v4566
        %4659 = vmatpush.bf16.msra.mxu0 %v4564
        %4660 = vmatpush.bf16.msra.mxu0 %v4562
        %4661 = vmatpush.bf16.msra.mxu0 %v4560
        %4662 = vmatpush.bf16.msra.mxu0 %v4558
        %4663 = vmatmul.bf16.gmra.mxu0 %v4425
        %v4664 = vpop.f32.mrf.mxu0
        %v4665 = vadd.f32 %v4616, %v4664
        %v4666 = vpop.f32.mrf.mxu0
        %v4667 = vadd.f32 %v4618, %v4666
        %4668 = vmatmul.bf16.gmra.mxu0 %v4427
        %v4669 = vpop.f32.mrf.mxu0
        %v4670 = vadd.f32 %v4621, %v4669
        %v4671 = vpop.f32.mrf.mxu0
        %v4672 = vadd.f32 %v4623, %v4671
        %4673 = vmatmul.bf16.gmra.mxu0 %v4429
        %v4674 = vpop.f32.mrf.mxu0
        %v4675 = vadd.f32 %v4626, %v4674
        %v4676 = vpop.f32.mrf.mxu0
        %v4677 = vadd.f32 %v4628, %v4676
        %4678 = vmatmul.bf16.gmra.mxu0 %v4431
        %v4679 = vpop.f32.mrf.mxu0
        %v4680 = vadd.f32 %v4631, %v4679
        %v4681 = vpop.f32.mrf.mxu0
        %v4682 = vadd.f32 %v4633, %v4681
        %4683 = vmatmul.bf16.gmra.mxu0 %v4433
        %v4684 = vpop.f32.mrf.mxu0
        %v4685 = vadd.f32 %v4636, %v4684
        %v4686 = vpop.f32.mrf.mxu0
        %v4687 = vadd.f32 %v4638, %v4686
        %4688 = vmatmul.bf16.gmra.mxu0 %v4435
        %v4689 = vpop.f32.mrf.mxu0
        %v4690 = vadd.f32 %v4641, %v4689
        %v4691 = vpop.f32.mrf.mxu0
        %v4692 = vadd.f32 %v4643, %v4691
        %4693 = vmatmul.bf16.gmra.mxu0 %v4437
        %v4694 = vpop.f32.mrf.mxu0
        %v4695 = vadd.f32 %v4646, %v4694
        %v4696 = vpop.f32.mrf.mxu0
        %v4697 = vadd.f32 %v4648, %v4696
        %4698 = vmatmul.bf16.gmra.mxu0 %v4439
        %v4699 = vpop.f32.mrf.mxu0
        %v4700 = vadd.f32 %v4651, %v4699
        %v4701 = vpop.f32.mrf.mxu0
        %v4702 = vadd.f32 %v4653, %v4701
        %4703 = vdwg.mxu0
        %4704 = vmatpush.bf16.msra.mxu0 %v4557
        %4705 = vmatpush.bf16.msra.mxu0 %v4555
        %4706 = vmatpush.bf16.msra.mxu0 %v4553
        %4707 = vmatpush.bf16.msra.mxu0 %v4551
        %4708 = vmatpush.bf16.msra.mxu0 %v4549
        %4709 = vmatpush.bf16.msra.mxu0 %v4547
        %4710 = vmatpush.bf16.msra.mxu0 %v4545
        %4711 = vmatpush.bf16.msra.mxu0 %v4543
        %4712 = vmatmul.bf16.gmra.mxu0 %v4424
        %v4713 = vpop.f32.mrf.mxu0
        %v4714 = vadd.f32 %v4443, %v4713
        %v4715 = vpop.f32.mrf.mxu0
        %v4716 = vadd.f32 %v4443, %v4715
        %4717 = vmatmul.bf16.gmra.mxu0 %v4426
        %v4718 = vpop.f32.mrf.mxu0
        %v4719 = vadd.f32 %v4443, %v4718
        %v4720 = vpop.f32.mrf.mxu0
        %v4721 = vadd.f32 %v4443, %v4720
        %4722 = vmatmul.bf16.gmra.mxu0 %v4428
        %v4723 = vpop.f32.mrf.mxu0
        %v4724 = vadd.f32 %v4443, %v4723
        %v4725 = vpop.f32.mrf.mxu0
        %v4726 = vadd.f32 %v4443, %v4725
        %4727 = vmatmul.bf16.gmra.mxu0 %v4430
        %v4728 = vpop.f32.mrf.mxu0
        %v4729 = vadd.f32 %v4443, %v4728
        %v4730 = vpop.f32.mrf.mxu0
        %v4731 = vadd.f32 %v4443, %v4730
        %4732 = vmatmul.bf16.gmra.mxu0 %v4432
        %v4733 = vpop.f32.mrf.mxu0
        %v4734 = vadd.f32 %v4443, %v4733
        %v4735 = vpop.f32.mrf.mxu0
        %v4736 = vadd.f32 %v4443, %v4735
        %4737 = vmatmul.bf16.gmra.mxu0 %v4434
        %v4738 = vpop.f32.mrf.mxu0
        %v4739 = vadd.f32 %v4443, %v4738
        %v4740 = vpop.f32.mrf.mxu0
        %v4741 = vadd.f32 %v4443, %v4740
        %4742 = vmatmul.bf16.gmra.mxu0 %v4436
        %v4743 = vpop.f32.mrf.mxu0
        %v4744 = vadd.f32 %v4443, %v4743
        %v4745 = vpop.f32.mrf.mxu0
        %v4746 = vadd.f32 %v4443, %v4745
        %4747 = vmatmul.bf16.gmra.mxu0 %v4438
        %v4748 = vpop.f32.mrf.mxu0
        %v4749 = vadd.f32 %v4443, %v4748
        %v4750 = vpop.f32.mrf.mxu0
        %v4751 = vadd.f32 %v4443, %v4750
        %4752 = vdwg.mxu0
        %4753 = vmatpush.bf16.msra.mxu0 %v4573
        %4754 = vmatpush.bf16.msra.mxu0 %v4571
        %4755 = vmatpush.bf16.msra.mxu0 %v4569
        %4756 = vmatpush.bf16.msra.mxu0 %v4567
        %4757 = vmatpush.bf16.msra.mxu0 %v4565
        %4758 = vmatpush.bf16.msra.mxu0 %v4563
        %4759 = vmatpush.bf16.msra.mxu0 %v4561
        %4760 = vmatpush.bf16.msra.mxu0 %v4559
        %4761 = vmatmul.bf16.gmra.mxu0 %v4425
        %v4762 = vpop.f32.mrf.mxu0
        %v4763 = vadd.f32 %v4714, %v4762
        %v4764 = vpop.f32.mrf.mxu0
        %v4765 = vadd.f32 %v4716, %v4764
        %4766 = vmatmul.bf16.gmra.mxu0 %v4427
        %v4767 = vpop.f32.mrf.mxu0
        %v4768 = vadd.f32 %v4719, %v4767
        %v4769 = vpop.f32.mrf.mxu0
        %v4770 = vadd.f32 %v4721, %v4769
        %4771 = vmatmul.bf16.gmra.mxu0 %v4429
        %v4772 = vpop.f32.mrf.mxu0
        %v4773 = vadd.f32 %v4724, %v4772
        %v4774 = vpop.f32.mrf.mxu0
        %v4775 = vadd.f32 %v4726, %v4774
        %4776 = vmatmul.bf16.gmra.mxu0 %v4431
        %v4777 = vpop.f32.mrf.mxu0
        %v4778 = vadd.f32 %v4729, %v4777
        %v4779 = vpop.f32.mrf.mxu0
        %v4780 = vadd.f32 %v4731, %v4779
        %4781 = vmatmul.bf16.gmra.mxu0 %v4433
        %v4782 = vpop.f32.mrf.mxu0
        %v4783 = vadd.f32 %v4734, %v4782
        %v4784 = vpop.f32.mrf.mxu0
        %v4785 = vadd.f32 %v4736, %v4784
        %4786 = vmatmul.bf16.gmra.mxu0 %v4435
        %v4787 = vpop.f32.mrf.mxu0
        %v4788 = vadd.f32 %v4739, %v4787
        %v4789 = vpop.f32.mrf.mxu0
        %v4790 = vadd.f32 %v4741, %v4789
        %4791 = vmatmul.bf16.gmra.mxu0 %v4437
        %v4792 = vpop.f32.mrf.mxu0
        %v4793 = vadd.f32 %v4744, %v4792
        %v4794 = vpop.f32.mrf.mxu0
        %v4795 = vadd.f32 %v4746, %v4794
        %4796 = vmatmul.bf16.gmra.mxu0 %v4439
        %v4797 = vpop.f32.mrf.mxu0
        %v4798 = vadd.f32 %v4749, %v4797
        %v4799 = vpop.f32.mrf.mxu0
        %v4800 = vadd.f32 %v4751, %v4799
        %4801 = vdwg.mxu0
        %v4802 = vld [vmem:[%s544] sm:$0xf]
        %v4803 = vld [vmem:[%s544 + $0x4] sm:$0xf]
        %v4804 = vld [vmem:[%s544 + $0x8] sm:$0xf]
        %v4805 = vld [vmem:[%s544 + $0xc] sm:$0xf]
        %v4806 = vld [vmem:[%s544 + $0x10] sm:$0xf]
        %v4807 = vld [vmem:[%s544 + $0x14] sm:$0xf]
        %v4808 = vld [vmem:[%s544 + $0x18] sm:$0xf]
        %v4809 = vld [vmem:[%s544 + $0x1c] sm:$0xf]
        %v4810 = vld [vmem:[%s544 + $0x20] sm:$0xf]
        %v4811 = vld [vmem:[%s544 + $0x24] sm:$0xf]
        %v4812 = vld [vmem:[%s544 + $0x28] sm:$0xf]
        %v4813 = vld [vmem:[%s544 + $0x2c] sm:$0xf]
        %v4814 = vld [vmem:[%s544 + $0x30] sm:$0xf]
        %v4815 = vld [vmem:[%s544 + $0x34] sm:$0xf]
        %v4816 = vld [vmem:[%s544 + $0x38] sm:$0xf]
        %v4817 = vld [vmem:[%s544 + $0x3c] sm:$0xf]
        %v4818 = vunpack.c.l.bf16 %v4802
        %v4819 = vunpack.c.l.bf16 %v4803
        %v4820 = vunpack.c.l.bf16 %v4804
        %v4821 = vunpack.c.l.bf16 %v4805
        %v4822 = vunpack.c.l.bf16 %v4806
        %v4823 = vunpack.c.l.bf16 %v4807
        %v4824 = vunpack.c.l.bf16 %v4808
        %v4825 = vunpack.c.l.bf16 %v4809
        %v4826 = vunpack.c.l.bf16 %v4810
        %v4827 = vunpack.c.l.bf16 %v4811
        %v4828 = vunpack.c.l.bf16 %v4812
        %v4829 = vunpack.c.l.bf16 %v4813
        %v4830 = vunpack.c.l.bf16 %v4814
        %v4831 = vunpack.c.l.bf16 %v4815
        %v4832 = vunpack.c.l.bf16 %v4816
        %v4833 = vunpack.c.l.bf16 %v4817
        %v4834 = vmul.f32 %v4763, 0.5
        %v4835 = vmul.f32 %v4765, 0.5
        %v4836 = vmul.f32 %v4768, 0.5
        %v4837 = vmul.f32 %v4770, 0.5
        %v4838 = vmul.f32 %v4773, 0.5
        %v4839 = vmul.f32 %v4775, 0.5
        %v4840 = vmul.f32 %v4778, 0.5
        %v4841 = vmul.f32 %v4780, 0.5
        %v4842 = vmul.f32 %v4783, 0.5
        %v4843 = vmul.f32 %v4785, 0.5
        %v4844 = vmul.f32 %v4788, 0.5
        %v4845 = vmul.f32 %v4790, 0.5
        %v4846 = vmul.f32 %v4793, 0.5
        %v4847 = vmul.f32 %v4795, 0.5
        %v4848 = vmul.f32 %v4798, 0.5
        %v4849 = vmul.f32 %v4800, 0.5
        %v4850 = vmul.f32 %v4834, 1.442695
        %v4851 = vpow.pop %v4850
        %v4852 = vmul.f32 %v4835, 1.442695
        %v4853 = vpow.pop %v4852
        %v4854 = vmul.f32 %v4836, 1.442695
        %v4855 = vpow.pop %v4854
        %v4856 = vmul.f32 %v4837, 1.442695
        %v4857 = vpow.pop %v4856
        %v4858 = vmul.f32 %v4838, 1.442695
        %v4859 = vpow.pop %v4858
        %v4860 = vmul.f32 %v4839, 1.442695
        %v4861 = vpow.pop %v4860
        %v4862 = vmul.f32 %v4840, 1.442695
        %v4863 = vpow.pop %v4862
        %v4864 = vmul.f32 %v4841, 1.442695
        %v4865 = vpow.pop %v4864
        %v4866 = vmul.f32 %v4842, 1.442695
        %v4867 = vpow.pop %v4866
        %v4868 = vmul.f32 %v4843, 1.442695
        %v4869 = vpow.pop %v4868
        %v4870 = vmul.f32 %v4844, 1.442695
        %v4871 = vpow.pop %v4870
        %v4872 = vmul.f32 %v4845, 1.442695
        %v4873 = vpow.pop %v4872
        %v4874 = vmul.f32 %v4846, 1.442695
        %v4875 = vpow.pop %v4874
        %v4876 = vmul.f32 %v4847, 1.442695
        %v4877 = vpow.pop %v4876
        %v4878 = vmul.f32 %v4848, 1.442695
        %v4879 = vpow.pop %v4878
        %v4880 = vmul.f32 %v4849, 1.442695
        %v4881 = vpow.pop %v4880
        %v4882 = vmul.f32 %v4818, %v4851
        %v4883 = vmul.f32 %v4819, %v4853
        %v4884 = vmul.f32 %v4820, %v4855
        %v4885 = vmul.f32 %v4821, %v4857
        %v4886 = vmul.f32 %v4822, %v4859
        %v4887 = vmul.f32 %v4823, %v4861
        %v4888 = vmul.f32 %v4824, %v4863
        %v4889 = vmul.f32 %v4825, %v4865
        %v4890 = vmul.f32 %v4826, %v4867
        %v4891 = vmul.f32 %v4827, %v4869
        %v4892 = vmul.f32 %v4828, %v4871
        %v4893 = vmul.f32 %v4829, %v4873
        %v4894 = vmul.f32 %v4830, %v4875
        %v4895 = vmul.f32 %v4831, %v4877
        %v4896 = vmul.f32 %v4832, %v4879
        %v4897 = vmul.f32 %v4833, %v4881
        %v4898 = vadd.f32 %v4665, %v4882
        %v4899 = vadd.f32 %v4667, %v4883
        %v4900 = vadd.f32 %v4670, %v4884
        %v4901 = vadd.f32 %v4672, %v4885
        %v4902 = vadd.f32 %v4675, %v4886
        %v4903 = vadd.f32 %v4677, %v4887
        %v4904 = vadd.f32 %v4680, %v4888
        %v4905 = vadd.f32 %v4682, %v4889
        %v4906 = vadd.f32 %v4685, %v4890
        %v4907 = vadd.f32 %v4687, %v4891
        %v4908 = vadd.f32 %v4690, %v4892
        %v4909 = vadd.f32 %v4692, %v4893
        %v4910 = vadd.f32 %v4695, %v4894
        %v4911 = vadd.f32 %v4697, %v4895
        %v4912 = vadd.f32 %v4700, %v4896
        %v4913 = vadd.f32 %v4702, %v4897
        %v4914 = vld [vmem:[%s8] sm:$0xf]
        %v4915 = vld [vmem:[%s8 + $0x4] sm:$0xf]
        %v4916 = vld [vmem:[%s8 + $0x8] sm:$0xf]
        %v4917 = vld [vmem:[%s8 + $0xc] sm:$0xf]
        %v4918 = vld [vmem:[%s8 + $0x10] sm:$0xf]
        %v4919 = vld [vmem:[%s8 + $0x14] sm:$0xf]
        %v4920 = vld [vmem:[%s8 + $0x18] sm:$0xf]
        %v4921 = vld [vmem:[%s8 + $0x1c] sm:$0xf]
        %v4922 = vld [vmem:[%s8 + $0x20] sm:$0xf]
        %v4923 = vld [vmem:[%s8 + $0x24] sm:$0xf]
        %v4924 = vld [vmem:[%s8 + $0x28] sm:$0xf]
        %v4925 = vld [vmem:[%s8 + $0x2c] sm:$0xf]
        %v4926 = vld [vmem:[%s8 + $0x30] sm:$0xf]
        %v4927 = vld [vmem:[%s8 + $0x34] sm:$0xf]
        %v4928 = vld [vmem:[%s8 + $0x38] sm:$0xf]
        %v4929 = vld [vmem:[%s8 + $0x3c] sm:$0xf]
        %v4930 = vpack.c.bf16 %v4899, %v4898
        %v4931 = vpack.c.bf16 %v4901, %v4900
        %v4932 = vpack.c.bf16 %v4903, %v4902
        %v4933 = vpack.c.bf16 %v4905, %v4904
        %v4934 = vpack.c.bf16 %v4907, %v4906
        %v4935 = vpack.c.bf16 %v4909, %v4908
        %v4936 = vpack.c.bf16 %v4911, %v4910
        %v4937 = vpack.c.bf16 %v4913, %v4912
        %v4938 = vld [vmem:[%s9] sm:$0x1]
        %v4940 = vperm.slane %v4938, 0
        %v4958 = vunpack.c.l.b16 %v4914
        %v4959 = vunpack.c.l.b16 %v4915
        %v4960 = vunpack.c.l.b16 %v4916
        %v4961 = vunpack.c.l.b16 %v4917
        %v4962 = vunpack.c.l.b16 %v4918
        %v4963 = vunpack.c.l.b16 %v4919
        %v4964 = vunpack.c.l.b16 %v4920
        %v4965 = vunpack.c.l.b16 %v4921
        %v4966 = vunpack.c.l.b16 %v4922
        %v4967 = vunpack.c.l.b16 %v4923
        %v4968 = vunpack.c.l.b16 %v4924
        %v4969 = vunpack.c.l.b16 %v4925
        %v4970 = vunpack.c.l.b16 %v4926
        %v4971 = vunpack.c.l.b16 %v4927
        %v4972 = vunpack.c.l.b16 %v4928
        %v4973 = vunpack.c.l.b16 %v4929
        %v4974 = vpack.c.b16 %v4959, %v4958
        %v4975 = vpack.c.b16 %v4961, %v4960
        %v4976 = vpack.c.b16 %v4963, %v4962
        %v4977 = vpack.c.b16 %v4965, %v4964
        %v4978 = vpack.c.b16 %v4967, %v4966
        %v4979 = vpack.c.b16 %v4969, %v4968
        %v4980 = vpack.c.b16 %v4971, %v4970
        %v4981 = vpack.c.b16 %v4973, %v4972
        %4990 = vmatpush.bf16.msra.mxu0 %v4981
        %4991 = vmatpush.bf16.msra.mxu0 %v4980
        %4992 = vmatpush.bf16.msra.mxu0 %v4979
        %4993 = vmatpush.bf16.msra.mxu0 %v4978
        %4994 = vmatpush.bf16.msra.mxu0 %v4977
        %4995 = vmatpush.bf16.msra.mxu0 %v4976
        %4996 = vmatpush.bf16.msra.mxu0 %v4975
        %4997 = vmatpush.bf16.msra.mxu0 %v4974
        %4998 = vmatmul.bf16.gmra.mxu0 %v4930
        %v4999 = vpop.f32.mrf.mxu0
        %v5000 = vadd.f32 %v4940, %v4999
        %v5001 = vpop.f32.mrf.mxu0
        %v5002 = vadd.f32 %v4940, %v5001
        %5003 = vmatmul.bf16.gmra.mxu0 %v4931
        %v5004 = vpop.f32.mrf.mxu0
        %v5005 = vadd.f32 %v4940, %v5004
        %v5006 = vpop.f32.mrf.mxu0
        %v5007 = vadd.f32 %v4940, %v5006
        %5008 = vmatmul.bf16.gmra.mxu0 %v4932
        %v5009 = vpop.f32.mrf.mxu0
        %v5010 = vadd.f32 %v4940, %v5009
        %v5011 = vpop.f32.mrf.mxu0
        %v5012 = vadd.f32 %v4940, %v5011
        %5013 = vmatmul.bf16.gmra.mxu0 %v4933
        %v5014 = vpop.f32.mrf.mxu0
        %v5015 = vadd.f32 %v4940, %v5014
        %v5016 = vpop.f32.mrf.mxu0
        %v5017 = vadd.f32 %v4940, %v5016
        %5018 = vmatmul.bf16.gmra.mxu0 %v4934
        %v5019 = vpop.f32.mrf.mxu0
        %v5020 = vadd.f32 %v4940, %v5019
        %v5021 = vpop.f32.mrf.mxu0
        %v5022 = vadd.f32 %v4940, %v5021
        %5023 = vmatmul.bf16.gmra.mxu0 %v4935
        %v5024 = vpop.f32.mrf.mxu0
        %v5025 = vadd.f32 %v4940, %v5024
        %v5026 = vpop.f32.mrf.mxu0
        %v5027 = vadd.f32 %v4940, %v5026
        %5028 = vmatmul.bf16.gmra.mxu0 %v4936
        %v5029 = vpop.f32.mrf.mxu0
        %v5030 = vadd.f32 %v4940, %v5029
        %v5031 = vpop.f32.mrf.mxu0
        %v5032 = vadd.f32 %v4940, %v5031
        %5033 = vmatmul.bf16.gmra.mxu0 %v4937
        %v5034 = vpop.f32.mrf.mxu0
        %v5035 = vadd.f32 %v4940, %v5034
        %v5036 = vpop.f32.mrf.mxu0
        %v5037 = vadd.f32 %v4940, %v5036
        %5038 = vdwg.mxu0
        %v5039 = vmax.f32 %v5000, 0.0
        %v5040 = vmax.f32 %v5002, 0.0
        %v5041 = vmax.f32 %v5005, 0.0
        %v5042 = vmax.f32 %v5007, 0.0
        %v5043 = vmax.f32 %v5010, 0.0
        %v5044 = vmax.f32 %v5012, 0.0
        %v5045 = vmax.f32 %v5015, 0.0
        %v5046 = vmax.f32 %v5017, 0.0
        %v5047 = vmax.f32 %v5020, 0.0
        %v5048 = vmax.f32 %v5022, 0.0
        %v5049 = vmax.f32 %v5025, 0.0
        %v5050 = vmax.f32 %v5027, 0.0
        %v5051 = vmax.f32 %v5030, 0.0
        %v5052 = vmax.f32 %v5032, 0.0
        %v5053 = vmax.f32 %v5035, 0.0
        %v5054 = vmax.f32 %v5037, 0.0
        %v5055 = vld [vmem:[#allocation2] sm:$0xff]
        %v5056 = vld [vmem:[#allocation2 + $0x8] sm:$0xff]
        %v5057 = vld [vmem:[#allocation2 + $0x10] sm:$0xff]
        %v5058 = vld [vmem:[#allocation2 + $0x18] sm:$0xff]
        %v5059 = vld [vmem:[#allocation2 + $0x20] sm:$0xff]
        %v5060 = vld [vmem:[#allocation2 + $0x28] sm:$0xff]
        %v5061 = vld [vmem:[#allocation2 + $0x30] sm:$0xff]
        %v5062 = vld [vmem:[#allocation2 + $0x38] sm:$0xff]
        %v5063 = vld [vmem:[#allocation2 + $0x40] sm:$0xff]
        %v5064 = vld [vmem:[#allocation2 + $0x48] sm:$0xff]
        %v5065 = vld [vmem:[#allocation2 + $0x50] sm:$0xff]
        %v5066 = vld [vmem:[#allocation2 + $0x58] sm:$0xff]
        %v5067 = vld [vmem:[#allocation2 + $0x60] sm:$0xff]
        %v5068 = vld [vmem:[#allocation2 + $0x68] sm:$0xff]
        %v5069 = vld [vmem:[#allocation2 + $0x70] sm:$0xff]
        %v5070 = vld [vmem:[#allocation2 + $0x78] sm:$0xff]
        %v5071 = vpack.c.bf16 %v5040, %v5039
        %v5072 = vpack.c.bf16 %v5042, %v5041
        %v5073 = vpack.c.bf16 %v5044, %v5043
        %v5074 = vpack.c.bf16 %v5046, %v5045
        %v5075 = vpack.c.bf16 %v5048, %v5047
        %v5076 = vpack.c.bf16 %v5050, %v5049
        %v5077 = vpack.c.bf16 %v5052, %v5051
        %v5078 = vpack.c.bf16 %v5054, %v5053
        %v5079 = vld [vmem:[%s11] sm:$0x3]
        %v5081 = vperm.slane %v5079, 0
        %v5082 = vperm.slane %v5079, 1
        %v5101 = vunpack.c.l.b16 %v5055
        %v5102 = vunpack.c.h.b16 %v5055
        %v5103 = vunpack.c.l.b16 %v5056
        %v5104 = vunpack.c.h.b16 %v5056
        %v5105 = vunpack.c.l.b16 %v5057
        %v5106 = vunpack.c.h.b16 %v5057
        %v5107 = vunpack.c.l.b16 %v5058
        %v5108 = vunpack.c.h.b16 %v5058
        %v5109 = vunpack.c.l.b16 %v5059
        %v5110 = vunpack.c.h.b16 %v5059
        %v5111 = vunpack.c.l.b16 %v5060
        %v5112 = vunpack.c.h.b16 %v5060
        %v5113 = vunpack.c.l.b16 %v5061
        %v5114 = vunpack.c.h.b16 %v5061
        %v5115 = vunpack.c.l.b16 %v5062
        %v5116 = vunpack.c.h.b16 %v5062
        %v5117 = vunpack.c.l.b16 %v5063
        %v5118 = vunpack.c.h.b16 %v5063
        %v5119 = vunpack.c.l.b16 %v5064
        %v5120 = vunpack.c.h.b16 %v5064
        %v5121 = vunpack.c.l.b16 %v5065
        %v5122 = vunpack.c.h.b16 %v5065
        %v5123 = vunpack.c.l.b16 %v5066
        %v5124 = vunpack.c.h.b16 %v5066
        %v5125 = vunpack.c.l.b16 %v5067
        %v5126 = vunpack.c.h.b16 %v5067
        %v5127 = vunpack.c.l.b16 %v5068
        %v5128 = vunpack.c.h.b16 %v5068
        %v5129 = vunpack.c.l.b16 %v5069
        %v5130 = vunpack.c.h.b16 %v5069
        %v5131 = vunpack.c.l.b16 %v5070
        %v5132 = vunpack.c.h.b16 %v5070
        %v5133 = vpack.c.b16 %v5103, %v5101
        %v5134 = vpack.c.b16 %v5104, %v5102
        %v5135 = vpack.c.b16 %v5107, %v5105
        %v5136 = vpack.c.b16 %v5108, %v5106
        %v5137 = vpack.c.b16 %v5111, %v5109
        %v5138 = vpack.c.b16 %v5112, %v5110
        %v5139 = vpack.c.b16 %v5115, %v5113
        %v5140 = vpack.c.b16 %v5116, %v5114
        %v5141 = vpack.c.b16 %v5119, %v5117
        %v5142 = vpack.c.b16 %v5120, %v5118
        %v5143 = vpack.c.b16 %v5123, %v5121
        %v5144 = vpack.c.b16 %v5124, %v5122
        %v5145 = vpack.c.b16 %v5127, %v5125
        %v5146 = vpack.c.b16 %v5128, %v5126
        %v5147 = vpack.c.b16 %v5131, %v5129
        %v5148 = vpack.c.b16 %v5132, %v5130
        %5165 = vmatpush.bf16.msra.mxu0 %v5147
        %5166 = vmatpush.bf16.msra.mxu0 %v5145
        %5167 = vmatpush.bf16.msra.mxu0 %v5143
        %5168 = vmatpush.bf16.msra.mxu0 %v5141
        %5169 = vmatpush.bf16.msra.mxu0 %v5139
        %5170 = vmatpush.bf16.msra.mxu0 %v5137
        %5171 = vmatpush.bf16.msra.mxu0 %v5135
        %5172 = vmatpush.bf16.msra.mxu0 %v5133
        %5173 = vmatmul.bf16.gmra.mxu0 %v5071
        %v5174 = vpop.f32.mrf.mxu0
        %v5175 = vadd.f32 %v5081, %v5174
        %v5176 = vpop.f32.mrf.mxu0
        %v5177 = vadd.f32 %v5081, %v5176
        %5178 = vmatmul.bf16.gmra.mxu0 %v5072
        %v5179 = vpop.f32.mrf.mxu0
        %v5180 = vadd.f32 %v5081, %v5179
        %v5181 = vpop.f32.mrf.mxu0
        %v5182 = vadd.f32 %v5081, %v5181
        %5183 = vmatmul.bf16.gmra.mxu0 %v5073
        %v5184 = vpop.f32.mrf.mxu0
        %v5185 = vadd.f32 %v5081, %v5184
        %v5186 = vpop.f32.mrf.mxu0
        %v5187 = vadd.f32 %v5081, %v5186
        %5188 = vmatmul.bf16.gmra.mxu0 %v5074
        %v5189 = vpop.f32.mrf.mxu0
        %v5190 = vadd.f32 %v5081, %v5189
        %v5191 = vpop.f32.mrf.mxu0
        %v5192 = vadd.f32 %v5081, %v5191
        %5193 = vmatmul.bf16.gmra.mxu0 %v5075
        %v5194 = vpop.f32.mrf.mxu0
        %v5195 = vadd.f32 %v5081, %v5194
        %v5196 = vpop.f32.mrf.mxu0
        %v5197 = vadd.f32 %v5081, %v5196
        %5198 = vmatmul.bf16.gmra.mxu0 %v5076
        %v5199 = vpop.f32.mrf.mxu0
        %v5200 = vadd.f32 %v5081, %v5199
        %v5201 = vpop.f32.mrf.mxu0
        %v5202 = vadd.f32 %v5081, %v5201
        %5203 = vmatmul.bf16.gmra.mxu0 %v5077
        %v5204 = vpop.f32.mrf.mxu0
        %v5205 = vadd.f32 %v5081, %v5204
        %v5206 = vpop.f32.mrf.mxu0
        %v5207 = vadd.f32 %v5081, %v5206
        %5208 = vmatmul.bf16.gmra.mxu0 %v5078
        %v5209 = vpop.f32.mrf.mxu0
        %v5210 = vadd.f32 %v5081, %v5209
        %v5211 = vpop.f32.mrf.mxu0
        %v5212 = vadd.f32 %v5081, %v5211
        %5213 = vdwg.mxu0
        %5214 = vmatpush.bf16.msra.mxu0 %v5148
        %5215 = vmatpush.bf16.msra.mxu0 %v5146
        %5216 = vmatpush.bf16.msra.mxu0 %v5144
        %5217 = vmatpush.bf16.msra.mxu0 %v5142
        %5218 = vmatpush.bf16.msra.mxu0 %v5140
        %5219 = vmatpush.bf16.msra.mxu0 %v5138
        %5220 = vmatpush.bf16.msra.mxu0 %v5136
        %5221 = vmatpush.bf16.msra.mxu0 %v5134
        %5222 = vmatmul.bf16.gmra.mxu0 %v5071
        %v5223 = vpop.f32.mrf.mxu0
        %v5224 = vadd.f32 %v5082, %v5223
        %v5225 = vpop.f32.mrf.mxu0
        %v5226 = vadd.f32 %v5082, %v5225
        %5227 = vmatmul.bf16.gmra.mxu0 %v5072
        %v5228 = vpop.f32.mrf.mxu0
        %v5229 = vadd.f32 %v5082, %v5228
        %v5230 = vpop.f32.mrf.mxu0
        %v5231 = vadd.f32 %v5082, %v5230
        %5232 = vmatmul.bf16.gmra.mxu0 %v5073
        %v5233 = vpop.f32.mrf.mxu0
        %v5234 = vadd.f32 %v5082, %v5233
        %v5235 = vpop.f32.mrf.mxu0
        %v5236 = vadd.f32 %v5082, %v5235
        %5237 = vmatmul.bf16.gmra.mxu0 %v5074
        %v5238 = vpop.f32.mrf.mxu0
        %v5239 = vadd.f32 %v5082, %v5238
        %v5240 = vpop.f32.mrf.mxu0
        %v5241 = vadd.f32 %v5082, %v5240
        %5242 = vmatmul.bf16.gmra.mxu0 %v5075
        %v5243 = vpop.f32.mrf.mxu0
        %v5244 = vadd.f32 %v5082, %v5243
        %v5245 = vpop.f32.mrf.mxu0
        %v5246 = vadd.f32 %v5082, %v5245
        %5247 = vmatmul.bf16.gmra.mxu0 %v5076
        %v5248 = vpop.f32.mrf.mxu0
        %v5249 = vadd.f32 %v5082, %v5248
        %v5250 = vpop.f32.mrf.mxu0
        %v5251 = vadd.f32 %v5082, %v5250
        %5252 = vmatmul.bf16.gmra.mxu0 %v5077
        %v5253 = vpop.f32.mrf.mxu0
        %v5254 = vadd.f32 %v5082, %v5253
        %v5255 = vpop.f32.mrf.mxu0
        %v5256 = vadd.f32 %v5082, %v5255
        %5257 = vmatmul.bf16.gmra.mxu0 %v5078
        %v5258 = vpop.f32.mrf.mxu0
        %v5259 = vadd.f32 %v5082, %v5258
        %v5260 = vpop.f32.mrf.mxu0
        %v5261 = vadd.f32 %v5082, %v5260
        %5262 = vdwg.mxu0
        %v5263 = vmax.f32 %v5175, 0.0
        %v5264 = vmax.f32 %v5224, 0.0
        %v5265 = vmax.f32 %v5177, 0.0
        %v5266 = vmax.f32 %v5226, 0.0
        %v5267 = vmax.f32 %v5180, 0.0
        %v5268 = vmax.f32 %v5229, 0.0
        %v5269 = vmax.f32 %v5182, 0.0
        %v5270 = vmax.f32 %v5231, 0.0
        %v5271 = vmax.f32 %v5185, 0.0
        %v5272 = vmax.f32 %v5234, 0.0
        %v5273 = vmax.f32 %v5187, 0.0
        %v5274 = vmax.f32 %v5236, 0.0
        %v5275 = vmax.f32 %v5190, 0.0
        %v5276 = vmax.f32 %v5239, 0.0
        %v5277 = vmax.f32 %v5192, 0.0
        %v5278 = vmax.f32 %v5241, 0.0
        %v5279 = vmax.f32 %v5195, 0.0
        %v5280 = vmax.f32 %v5244, 0.0
        %v5281 = vmax.f32 %v5197, 0.0
        %v5282 = vmax.f32 %v5246, 0.0
        %v5283 = vmax.f32 %v5200, 0.0
        %v5284 = vmax.f32 %v5249, 0.0
        %v5285 = vmax.f32 %v5202, 0.0
        %v5286 = vmax.f32 %v5251, 0.0
        %v5287 = vmax.f32 %v5205, 0.0
        %v5288 = vmax.f32 %v5254, 0.0
        %v5289 = vmax.f32 %v5207, 0.0
        %v5290 = vmax.f32 %v5256, 0.0
        %v5291 = vmax.f32 %v5210, 0.0
        %v5292 = vmax.f32 %v5259, 0.0
        %v5293 = vmax.f32 %v5212, 0.0
        %v5294 = vmax.f32 %v5261, 0.0
        %v5295 = vld [vmem:[%s12] sm:$0xff]
        %v5296 = vld [vmem:[%s12 + $0x8] sm:$0xff]
        %v5297 = vld [vmem:[%s12 + $0x10] sm:$0xff]
        %v5298 = vld [vmem:[%s12 + $0x18] sm:$0xf]
        %v5299 = vld [vmem:[%s12 + $0x1c] sm:$0xff]
        %v5300 = vld [vmem:[%s12 + $0x24] sm:$0xff]
        %v5301 = vld [vmem:[%s12 + $0x2c] sm:$0xff]
        %v5302 = vld [vmem:[%s12 + $0x34] sm:$0xf]
        %v5303 = vld [vmem:[%s12 + $0x38] sm:$0xff]
        %v5304 = vld [vmem:[%s12 + $0x40] sm:$0xff]
        %v5305 = vld [vmem:[%s12 + $0x48] sm:$0xff]
        %v5306 = vld [vmem:[%s12 + $0x50] sm:$0xf]
        %v5307 = vld [vmem:[%s12 + $0x54] sm:$0xff]
        %v5308 = vld [vmem:[%s12 + $0x5c] sm:$0xff]
        %v5309 = vld [vmem:[%s12 + $0x64] sm:$0xff]
        %v5310 = vld [vmem:[%s12 + $0x6c] sm:$0xf]
        %v5311 = vld [vmem:[%s12 + $0x70] sm:$0xff]
        %v5312 = vld [vmem:[%s12 + $0x78] sm:$0xff]
        %v5313 = vld [vmem:[%s12 + $0x80] sm:$0xff]
        %v5314 = vld [vmem:[%s12 + $0x88] sm:$0xf]
        %v5315 = vld [vmem:[%s12 + $0x8c] sm:$0xff]
        %v5316 = vld [vmem:[%s12 + $0x94] sm:$0xff]
        %v5317 = vld [vmem:[%s12 + $0x9c] sm:$0xff]
        %v5318 = vld [vmem:[%s12 + $0xa4] sm:$0xf]
        %v5319 = vld [vmem:[%s12 + $0xa8] sm:$0xff]
        %v5320 = vld [vmem:[%s12 + $0xb0] sm:$0xff]
        %v5321 = vld [vmem:[%s12 + $0xb8] sm:$0xff]
        %v5322 = vld [vmem:[%s12 + $0xc0] sm:$0xf]
        %v5323 = vld [vmem:[%s12 + $0xc4] sm:$0xff]
        %v5324 = vld [vmem:[%s12 + $0xcc] sm:$0xff]
        %v5325 = vld [vmem:[%s12 + $0xd4] sm:$0xff]
        %v5326 = vld [vmem:[%s12 + $0xdc] sm:$0xf]
        %v5327 = vld [vmem:[%s12 + $0xe0] sm:$0xff]
        %v5328 = vld [vmem:[%s12 + $0xe8] sm:$0xff]
        %v5329 = vld [vmem:[%s12 + $0xf0] sm:$0xff]
        %v5330 = vld [vmem:[%s12 + $0xf8] sm:$0xf]
        %v5331 = vld [vmem:[%s12 + $0xfc] sm:$0xff]
        %v5332 = vld [vmem:[%s12 + $0x104] sm:$0xff]
        %v5333 = vld [vmem:[%s12 + $0x10c] sm:$0xff]
        %v5334 = vld [vmem:[%s12 + $0x114] sm:$0xf]
        %v5335 = vld [vmem:[%s12 + $0x118] sm:$0xff]
        %v5336 = vld [vmem:[%s12 + $0x120] sm:$0xff]
        %v5337 = vld [vmem:[%s12 + $0x128] sm:$0xff]
        %v5338 = vld [vmem:[%s12 + $0x130] sm:$0xf]
        %v5339 = vld [vmem:[%s12 + $0x134] sm:$0xff]
        %v5340 = vld [vmem:[%s12 + $0x13c] sm:$0xff]
        %v5341 = vld [vmem:[%s12 + $0x144] sm:$0xff]
        %v5342 = vld [vmem:[%s12 + $0x14c] sm:$0xf]
        %v5343 = vld [vmem:[%s12 + $0x150] sm:$0xff]
        %v5344 = vld [vmem:[%s12 + $0x158] sm:$0xff]
        %v5345 = vld [vmem:[%s12 + $0x160] sm:$0xff]
        %v5346 = vld [vmem:[%s12 + $0x168] sm:$0xf]
        %v5347 = vld [vmem:[%s12 + $0x16c] sm:$0xff]
        %v5348 = vld [vmem:[%s12 + $0x174] sm:$0xff]
        %v5349 = vld [vmem:[%s12 + $0x17c] sm:$0xff]
        %v5350 = vld [vmem:[%s12 + $0x184] sm:$0xf]
        %v5351 = vld [vmem:[%s12 + $0x188] sm:$0xff]
        %v5352 = vld [vmem:[%s12 + $0x190] sm:$0xff]
        %v5353 = vld [vmem:[%s12 + $0x198] sm:$0xff]
        %v5354 = vld [vmem:[%s12 + $0x1a0] sm:$0xf]
        %v5355 = vld [vmem:[%s12 + $0x1a4] sm:$0xff]
        %v5356 = vld [vmem:[%s12 + $0x1ac] sm:$0xff]
        %v5357 = vld [vmem:[%s12 + $0x1b4] sm:$0xff]
        %v5358 = vld [vmem:[%s12 + $0x1bc] sm:$0xf]
        %v5359 = vld [vmem:[%s12 + $0x1c0] sm:$0xff]
        %v5360 = vld [vmem:[%s12 + $0x1c8] sm:$0xff]
        %v5361 = vld [vmem:[%s12 + $0x1d0] sm:$0xff]
        %v5362 = vld [vmem:[%s12 + $0x1d8] sm:$0xf]
        %v5363 = vld [vmem:[%s12 + $0x1dc] sm:$0xff]
        %v5364 = vld [vmem:[%s12 + $0x1e4] sm:$0xff]
        %v5365 = vld [vmem:[%s12 + $0x1ec] sm:$0xff]
        %v5366 = vld [vmem:[%s12 + $0x1f4] sm:$0xf]
        %v5367 = vld [vmem:[%s12 + $0x1f8] sm:$0xff]
        %v5368 = vld [vmem:[%s12 + $0x200] sm:$0xff]
        %v5369 = vld [vmem:[%s12 + $0x208] sm:$0xff]
        %v5370 = vld [vmem:[%s12 + $0x210] sm:$0xf]
        %v5371 = vld [vmem:[%s12 + $0x214] sm:$0xff]
        %v5372 = vld [vmem:[%s12 + $0x21c] sm:$0xff]
        %v5373 = vld [vmem:[%s12 + $0x224] sm:$0xff]
        %v5374 = vld [vmem:[%s12 + $0x22c] sm:$0xf]
        %v5375 = vld [vmem:[%s12 + $0x230] sm:$0xff]
        %v5376 = vld [vmem:[%s12 + $0x238] sm:$0xff]
        %v5377 = vld [vmem:[%s12 + $0x240] sm:$0xff]
        %v5378 = vld [vmem:[%s12 + $0x248] sm:$0xf]
        %v5379 = vld [vmem:[%s12 + $0x24c] sm:$0xff]
        %v5380 = vld [vmem:[%s12 + $0x254] sm:$0xff]
        %v5381 = vld [vmem:[%s12 + $0x25c] sm:$0xff]
        %v5382 = vld [vmem:[%s12 + $0x264] sm:$0xf]
        %v5383 = vld [vmem:[%s12 + $0x268] sm:$0xff]
        %v5384 = vld [vmem:[%s12 + $0x270] sm:$0xff]
        %v5385 = vld [vmem:[%s12 + $0x278] sm:$0xff]
        %v5386 = vld [vmem:[%s12 + $0x280] sm:$0xf]
        %v5387 = vld [vmem:[%s12 + $0x284] sm:$0xff]
        %v5388 = vld [vmem:[%s12 + $0x28c] sm:$0xff]
        %v5389 = vld [vmem:[%s12 + $0x294] sm:$0xff]
        %v5390 = vld [vmem:[%s12 + $0x29c] sm:$0xf]
        %v5391 = vld [vmem:[%s12 + $0x2a0] sm:$0xff]
        %v5392 = vld [vmem:[%s12 + $0x2a8] sm:$0xff]
        %v5393 = vld [vmem:[%s12 + $0x2b0] sm:$0xff]
        %v5394 = vld [vmem:[%s12 + $0x2b8] sm:$0xf]
        %v5395 = vld [vmem:[%s12 + $0x2bc] sm:$0xff]
        %v5396 = vld [vmem:[%s12 + $0x2c4] sm:$0xff]
        %v5397 = vld [vmem:[%s12 + $0x2cc] sm:$0xff]
        %v5398 = vld [vmem:[%s12 + $0x2d4] sm:$0xf]
        %v5399 = vld [vmem:[%s12 + $0x2d8] sm:$0xff]
        %v5400 = vld [vmem:[%s12 + $0x2e0] sm:$0xff]
        %v5401 = vld [vmem:[%s12 + $0x2e8] sm:$0xff]
        %v5402 = vld [vmem:[%s12 + $0x2f0] sm:$0xf]
        %v5403 = vld [vmem:[%s12 + $0x2f4] sm:$0xff]
        %v5404 = vld [vmem:[%s12 + $0x2fc] sm:$0xff]
        %v5405 = vld [vmem:[%s12 + $0x304] sm:$0xff]
        %v5406 = vld [vmem:[%s12 + $0x30c] sm:$0xf]
        %v5407 = vld [vmem:[%s12 + $0x310] sm:$0xff]
        %v5408 = vld [vmem:[%s12 + $0x318] sm:$0xff]
        %v5409 = vld [vmem:[%s12 + $0x320] sm:$0xff]
        %v5410 = vld [vmem:[%s12 + $0x328] sm:$0xf]
        %v5411 = vld [vmem:[%s12 + $0x32c] sm:$0xff]
        %v5412 = vld [vmem:[%s12 + $0x334] sm:$0xff]
        %v5413 = vld [vmem:[%s12 + $0x33c] sm:$0xff]
        %v5414 = vld [vmem:[%s12 + $0x344] sm:$0xf]
        %v5415 = vld [vmem:[%s12 + $0x348] sm:$0xff]
        %v5416 = vld [vmem:[%s12 + $0x350] sm:$0xff]
        %v5417 = vld [vmem:[%s12 + $0x358] sm:$0xff]
        %v5418 = vld [vmem:[%s12 + $0x360] sm:$0xf]
        %v5419 = vld [vmem:[%s12 + $0x364] sm:$0xff]
        %v5420 = vld [vmem:[%s12 + $0x36c] sm:$0xff]
        %v5421 = vld [vmem:[%s12 + $0x374] sm:$0xff]
        %v5422 = vld [vmem:[%s12 + $0x37c] sm:$0xf]
        %v5423 = vpack.c.bf16 %v5265, %v5263
        %v5424 = vpack.c.bf16 %v5266, %v5264
        %v5425 = vpack.c.bf16 %v5269, %v5267
        %v5426 = vpack.c.bf16 %v5270, %v5268
        %v5427 = vpack.c.bf16 %v5273, %v5271
        %v5428 = vpack.c.bf16 %v5274, %v5272
        %v5429 = vpack.c.bf16 %v5277, %v5275
        %v5430 = vpack.c.bf16 %v5278, %v5276
        %v5431 = vpack.c.bf16 %v5281, %v5279
        %v5432 = vpack.c.bf16 %v5282, %v5280
        %v5433 = vpack.c.bf16 %v5285, %v5283
        %v5434 = vpack.c.bf16 %v5286, %v5284
        %v5435 = vpack.c.bf16 %v5289, %v5287
        %v5436 = vpack.c.bf16 %v5290, %v5288
        %v5437 = vpack.c.bf16 %v5293, %v5291
        %v5438 = vpack.c.bf16 %v5294, %v5292
        %v5439 = vld [vmem:[%s13] sm:$0x7f]
        %v5441 = vperm.slane %v5439, 0
        %v5442 = vperm.slane %v5439, 1
        %v5443 = vperm.slane %v5439, 2
        %v5444 = vperm.slane %v5439, 3
        %v5445 = vperm.slane %v5439, 4
        %v5446 = vperm.slane %v5439, 5
        %v5447 = vperm.slane %v5439, 6
        %v5583 = vunpack.c.l.b16 %v5295
        %v5584 = vunpack.c.h.b16 %v5295
        %v5585 = vunpack.c.l.b16 %v5296
        %v5586 = vunpack.c.h.b16 %v5296
        %v5587 = vunpack.c.l.b16 %v5297
        %v5588 = vunpack.c.h.b16 %v5297
        %v5589 = vunpack.c.l.b16 %v5298
        %v5590 = vunpack.c.l.b16 %v5299
        %v5591 = vunpack.c.h.b16 %v5299
        %v5592 = vunpack.c.l.b16 %v5300
        %v5593 = vunpack.c.h.b16 %v5300
        %v5594 = vunpack.c.l.b16 %v5301
        %v5595 = vunpack.c.h.b16 %v5301
        %v5596 = vunpack.c.l.b16 %v5302
        %v5597 = vunpack.c.l.b16 %v5303
        %v5598 = vunpack.c.h.b16 %v5303
        %v5599 = vunpack.c.l.b16 %v5304
        %v5600 = vunpack.c.h.b16 %v5304
        %v5601 = vunpack.c.l.b16 %v5305
        %v5602 = vunpack.c.h.b16 %v5305
        %v5603 = vunpack.c.l.b16 %v5306
        %v5604 = vunpack.c.l.b16 %v5307
        %v5605 = vunpack.c.h.b16 %v5307
        %v5606 = vunpack.c.l.b16 %v5308
        %v5607 = vunpack.c.h.b16 %v5308
        %v5608 = vunpack.c.l.b16 %v5309
        %v5609 = vunpack.c.h.b16 %v5309
        %v5610 = vunpack.c.l.b16 %v5310
        %v5611 = vunpack.c.l.b16 %v5311
        %v5612 = vunpack.c.h.b16 %v5311
        %v5613 = vunpack.c.l.b16 %v5312
        %v5614 = vunpack.c.h.b16 %v5312
        %v5615 = vunpack.c.l.b16 %v5313
        %v5616 = vunpack.c.h.b16 %v5313
        %v5617 = vunpack.c.l.b16 %v5314
        %v5618 = vunpack.c.l.b16 %v5315
        %v5619 = vunpack.c.h.b16 %v5315
        %v5620 = vunpack.c.l.b16 %v5316
        %v5621 = vunpack.c.h.b16 %v5316
        %v5622 = vunpack.c.l.b16 %v5317
        %v5623 = vunpack.c.h.b16 %v5317
        %v5624 = vunpack.c.l.b16 %v5318
        %v5625 = vunpack.c.l.b16 %v5319
        %v5626 = vunpack.c.h.b16 %v5319
        %v5627 = vunpack.c.l.b16 %v5320
        %v5628 = vunpack.c.h.b16 %v5320
        %v5629 = vunpack.c.l.b16 %v5321
        %v5630 = vunpack.c.h.b16 %v5321
        %v5631 = vunpack.c.l.b16 %v5322
        %v5632 = vunpack.c.l.b16 %v5323
        %v5633 = vunpack.c.h.b16 %v5323
        %v5634 = vunpack.c.l.b16 %v5324
        %v5635 = vunpack.c.h.b16 %v5324
        %v5636 = vunpack.c.l.b16 %v5325
        %v5637 = vunpack.c.h.b16 %v5325
        %v5638 = vunpack.c.l.b16 %v5326
        %v5639 = vunpack.c.l.b16 %v5327
        %v5640 = vunpack.c.h.b16 %v5327
        %v5641 = vunpack.c.l.b16 %v5328
        %v5642 = vunpack.c.h.b16 %v5328
        %v5643 = vunpack.c.l.b16 %v5329
        %v5644 = vunpack.c.h.b16 %v5329
        %v5645 = vunpack.c.l.b16 %v5330
        %v5646 = vunpack.c.l.b16 %v5331
        %v5647 = vunpack.c.h.b16 %v5331
        %v5648 = vunpack.c.l.b16 %v5332
        %v5649 = vunpack.c.h.b16 %v5332
        %v5650 = vunpack.c.l.b16 %v5333
        %v5651 = vunpack.c.h.b16 %v5333
        %v5652 = vunpack.c.l.b16 %v5334
        %v5653 = vunpack.c.l.b16 %v5335
        %v5654 = vunpack.c.h.b16 %v5335
        %v5655 = vunpack.c.l.b16 %v5336
        %v5656 = vunpack.c.h.b16 %v5336
        %v5657 = vunpack.c.l.b16 %v5337
        %v5658 = vunpack.c.h.b16 %v5337
        %v5659 = vunpack.c.l.b16 %v5338
        %v5660 = vunpack.c.l.b16 %v5339
        %v5661 = vunpack.c.h.b16 %v5339
        %v5662 = vunpack.c.l.b16 %v5340
        %v5663 = vunpack.c.h.b16 %v5340
        %v5664 = vunpack.c.l.b16 %v5341
        %v5665 = vunpack.c.h.b16 %v5341
        %v5666 = vunpack.c.l.b16 %v5342
        %v5667 = vunpack.c.l.b16 %v5343
        %v5668 = vunpack.c.h.b16 %v5343
        %v5669 = vunpack.c.l.b16 %v5344
        %v5670 = vunpack.c.h.b16 %v5344
        %v5671 = vunpack.c.l.b16 %v5345
        %v5672 = vunpack.c.h.b16 %v5345
        %v5673 = vunpack.c.l.b16 %v5346
        %v5674 = vunpack.c.l.b16 %v5347
        %v5675 = vunpack.c.h.b16 %v5347
        %v5676 = vunpack.c.l.b16 %v5348
        %v5677 = vunpack.c.h.b16 %v5348
        %v5678 = vunpack.c.l.b16 %v5349
        %v5679 = vunpack.c.h.b16 %v5349
        %v5680 = vunpack.c.l.b16 %v5350
        %v5681 = vunpack.c.l.b16 %v5351
        %v5682 = vunpack.c.h.b16 %v5351
        %v5683 = vunpack.c.l.b16 %v5352
        %v5684 = vunpack.c.h.b16 %v5352
        %v5685 = vunpack.c.l.b16 %v5353
        %v5686 = vunpack.c.h.b16 %v5353
        %v5687 = vunpack.c.l.b16 %v5354
        %v5688 = vunpack.c.l.b16 %v5355
        %v5689 = vunpack.c.h.b16 %v5355
        %v5690 = vunpack.c.l.b16 %v5356
        %v5691 = vunpack.c.h.b16 %v5356
        %v5692 = vunpack.c.l.b16 %v5357
        %v5693 = vunpack.c.h.b16 %v5357
        %v5694 = vunpack.c.l.b16 %v5358
        %v5695 = vunpack.c.l.b16 %v5359
        %v5696 = vunpack.c.h.b16 %v5359
        %v5697 = vunpack.c.l.b16 %v5360
        %v5698 = vunpack.c.h.b16 %v5360
        %v5699 = vunpack.c.l.b16 %v5361
        %v5700 = vunpack.c.h.b16 %v5361
        %v5701 = vunpack.c.l.b16 %v5362
        %v5702 = vunpack.c.l.b16 %v5363
        %v5703 = vunpack.c.h.b16 %v5363
        %v5704 = vunpack.c.l.b16 %v5364
        %v5705 = vunpack.c.h.b16 %v5364
        %v5706 = vunpack.c.l.b16 %v5365
        %v5707 = vunpack.c.h.b16 %v5365
        %v5708 = vunpack.c.l.b16 %v5366
        %v5709 = vunpack.c.l.b16 %v5367
        %v5710 = vunpack.c.h.b16 %v5367
        %v5711 = vunpack.c.l.b16 %v5368
        %v5712 = vunpack.c.h.b16 %v5368
        %v5713 = vunpack.c.l.b16 %v5369
        %v5714 = vunpack.c.h.b16 %v5369
        %v5715 = vunpack.c.l.b16 %v5370
        %v5716 = vunpack.c.l.b16 %v5371
        %v5717 = vunpack.c.h.b16 %v5371
        %v5718 = vunpack.c.l.b16 %v5372
        %v5719 = vunpack.c.h.b16 %v5372
        %v5720 = vunpack.c.l.b16 %v5373
        %v5721 = vunpack.c.h.b16 %v5373
        %v5722 = vunpack.c.l.b16 %v5374
        %v5723 = vunpack.c.l.b16 %v5375
        %v5724 = vunpack.c.h.b16 %v5375
        %v5725 = vunpack.c.l.b16 %v5376
        %v5726 = vunpack.c.h.b16 %v5376
        %v5727 = vunpack.c.l.b16 %v5377
        %v5728 = vunpack.c.h.b16 %v5377
        %v5729 = vunpack.c.l.b16 %v5378
        %v5730 = vunpack.c.l.b16 %v5379
        %v5731 = vunpack.c.h.b16 %v5379
        %v5732 = vunpack.c.l.b16 %v5380
        %v5733 = vunpack.c.h.b16 %v5380
        %v5734 = vunpack.c.l.b16 %v5381
        %v5735 = vunpack.c.h.b16 %v5381
        %v5736 = vunpack.c.l.b16 %v5382
        %v5737 = vunpack.c.l.b16 %v5383
        %v5738 = vunpack.c.h.b16 %v5383
        %v5739 = vunpack.c.l.b16 %v5384
        %v5740 = vunpack.c.h.b16 %v5384
        %v5741 = vunpack.c.l.b16 %v5385
        %v5742 = vunpack.c.h.b16 %v5385
        %v5743 = vunpack.c.l.b16 %v5386
        %v5744 = vunpack.c.l.b16 %v5387
        %v5745 = vunpack.c.h.b16 %v5387
        %v5746 = vunpack.c.l.b16 %v5388
        %v5747 = vunpack.c.h.b16 %v5388
        %v5748 = vunpack.c.l.b16 %v5389
        %v5749 = vunpack.c.h.b16 %v5389
        %v5750 = vunpack.c.l.b16 %v5390
        %v5751 = vunpack.c.l.b16 %v5391
        %v5752 = vunpack.c.h.b16 %v5391
        %v5753 = vunpack.c.l.b16 %v5392
        %v5754 = vunpack.c.h.b16 %v5392
        %v5755 = vunpack.c.l.b16 %v5393
        %v5756 = vunpack.c.h.b16 %v5393
        %v5757 = vunpack.c.l.b16 %v5394
        %v5758 = vunpack.c.l.b16 %v5395
        %v5759 = vunpack.c.h.b16 %v5395
        %v5760 = vunpack.c.l.b16 %v5396
        %v5761 = vunpack.c.h.b16 %v5396
        %v5762 = vunpack.c.l.b16 %v5397
        %v5763 = vunpack.c.h.b16 %v5397
        %v5764 = vunpack.c.l.b16 %v5398
        %v5765 = vunpack.c.l.b16 %v5399
        %v5766 = vunpack.c.h.b16 %v5399
        %v5767 = vunpack.c.l.b16 %v5400
        %v5768 = vunpack.c.h.b16 %v5400
        %v5769 = vunpack.c.l.b16 %v5401
        %v5770 = vunpack.c.h.b16 %v5401
        %v5771 = vunpack.c.l.b16 %v5402
        %v5772 = vunpack.c.l.b16 %v5403
        %v5773 = vunpack.c.h.b16 %v5403
        %v5774 = vunpack.c.l.b16 %v5404
        %v5775 = vunpack.c.h.b16 %v5404
        %v5776 = vunpack.c.l.b16 %v5405
        %v5777 = vunpack.c.h.b16 %v5405
        %v5778 = vunpack.c.l.b16 %v5406
        %v5779 = vunpack.c.l.b16 %v5407
        %v5780 = vunpack.c.h.b16 %v5407
        %v5781 = vunpack.c.l.b16 %v5408
        %v5782 = vunpack.c.h.b16 %v5408
        %v5783 = vunpack.c.l.b16 %v5409
        %v5784 = vunpack.c.h.b16 %v5409
        %v5785 = vunpack.c.l.b16 %v5410
        %v5786 = vunpack.c.l.b16 %v5411
        %v5787 = vunpack.c.h.b16 %v5411
        %v5788 = vunpack.c.l.b16 %v5412
        %v5789 = vunpack.c.h.b16 %v5412
        %v5790 = vunpack.c.l.b16 %v5413
        %v5791 = vunpack.c.h.b16 %v5413
        %v5792 = vunpack.c.l.b16 %v5414
        %v5793 = vunpack.c.l.b16 %v5415
        %v5794 = vunpack.c.h.b16 %v5415
        %v5795 = vunpack.c.l.b16 %v5416
        %v5796 = vunpack.c.h.b16 %v5416
        %v5797 = vunpack.c.l.b16 %v5417
        %v5798 = vunpack.c.h.b16 %v5417
        %v5799 = vunpack.c.l.b16 %v5418
        %v5800 = vunpack.c.l.b16 %v5419
        %v5801 = vunpack.c.h.b16 %v5419
        %v5802 = vunpack.c.l.b16 %v5420
        %v5803 = vunpack.c.h.b16 %v5420
        %v5804 = vunpack.c.l.b16 %v5421
        %v5805 = vunpack.c.h.b16 %v5421
        %v5806 = vunpack.c.l.b16 %v5422
        %v5807 = vpack.c.b16 %v5590, %v5583
        %v5808 = vpack.c.b16 %v5591, %v5584
        %v5809 = vpack.c.b16 %v5592, %v5585
        %v5810 = vpack.c.b16 %v5593, %v5586
        %v5811 = vpack.c.b16 %v5594, %v5587
        %v5812 = vpack.c.b16 %v5595, %v5588
        %v5813 = vpack.c.b16 %v5596, %v5589
        %v5814 = vpack.c.b16 %v5604, %v5597
        %v5815 = vpack.c.b16 %v5605, %v5598
        %v5816 = vpack.c.b16 %v5606, %v5599
        %v5817 = vpack.c.b16 %v5607, %v5600
        %v5818 = vpack.c.b16 %v5608, %v5601
        %v5819 = vpack.c.b16 %v5609, %v5602
        %v5820 = vpack.c.b16 %v5610, %v5603
        %v5821 = vpack.c.b16 %v5618, %v5611
        %v5822 = vpack.c.b16 %v5619, %v5612
        %v5823 = vpack.c.b16 %v5620, %v5613
        %v5824 = vpack.c.b16 %v5621, %v5614
        %v5825 = vpack.c.b16 %v5622, %v5615
        %v5826 = vpack.c.b16 %v5623, %v5616
        %v5827 = vpack.c.b16 %v5624, %v5617
        %v5828 = vpack.c.b16 %v5632, %v5625
        %v5829 = vpack.c.b16 %v5633, %v5626
        %v5830 = vpack.c.b16 %v5634, %v5627
        %v5831 = vpack.c.b16 %v5635, %v5628
        %v5832 = vpack.c.b16 %v5636, %v5629
        %v5833 = vpack.c.b16 %v5637, %v5630
        %v5834 = vpack.c.b16 %v5638, %v5631
        %v5835 = vpack.c.b16 %v5646, %v5639
        %v5836 = vpack.c.b16 %v5647, %v5640
        %v5837 = vpack.c.b16 %v5648, %v5641
        %v5838 = vpack.c.b16 %v5649, %v5642
        %v5839 = vpack.c.b16 %v5650, %v5643
        %v5840 = vpack.c.b16 %v5651, %v5644
        %v5841 = vpack.c.b16 %v5652, %v5645
        %v5842 = vpack.c.b16 %v5660, %v5653
        %v5843 = vpack.c.b16 %v5661, %v5654
        %v5844 = vpack.c.b16 %v5662, %v5655
        %v5845 = vpack.c.b16 %v5663, %v5656
        %v5846 = vpack.c.b16 %v5664, %v5657
        %v5847 = vpack.c.b16 %v5665, %v5658
        %v5848 = vpack.c.b16 %v5666, %v5659
        %v5849 = vpack.c.b16 %v5674, %v5667
        %v5850 = vpack.c.b16 %v5675, %v5668
        %v5851 = vpack.c.b16 %v5676, %v5669
        %v5852 = vpack.c.b16 %v5677, %v5670
        %v5853 = vpack.c.b16 %v5678, %v5671
        %v5854 = vpack.c.b16 %v5679, %v5672
        %v5855 = vpack.c.b16 %v5680, %v5673
        %v5856 = vpack.c.b16 %v5688, %v5681
        %v5857 = vpack.c.b16 %v5689, %v5682
        %v5858 = vpack.c.b16 %v5690, %v5683
        %v5859 = vpack.c.b16 %v5691, %v5684
        %v5860 = vpack.c.b16 %v5692, %v5685
        %v5861 = vpack.c.b16 %v5693, %v5686
        %v5862 = vpack.c.b16 %v5694, %v5687
        %v5863 = vpack.c.b16 %v5702, %v5695
        %v5864 = vpack.c.b16 %v5703, %v5696
        %v5865 = vpack.c.b16 %v5704, %v5697
        %v5866 = vpack.c.b16 %v5705, %v5698
        %v5867 = vpack.c.b16 %v5706, %v5699
        %v5868 = vpack.c.b16 %v5707, %v5700
        %v5869 = vpack.c.b16 %v5708, %v5701
        %v5870 = vpack.c.b16 %v5716, %v5709
        %v5871 = vpack.c.b16 %v5717, %v5710
        %v5872 = vpack.c.b16 %v5718, %v5711
        %v5873 = vpack.c.b16 %v5719, %v5712
        %v5874 = vpack.c.b16 %v5720, %v5713
        %v5875 = vpack.c.b16 %v5721, %v5714
        %v5876 = vpack.c.b16 %v5722, %v5715
        %v5877 = vpack.c.b16 %v5730, %v5723
        %v5878 = vpack.c.b16 %v5731, %v5724
        %v5879 = vpack.c.b16 %v5732, %v5725
        %v5880 = vpack.c.b16 %v5733, %v5726
        %v5881 = vpack.c.b16 %v5734, %v5727
        %v5882 = vpack.c.b16 %v5735, %v5728
        %v5883 = vpack.c.b16 %v5736, %v5729
        %v5884 = vpack.c.b16 %v5744, %v5737
        %v5885 = vpack.c.b16 %v5745, %v5738
        %v5886 = vpack.c.b16 %v5746, %v5739
        %v5887 = vpack.c.b16 %v5747, %v5740
        %v5888 = vpack.c.b16 %v5748, %v5741
        %v5889 = vpack.c.b16 %v5749, %v5742
        %v5890 = vpack.c.b16 %v5750, %v5743
        %v5891 = vpack.c.b16 %v5758, %v5751
        %v5892 = vpack.c.b16 %v5759, %v5752
        %v5893 = vpack.c.b16 %v5760, %v5753
        %v5894 = vpack.c.b16 %v5761, %v5754
        %v5895 = vpack.c.b16 %v5762, %v5755
        %v5896 = vpack.c.b16 %v5763, %v5756
        %v5897 = vpack.c.b16 %v5764, %v5757
        %v5898 = vpack.c.b16 %v5772, %v5765
        %v5899 = vpack.c.b16 %v5773, %v5766
        %v5900 = vpack.c.b16 %v5774, %v5767
        %v5901 = vpack.c.b16 %v5775, %v5768
        %v5902 = vpack.c.b16 %v5776, %v5769
        %v5903 = vpack.c.b16 %v5777, %v5770
        %v5904 = vpack.c.b16 %v5778, %v5771
        %v5905 = vpack.c.b16 %v5786, %v5779
        %v5906 = vpack.c.b16 %v5787, %v5780
        %v5907 = vpack.c.b16 %v5788, %v5781
        %v5908 = vpack.c.b16 %v5789, %v5782
        %v5909 = vpack.c.b16 %v5790, %v5783
        %v5910 = vpack.c.b16 %v5791, %v5784
        %v5911 = vpack.c.b16 %v5792, %v5785
        %v5912 = vpack.c.b16 %v5800, %v5793
        %v5913 = vpack.c.b16 %v5801, %v5794
        %v5914 = vpack.c.b16 %v5802, %v5795
        %v5915 = vpack.c.b16 %v5803, %v5796
        %v5916 = vpack.c.b16 %v5804, %v5797
        %v5917 = vpack.c.b16 %v5805, %v5798
        %v5918 = vpack.c.b16 %v5806, %v5799
        %6031 = vmatpush.bf16.msra.mxu0 %v5856
        %6032 = vmatpush.bf16.msra.mxu0 %v5849
        %6033 = vmatpush.bf16.msra.mxu0 %v5842
        %6034 = vmatpush.bf16.msra.mxu0 %v5835
        %6035 = vmatpush.bf16.msra.mxu0 %v5828
        %6036 = vmatpush.bf16.msra.mxu0 %v5821
        %6037 = vmatpush.bf16.msra.mxu0 %v5814
        %6038 = vmatpush.bf16.msra.mxu0 %v5807
        %6039 = vmatmul.bf16.gmra.mxu0 %v5423
        %v6040 = vpop.f32.mrf.mxu0
        %v6041 = vadd.f32 %v5441, %v6040
        %v6042 = vpop.f32.mrf.mxu0
        %v6043 = vadd.f32 %v5441, %v6042
        %6044 = vmatmul.bf16.gmra.mxu0 %v5425
        %v6045 = vpop.f32.mrf.mxu0
        %v6046 = vadd.f32 %v5441, %v6045
        %v6047 = vpop.f32.mrf.mxu0
        %v6048 = vadd.f32 %v5441, %v6047
        %6049 = vmatmul.bf16.gmra.mxu0 %v5427
        %v6050 = vpop.f32.mrf.mxu0
        %v6051 = vadd.f32 %v5441, %v6050
        %v6052 = vpop.f32.mrf.mxu0
        %v6053 = vadd.f32 %v5441, %v6052
        %6054 = vmatmul.bf16.gmra.mxu0 %v5429
        %v6055 = vpop.f32.mrf.mxu0
        %v6056 = vadd.f32 %v5441, %v6055
        %v6057 = vpop.f32.mrf.mxu0
        %v6058 = vadd.f32 %v5441, %v6057
        %6059 = vmatmul.bf16.gmra.mxu0 %v5431
        %v6060 = vpop.f32.mrf.mxu0
        %v6061 = vadd.f32 %v5441, %v6060
        %v6062 = vpop.f32.mrf.mxu0
        %v6063 = vadd.f32 %v5441, %v6062
        %6064 = vmatmul.bf16.gmra.mxu0 %v5433
        %v6065 = vpop.f32.mrf.mxu0
        %v6066 = vadd.f32 %v5441, %v6065
        %v6067 = vpop.f32.mrf.mxu0
        %v6068 = vadd.f32 %v5441, %v6067
        %6069 = vmatmul.bf16.gmra.mxu0 %v5435
        %v6070 = vpop.f32.mrf.mxu0
        %v6071 = vadd.f32 %v5441, %v6070
        %v6072 = vpop.f32.mrf.mxu0
        %v6073 = vadd.f32 %v5441, %v6072
        %6074 = vmatmul.bf16.gmra.mxu0 %v5437
        %v6075 = vpop.f32.mrf.mxu0
        %v6076 = vadd.f32 %v5441, %v6075
        %v6077 = vpop.f32.mrf.mxu0
        %v6078 = vadd.f32 %v5441, %v6077
        %6079 = vdwg.mxu0
        %6080 = vmatpush.bf16.msra.mxu0 %v5912
        %6081 = vmatpush.bf16.msra.mxu0 %v5905
        %6082 = vmatpush.bf16.msra.mxu0 %v5898
        %6083 = vmatpush.bf16.msra.mxu0 %v5891
        %6084 = vmatpush.bf16.msra.mxu0 %v5884
        %6085 = vmatpush.bf16.msra.mxu0 %v5877
        %6086 = vmatpush.bf16.msra.mxu0 %v5870
        %6087 = vmatpush.bf16.msra.mxu0 %v5863
        %6088 = vmatmul.bf16.gmra.mxu0 %v5424
        %v6089 = vpop.f32.mrf.mxu0
        %v6090 = vadd.f32 %v6041, %v6089
        %v6091 = vpop.f32.mrf.mxu0
        %v6092 = vadd.f32 %v6043, %v6091
        %6093 = vmatmul.bf16.gmra.mxu0 %v5426
        %v6094 = vpop.f32.mrf.mxu0
        %v6095 = vadd.f32 %v6046, %v6094
        %v6096 = vpop.f32.mrf.mxu0
        %v6097 = vadd.f32 %v6048, %v6096
        %6098 = vmatmul.bf16.gmra.mxu0 %v5428
        %v6099 = vpop.f32.mrf.mxu0
        %v6100 = vadd.f32 %v6051, %v6099
        %v6101 = vpop.f32.mrf.mxu0
        %v6102 = vadd.f32 %v6053, %v6101
        %6103 = vmatmul.bf16.gmra.mxu0 %v5430
        %v6104 = vpop.f32.mrf.mxu0
        %v6105 = vadd.f32 %v6056, %v6104
        %v6106 = vpop.f32.mrf.mxu0
        %v6107 = vadd.f32 %v6058, %v6106
        %6108 = vmatmul.bf16.gmra.mxu0 %v5432
        %v6109 = vpop.f32.mrf.mxu0
        %v6110 = vadd.f32 %v6061, %v6109
        %v6111 = vpop.f32.mrf.mxu0
        %v6112 = vadd.f32 %v6063, %v6111
        %6113 = vmatmul.bf16.gmra.mxu0 %v5434
        %v6114 = vpop.f32.mrf.mxu0
        %v6115 = vadd.f32 %v6066, %v6114
        %v6116 = vpop.f32.mrf.mxu0
        %v6117 = vadd.f32 %v6068, %v6116
        %6118 = vmatmul.bf16.gmra.mxu0 %v5436
        %v6119 = vpop.f32.mrf.mxu0
        %v6120 = vadd.f32 %v6071, %v6119
        %v6121 = vpop.f32.mrf.mxu0
        %v6122 = vadd.f32 %v6073, %v6121
        %6123 = vmatmul.bf16.gmra.mxu0 %v5438
        %v6124 = vpop.f32.mrf.mxu0
        %v6125 = vadd.f32 %v6076, %v6124
        %v6126 = vpop.f32.mrf.mxu0
        %v6127 = vadd.f32 %v6078, %v6126
        %6128 = vdwg.mxu0
        %6129 = vmatpush.bf16.msra.mxu0 %v5857
        %6130 = vmatpush.bf16.msra.mxu0 %v5850
        %6131 = vmatpush.bf16.msra.mxu0 %v5843
        %6132 = vmatpush.bf16.msra.mxu0 %v5836
        %6133 = vmatpush.bf16.msra.mxu0 %v5829
        %6134 = vmatpush.bf16.msra.mxu0 %v5822
        %6135 = vmatpush.bf16.msra.mxu0 %v5815
        %6136 = vmatpush.bf16.msra.mxu0 %v5808
        %6137 = vmatmul.bf16.gmra.mxu0 %v5423
        %v6138 = vpop.f32.mrf.mxu0
        %v6139 = vadd.f32 %v5442, %v6138
        %v6140 = vpop.f32.mrf.mxu0
        %v6141 = vadd.f32 %v5442, %v6140
        %6142 = vmatmul.bf16.gmra.mxu0 %v5425
        %v6143 = vpop.f32.mrf.mxu0
        %v6144 = vadd.f32 %v5442, %v6143
        %v6145 = vpop.f32.mrf.mxu0
        %v6146 = vadd.f32 %v5442, %v6145
        %6147 = vmatmul.bf16.gmra.mxu0 %v5427
        %v6148 = vpop.f32.mrf.mxu0
        %v6149 = vadd.f32 %v5442, %v6148
        %v6150 = vpop.f32.mrf.mxu0
        %v6151 = vadd.f32 %v5442, %v6150
        %6152 = vmatmul.bf16.gmra.mxu0 %v5429
        %v6153 = vpop.f32.mrf.mxu0
        %v6154 = vadd.f32 %v5442, %v6153
        %v6155 = vpop.f32.mrf.mxu0
        %v6156 = vadd.f32 %v5442, %v6155
        %6157 = vmatmul.bf16.gmra.mxu0 %v5431
        %v6158 = vpop.f32.mrf.mxu0
        %v6159 = vadd.f32 %v5442, %v6158
        %v6160 = vpop.f32.mrf.mxu0
        %v6161 = vadd.f32 %v5442, %v6160
        %6162 = vmatmul.bf16.gmra.mxu0 %v5433
        %v6163 = vpop.f32.mrf.mxu0
        %v6164 = vadd.f32 %v5442, %v6163
        %v6165 = vpop.f32.mrf.mxu0
        %v6166 = vadd.f32 %v5442, %v6165
        %6167 = vmatmul.bf16.gmra.mxu0 %v5435
        %v6168 = vpop.f32.mrf.mxu0
        %v6169 = vadd.f32 %v5442, %v6168
        %v6170 = vpop.f32.mrf.mxu0
        %v6171 = vadd.f32 %v5442, %v6170
        %6172 = vmatmul.bf16.gmra.mxu0 %v5437
        %v6173 = vpop.f32.mrf.mxu0
        %v6174 = vadd.f32 %v5442, %v6173
        %v6175 = vpop.f32.mrf.mxu0
        %v6176 = vadd.f32 %v5442, %v6175
        %6177 = vdwg.mxu0
        %6178 = vmatpush.bf16.msra.mxu0 %v5913
        %6179 = vmatpush.bf16.msra.mxu0 %v5906
        %6180 = vmatpush.bf16.msra.mxu0 %v5899
        %6181 = vmatpush.bf16.msra.mxu0 %v5892
        %6182 = vmatpush.bf16.msra.mxu0 %v5885
        %6183 = vmatpush.bf16.msra.mxu0 %v5878
        %6184 = vmatpush.bf16.msra.mxu0 %v5871
        %6185 = vmatpush.bf16.msra.mxu0 %v5864
        %6186 = vmatmul.bf16.gmra.mxu0 %v5424
        %v6187 = vpop.f32.mrf.mxu0
        %v6188 = vadd.f32 %v6139, %v6187
        %v6189 = vpop.f32.mrf.mxu0
        %v6190 = vadd.f32 %v6141, %v6189
        %6191 = vmatmul.bf16.gmra.mxu0 %v5426
        %v6192 = vpop.f32.mrf.mxu0
        %v6193 = vadd.f32 %v6144, %v6192
        %v6194 = vpop.f32.mrf.mxu0
        %v6195 = vadd.f32 %v6146, %v6194
        %6196 = vmatmul.bf16.gmra.mxu0 %v5428
        %v6197 = vpop.f32.mrf.mxu0
        %v6198 = vadd.f32 %v6149, %v6197
        %v6199 = vpop.f32.mrf.mxu0
        %v6200 = vadd.f32 %v6151, %v6199
        %6201 = vmatmul.bf16.gmra.mxu0 %v5430
        %v6202 = vpop.f32.mrf.mxu0
        %v6203 = vadd.f32 %v6154, %v6202
        %v6204 = vpop.f32.mrf.mxu0
        %v6205 = vadd.f32 %v6156, %v6204
        %6206 = vmatmul.bf16.gmra.mxu0 %v5432
        %v6207 = vpop.f32.mrf.mxu0
        %v6208 = vadd.f32 %v6159, %v6207
        %v6209 = vpop.f32.mrf.mxu0
        %v6210 = vadd.f32 %v6161, %v6209
        %6211 = vmatmul.bf16.gmra.mxu0 %v5434
        %v6212 = vpop.f32.mrf.mxu0
        %v6213 = vadd.f32 %v6164, %v6212
        %v6214 = vpop.f32.mrf.mxu0
        %v6215 = vadd.f32 %v6166, %v6214
        %6216 = vmatmul.bf16.gmra.mxu0 %v5436
        %v6217 = vpop.f32.mrf.mxu0
        %v6218 = vadd.f32 %v6169, %v6217
        %v6219 = vpop.f32.mrf.mxu0
        %v6220 = vadd.f32 %v6171, %v6219
        %6221 = vmatmul.bf16.gmra.mxu0 %v5438
        %v6222 = vpop.f32.mrf.mxu0
        %v6223 = vadd.f32 %v6174, %v6222
        %v6224 = vpop.f32.mrf.mxu0
        %v6225 = vadd.f32 %v6176, %v6224
        %6226 = vdwg.mxu0
        %6227 = vmatpush.bf16.msra.mxu0 %v5858
        %6228 = vmatpush.bf16.msra.mxu0 %v5851
        %6229 = vmatpush.bf16.msra.mxu0 %v5844
        %6230 = vmatpush.bf16.msra.mxu0 %v5837
        %6231 = vmatpush.bf16.msra.mxu0 %v5830
        %6232 = vmatpush.bf16.msra.mxu0 %v5823
        %6233 = vmatpush.bf16.msra.mxu0 %v5816
        %6234 = vmatpush.bf16.msra.mxu0 %v5809
        %6235 = vmatmul.bf16.gmra.mxu0 %v5423
        %v6236 = vpop.f32.mrf.mxu0
        %v6237 = vadd.f32 %v5443, %v6236
        %v6238 = vpop.f32.mrf.mxu0
        %v6239 = vadd.f32 %v5443, %v6238
        %6240 = vmatmul.bf16.gmra.mxu0 %v5425
        %v6241 = vpop.f32.mrf.mxu0
        %v6242 = vadd.f32 %v5443, %v6241
        %v6243 = vpop.f32.mrf.mxu0
        %v6244 = vadd.f32 %v5443, %v6243
        %6245 = vmatmul.bf16.gmra.mxu0 %v5427
        %v6246 = vpop.f32.mrf.mxu0
        %v6247 = vadd.f32 %v5443, %v6246
        %v6248 = vpop.f32.mrf.mxu0
        %v6249 = vadd.f32 %v5443, %v6248
        %6250 = vmatmul.bf16.gmra.mxu0 %v5429
        %v6251 = vpop.f32.mrf.mxu0
        %v6252 = vadd.f32 %v5443, %v6251
        %v6253 = vpop.f32.mrf.mxu0
        %v6254 = vadd.f32 %v5443, %v6253
        %6255 = vmatmul.bf16.gmra.mxu0 %v5431
        %v6256 = vpop.f32.mrf.mxu0
        %v6257 = vadd.f32 %v5443, %v6256
        %v6258 = vpop.f32.mrf.mxu0
        %v6259 = vadd.f32 %v5443, %v6258
        %6260 = vmatmul.bf16.gmra.mxu0 %v5433
        %v6261 = vpop.f32.mrf.mxu0
        %v6262 = vadd.f32 %v5443, %v6261
        %v6263 = vpop.f32.mrf.mxu0
        %v6264 = vadd.f32 %v5443, %v6263
        %6265 = vmatmul.bf16.gmra.mxu0 %v5435
        %v6266 = vpop.f32.mrf.mxu0
        %v6267 = vadd.f32 %v5443, %v6266
        %v6268 = vpop.f32.mrf.mxu0
        %v6269 = vadd.f32 %v5443, %v6268
        %6270 = vmatmul.bf16.gmra.mxu0 %v5437
        %v6271 = vpop.f32.mrf.mxu0
        %v6272 = vadd.f32 %v5443, %v6271
        %v6273 = vpop.f32.mrf.mxu0
        %v6274 = vadd.f32 %v5443, %v6273
        %6275 = vdwg.mxu0
        %6276 = vmatpush.bf16.msra.mxu0 %v5914
        %6277 = vmatpush.bf16.msra.mxu0 %v5907
        %6278 = vmatpush.bf16.msra.mxu0 %v5900
        %6279 = vmatpush.bf16.msra.mxu0 %v5893
        %6280 = vmatpush.bf16.msra.mxu0 %v5886
        %6281 = vmatpush.bf16.msra.mxu0 %v5879
        %6282 = vmatpush.bf16.msra.mxu0 %v5872
        %6283 = vmatpush.bf16.msra.mxu0 %v5865
        %6284 = vmatmul.bf16.gmra.mxu0 %v5424
        %v6285 = vpop.f32.mrf.mxu0
        %v6286 = vadd.f32 %v6237, %v6285
        %v6287 = vpop.f32.mrf.mxu0
        %v6288 = vadd.f32 %v6239, %v6287
        %6289 = vmatmul.bf16.gmra.mxu0 %v5426
        %v6290 = vpop.f32.mrf.mxu0
        %v6291 = vadd.f32 %v6242, %v6290
        %v6292 = vpop.f32.mrf.mxu0
        %v6293 = vadd.f32 %v6244, %v6292
        %6294 = vmatmul.bf16.gmra.mxu0 %v5428
        %v6295 = vpop.f32.mrf.mxu0
        %v6296 = vadd.f32 %v6247, %v6295
        %v6297 = vpop.f32.mrf.mxu0
        %v6298 = vadd.f32 %v6249, %v6297
        %6299 = vmatmul.bf16.gmra.mxu0 %v5430
        %v6300 = vpop.f32.mrf.mxu0
        %v6301 = vadd.f32 %v6252, %v6300
        %v6302 = vpop.f32.mrf.mxu0
        %v6303 = vadd.f32 %v6254, %v6302
        %6304 = vmatmul.bf16.gmra.mxu0 %v5432
        %v6305 = vpop.f32.mrf.mxu0
        %v6306 = vadd.f32 %v6257, %v6305
        %v6307 = vpop.f32.mrf.mxu0
        %v6308 = vadd.f32 %v6259, %v6307
        %6309 = vmatmul.bf16.gmra.mxu0 %v5434
        %v6310 = vpop.f32.mrf.mxu0
        %v6311 = vadd.f32 %v6262, %v6310
        %v6312 = vpop.f32.mrf.mxu0
        %v6313 = vadd.f32 %v6264, %v6312
        %6314 = vmatmul.bf16.gmra.mxu0 %v5436
        %v6315 = vpop.f32.mrf.mxu0
        %v6316 = vadd.f32 %v6267, %v6315
        %v6317 = vpop.f32.mrf.mxu0
        %v6318 = vadd.f32 %v6269, %v6317
        %6319 = vmatmul.bf16.gmra.mxu0 %v5438
        %v6320 = vpop.f32.mrf.mxu0
        %v6321 = vadd.f32 %v6272, %v6320
        %v6322 = vpop.f32.mrf.mxu0
        %v6323 = vadd.f32 %v6274, %v6322
        %6324 = vdwg.mxu0
        %6325 = vmatpush.bf16.msra.mxu0 %v5859
        %6326 = vmatpush.bf16.msra.mxu0 %v5852
        %6327 = vmatpush.bf16.msra.mxu0 %v5845
        %6328 = vmatpush.bf16.msra.mxu0 %v5838
        %6329 = vmatpush.bf16.msra.mxu0 %v5831
        %6330 = vmatpush.bf16.msra.mxu0 %v5824
        %6331 = vmatpush.bf16.msra.mxu0 %v5817
        %6332 = vmatpush.bf16.msra.mxu0 %v5810
        %6333 = vmatmul.bf16.gmra.mxu0 %v5423
        %v6334 = vpop.f32.mrf.mxu0
        %v6335 = vadd.f32 %v5444, %v6334
        %v6336 = vpop.f32.mrf.mxu0
        %v6337 = vadd.f32 %v5444, %v6336
        %6338 = vmatmul.bf16.gmra.mxu0 %v5425
        %v6339 = vpop.f32.mrf.mxu0
        %v6340 = vadd.f32 %v5444, %v6339
        %v6341 = vpop.f32.mrf.mxu0
        %v6342 = vadd.f32 %v5444, %v6341
        %6343 = vmatmul.bf16.gmra.mxu0 %v5427
        %v6344 = vpop.f32.mrf.mxu0
        %v6345 = vadd.f32 %v5444, %v6344
        %v6346 = vpop.f32.mrf.mxu0
        %v6347 = vadd.f32 %v5444, %v6346
        %6348 = vmatmul.bf16.gmra.mxu0 %v5429
        %v6349 = vpop.f32.mrf.mxu0
        %v6350 = vadd.f32 %v5444, %v6349
        %v6351 = vpop.f32.mrf.mxu0
        %v6352 = vadd.f32 %v5444, %v6351
        %6353 = vmatmul.bf16.gmra.mxu0 %v5431
        %v6354 = vpop.f32.mrf.mxu0
        %v6355 = vadd.f32 %v5444, %v6354
        %v6356 = vpop.f32.mrf.mxu0
        %v6357 = vadd.f32 %v5444, %v6356
        %6358 = vmatmul.bf16.gmra.mxu0 %v5433
        %v6359 = vpop.f32.mrf.mxu0
        %v6360 = vadd.f32 %v5444, %v6359
        %v6361 = vpop.f32.mrf.mxu0
        %v6362 = vadd.f32 %v5444, %v6361
        %6363 = vmatmul.bf16.gmra.mxu0 %v5435
        %v6364 = vpop.f32.mrf.mxu0
        %v6365 = vadd.f32 %v5444, %v6364
        %v6366 = vpop.f32.mrf.mxu0
        %v6367 = vadd.f32 %v5444, %v6366
        %6368 = vmatmul.bf16.gmra.mxu0 %v5437
        %v6369 = vpop.f32.mrf.mxu0
        %v6370 = vadd.f32 %v5444, %v6369
        %v6371 = vpop.f32.mrf.mxu0
        %v6372 = vadd.f32 %v5444, %v6371
        %6373 = vdwg.mxu0
        %6374 = vmatpush.bf16.msra.mxu0 %v5915
        %6375 = vmatpush.bf16.msra.mxu0 %v5908
        %6376 = vmatpush.bf16.msra.mxu0 %v5901
        %6377 = vmatpush.bf16.msra.mxu0 %v5894
        %6378 = vmatpush.bf16.msra.mxu0 %v5887
        %6379 = vmatpush.bf16.msra.mxu0 %v5880
        %6380 = vmatpush.bf16.msra.mxu0 %v5873
        %6381 = vmatpush.bf16.msra.mxu0 %v5866
        %6382 = vmatmul.bf16.gmra.mxu0 %v5424
        %v6383 = vpop.f32.mrf.mxu0
        %v6384 = vadd.f32 %v6335, %v6383
        %v6385 = vpop.f32.mrf.mxu0
        %v6386 = vadd.f32 %v6337, %v6385
        %6387 = vmatmul.bf16.gmra.mxu0 %v5426
        %v6388 = vpop.f32.mrf.mxu0
        %v6389 = vadd.f32 %v6340, %v6388
        %v6390 = vpop.f32.mrf.mxu0
        %v6391 = vadd.f32 %v6342, %v6390
        %6392 = vmatmul.bf16.gmra.mxu0 %v5428
        %v6393 = vpop.f32.mrf.mxu0
        %v6394 = vadd.f32 %v6345, %v6393
        %v6395 = vpop.f32.mrf.mxu0
        %v6396 = vadd.f32 %v6347, %v6395
        %6397 = vmatmul.bf16.gmra.mxu0 %v5430
        %v6398 = vpop.f32.mrf.mxu0
        %v6399 = vadd.f32 %v6350, %v6398
        %v6400 = vpop.f32.mrf.mxu0
        %v6401 = vadd.f32 %v6352, %v6400
        %6402 = vmatmul.bf16.gmra.mxu0 %v5432
        %v6403 = vpop.f32.mrf.mxu0
        %v6404 = vadd.f32 %v6355, %v6403
        %v6405 = vpop.f32.mrf.mxu0
        %v6406 = vadd.f32 %v6357, %v6405
        %6407 = vmatmul.bf16.gmra.mxu0 %v5434
        %v6408 = vpop.f32.mrf.mxu0
        %v6409 = vadd.f32 %v6360, %v6408
        %v6410 = vpop.f32.mrf.mxu0
        %v6411 = vadd.f32 %v6362, %v6410
        %6412 = vmatmul.bf16.gmra.mxu0 %v5436
        %v6413 = vpop.f32.mrf.mxu0
        %v6414 = vadd.f32 %v6365, %v6413
        %v6415 = vpop.f32.mrf.mxu0
        %v6416 = vadd.f32 %v6367, %v6415
        %6417 = vmatmul.bf16.gmra.mxu0 %v5438
        %v6418 = vpop.f32.mrf.mxu0
        %v6419 = vadd.f32 %v6370, %v6418
        %v6420 = vpop.f32.mrf.mxu0
        %v6421 = vadd.f32 %v6372, %v6420
        %6422 = vdwg.mxu0
        %6423 = vmatpush.bf16.msra.mxu0 %v5860
        %6424 = vmatpush.bf16.msra.mxu0 %v5853
        %6425 = vmatpush.bf16.msra.mxu0 %v5846
        %6426 = vmatpush.bf16.msra.mxu0 %v5839
        %6427 = vmatpush.bf16.msra.mxu0 %v5832
        %6428 = vmatpush.bf16.msra.mxu0 %v5825
        %6429 = vmatpush.bf16.msra.mxu0 %v5818
        %6430 = vmatpush.bf16.msra.mxu0 %v5811
        %6431 = vmatmul.bf16.gmra.mxu0 %v5423
        %v6432 = vpop.f32.mrf.mxu0
        %v6433 = vadd.f32 %v5445, %v6432
        %v6434 = vpop.f32.mrf.mxu0
        %v6435 = vadd.f32 %v5445, %v6434
        %6436 = vmatmul.bf16.gmra.mxu0 %v5425
        %v6437 = vpop.f32.mrf.mxu0
        %v6438 = vadd.f32 %v5445, %v6437
        %v6439 = vpop.f32.mrf.mxu0
        %v6440 = vadd.f32 %v5445, %v6439
        %6441 = vmatmul.bf16.gmra.mxu0 %v5427
        %v6442 = vpop.f32.mrf.mxu0
        %v6443 = vadd.f32 %v5445, %v6442
        %v6444 = vpop.f32.mrf.mxu0
        %v6445 = vadd.f32 %v5445, %v6444
        %6446 = vmatmul.bf16.gmra.mxu0 %v5429
        %v6447 = vpop.f32.mrf.mxu0
        %v6448 = vadd.f32 %v5445, %v6447
        %v6449 = vpop.f32.mrf.mxu0
        %v6450 = vadd.f32 %v5445, %v6449
        %6451 = vmatmul.bf16.gmra.mxu0 %v5431
        %v6452 = vpop.f32.mrf.mxu0
        %v6453 = vadd.f32 %v5445, %v6452
        %v6454 = vpop.f32.mrf.mxu0
        %v6455 = vadd.f32 %v5445, %v6454
        %6456 = vmatmul.bf16.gmra.mxu0 %v5433
        %v6457 = vpop.f32.mrf.mxu0
        %v6458 = vadd.f32 %v5445, %v6457
        %v6459 = vpop.f32.mrf.mxu0
        %v6460 = vadd.f32 %v5445, %v6459
        %6461 = vmatmul.bf16.gmra.mxu0 %v5435
        %v6462 = vpop.f32.mrf.mxu0
        %v6463 = vadd.f32 %v5445, %v6462
        %v6464 = vpop.f32.mrf.mxu0
        %v6465 = vadd.f32 %v5445, %v6464
        %6466 = vmatmul.bf16.gmra.mxu0 %v5437
        %v6467 = vpop.f32.mrf.mxu0
        %v6468 = vadd.f32 %v5445, %v6467
        %v6469 = vpop.f32.mrf.mxu0
        %v6470 = vadd.f32 %v5445, %v6469
        %6471 = vdwg.mxu0
        %6472 = vmatpush.bf16.msra.mxu0 %v5916
        %6473 = vmatpush.bf16.msra.mxu0 %v5909
        %6474 = vmatpush.bf16.msra.mxu0 %v5902
        %6475 = vmatpush.bf16.msra.mxu0 %v5895
        %6476 = vmatpush.bf16.msra.mxu0 %v5888
        %6477 = vmatpush.bf16.msra.mxu0 %v5881
        %6478 = vmatpush.bf16.msra.mxu0 %v5874
        %6479 = vmatpush.bf16.msra.mxu0 %v5867
        %6480 = vmatmul.bf16.gmra.mxu0 %v5424
        %v6481 = vpop.f32.mrf.mxu0
        %v6482 = vadd.f32 %v6433, %v6481
        %v6483 = vpop.f32.mrf.mxu0
        %v6484 = vadd.f32 %v6435, %v6483
        %6485 = vmatmul.bf16.gmra.mxu0 %v5426
        %v6486 = vpop.f32.mrf.mxu0
        %v6487 = vadd.f32 %v6438, %v6486
        %v6488 = vpop.f32.mrf.mxu0
        %v6489 = vadd.f32 %v6440, %v6488
        %6490 = vmatmul.bf16.gmra.mxu0 %v5428
        %v6491 = vpop.f32.mrf.mxu0
        %v6492 = vadd.f32 %v6443, %v6491
        %v6493 = vpop.f32.mrf.mxu0
        %v6494 = vadd.f32 %v6445, %v6493
        %6495 = vmatmul.bf16.gmra.mxu0 %v5430
        %v6496 = vpop.f32.mrf.mxu0
        %v6497 = vadd.f32 %v6448, %v6496
        %v6498 = vpop.f32.mrf.mxu0
        %v6499 = vadd.f32 %v6450, %v6498
        %6500 = vmatmul.bf16.gmra.mxu0 %v5432
        %v6501 = vpop.f32.mrf.mxu0
        %v6502 = vadd.f32 %v6453, %v6501
        %v6503 = vpop.f32.mrf.mxu0
        %v6504 = vadd.f32 %v6455, %v6503
        %6505 = vmatmul.bf16.gmra.mxu0 %v5434
        %v6506 = vpop.f32.mrf.mxu0
        %v6507 = vadd.f32 %v6458, %v6506
        %v6508 = vpop.f32.mrf.mxu0
        %v6509 = vadd.f32 %v6460, %v6508
        %6510 = vmatmul.bf16.gmra.mxu0 %v5436
        %v6511 = vpop.f32.mrf.mxu0
        %v6512 = vadd.f32 %v6463, %v6511
        %v6513 = vpop.f32.mrf.mxu0
        %v6514 = vadd.f32 %v6465, %v6513
        %6515 = vmatmul.bf16.gmra.mxu0 %v5438
        %v6516 = vpop.f32.mrf.mxu0
        %v6517 = vadd.f32 %v6468, %v6516
        %v6518 = vpop.f32.mrf.mxu0
        %v6519 = vadd.f32 %v6470, %v6518
        %6520 = vdwg.mxu0
        %6521 = vmatpush.bf16.msra.mxu0 %v5861
        %6522 = vmatpush.bf16.msra.mxu0 %v5854
        %6523 = vmatpush.bf16.msra.mxu0 %v5847
        %6524 = vmatpush.bf16.msra.mxu0 %v5840
        %6525 = vmatpush.bf16.msra.mxu0 %v5833
        %6526 = vmatpush.bf16.msra.mxu0 %v5826
        %6527 = vmatpush.bf16.msra.mxu0 %v5819
        %6528 = vmatpush.bf16.msra.mxu0 %v5812
        %6529 = vmatmul.bf16.gmra.mxu0 %v5423
        %v6530 = vpop.f32.mrf.mxu0
        %v6531 = vadd.f32 %v5446, %v6530
        %v6532 = vpop.f32.mrf.mxu0
        %v6533 = vadd.f32 %v5446, %v6532
        %6534 = vmatmul.bf16.gmra.mxu0 %v5425
        %v6535 = vpop.f32.mrf.mxu0
        %v6536 = vadd.f32 %v5446, %v6535
        %v6537 = vpop.f32.mrf.mxu0
        %v6538 = vadd.f32 %v5446, %v6537
        %6539 = vmatmul.bf16.gmra.mxu0 %v5427
        %v6540 = vpop.f32.mrf.mxu0
        %v6541 = vadd.f32 %v5446, %v6540
        %v6542 = vpop.f32.mrf.mxu0
        %v6543 = vadd.f32 %v5446, %v6542
        %6544 = vmatmul.bf16.gmra.mxu0 %v5429
        %v6545 = vpop.f32.mrf.mxu0
        %v6546 = vadd.f32 %v5446, %v6545
        %v6547 = vpop.f32.mrf.mxu0
        %v6548 = vadd.f32 %v5446, %v6547
        %6549 = vmatmul.bf16.gmra.mxu0 %v5431
        %v6550 = vpop.f32.mrf.mxu0
        %v6551 = vadd.f32 %v5446, %v6550
        %v6552 = vpop.f32.mrf.mxu0
        %v6553 = vadd.f32 %v5446, %v6552
        %6554 = vmatmul.bf16.gmra.mxu0 %v5433
        %v6555 = vpop.f32.mrf.mxu0
        %v6556 = vadd.f32 %v5446, %v6555
        %v6557 = vpop.f32.mrf.mxu0
        %v6558 = vadd.f32 %v5446, %v6557
        %6559 = vmatmul.bf16.gmra.mxu0 %v5435
        %v6560 = vpop.f32.mrf.mxu0
        %v6561 = vadd.f32 %v5446, %v6560
        %v6562 = vpop.f32.mrf.mxu0
        %v6563 = vadd.f32 %v5446, %v6562
        %6564 = vmatmul.bf16.gmra.mxu0 %v5437
        %v6565 = vpop.f32.mrf.mxu0
        %v6566 = vadd.f32 %v5446, %v6565
        %v6567 = vpop.f32.mrf.mxu0
        %v6568 = vadd.f32 %v5446, %v6567
        %6569 = vdwg.mxu0
        %6570 = vmatpush.bf16.msra.mxu0 %v5917
        %6571 = vmatpush.bf16.msra.mxu0 %v5910
        %6572 = vmatpush.bf16.msra.mxu0 %v5903
        %6573 = vmatpush.bf16.msra.mxu0 %v5896
        %6574 = vmatpush.bf16.msra.mxu0 %v5889
        %6575 = vmatpush.bf16.msra.mxu0 %v5882
        %6576 = vmatpush.bf16.msra.mxu0 %v5875
        %6577 = vmatpush.bf16.msra.mxu0 %v5868
        %6578 = vmatmul.bf16.gmra.mxu0 %v5424
        %v6579 = vpop.f32.mrf.mxu0
        %v6580 = vadd.f32 %v6531, %v6579
        %v6581 = vpop.f32.mrf.mxu0
        %v6582 = vadd.f32 %v6533, %v6581
        %6583 = vmatmul.bf16.gmra.mxu0 %v5426
        %v6584 = vpop.f32.mrf.mxu0
        %v6585 = vadd.f32 %v6536, %v6584
        %v6586 = vpop.f32.mrf.mxu0
        %v6587 = vadd.f32 %v6538, %v6586
        %6588 = vmatmul.bf16.gmra.mxu0 %v5428
        %v6589 = vpop.f32.mrf.mxu0
        %v6590 = vadd.f32 %v6541, %v6589
        %v6591 = vpop.f32.mrf.mxu0
        %v6592 = vadd.f32 %v6543, %v6591
        %6593 = vmatmul.bf16.gmra.mxu0 %v5430
        %v6594 = vpop.f32.mrf.mxu0
        %v6595 = vadd.f32 %v6546, %v6594
        %v6596 = vpop.f32.mrf.mxu0
        %v6597 = vadd.f32 %v6548, %v6596
        %6598 = vmatmul.bf16.gmra.mxu0 %v5432
        %v6599 = vpop.f32.mrf.mxu0
        %v6600 = vadd.f32 %v6551, %v6599
        %v6601 = vpop.f32.mrf.mxu0
        %v6602 = vadd.f32 %v6553, %v6601
        %6603 = vmatmul.bf16.gmra.mxu0 %v5434
        %v6604 = vpop.f32.mrf.mxu0
        %v6605 = vadd.f32 %v6556, %v6604
        %v6606 = vpop.f32.mrf.mxu0
        %v6607 = vadd.f32 %v6558, %v6606
        %6608 = vmatmul.bf16.gmra.mxu0 %v5436
        %v6609 = vpop.f32.mrf.mxu0
        %v6610 = vadd.f32 %v6561, %v6609
        %v6611 = vpop.f32.mrf.mxu0
        %v6612 = vadd.f32 %v6563, %v6611
        %6613 = vmatmul.bf16.gmra.mxu0 %v5438
        %v6614 = vpop.f32.mrf.mxu0
        %v6615 = vadd.f32 %v6566, %v6614
        %v6616 = vpop.f32.mrf.mxu0
        %v6617 = vadd.f32 %v6568, %v6616
        %6618 = vdwg.mxu0
        %6619 = vmatpush.bf16.msra.mxu0 %v5862
        %6620 = vmatpush.bf16.msra.mxu0 %v5855
        %6621 = vmatpush.bf16.msra.mxu0 %v5848
        %6622 = vmatpush.bf16.msra.mxu0 %v5841
        %6623 = vmatpush.bf16.msra.mxu0 %v5834
        %6624 = vmatpush.bf16.msra.mxu0 %v5827
        %6625 = vmatpush.bf16.msra.mxu0 %v5820
        %6626 = vmatpush.bf16.msra.mxu0 %v5813
        %6627 = vmatmul.bf16.gmra.mxu0 %v5423
        %v6628 = vpop.f32.mrf.mxu0
        %v6629 = vadd.f32 %v5447, %v6628
        %v6630 = vpop.f32.mrf.mxu0
        %v6631 = vadd.f32 %v5447, %v6630
        %6632 = vmatmul.bf16.gmra.mxu0 %v5425
        %v6633 = vpop.f32.mrf.mxu0
        %v6634 = vadd.f32 %v5447, %v6633
        %v6635 = vpop.f32.mrf.mxu0
        %v6636 = vadd.f32 %v5447, %v6635
        %6637 = vmatmul.bf16.gmra.mxu0 %v5427
        %v6638 = vpop.f32.mrf.mxu0
        %v6639 = vadd.f32 %v5447, %v6638
        %v6640 = vpop.f32.mrf.mxu0
        %v6641 = vadd.f32 %v5447, %v6640
        %6642 = vmatmul.bf16.gmra.mxu0 %v5429
        %v6643 = vpop.f32.mrf.mxu0
        %v6644 = vadd.f32 %v5447, %v6643
        %v6645 = vpop.f32.mrf.mxu0
        %v6646 = vadd.f32 %v5447, %v6645
        %6647 = vmatmul.bf16.gmra.mxu0 %v5431
        %v6648 = vpop.f32.mrf.mxu0
        %v6649 = vadd.f32 %v5447, %v6648
        %v6650 = vpop.f32.mrf.mxu0
        %v6651 = vadd.f32 %v5447, %v6650
        %6652 = vmatmul.bf16.gmra.mxu0 %v5433
        %v6653 = vpop.f32.mrf.mxu0
        %v6654 = vadd.f32 %v5447, %v6653
        %v6655 = vpop.f32.mrf.mxu0
        %v6656 = vadd.f32 %v5447, %v6655
        %6657 = vmatmul.bf16.gmra.mxu0 %v5435
        %v6658 = vpop.f32.mrf.mxu0
        %v6659 = vadd.f32 %v5447, %v6658
        %v6660 = vpop.f32.mrf.mxu0
        %v6661 = vadd.f32 %v5447, %v6660
        %6662 = vmatmul.bf16.gmra.mxu0 %v5437
        %v6663 = vpop.f32.mrf.mxu0
        %v6664 = vadd.f32 %v5447, %v6663
        %v6665 = vpop.f32.mrf.mxu0
        %v6666 = vadd.f32 %v5447, %v6665
        %6667 = vdwg.mxu0
        %6668 = vmatpush.bf16.msra.mxu0 %v5918
        %6669 = vmatpush.bf16.msra.mxu0 %v5911
        %6670 = vmatpush.bf16.msra.mxu0 %v5904
        %6671 = vmatpush.bf16.msra.mxu0 %v5897
        %6672 = vmatpush.bf16.msra.mxu0 %v5890
        %6673 = vmatpush.bf16.msra.mxu0 %v5883
        %6674 = vmatpush.bf16.msra.mxu0 %v5876
        %6675 = vmatpush.bf16.msra.mxu0 %v5869
        %6676 = vmatmul.bf16.gmra.mxu0 %v5424
        %v6677 = vpop.f32.mrf.mxu0
        %v6678 = vadd.f32 %v6629, %v6677
        %v6679 = vpop.f32.mrf.mxu0
        %v6680 = vadd.f32 %v6631, %v6679
        %6681 = vmatmul.bf16.gmra.mxu0 %v5426
        %v6682 = vpop.f32.mrf.mxu0
        %v6683 = vadd.f32 %v6634, %v6682
        %v6684 = vpop.f32.mrf.mxu0
        %v6685 = vadd.f32 %v6636, %v6684
        %6686 = vmatmul.bf16.gmra.mxu0 %v5428
        %v6687 = vpop.f32.mrf.mxu0
        %v6688 = vadd.f32 %v6639, %v6687
        %v6689 = vpop.f32.mrf.mxu0
        %v6690 = vadd.f32 %v6641, %v6689
        %6691 = vmatmul.bf16.gmra.mxu0 %v5430
        %v6692 = vpop.f32.mrf.mxu0
        %v6693 = vadd.f32 %v6644, %v6692
        %v6694 = vpop.f32.mrf.mxu0
        %v6695 = vadd.f32 %v6646, %v6694
        %6696 = vmatmul.bf16.gmra.mxu0 %v5432
        %v6697 = vpop.f32.mrf.mxu0
        %v6698 = vadd.f32 %v6649, %v6697
        %v6699 = vpop.f32.mrf.mxu0
        %v6700 = vadd.f32 %v6651, %v6699
        %6701 = vmatmul.bf16.gmra.mxu0 %v5434
        %v6702 = vpop.f32.mrf.mxu0
        %v6703 = vadd.f32 %v6654, %v6702
        %v6704 = vpop.f32.mrf.mxu0
        %v6705 = vadd.f32 %v6656, %v6704
        %6706 = vmatmul.bf16.gmra.mxu0 %v5436
        %v6707 = vpop.f32.mrf.mxu0
        %v6708 = vadd.f32 %v6659, %v6707
        %v6709 = vpop.f32.mrf.mxu0
        %v6710 = vadd.f32 %v6661, %v6709
        %6711 = vmatmul.bf16.gmra.mxu0 %v5438
        %v6712 = vpop.f32.mrf.mxu0
        %v6713 = vadd.f32 %v6664, %v6712
        %v6714 = vpop.f32.mrf.mxu0
        %v6715 = vadd.f32 %v6666, %v6714
        %6716 = vdwg.mxu0
        %v6717 = vmul.f32 %v6090, 0.5
        %v6718 = vmul.f32 %v6188, 0.5
        %v6719 = vmul.f32 %v6286, 0.5
        %v6720 = vmul.f32 %v6384, 0.5
        %v6721 = vmul.f32 %v6482, 0.5
        %v6722 = vmul.f32 %v6580, 0.5
        %v6723 = vmul.f32 %v6678, 0.5
        %v6724 = vmul.f32 %v6092, 0.5
        %v6725 = vmul.f32 %v6190, 0.5
        %v6726 = vmul.f32 %v6288, 0.5
        %v6727 = vmul.f32 %v6386, 0.5
        %v6728 = vmul.f32 %v6484, 0.5
        %v6729 = vmul.f32 %v6582, 0.5
        %v6730 = vmul.f32 %v6680, 0.5
        %v6731 = vmul.f32 %v6095, 0.5
        %v6732 = vmul.f32 %v6193, 0.5
        %v6733 = vmul.f32 %v6291, 0.5
        %v6734 = vmul.f32 %v6389, 0.5
        %v6735 = vmul.f32 %v6487, 0.5
        %v6736 = vmul.f32 %v6585, 0.5
        %v6737 = vmul.f32 %v6683, 0.5
        %v6738 = vmul.f32 %v6097, 0.5
        %v6739 = vmul.f32 %v6195, 0.5
        %v6740 = vmul.f32 %v6293, 0.5
        %v6741 = vmul.f32 %v6391, 0.5
        %v6742 = vmul.f32 %v6489, 0.5
        %v6743 = vmul.f32 %v6587, 0.5
        %v6744 = vmul.f32 %v6685, 0.5
        %v6745 = vmul.f32 %v6100, 0.5
        %v6746 = vmul.f32 %v6198, 0.5
        %v6747 = vmul.f32 %v6296, 0.5
        %v6748 = vmul.f32 %v6394, 0.5
        %v6749 = vmul.f32 %v6492, 0.5
        %v6750 = vmul.f32 %v6590, 0.5
        %v6751 = vmul.f32 %v6688, 0.5
        %v6752 = vmul.f32 %v6102, 0.5
        %v6753 = vmul.f32 %v6200, 0.5
        %v6754 = vmul.f32 %v6298, 0.5
        %v6755 = vmul.f32 %v6396, 0.5
        %v6756 = vmul.f32 %v6494, 0.5
        %v6757 = vmul.f32 %v6592, 0.5
        %v6758 = vmul.f32 %v6690, 0.5
        %v6759 = vmul.f32 %v6105, 0.5
        %v6760 = vmul.f32 %v6203, 0.5
        %v6761 = vmul.f32 %v6301, 0.5
        %v6762 = vmul.f32 %v6399, 0.5
        %v6763 = vmul.f32 %v6497, 0.5
        %v6764 = vmul.f32 %v6595, 0.5
        %v6765 = vmul.f32 %v6693, 0.5
        %v6766 = vmul.f32 %v6107, 0.5
        %v6767 = vmul.f32 %v6205, 0.5
        %v6768 = vmul.f32 %v6303, 0.5
        %v6769 = vmul.f32 %v6401, 0.5
        %v6770 = vmul.f32 %v6499, 0.5
        %v6771 = vmul.f32 %v6597, 0.5
        %v6772 = vmul.f32 %v6695, 0.5
        %v6773 = vmul.f32 %v6110, 0.5
        %v6774 = vmul.f32 %v6208, 0.5
        %v6775 = vmul.f32 %v6306, 0.5
        %v6776 = vmul.f32 %v6404, 0.5
        %v6777 = vmul.f32 %v6502, 0.5
        %v6778 = vmul.f32 %v6600, 0.5
        %v6779 = vmul.f32 %v6698, 0.5
        %v6780 = vmul.f32 %v6112, 0.5
        %v6781 = vmul.f32 %v6210, 0.5
        %v6782 = vmul.f32 %v6308, 0.5
        %v6783 = vmul.f32 %v6406, 0.5
        %v6784 = vmul.f32 %v6504, 0.5
        %v6785 = vmul.f32 %v6602, 0.5
        %v6786 = vmul.f32 %v6700, 0.5
        %v6787 = vmul.f32 %v6115, 0.5
        %v6788 = vmul.f32 %v6213, 0.5
        %v6789 = vmul.f32 %v6311, 0.5
        %v6790 = vmul.f32 %v6409, 0.5
        %v6791 = vmul.f32 %v6507, 0.5
        %v6792 = vmul.f32 %v6605, 0.5
        %v6793 = vmul.f32 %v6703, 0.5
        %v6794 = vmul.f32 %v6117, 0.5
        %v6795 = vmul.f32 %v6215, 0.5
        %v6796 = vmul.f32 %v6313, 0.5
        %v6797 = vmul.f32 %v6411, 0.5
        %v6798 = vmul.f32 %v6509, 0.5
        %v6799 = vmul.f32 %v6607, 0.5
        %v6800 = vmul.f32 %v6705, 0.5
        %v6801 = vmul.f32 %v6120, 0.5
        %v6802 = vmul.f32 %v6218, 0.5
        %v6803 = vmul.f32 %v6316, 0.5
        %v6804 = vmul.f32 %v6414, 0.5
        %v6805 = vmul.f32 %v6512, 0.5
        %v6806 = vmul.f32 %v6610, 0.5
        %v6807 = vmul.f32 %v6708, 0.5
        %v6808 = vmul.f32 %v6122, 0.5
        %v6809 = vmul.f32 %v6220, 0.5
        %v6810 = vmul.f32 %v6318, 0.5
        %v6811 = vmul.f32 %v6416, 0.5
        %v6812 = vmul.f32 %v6514, 0.5
        %v6813 = vmul.f32 %v6612, 0.5
        %v6814 = vmul.f32 %v6710, 0.5
        %v6815 = vmul.f32 %v6125, 0.5
        %v6816 = vmul.f32 %v6223, 0.5
        %v6817 = vmul.f32 %v6321, 0.5
        %v6818 = vmul.f32 %v6419, 0.5
        %v6819 = vmul.f32 %v6517, 0.5
        %v6820 = vmul.f32 %v6615, 0.5
        %v6821 = vmul.f32 %v6713, 0.5
        %v6822 = vmul.f32 %v6127, 0.5
        %v6823 = vmul.f32 %v6225, 0.5
        %v6824 = vmul.f32 %v6323, 0.5
        %v6825 = vmul.f32 %v6421, 0.5
        %v6826 = vmul.f32 %v6519, 0.5
        %v6827 = vmul.f32 %v6617, 0.5
        %v6828 = vmul.f32 %v6715, 0.5
        %v6829 = vtanh.pop %v6717
        %v6830 = vtanh.pop %v6718
        %v6831 = vtanh.pop %v6719
        %v6832 = vtanh.pop %v6720
        %v6833 = vtanh.pop %v6721
        %v6834 = vtanh.pop %v6722
        %v6835 = vtanh.pop %v6723
        %v6836 = vtanh.pop %v6724
        %v6837 = vtanh.pop %v6725
        %v6838 = vtanh.pop %v6726
        %v6839 = vtanh.pop %v6727
        %v6840 = vtanh.pop %v6728
        %v6841 = vtanh.pop %v6729
        %v6842 = vtanh.pop %v6730
        %v6843 = vtanh.pop %v6731
        %v6844 = vtanh.pop %v6732
        %v6845 = vtanh.pop %v6733
        %v6846 = vtanh.pop %v6734
        %v6847 = vtanh.pop %v6735
        %v6848 = vtanh.pop %v6736
        %v6849 = vtanh.pop %v6737
        %v6850 = vtanh.pop %v6738
        %v6851 = vtanh.pop %v6739
        %v6852 = vtanh.pop %v6740
        %v6853 = vtanh.pop %v6741
        %v6854 = vtanh.pop %v6742
        %v6855 = vtanh.pop %v6743
        %v6856 = vtanh.pop %v6744
        %v6857 = vtanh.pop %v6745
        %v6858 = vtanh.pop %v6746
        %v6859 = vtanh.pop %v6747
        %v6860 = vtanh.pop %v6748
        %v6861 = vtanh.pop %v6749
        %v6862 = vtanh.pop %v6750
        %v6863 = vtanh.pop %v6751
        %v6864 = vtanh.pop %v6752
        %v6865 = vtanh.pop %v6753
        %v6866 = vtanh.pop %v6754
        %v6867 = vtanh.pop %v6755
        %v6868 = vtanh.pop %v6756
        %v6869 = vtanh.pop %v6757
        %v6870 = vtanh.pop %v6758
        %v6871 = vtanh.pop %v6759
        %v6872 = vtanh.pop %v6760
        %v6873 = vtanh.pop %v6761
        %v6874 = vtanh.pop %v6762
        %v6875 = vtanh.pop %v6763
        %v6876 = vtanh.pop %v6764
        %v6877 = vtanh.pop %v6765
        %v6878 = vtanh.pop %v6766
        %v6879 = vtanh.pop %v6767
        %v6880 = vtanh.pop %v6768
        %v6881 = vtanh.pop %v6769
        %v6882 = vtanh.pop %v6770
        %v6883 = vtanh.pop %v6771
        %v6884 = vtanh.pop %v6772
        %v6885 = vtanh.pop %v6773
        %v6886 = vtanh.pop %v6774
        %v6887 = vtanh.pop %v6775
        %v6888 = vtanh.pop %v6776
        %v6889 = vtanh.pop %v6777
        %v6890 = vtanh.pop %v6778
        %v6891 = vtanh.pop %v6779
        %v6892 = vtanh.pop %v6780
        %v6893 = vtanh.pop %v6781
        %v6894 = vtanh.pop %v6782
        %v6895 = vtanh.pop %v6783
        %v6896 = vtanh.pop %v6784
        %v6897 = vtanh.pop %v6785
        %v6898 = vtanh.pop %v6786
        %v6899 = vtanh.pop %v6787
        %v6900 = vtanh.pop %v6788
        %v6901 = vtanh.pop %v6789
        %v6902 = vtanh.pop %v6790
        %v6903 = vtanh.pop %v6791
        %v6904 = vtanh.pop %v6792
        %v6905 = vtanh.pop %v6793
        %v6906 = vtanh.pop %v6794
        %v6907 = vtanh.pop %v6795
        %v6908 = vtanh.pop %v6796
        %v6909 = vtanh.pop %v6797
        %v6910 = vtanh.pop %v6798
        %v6911 = vtanh.pop %v6799
        %v6912 = vtanh.pop %v6800
        %v6913 = vtanh.pop %v6801
        %v6914 = vtanh.pop %v6802
        %v6915 = vtanh.pop %v6803
        %v6916 = vtanh.pop %v6804
        %v6917 = vtanh.pop %v6805
        %v6918 = vtanh.pop %v6806
        %v6919 = vtanh.pop %v6807
        %v6920 = vtanh.pop %v6808
        %v6921 = vtanh.pop %v6809
        %v6922 = vtanh.pop %v6810
        %v6923 = vtanh.pop %v6811
        %v6924 = vtanh.pop %v6812
        %v6925 = vtanh.pop %v6813
        %v6926 = vtanh.pop %v6814
        %v6927 = vtanh.pop %v6815
        %v6928 = vtanh.pop %v6816
        %v6929 = vtanh.pop %v6817
        %v6930 = vtanh.pop %v6818
        %v6931 = vtanh.pop %v6819
        %v6932 = vtanh.pop %v6820
        %v6933 = vtanh.pop %v6821
        %v6934 = vtanh.pop %v6822
        %v6935 = vtanh.pop %v6823
        %v6936 = vtanh.pop %v6824
        %v6937 = vtanh.pop %v6825
        %v6938 = vtanh.pop %v6826
        %v6939 = vtanh.pop %v6827
        %v6940 = vtanh.pop %v6828
        %v6941 = vadd.f32 %v6829, 1.0
        %v6942 = vadd.f32 %v6830, 1.0
        %v6943 = vadd.f32 %v6831, 1.0
        %v6944 = vadd.f32 %v6832, 1.0
        %v6945 = vadd.f32 %v6833, 1.0
        %v6946 = vadd.f32 %v6834, 1.0
        %v6947 = vadd.f32 %v6835, 1.0
        %v6948 = vadd.f32 %v6836, 1.0
        %v6949 = vadd.f32 %v6837, 1.0
        %v6950 = vadd.f32 %v6838, 1.0
        %v6951 = vadd.f32 %v6839, 1.0
        %v6952 = vadd.f32 %v6840, 1.0
        %v6953 = vadd.f32 %v6841, 1.0
        %v6954 = vadd.f32 %v6842, 1.0
        %v6955 = vadd.f32 %v6843, 1.0
        %v6956 = vadd.f32 %v6844, 1.0
        %v6957 = vadd.f32 %v6845, 1.0
        %v6958 = vadd.f32 %v6846, 1.0
        %v6959 = vadd.f32 %v6847, 1.0
        %v6960 = vadd.f32 %v6848, 1.0
        %v6961 = vadd.f32 %v6849, 1.0
        %v6962 = vadd.f32 %v6850, 1.0
        %v6963 = vadd.f32 %v6851, 1.0
        %v6964 = vadd.f32 %v6852, 1.0
        %v6965 = vadd.f32 %v6853, 1.0
        %v6966 = vadd.f32 %v6854, 1.0
        %v6967 = vadd.f32 %v6855, 1.0
        %v6968 = vadd.f32 %v6856, 1.0
        %v6969 = vadd.f32 %v6857, 1.0
        %v6970 = vadd.f32 %v6858, 1.0
        %v6971 = vadd.f32 %v6859, 1.0
        %v6972 = vadd.f32 %v6860, 1.0
        %v6973 = vadd.f32 %v6861, 1.0
        %v6974 = vadd.f32 %v6862, 1.0
        %v6975 = vadd.f32 %v6863, 1.0
        %v6976 = vadd.f32 %v6864, 1.0
        %v6977 = vadd.f32 %v6865, 1.0
        %v6978 = vadd.f32 %v6866, 1.0
        %v6979 = vadd.f32 %v6867, 1.0
        %v6980 = vadd.f32 %v6868, 1.0
        %v6981 = vadd.f32 %v6869, 1.0
        %v6982 = vadd.f32 %v6870, 1.0
        %v6983 = vadd.f32 %v6871, 1.0
        %v6984 = vadd.f32 %v6872, 1.0
        %v6985 = vadd.f32 %v6873, 1.0
        %v6986 = vadd.f32 %v6874, 1.0
        %v6987 = vadd.f32 %v6875, 1.0
        %v6988 = vadd.f32 %v6876, 1.0
        %v6989 = vadd.f32 %v6877, 1.0
        %v6990 = vadd.f32 %v6878, 1.0
        %v6991 = vadd.f32 %v6879, 1.0
        %v6992 = vadd.f32 %v6880, 1.0
        %v6993 = vadd.f32 %v6881, 1.0
        %v6994 = vadd.f32 %v6882, 1.0
        %v6995 = vadd.f32 %v6883, 1.0
        %v6996 = vadd.f32 %v6884, 1.0
        %v6997 = vadd.f32 %v6885, 1.0
        %v6998 = vadd.f32 %v6886, 1.0
        %v6999 = vadd.f32 %v6887, 1.0
        %v7000 = vadd.f32 %v6888, 1.0
        %v7001 = vadd.f32 %v6889, 1.0
        %v7002 = vadd.f32 %v6890, 1.0
        %v7003 = vadd.f32 %v6891, 1.0
        %v7004 = vadd.f32 %v6892, 1.0
        %v7005 = vadd.f32 %v6893, 1.0
        %v7006 = vadd.f32 %v6894, 1.0
        %v7007 = vadd.f32 %v6895, 1.0
        %v7008 = vadd.f32 %v6896, 1.0
        %v7009 = vadd.f32 %v6897, 1.0
        %v7010 = vadd.f32 %v6898, 1.0
        %v7011 = vadd.f32 %v6899, 1.0
        %v7012 = vadd.f32 %v6900, 1.0
        %v7013 = vadd.f32 %v6901, 1.0
        %v7014 = vadd.f32 %v6902, 1.0
        %v7015 = vadd.f32 %v6903, 1.0
        %v7016 = vadd.f32 %v6904, 1.0
        %v7017 = vadd.f32 %v6905, 1.0
        %v7018 = vadd.f32 %v6906, 1.0
        %v7019 = vadd.f32 %v6907, 1.0
        %v7020 = vadd.f32 %v6908, 1.0
        %v7021 = vadd.f32 %v6909, 1.0
        %v7022 = vadd.f32 %v6910, 1.0
        %v7023 = vadd.f32 %v6911, 1.0
        %v7024 = vadd.f32 %v6912, 1.0
        %v7025 = vadd.f32 %v6913, 1.0
        %v7026 = vadd.f32 %v6914, 1.0
        %v7027 = vadd.f32 %v6915, 1.0
        %v7028 = vadd.f32 %v6916, 1.0
        %v7029 = vadd.f32 %v6917, 1.0
        %v7030 = vadd.f32 %v6918, 1.0
        %v7031 = vadd.f32 %v6919, 1.0
        %v7032 = vadd.f32 %v6920, 1.0
        %v7033 = vadd.f32 %v6921, 1.0
        %v7034 = vadd.f32 %v6922, 1.0
        %v7035 = vadd.f32 %v6923, 1.0
        %v7036 = vadd.f32 %v6924, 1.0
        %v7037 = vadd.f32 %v6925, 1.0
        %v7038 = vadd.f32 %v6926, 1.0
        %v7039 = vadd.f32 %v6927, 1.0
        %v7040 = vadd.f32 %v6928, 1.0
        %v7041 = vadd.f32 %v6929, 1.0
        %v7042 = vadd.f32 %v6930, 1.0
        %v7043 = vadd.f32 %v6931, 1.0
        %v7044 = vadd.f32 %v6932, 1.0
        %v7045 = vadd.f32 %v6933, 1.0
        %v7046 = vadd.f32 %v6934, 1.0
        %v7047 = vadd.f32 %v6935, 1.0
        %v7048 = vadd.f32 %v6936, 1.0
        %v7049 = vadd.f32 %v6937, 1.0
        %v7050 = vadd.f32 %v6938, 1.0
        %v7051 = vadd.f32 %v6939, 1.0
        %v7052 = vadd.f32 %v6940, 1.0
        %v7053 = vmul.f32 %v6941, 0.5
        %v7054 = vmul.f32 %v6942, 0.5
        %v7055 = vmul.f32 %v6943, 0.5
        %v7056 = vmul.f32 %v6944, 0.5
        %v7057 = vmul.f32 %v6945, 0.5
        %v7058 = vmul.f32 %v6946, 0.5
        %v7059 = vmul.f32 %v6947, 0.5
        %v7060 = vmul.f32 %v6948, 0.5
        %v7061 = vmul.f32 %v6949, 0.5
        %v7062 = vmul.f32 %v6950, 0.5
        %v7063 = vmul.f32 %v6951, 0.5
        %v7064 = vmul.f32 %v6952, 0.5
        %v7065 = vmul.f32 %v6953, 0.5
        %v7066 = vmul.f32 %v6954, 0.5
        %v7067 = vmul.f32 %v6955, 0.5
        %v7068 = vmul.f32 %v6956, 0.5
        %v7069 = vmul.f32 %v6957, 0.5
        %v7070 = vmul.f32 %v6958, 0.5
        %v7071 = vmul.f32 %v6959, 0.5
        %v7072 = vmul.f32 %v6960, 0.5
        %v7073 = vmul.f32 %v6961, 0.5
        %v7074 = vmul.f32 %v6962, 0.5
        %v7075 = vmul.f32 %v6963, 0.5
        %v7076 = vmul.f32 %v6964, 0.5
        %v7077 = vmul.f32 %v6965, 0.5
        %v7078 = vmul.f32 %v6966, 0.5
        %v7079 = vmul.f32 %v6967, 0.5
        %v7080 = vmul.f32 %v6968, 0.5
        %v7081 = vmul.f32 %v6969, 0.5
        %v7082 = vmul.f32 %v6970, 0.5
        %v7083 = vmul.f32 %v6971, 0.5
        %v7084 = vmul.f32 %v6972, 0.5
        %v7085 = vmul.f32 %v6973, 0.5
        %v7086 = vmul.f32 %v6974, 0.5
        %v7087 = vmul.f32 %v6975, 0.5
        %v7088 = vmul.f32 %v6976, 0.5
        %v7089 = vmul.f32 %v6977, 0.5
        %v7090 = vmul.f32 %v6978, 0.5
        %v7091 = vmul.f32 %v6979, 0.5
        %v7092 = vmul.f32 %v6980, 0.5
        %v7093 = vmul.f32 %v6981, 0.5
        %v7094 = vmul.f32 %v6982, 0.5
        %v7095 = vmul.f32 %v6983, 0.5
        %v7096 = vmul.f32 %v6984, 0.5
        %v7097 = vmul.f32 %v6985, 0.5
        %v7098 = vmul.f32 %v6986, 0.5
        %v7099 = vmul.f32 %v6987, 0.5
        %v7100 = vmul.f32 %v6988, 0.5
        %v7101 = vmul.f32 %v6989, 0.5
        %v7102 = vmul.f32 %v6990, 0.5
        %v7103 = vmul.f32 %v6991, 0.5
        %v7104 = vmul.f32 %v6992, 0.5
        %v7105 = vmul.f32 %v6993, 0.5
        %v7106 = vmul.f32 %v6994, 0.5
        %v7107 = vmul.f32 %v6995, 0.5
        %v7108 = vmul.f32 %v6996, 0.5
        %v7109 = vmul.f32 %v6997, 0.5
        %v7110 = vmul.f32 %v6998, 0.5
        %v7111 = vmul.f32 %v6999, 0.5
        %v7112 = vmul.f32 %v7000, 0.5
        %v7113 = vmul.f32 %v7001, 0.5
        %v7114 = vmul.f32 %v7002, 0.5
        %v7115 = vmul.f32 %v7003, 0.5
        %v7116 = vmul.f32 %v7004, 0.5
        %v7117 = vmul.f32 %v7005, 0.5
        %v7118 = vmul.f32 %v7006, 0.5
        %v7119 = vmul.f32 %v7007, 0.5
        %v7120 = vmul.f32 %v7008, 0.5
        %v7121 = vmul.f32 %v7009, 0.5
        %v7122 = vmul.f32 %v7010, 0.5
        %v7123 = vmul.f32 %v7011, 0.5
        %v7124 = vmul.f32 %v7012, 0.5
        %v7125 = vmul.f32 %v7013, 0.5
        %v7126 = vmul.f32 %v7014, 0.5
        %v7127 = vmul.f32 %v7015, 0.5
        %v7128 = vmul.f32 %v7016, 0.5
        %v7129 = vmul.f32 %v7017, 0.5
        %v7130 = vmul.f32 %v7018, 0.5
        %v7131 = vmul.f32 %v7019, 0.5
        %v7132 = vmul.f32 %v7020, 0.5
        %v7133 = vmul.f32 %v7021, 0.5
        %v7134 = vmul.f32 %v7022, 0.5
        %v7135 = vmul.f32 %v7023, 0.5
        %v7136 = vmul.f32 %v7024, 0.5
        %v7137 = vmul.f32 %v7025, 0.5
        %v7138 = vmul.f32 %v7026, 0.5
        %v7139 = vmul.f32 %v7027, 0.5
        %v7140 = vmul.f32 %v7028, 0.5
        %v7141 = vmul.f32 %v7029, 0.5
        %v7142 = vmul.f32 %v7030, 0.5
        %v7143 = vmul.f32 %v7031, 0.5
        %v7144 = vmul.f32 %v7032, 0.5
        %v7145 = vmul.f32 %v7033, 0.5
        %v7146 = vmul.f32 %v7034, 0.5
        %v7147 = vmul.f32 %v7035, 0.5
        %v7148 = vmul.f32 %v7036, 0.5
        %v7149 = vmul.f32 %v7037, 0.5
        %v7150 = vmul.f32 %v7038, 0.5
        %v7151 = vmul.f32 %v7039, 0.5
        %v7152 = vmul.f32 %v7040, 0.5
        %v7153 = vmul.f32 %v7041, 0.5
        %v7154 = vmul.f32 %v7042, 0.5
        %v7155 = vmul.f32 %v7043, 0.5
        %v7156 = vmul.f32 %v7044, 0.5
        %v7157 = vmul.f32 %v7045, 0.5
        %v7158 = vmul.f32 %v7046, 0.5
        %v7159 = vmul.f32 %v7047, 0.5
        %v7160 = vmul.f32 %v7048, 0.5
        %v7161 = vmul.f32 %v7049, 0.5
        %v7162 = vmul.f32 %v7050, 0.5
        %v7163 = vmul.f32 %v7051, 0.5
        %v7164 = vmul.f32 %v7052, 0.5
        %v7165 = vpack.c.bf16 %v7054, %v7053
        %v7166 = vpack.c.bf16 %v7056, %v7055
        %v7167 = vpack.c.bf16 %v7058, %v7057
        %v7168 = vpack.c.bf16 %v7059, %v7059
        %v7169 = vpack.c.bf16 %v7061, %v7060
        %v7170 = vpack.c.bf16 %v7063, %v7062
        %v7171 = vpack.c.bf16 %v7065, %v7064
        %v7172 = vpack.c.bf16 %v7066, %v7066
        %v7173 = vpack.c.bf16 %v7068, %v7067
        %v7174 = vpack.c.bf16 %v7070, %v7069
        %v7175 = vpack.c.bf16 %v7072, %v7071
        %v7176 = vpack.c.bf16 %v7073, %v7073
        %v7177 = vpack.c.bf16 %v7075, %v7074
        %v7178 = vpack.c.bf16 %v7077, %v7076
        %v7179 = vpack.c.bf16 %v7079, %v7078
        %v7180 = vpack.c.bf16 %v7080, %v7080
        %v7181 = vpack.c.bf16 %v7082, %v7081
        %v7182 = vpack.c.bf16 %v7084, %v7083
        %v7183 = vpack.c.bf16 %v7086, %v7085
        %v7184 = vpack.c.bf16 %v7087, %v7087
        %v7185 = vpack.c.bf16 %v7089, %v7088
        %v7186 = vpack.c.bf16 %v7091, %v7090
        %v7187 = vpack.c.bf16 %v7093, %v7092
        %v7188 = vpack.c.bf16 %v7094, %v7094
        %v7189 = vpack.c.bf16 %v7096, %v7095
        %v7190 = vpack.c.bf16 %v7098, %v7097
        %v7191 = vpack.c.bf16 %v7100, %v7099
        %v7192 = vpack.c.bf16 %v7101, %v7101
        %v7193 = vpack.c.bf16 %v7103, %v7102
        %v7194 = vpack.c.bf16 %v7105, %v7104
        %v7195 = vpack.c.bf16 %v7107, %v7106
        %v7196 = vpack.c.bf16 %v7108, %v7108
        %v7197 = vpack.c.bf16 %v7110, %v7109
        %v7198 = vpack.c.bf16 %v7112, %v7111
        %v7199 = vpack.c.bf16 %v7114, %v7113
        %v7200 = vpack.c.bf16 %v7115, %v7115
        %v7201 = vpack.c.bf16 %v7117, %v7116
        %v7202 = vpack.c.bf16 %v7119, %v7118
        %v7203 = vpack.c.bf16 %v7121, %v7120
        %v7204 = vpack.c.bf16 %v7122, %v7122
        %v7205 = vpack.c.bf16 %v7124, %v7123
        %v7206 = vpack.c.bf16 %v7126, %v7125
        %v7207 = vpack.c.bf16 %v7128, %v7127
        %v7208 = vpack.c.bf16 %v7129, %v7129
        %v7209 = vpack.c.bf16 %v7131, %v7130
        %v7210 = vpack.c.bf16 %v7133, %v7132
        %v7211 = vpack.c.bf16 %v7135, %v7134
        %v7212 = vpack.c.bf16 %v7136, %v7136
        %v7213 = vpack.c.bf16 %v7138, %v7137
        %v7214 = vpack.c.bf16 %v7140, %v7139
        %v7215 = vpack.c.bf16 %v7142, %v7141
        %v7216 = vpack.c.bf16 %v7143, %v7143
        %v7217 = vpack.c.bf16 %v7145, %v7144
        %v7218 = vpack.c.bf16 %v7147, %v7146
        %v7219 = vpack.c.bf16 %v7149, %v7148
        %v7220 = vpack.c.bf16 %v7150, %v7150
        %v7221 = vpack.c.bf16 %v7152, %v7151
        %v7222 = vpack.c.bf16 %v7154, %v7153
        %v7223 = vpack.c.bf16 %v7156, %v7155
        %v7224 = vpack.c.bf16 %v7157, %v7157
        %v7225 = vpack.c.bf16 %v7159, %v7158
        %v7226 = vpack.c.bf16 %v7161, %v7160
        %v7227 = vpack.c.bf16 %v7163, %v7162
        %v7228 = vpack.c.bf16 %v7164, %v7164
        %7229 = vst [vmem:[%s551] sm:$0xff] %v7165
        %7230 = vst [vmem:[%s551 + $0x8] sm:$0xff] %v7166
        %7231 = vst [vmem:[%s551 + $0x10] sm:$0xff] %v7167
        %vm7232 = vcmask 125952
        %7233 = vst.msk [vmem:[%s551 + $0x18] sm:$0xf] %vm7232, %v7168
        %7234 = vst [vmem:[%s551 + $0x1c] sm:$0xff] %v7169
        %7235 = vst [vmem:[%s551 + $0x24] sm:$0xff] %v7170
        %7236 = vst [vmem:[%s551 + $0x2c] sm:$0xff] %v7171
        %7237 = vst.msk [vmem:[%s551 + $0x34] sm:$0xf] %vm7232, %v7172
        %7238 = vst [vmem:[%s551 + $0x38] sm:$0xff] %v7173
        %7239 = vst [vmem:[%s551 + $0x40] sm:$0xff] %v7174
        %7240 = vst [vmem:[%s551 + $0x48] sm:$0xff] %v7175
        %7241 = vst.msk [vmem:[%s551 + $0x50] sm:$0xf] %vm7232, %v7176
        %7242 = vst [vmem:[%s551 + $0x54] sm:$0xff] %v7177
        %7243 = vst [vmem:[%s551 + $0x5c] sm:$0xff] %v7178
        %7244 = vst [vmem:[%s551 + $0x64] sm:$0xff] %v7179
        %7245 = vst.msk [vmem:[%s551 + $0x6c] sm:$0xf] %vm7232, %v7180
        %7246 = vst [vmem:[%s551 + $0x70] sm:$0xff] %v7181
        %7247 = vst [vmem:[%s551 + $0x78] sm:$0xff] %v7182
        %7248 = vst [vmem:[%s551 + $0x80] sm:$0xff] %v7183
        %7249 = vst.msk [vmem:[%s551 + $0x88] sm:$0xf] %vm7232, %v7184
        %7250 = vst [vmem:[%s551 + $0x8c] sm:$0xff] %v7185
        %7251 = vst [vmem:[%s551 + $0x94] sm:$0xff] %v7186
        %7252 = vst [vmem:[%s551 + $0x9c] sm:$0xff] %v7187
        %7253 = vst.msk [vmem:[%s551 + $0xa4] sm:$0xf] %vm7232, %v7188
        %7254 = vst [vmem:[%s551 + $0xa8] sm:$0xff] %v7189
        %7255 = vst [vmem:[%s551 + $0xb0] sm:$0xff] %v7190
        %7256 = vst [vmem:[%s551 + $0xb8] sm:$0xff] %v7191
        %7257 = vst.msk [vmem:[%s551 + $0xc0] sm:$0xf] %vm7232, %v7192
        %7258 = vst [vmem:[%s551 + $0xc4] sm:$0xff] %v7193
        %7259 = vst [vmem:[%s551 + $0xcc] sm:$0xff] %v7194
        %7260 = vst [vmem:[%s551 + $0xd4] sm:$0xff] %v7195
        %7261 = vst.msk [vmem:[%s551 + $0xdc] sm:$0xf] %vm7232, %v7196
        %7262 = vst [vmem:[%s551 + $0xe0] sm:$0xff] %v7197
        %7263 = vst [vmem:[%s551 + $0xe8] sm:$0xff] %v7198
        %7264 = vst [vmem:[%s551 + $0xf0] sm:$0xff] %v7199
        %7265 = vst.msk [vmem:[%s551 + $0xf8] sm:$0xf] %vm7232, %v7200
        %7266 = vst [vmem:[%s551 + $0xfc] sm:$0xff] %v7201
        %7267 = vst [vmem:[%s551 + $0x104] sm:$0xff] %v7202
        %7268 = vst [vmem:[%s551 + $0x10c] sm:$0xff] %v7203
        %7269 = vst.msk [vmem:[%s551 + $0x114] sm:$0xf] %vm7232, %v7204
        %7270 = vst [vmem:[%s551 + $0x118] sm:$0xff] %v7205
        %7271 = vst [vmem:[%s551 + $0x120] sm:$0xff] %v7206
        %7272 = vst [vmem:[%s551 + $0x128] sm:$0xff] %v7207
        %7273 = vst.msk [vmem:[%s551 + $0x130] sm:$0xf] %vm7232, %v7208
        %7274 = vst [vmem:[%s551 + $0x134] sm:$0xff] %v7209
        %7275 = vst [vmem:[%s551 + $0x13c] sm:$0xff] %v7210
        %7276 = vst [vmem:[%s551 + $0x144] sm:$0xff] %v7211
        %7277 = vst.msk [vmem:[%s551 + $0x14c] sm:$0xf] %vm7232, %v7212
        %7278 = vst [vmem:[%s551 + $0x150] sm:$0xff] %v7213
        %7279 = vst [vmem:[%s551 + $0x158] sm:$0xff] %v7214
        %7280 = vst [vmem:[%s551 + $0x160] sm:$0xff] %v7215
        %7281 = vst.msk [vmem:[%s551 + $0x168] sm:$0xf] %vm7232, %v7216
        %7282 = vst [vmem:[%s551 + $0x16c] sm:$0xff] %v7217
        %7283 = vst [vmem:[%s551 + $0x174] sm:$0xff] %v7218
        %7284 = vst [vmem:[%s551 + $0x17c] sm:$0xff] %v7219
        %7285 = vst.msk [vmem:[%s551 + $0x184] sm:$0xf] %vm7232, %v7220
        %7286 = vst [vmem:[%s551 + $0x188] sm:$0xff] %v7221
        %7287 = vst [vmem:[%s551 + $0x190] sm:$0xff] %v7222
        %7288 = vst [vmem:[%s551 + $0x198] sm:$0xff] %v7223
        %7289 = vst.msk [vmem:[%s551 + $0x1a0] sm:$0xf] %vm7232, %v7224
        %7290 = vst [vmem:[%s551 + $0x1a4] sm:$0xff] %v7225
        %7291 = vst [vmem:[%s551 + $0x1ac] sm:$0xff] %v7226
        %7292 = vst [vmem:[%s551 + $0x1b4] sm:$0xff] %v7227
        %7293 = vst.msk [vmem:[%s551 + $0x1bc] sm:$0xf] %vm7232, %v7228
        %7294 = vst [vmem:[%s532] sm:$0xff] %v4898
        %7295 = vst [vmem:[%s532 + $0x18] sm:$0xff] %v4899
        %7296 = vst [vmem:[%s532 + $0x30] sm:$0xff] %v4900
        %7297 = vst [vmem:[%s532 + $0x48] sm:$0xff] %v4901
        %7298 = vst [vmem:[%s532 + $0x60] sm:$0xff] %v4902
        %7299 = vst [vmem:[%s532 + $0x78] sm:$0xff] %v4903
        %7300 = vst [vmem:[%s532 + $0x90] sm:$0xff] %v4904
        %7301 = vst [vmem:[%s532 + $0xa8] sm:$0xff] %v4905
        %7302 = vst [vmem:[%s532 + $0xc0] sm:$0xff] %v4906
        %7303 = vst [vmem:[%s532 + $0xd8] sm:$0xff] %v4907
        %7304 = vst [vmem:[%s532 + $0xf0] sm:$0xff] %v4908
        %7305 = vst [vmem:[%s532 + $0x108] sm:$0xff] %v4909
        %7306 = vst [vmem:[%s532 + $0x120] sm:$0xff] %v4910
        %7307 = vst [vmem:[%s532 + $0x138] sm:$0xff] %v4911
        %7308 = vst [vmem:[%s532 + $0x150] sm:$0xff] %v4912
        %7309 = vst [vmem:[%s532 + $0x168] sm:$0xff] %v4913
        %7310 = vst [vmem:[%s532 + $0x8] sm:$0xff] %v4665
        %7311 = vst [vmem:[%s532 + $0x20] sm:$0xff] %v4667
        %7312 = vst [vmem:[%s532 + $0x38] sm:$0xff] %v4670
        %7313 = vst [vmem:[%s532 + $0x50] sm:$0xff] %v4672
        %7314 = vst [vmem:[%s532 + $0x68] sm:$0xff] %v4675
        %7315 = vst [vmem:[%s532 + $0x80] sm:$0xff] %v4677
        %7316 = vst [vmem:[%s532 + $0x98] sm:$0xff] %v4680
        %7317 = vst [vmem:[%s532 + $0xb0] sm:$0xff] %v4682
        %7318 = vst [vmem:[%s532 + $0xc8] sm:$0xff] %v4685
        %7319 = vst [vmem:[%s532 + $0xe0] sm:$0xff] %v4687
        %7320 = vst [vmem:[%s532 + $0xf8] sm:$0xff] %v4690
        %7321 = vst [vmem:[%s532 + $0x110] sm:$0xff] %v4692
        %7322 = vst [vmem:[%s532 + $0x128] sm:$0xff] %v4695
        %7323 = vst [vmem:[%s532 + $0x140] sm:$0xff] %v4697
        %7324 = vst [vmem:[%s532 + $0x158] sm:$0xff] %v4700
        %7325 = vst [vmem:[%s532 + $0x170] sm:$0xff] %v4702
        %7326 = vst [vmem:[%s532 + $0x10] sm:$0xff] %v4763
        %7327 = vst [vmem:[%s532 + $0x28] sm:$0xff] %v4765
        %7328 = vst [vmem:[%s532 + $0x40] sm:$0xff] %v4768
        %7329 = vst [vmem:[%s532 + $0x58] sm:$0xff] %v4770
        %7330 = vst [vmem:[%s532 + $0x70] sm:$0xff] %v4773
        %7331 = vst [vmem:[%s532 + $0x88] sm:$0xff] %v4775
        %7332 = vst [vmem:[%s532 + $0xa0] sm:$0xff] %v4778
        %7333 = vst [vmem:[%s532 + $0xb8] sm:$0xff] %v4780
        %7334 = vst [vmem:[%s532 + $0xd0] sm:$0xff] %v4783
        %7335 = vst [vmem:[%s532 + $0xe8] sm:$0xff] %v4785
        %7336 = vst [vmem:[%s532 + $0x100] sm:$0xff] %v4788
        %7337 = vst [vmem:[%s532 + $0x118] sm:$0xff] %v4790
        %7338 = vst [vmem:[%s532 + $0x130] sm:$0xff] %v4793
        %7339 = vst [vmem:[%s532 + $0x148] sm:$0xff] %v4795
        %7340 = vst [vmem:[%s532 + $0x160] sm:$0xff] %v4798
        %7341 = vst [vmem:[%s532 + $0x178] sm:$0xff] %v4800
        %s7342 = smul.u32 16, %s31
        %p7343 = scmp.lt.s32.totalorder %s7342, 31
        %s7344 = scalar_select %p7343, %s7342, 31
        %s7345 = smul.addr %s7344, 7
        %s7346 = smul.addr %s7345, 4
        %s7347 = scalar_lea.vmem %s14, %s7346
        %s7348 = sand.u32 %s369, 1
        %s7349 = scalar_lea.sflag [#allocation4], %s7348
        %s7350 = sand.u32 %s369, 1
        %s7351 = smul.addr %s7350, 384
        %s7352 = scalar_lea.vmem [#allocation5], %s7351
        // Predicated region
        $region81: #{tpu_custom_call.1} parent=75 // pred_check
          %p7353 = pneg %p353
        $region82: #{tpu_custom_call.1} parent=75 // pred_check_branch
          %7355 = sbr.rel (%p7353) target = $region84
        $region83: #{tpu_custom_call.1} parent=75 // pred_region
          %s7356 = smul.u32 16, %s31
        $region84: #{tpu_custom_call.1} parent=75 // pred_fallthru
          _
        // Predicated region
        $region85: #{tpu_custom_call.1} parent=75 // pred_check
          %p7357 = pneg %p379
        $region86: #{tpu_custom_call.1} parent=75 // pred_check_branch
          %7359 = sbr.rel (%p7357) target = $region88
        $region87: #{tpu_custom_call.1} parent=75 // pred_region
          %s7360 = smul.u32 16, %s31
          %7362 = vsyncadd %s7349, 0
          %s7363 = smul.addr %s7360, 3
          %s7364 = smul.addr %s7363, 8
          %s7365 = scalar_lea.hbm %s15, %s7364
          %s7366 = sshll.u32 %s7352, 4
          %s7367 = int_to_ptr.vmem [resolvable:$true] %s7366
          %s7368 = sshll.u32 %s7365, 4
          %s7369 = int_to_ptr.hbm [resolvable:$true] %s7368
          %7374 = dma.vmem_to_hbm [thread:$0]  %s7367, 6144, %s7369, %s7349, 384, 384, 24
        $region88: #{tpu_custom_call.1} parent=75 // pred_fallthru
          _
      $region76: #{tpu_custom_call.1} parent=5 // pred_fallthru
        _
      %p7375 = scmp.le.s32.totalorder 2, %s26
      // Predicated region
      $region89: #{tpu_custom_call.1} parent=5 // pred_check
        %p7376 = pneg %p7375
      $region90: #{tpu_custom_call.1} parent=5 // pred_check_branch
        %7378 = sbr.rel (%p7376) target = $region92
      $region91: #{tpu_custom_call.1} parent=5 // pred_region
        %s7379 = ssub.s32 %s26, 2
        // Predicated region
        $region93: #{tpu_custom_call.1} parent=91 // pred_check
          %p7380 = pneg %p359
        $region94: #{tpu_custom_call.1} parent=91 // pred_check_branch
          %7382 = sbr.rel (%p7380) target = $region96
        $region95: #{tpu_custom_call.1} parent=91 // pred_region
          %s7383 = smul.u32 16, %s32
          %p7384 = scmp.lt.s32.totalorder %s7383, 31
          %s7385 = scalar_select %p7384, %s7383, 31
          %s7386 = smul.addr %s7385, 7
          %s7387 = smul.addr %s7386, 4
          %s7388 = scalar_lea.vmem %s14, %s7387
        $region96: #{tpu_custom_call.1} parent=91 // pred_fallthru
          _
        // Predicated region
        $region97: #{tpu_custom_call.1} parent=91 // pred_check
          %p7389 = pneg %p385
        $region98: #{tpu_custom_call.1} parent=91 // pred_check_branch
          %7391 = sbr.rel (%p7389) target = $region100
        $region99: #{tpu_custom_call.1} parent=91 // pred_region
          %s7392 = sand.u32 %s370, 1
          %s7393 = scalar_lea.sflag [#allocation4], %s7392
          %s7394 = sand.u32 %s370, 1
          %s7395 = smul.addr %s7394, 384
          %s7396 = scalar_lea.vmem [#allocation5], %s7395
          %7398 = dma.done %s7393, 6144
        $region100: #{tpu_custom_call.1} parent=91 // pred_fallthru
          _
      $region92: #{tpu_custom_call.1} parent=5 // pred_fallthru
        _
    $region6: #{tpu_custom_call.1} parent=1 // loop_footer
      %s30 = sadd.s32 1, %s26
    $region7: #{tpu_custom_call.1} parent=1 // loop_footer_branch
      %25 = sbr.rel target = $region3
    $region8: #{tpu_custom_call.1} parent=1 // loop_exit
      _
    %7399 = vsyncpa [#allocation3], 1
    %s7400 = scalar_lea.sflag [#allocation3], 1
    %7401 = vsyncpa %s7400, 1
    %7402 = vsyncpa [#allocation4], 1
    %s7403 = scalar_lea.sflag [#allocation4], 1
    %7404 = vsyncpa %s7403, 1

</llo_original>
